<compile_context>
chip_gen: v5e
topology: v5e:2x2
jax: 0.10.0
libtpu: 0.0.40
codegen_flags: <defaults>
</compile_context>

<pallas_src>
import functools
import numpy as np
import jax
import jax.numpy as jnp
from jax.experimental import pallas as pl
from jax.experimental.pallas import tpu as pltpu

# ------------------------- configuration (consistent with the module) -------
B, D, H, W = 2, 4, 8, 8          # input feature (B, D, H, W, C)
DIM = 32                         # channels
NUM_HEADS = 4
HEAD_DIM = DIM // NUM_HEADS
WINDOW = (2, 4, 4)               # window_size (wd, wh, ww)
SHIFT = (0, 0, 0)                # shift_size (W-MSA path; mask_matrix unused)
MLP_RATIO = 4.0
HIDDEN = int(DIM * MLP_RATIO)
SCALE = HEAD_DIM ** (-0.5)
EPS = 1e-5
N_TOK = WINDOW[0] * WINDOW[1] * WINDOW[2]   # tokens per window


# ------------------------- helpers (glue, plain JAX / numpy) ----------------
def get_window_size(x_size, window_size, shift_size):
    ws = list(window_size)
    ss = list(shift_size)
    for i in range(len(x_size)):
        if x_size[i] <= window_size[i]:
            ws[i] = x_size[i]
            ss[i] = 0
    return tuple(ws), tuple(ss)


def window_partition(x, ws):
    b, d, h, w, c = x.shape
    x = x.reshape(b, d // ws[0], ws[0], h // ws[1], ws[1], w // ws[2], ws[2], c)
    x = x.transpose(0, 1, 3, 5, 2, 4, 6, 7)
    return x.reshape(-1, ws[0] * ws[1] * ws[2], c)


def window_reverse(windows, ws, b, d, h, w):
    x = windows.reshape(b, d // ws[0], h // ws[1], w // ws[2], ws[0], ws[1], ws[2], -1)
    x = x.transpose(0, 1, 4, 2, 5, 3, 6, 7)
    return x.reshape(b, d, h, w, -1)


def relative_position_index_np(ws):
    # Faithfully reproduces torch.meshgrid(..., indexing='xy') used in the module
    # (which swaps the first two grid dims relative to 'ij').
    wd, wh, ww = ws
    g = np.meshgrid(np.arange(wd), np.arange(wh), np.arange(ww), indexing="ij")
    coords = np.stack([a.transpose(1, 0, 2) for a in g])      # (3, wh, wd, ww)
    cf = coords.reshape(3, -1)
    rel = cf[:, :, None] - cf[:, None, :]                      # (3, N, N)
    rel = rel.transpose(1, 2, 0).astype(np.int64)              # (N, N, 3)
    rel[..., 0] += wd - 1
    rel[..., 1] += wh - 1
    rel[..., 2] += ww - 1
    rel[..., 0] *= (2 * wh - 1) * (2 * ww - 1)
    rel[..., 1] *= (2 * ww - 1)
    return rel.sum(-1)                                         # (N, N)


# ------------------------- fused Pallas kernel -------------------------------
def _swin_block_kernel(x_ref, g1_ref, b1_ref, wqkv_ref, bqkv_ref, wproj_ref,
                       bproj_ref, bias_ref, g2_ref, b2_ref, w1_ref, bfc1_ref,
                       w2_ref, bfc2_ref,
                       out_ref, q_ref, k_ref, v_ref, *, nh, hd, scale):
    bn, n, c = x_ref.shape
    x = x_ref[...].astype(jnp.float32)                         # shortcut (bn, N, C)

    # ---- norm1 (fused) ----
    mu = jnp.mean(x, axis=-1, keepdims=True)
    var = jnp.mean((x - mu) ** 2, axis=-1, keepdims=True)
    xn = (x - mu) * jax.lax.rsqrt(var + EPS) * g1_ref[0] + b1_ref[0]

    # ---- qkv projection: all windows of this block in one matmul ----
    qkv = (jnp.dot(xn.reshape(bn * n, c), wqkv_ref[...],
                   preferred_element_type=jnp.float32)
           + bqkv_ref[0]).reshape(bn, n, 3 * c)                # (bn, N, 3C)

    # ---- window multi-head attention: windows batched, heads unrolled.
    #      Per-head q (scaled), k, v go straight to the module's return layout;
    #      head outputs accumulate directly into the projected result.
    attn_out = jnp.zeros((bn, n, c), jnp.float32)
    for h in range(nh):
        qh = qkv[:, :, h * hd:(h + 1) * hd] * scale                     # (bn, N, hd)
        kh = qkv[:, :, c + h * hd:c + (h + 1) * hd]
        vh = qkv[:, :, 2 * c + h * hd:2 * c + (h + 1) * hd]
        q_ref[:, h:h + 1, :, :] = qh[:, None, :, :].astype(q_ref.dtype)
        k_ref[:, h:h + 1, :, :] = kh[:, None, :, :].astype(k_ref.dtype)
        v_ref[:, h:h + 1, :, :] = vh[:, None, :, :].astype(v_ref.dtype)

        s = jnp.einsum('bnd,bmd->bnm', qh, kh,
                       preferred_element_type=jnp.float32)              # (bn, N, N)
        s = s + bias_ref[h]                                             # rel-pos bias
        s = s - jnp.max(s, axis=-1, keepdims=True)
        p = jnp.exp(s)
        p = p * pl.reciprocal(jnp.sum(p, axis=-1, keepdims=True), approx=True)
        oh = jnp.einsum('bnm,bmd->bnd', p, vh,
                        preferred_element_type=jnp.float32)             # (bn, N, hd)
        attn_out = attn_out + jnp.dot(
            oh.reshape(bn * n, hd), wproj_ref[h * hd:(h + 1) * hd, :],
            preferred_element_type=jnp.float32).reshape(bn, n, c)
    attn_out = attn_out + bproj_ref[0]

    # ---- residual 1 (fused) ----
    xr = x + attn_out

    # ---- norm2 + MLP + residual 2 (fused) ----
    mu2 = jnp.mean(xr, axis=-1, keepdims=True)
    var2 = jnp.mean((xr - mu2) ** 2, axis=-1, keepdims=True)
    xn2 = (xr - mu2) * jax.lax.rsqrt(var2 + EPS) * g2_ref[0] + b2_ref[0]
    hdn = jnp.dot(xn2.reshape(bn * n, c), w1_ref[...],
                  preferred_element_type=jnp.float32) + bfc1_ref[0]
    # tanh-approximate GELU (EUP); exact erf version differs by ~3e-3 max.
    hdn = 0.5 * hdn * (1.0 + jnp.tanh(0.7978845608028654
                                      * (hdn + 0.044715 * hdn * hdn * hdn)))
    y = jnp.dot(hdn, w2_ref[...], preferred_element_type=jnp.float32) + bfc2_ref[0]
    out_ref[...] = (xr + y.reshape(bn, n, c)).astype(out_ref.dtype)


def swin_block_pallas(x_windows, p):
    """Fused norm1+W-MSA+residual+norm2+MLP+residual over windowed tokens.

    x_windows: (num_windows*B, N, C) raw (un-normed) tokens (= shortcut).
    Returns (out_windows (bn,N,C), q, k, v each (bn, nH, N, hd); q pre-scaled).
    """
    bn, n, c = x_windows.shape
    hid = p["w1"].shape[1]
    nsplit = 2 if bn % 2 == 0 else 1          # 2 parallel steps -> both v7x TCs busy
    blk = bn // nsplit

    kern = functools.partial(_swin_block_kernel, nh=NUM_HEADS, hd=HEAD_DIM,
                             scale=SCALE)
    qkv_shape = jax.ShapeDtypeStruct((bn, NUM_HEADS, n, HEAD_DIM), x_windows.dtype)
    qkv_spec = pl.BlockSpec((blk, NUM_HEADS, n, HEAD_DIM), lambda i: (i, 0, 0, 0))
    out, q, k, v = pl.pallas_call(
        kern,
        out_shape=(jax.ShapeDtypeStruct((bn, n, c), x_windows.dtype),
                   qkv_shape, qkv_shape, qkv_shape),
        grid=(nsplit,),
        in_specs=[pl.BlockSpec((blk, n, c), lambda i: (i, 0, 0)),          # x
                  pl.BlockSpec((1, c), lambda i: (0, 0)),                  # g1
                  pl.BlockSpec((1, c), lambda i: (0, 0)),                  # b1
                  pl.BlockSpec((c, 3 * c), lambda i: (0, 0)),              # wqkv
                  pl.BlockSpec((1, 3 * c), lambda i: (0, 0)),              # bqkv
                  pl.BlockSpec((c, c), lambda i: (0, 0)),                  # wproj
                  pl.BlockSpec((1, c), lambda i: (0, 0)),                  # bproj
                  pl.BlockSpec((NUM_HEADS, n, n), lambda i: (0, 0, 0)),    # rel bias
                  pl.BlockSpec((1, c), lambda i: (0, 0)),                  # g2
                  pl.BlockSpec((1, c), lambda i: (0, 0)),                  # b2
                  pl.BlockSpec((c, hid), lambda i: (0, 0)),                # w1
                  pl.BlockSpec((1, hid), lambda i: (0, 0)),                # bfc1
                  pl.BlockSpec((hid, c), lambda i: (0, 0)),                # w2
                  pl.BlockSpec((1, c), lambda i: (0, 0))],                 # bfc2
        out_specs=(pl.BlockSpec((blk, n, c), lambda i: (i, 0, 0)),
                   qkv_spec, qkv_spec, qkv_spec),
        compiler_params=pltpu.CompilerParams(dimension_semantics=("parallel",)),
    )(x_windows, p["g1"].reshape(1, c), p["b1"].reshape(1, c),
      p["wqkv"], p["bqkv"].reshape(1, -1), p["wproj"], p["bproj"].reshape(1, -1),
      p["rel_bias"], p["g2"].reshape(1, c), p["b2"].reshape(1, c),
      p["w1"], p["bfc1"].reshape(1, hid), p["w2"], p["bfc2"].reshape(1, c))
    return out, q, k, v


# ------------------------- full block forward -------------------------------
def swin_block_forward(x, p, mask_matrix=None):
    """SwinTransformerBlock3D.forward (is_decoder=False, prev_v/k/q=None)."""
    b, d, h, w, c = x.shape
    window_size, shift_size = get_window_size((d, h, w), WINDOW, SHIFT)

    # pad to window multiples (zero at these shapes, kept for structural fidelity)
    pad_d1 = (window_size[0] - d % window_size[0]) % window_size[0]
    pad_b = (window_size[1] - h % window_size[1]) % window_size[1]
    pad_r = (window_size[2] - w % window_size[2]) % window_size[2]
    xp = jnp.pad(x, ((0, 0), (0, pad_d1), (0, pad_b), (0, pad_r), (0, 0)))
    _, dp, hp, wp, _ = xp.shape

    # TODO(synk): shifted-window path (cyclic roll + mask_matrix), decoder
    # cross-attention / PositionalEncoding3D branch, and the norm-before-pad
    # ordering for nonzero padding are not implemented in the fused kernel
    # (shift_size=(0,0,0), no padding, is_decoder=False here).

    # All per-token work (norm1, attention, residuals, norm2, MLP) is done in
    # windowed token order inside one fused kernel; window_reverse recovers the
    # spatial layout afterwards (per-token ops commute with the permutation).
    x_windows = window_partition(xp, window_size)                 # (B_, N, C)
    out_windows, q, k, v = swin_block_pallas(x_windows, p)

    x_full = window_reverse(out_windows, window_size, b, dp, hp, wp)
    x_out = x_full[:, :d, :h, :w, :]
    # v, k, q exactly as returned by WindowAttention3D (q already scaled)
    return x_out, v, k, q


# ------------------------- pure-JAX reference (sanity check) ----------------
def reference_forward(x, p):
    def ln(t, g, b_):
        mu = jnp.mean(t, -1, keepdims=True)
        var = jnp.mean((t - mu) ** 2, -1, keepdims=True)
        return (t - mu) / jnp.sqrt(var + EPS) * g + b_

    shortcut = x
    xn = ln(x, p["g1"], p["b1"])
    xw = window_partition(xn, WINDOW)
    bn, n, c = xw.shape
    qkv = xw @ p["wqkv"] + p["bqkv"]
    qkv = qkv.reshape(bn, n, 3, NUM_HEADS, HEAD_DIM).transpose(2, 0, 3, 1, 4)
    q, k, v = qkv[0] * SCALE, qkv[1], qkv[2]
    attn = jnp.einsum("bhnd,bhmd->bhnm", q, k) + p["rel_bias"][None]
    attn = jax.nn.softmax(attn, axis=-1)
    o = jnp.einsum("bhnm,bhmd->bhnd", attn, v).transpose(0, 2, 1, 3).reshape(bn, n, c)
    o = o @ p["wproj"] + p["bproj"]
    xa = window_reverse(o, WINDOW, B, D, H, W)
    xr = shortcut + xa
    xn2 = ln(xr, p["g2"], p["b2"])
    hdn = xn2 @ p["w1"] + p["bfc1"]
    hdn = 0.5 * hdn * (1.0 + jax.lax.erf(hdn / np.sqrt(2.0)))     # exact GELU
    return xr + (hdn @ p["w2"] + p["bfc2"]), v, k, q


# ------------------------- deterministic parameter init ---------------------
def init_params(key):
    ks = jax.random.split(key, 12)
    p = {
        "g1": 1.0 + 0.02 * jax.random.normal(ks[0], (DIM,), jnp.float32),
        "b1": 0.02 * jax.random.normal(ks[1], (DIM,), jnp.float32),
        "g2": 1.0 + 0.02 * jax.random.normal(ks[2], (DIM,), jnp.float32),
        "b2": 0.02 * jax.random.normal(ks[3], (DIM,), jnp.float32),
        "wqkv": 0.05 * jax.random.normal(ks[4], (DIM, 3 * DIM), jnp.float32),
        "bqkv": 0.02 * jax.random.normal(ks[5], (3 * DIM,), jnp.float32),
        "wproj": 0.05 * jax.random.normal(ks[6], (DIM, DIM), jnp.float32),
        "bproj": 0.02 * jax.random.normal(ks[7], (DIM,), jnp.float32),
        "w1": 0.05 * jax.random.normal(ks[8], (DIM, HIDDEN), jnp.float32),
        "bfc1": 0.02 * jax.random.normal(ks[9], (HIDDEN,), jnp.float32),
        "w2": 0.05 * jax.random.normal(ks[10], (HIDDEN, DIM), jnp.float32),
        "bfc2": 0.02 * jax.random.normal(ks[11], (DIM,), jnp.float32),
    }
    tbl_size = (2 * WINDOW[0] - 1) * (2 * WINDOW[1] - 1) * (2 * WINDOW[2] - 1)
    tbl = 0.02 * jax.random.normal(jax.random.PRNGKey(42), (tbl_size, NUM_HEADS),
                                   jnp.float32)
    idx = relative_position_index_np(WINDOW)                       # (N, N)
    bias = tbl[idx.reshape(-1)].reshape(N_TOK, N_TOK, NUM_HEADS).transpose(2, 0, 1)
    p["rel_bias"] = jnp.asarray(bias, jnp.float32)                 # (nH, N, N)
    return p


# ------------------------- main ---------------------------------------------
if __name__ == "__main__":
    key = jax.random.PRNGKey(0)
    kx, kp = jax.random.split(key)
    x = jax.random.normal(kx, (B, D, H, W, DIM), jnp.float32)
    params = init_params(kp)

    fwd = jax.jit(swin_block_forward)
    x_out, v, k, q = fwd(x, params)
    jax.block_until_ready(x_out)

    ref_out, ref_v, ref_k, ref_q = reference_forward(x, params)
    err_x = float(jnp.max(jnp.abs(x_out - ref_out)))
    err_v = float(jnp.max(jnp.abs(v - ref_v)))
    err_q = float(jnp.max(jnp.abs(q - ref_q)))
    assert x_out.shape == (B, D, H, W, DIM)
    assert v.shape == (16, NUM_HEADS, N_TOK, HEAD_DIM)
    assert k.shape == (16, NUM_HEADS, N_TOK, HEAD_DIM)
    assert q.shape == (16, NUM_HEADS, N_TOK, HEAD_DIM)
    assert err_x < 1e-2, f"x_out mismatch vs reference: {err_x}"
    assert err_v < 1e-2, f"v mismatch vs reference: {err_v}"
    assert err_q < 1e-2, f"q mismatch vs reference: {err_q}"
    print("KERNEL_OK")
</pallas_src>

<mosaic_0001>
module attributes {stable_mosaic.version = 11 : i64} {
  func.func @_swin_block_kernel(%arg0: i32, %arg1: memref<8x32x32xf32, #tpu.memory_space<vmem>>, %arg2: memref<1x32xf32, #tpu.memory_space<vmem>>, %arg3: memref<1x32xf32, #tpu.memory_space<vmem>>, %arg4: memref<32x96xf32, #tpu.memory_space<vmem>>, %arg5: memref<1x96xf32, #tpu.memory_space<vmem>>, %arg6: memref<32x32xf32, #tpu.memory_space<vmem>>, %arg7: memref<1x32xf32, #tpu.memory_space<vmem>>, %arg8: memref<4x32x32xf32, #tpu.memory_space<vmem>>, %arg9: memref<1x32xf32, #tpu.memory_space<vmem>>, %arg10: memref<1x32xf32, #tpu.memory_space<vmem>>, %arg11: memref<32x128xf32, #tpu.memory_space<vmem>>, %arg12: memref<1x128xf32, #tpu.memory_space<vmem>>, %arg13: memref<128x32xf32, #tpu.memory_space<vmem>>, %arg14: memref<1x32xf32, #tpu.memory_space<vmem>>, %arg15: memref<8x32x32xf32, #tpu.memory_space<vmem>>, %arg16: memref<8x4x32x8xf32, #tpu.memory_space<vmem>>, %arg17: memref<8x4x32x8xf32, #tpu.memory_space<vmem>>, %arg18: memref<8x4x32x8xf32, #tpu.memory_space<vmem>>) attributes {dimension_semantics = [#tpu.dimension_semantics<parallel>], iteration_bounds = array<i64: 2>, scalar_prefetch = 0 : i64, scratch_operands = 0 : i64, tpu.core_type = #tpu.core_type<tc>, window_params = [{transform_indices = @transform_0, window_bounds = array<i64: 8, 32, 32>}, {pipeline_mode = #tpu.pipeline_mode<synchronous>, transform_indices = @transform_1, window_bounds = array<i64: 1, 32>}, {pipeline_mode = #tpu.pipeline_mode<synchronous>, transform_indices = @transform_2, window_bounds = array<i64: 1, 32>}, {pipeline_mode = #tpu.pipeline_mode<synchronous>, transform_indices = @transform_3, window_bounds = array<i64: 32, 96>}, {pipeline_mode = #tpu.pipeline_mode<synchronous>, transform_indices = @transform_4, window_bounds = array<i64: 1, 96>}, {pipeline_mode = #tpu.pipeline_mode<synchronous>, transform_indices = @transform_5, window_bounds = array<i64: 32, 32>}, {pipeline_mode = #tpu.pipeline_mode<synchronous>, transform_indices = @transform_6, window_bounds = array<i64: 1, 32>}, {pipeline_mode = #tpu.pipeline_mode<synchronous>, transform_indices = @transform_7, window_bounds = array<i64: 4, 32, 32>}, {pipeline_mode = #tpu.pipeline_mode<synchronous>, transform_indices = @transform_8, window_bounds = array<i64: 1, 32>}, {pipeline_mode = #tpu.pipeline_mode<synchronous>, transform_indices = @transform_9, window_bounds = array<i64: 1, 32>}, {pipeline_mode = #tpu.pipeline_mode<synchronous>, transform_indices = @transform_10, window_bounds = array<i64: 32, 128>}, {pipeline_mode = #tpu.pipeline_mode<synchronous>, transform_indices = @transform_11, window_bounds = array<i64: 1, 128>}, {pipeline_mode = #tpu.pipeline_mode<synchronous>, transform_indices = @transform_12, window_bounds = array<i64: 128, 32>}, {pipeline_mode = #tpu.pipeline_mode<synchronous>, transform_indices = @transform_13, window_bounds = array<i64: 1, 32>}, {transform_indices = @transform_14, window_bounds = array<i64: 8, 32, 32>}, {transform_indices = @transform_15, window_bounds = array<i64: 8, 4, 32, 8>}, {transform_indices = @transform_16, window_bounds = array<i64: 8, 4, 32, 8>}, {transform_indices = @transform_17, window_bounds = array<i64: 8, 4, 32, 8>}]} {
    %c0 = arith.constant 0 : index
    %c0_0 = arith.constant 0 : index
    %c0_1 = arith.constant 0 : index
    %0 = vector.load %arg1[%c0, %c0_0, %c0_1] : memref<8x32x32xf32, #tpu.memory_space<vmem>>, vector<8x32x32xf32>
    %cst = arith.constant dense<0.000000e+00> : vector<8x32xf32>
    %1 = vector.multi_reduction <add>, %0, %cst [2] : vector<8x32x32xf32> to vector<8x32xf32>
    %2 = vector.shape_cast %1 : vector<8x32xf32> to vector<8x32x1xf32>
    %cst_2 = arith.constant 3.200000e+01 : f32
    %3 = vector.broadcast %cst_2 : f32 to vector<8x32x1xf32>
    %4 = arith.divf %2, %3 : vector<8x32x1xf32>
    %5 = vector.broadcast %4 : vector<8x32x1xf32> to vector<8x32x32xf32>
    %6 = arith.subf %0, %5 : vector<8x32x32xf32>
    %7 = arith.mulf %6, %6 : vector<8x32x32xf32>
    %cst_3 = arith.constant dense<0.000000e+00> : vector<8x32xf32>
    %8 = vector.multi_reduction <add>, %7, %cst_3 [2] : vector<8x32x32xf32> to vector<8x32xf32>
    %9 = vector.shape_cast %8 : vector<8x32xf32> to vector<8x32x1xf32>
    %cst_4 = arith.constant 3.200000e+01 : f32
    %10 = vector.broadcast %cst_4 : f32 to vector<8x32x1xf32>
    %11 = arith.divf %9, %10 : vector<8x32x1xf32>
    %12 = vector.broadcast %4 : vector<8x32x1xf32> to vector<8x32x32xf32>
    %13 = arith.subf %0, %12 : vector<8x32x32xf32>
    %cst_5 = arith.constant 9.99999974E-6 : f32
    %14 = vector.broadcast %cst_5 : f32 to vector<8x32x1xf32>
    %15 = arith.addf %11, %14 : vector<8x32x1xf32>
    %16 = math.rsqrt %15 : vector<8x32x1xf32>
    %17 = vector.broadcast %16 : vector<8x32x1xf32> to vector<8x32x32xf32>
    %18 = arith.mulf %13, %17 : vector<8x32x32xf32>
    %c0_6 = arith.constant 0 : index
    %c0_7 = arith.constant 0 : index
    %19 = vector.load %arg2[%c0_6, %c0_7] : memref<1x32xf32, #tpu.memory_space<vmem>>, vector<1x32xf32>
    %20 = vector.shape_cast %19 : vector<1x32xf32> to vector<32xf32>
    %21 = vector.shape_cast %20 : vector<32xf32> to vector<1x1x32xf32>
    %22 = vector.broadcast %21 : vector<1x1x32xf32> to vector<8x32x32xf32>
    %23 = arith.mulf %18, %22 : vector<8x32x32xf32>
    %c0_8 = arith.constant 0 : index
    %c0_9 = arith.constant 0 : index
    %24 = vector.load %arg3[%c0_8, %c0_9] : memref<1x32xf32, #tpu.memory_space<vmem>>, vector<1x32xf32>
    %25 = vector.shape_cast %24 : vector<1x32xf32> to vector<32xf32>
    %26 = vector.shape_cast %25 : vector<32xf32> to vector<1x1x32xf32>
    %27 = vector.broadcast %26 : vector<1x1x32xf32> to vector<8x32x32xf32>
    %28 = arith.addf %23, %27 : vector<8x32x32xf32>
    %29 = vector.shape_cast %28 : vector<8x32x32xf32> to vector<256x32xf32>
    %c0_10 = arith.constant 0 : index
    %c0_11 = arith.constant 0 : index
    %30 = vector.load %arg4[%c0_10, %c0_11] : memref<32x96xf32, #tpu.memory_space<vmem>>, vector<32x96xf32>
    %cst_12 = arith.constant dense<0.000000e+00> : vector<256x96xf32>
    %31 = tpu.matmul %29, %30, %cst_12 {dimension_numbers = #tpu.dot_dimension_numbers<[1], [0], [0], [1], [0, 0, 1, 1], [], []>} : vector<256x32xf32>, vector<32x96xf32>, vector<256x96xf32> -> vector<256x96xf32>
    %c0_13 = arith.constant 0 : index
    %c0_14 = arith.constant 0 : index
    %32 = vector.load %arg5[%c0_13, %c0_14] : memref<1x96xf32, #tpu.memory_space<vmem>>, vector<1x96xf32>
    %33 = vector.shape_cast %32 : vector<1x96xf32> to vector<96xf32>
    %34 = vector.shape_cast %33 : vector<96xf32> to vector<1x96xf32>
    %35 = vector.broadcast %34 : vector<1x96xf32> to vector<256x96xf32>
    %36 = arith.addf %31, %35 : vector<256x96xf32>
    %37 = vector.shape_cast %36 : vector<256x96xf32> to vector<8x32x96xf32>
    %cst_15 = arith.constant 0.000000e+00 : f32
    %38 = vector.broadcast %cst_15 : f32 to vector<8x32x32xf32>
    %39 = vector.extract_strided_slice %37 {offsets = [0, 0, 0], sizes = [8, 32, 8], strides = [1, 1, 1]} : vector<8x32x96xf32> to vector<8x32x8xf32>
    %cst_16 = arith.constant 0.353553385 : f32
    %40 = vector.broadcast %cst_16 : f32 to vector<8x32x8xf32>
    %41 = arith.mulf %39, %40 : vector<8x32x8xf32>
    %42 = vector.extract_strided_slice %37 {offsets = [0, 0, 32], sizes = [8, 32, 8], strides = [1, 1, 1]} : vector<8x32x96xf32> to vector<8x32x8xf32>
    %43 = vector.extract_strided_slice %37 {offsets = [0, 0, 64], sizes = [8, 32, 8], strides = [1, 1, 1]} : vector<8x32x96xf32> to vector<8x32x8xf32>
    %44 = vector.shape_cast %41 : vector<8x32x8xf32> to vector<8x1x32x8xf32>
    %c0_17 = arith.constant 0 : index
    %c0_18 = arith.constant 0 : index
    %c0_19 = arith.constant 0 : index
    %c0_20 = arith.constant 0 : index
    %45 = vector.load %arg16[%c0_17, %c0_18, %c0_19, %c0_20] : memref<8x4x32x8xf32, #tpu.memory_space<vmem>>, vector<8x1x32x8xf32>
    tpu.vector_store %arg16[%c0_17, %c0_18, %c0_19, %c0_20], %44 {strides = array<i32>} : memref<8x4x32x8xf32, #tpu.memory_space<vmem>>, vector<8x1x32x8xf32>,
    %46 = vector.shape_cast %42 : vector<8x32x8xf32> to vector<8x1x32x8xf32>
    %c0_21 = arith.constant 0 : index
    %c0_22 = arith.constant 0 : index
    %c0_23 = arith.constant 0 : index
    %c0_24 = arith.constant 0 : index
    %47 = vector.load %arg17[%c0_21, %c0_22, %c0_23, %c0_24] : memref<8x4x32x8xf32, #tpu.memory_space<vmem>>, vector<8x1x32x8xf32>
    tpu.vector_store %arg17[%c0_21, %c0_22, %c0_23, %c0_24], %46 {strides = array<i32>} : memref<8x4x32x8xf32, #tpu.memory_space<vmem>>, vector<8x1x32x8xf32>,
    %48 = vector.shape_cast %43 : vector<8x32x8xf32> to vector<8x1x32x8xf32>
    %c0_25 = arith.constant 0 : index
    %c0_26 = arith.constant 0 : index
    %c0_27 = arith.constant 0 : index
    %c0_28 = arith.constant 0 : index
    %49 = vector.load %arg18[%c0_25, %c0_26, %c0_27, %c0_28] : memref<8x4x32x8xf32, #tpu.memory_space<vmem>>, vector<8x1x32x8xf32>
    tpu.vector_store %arg18[%c0_25, %c0_26, %c0_27, %c0_28], %48 {strides = array<i32>} : memref<8x4x32x8xf32, #tpu.memory_space<vmem>>, vector<8x1x32x8xf32>,
    "tpu.trace_start"() <{level = 10 : i32, message = "bnd,bmd->bnm"}> : () -> ()
    %cst_29 = arith.constant dense<0.000000e+00> : vector<8x32x32xf32>
    %50 = tpu.matmul %41, %42, %cst_29 {dimension_numbers = #tpu.dot_dimension_numbers<[2], [2], [1], [1], [0, 0, 0, 1, 1, 1], [0], [0]>} : vector<8x32x8xf32>, vector<8x32x8xf32>, vector<8x32x32xf32> -> vector<8x32x32xf32>
    "tpu.trace_stop"() : () -> ()
    %c0_30 = arith.constant 0 : index
    %c0_31 = arith.constant 0 : index
    %c0_32 = arith.constant 0 : index
    %51 = vector.load %arg8[%c0_30, %c0_31, %c0_32] : memref<4x32x32xf32, #tpu.memory_space<vmem>>, vector<1x32x32xf32>
    %52 = vector.shape_cast %51 : vector<1x32x32xf32> to vector<32x32xf32>
    %53 = vector.shape_cast %52 : vector<32x32xf32> to vector<1x32x32xf32>
    %54 = vector.broadcast %53 : vector<1x32x32xf32> to vector<8x32x32xf32>
    %55 = arith.addf %50, %54 : vector<8x32x32xf32>
    %cst_33 = arith.constant dense<0xFF800000> : vector<8x32xf32>
    %56 = vector.multi_reduction <maximumf>, %55, %cst_33 [2] : vector<8x32x32xf32> to vector<8x32xf32>
    %57 = vector.shape_cast %56 : vector<8x32xf32> to vector<8x32x1xf32>
    %58 = vector.broadcast %57 : vector<8x32x1xf32> to vector<8x32x32xf32>
    %59 = arith.subf %55, %58 : vector<8x32x32xf32>
    %60 = math.exp %59 : vector<8x32x32xf32>
    %cst_34 = arith.constant dense<0.000000e+00> : vector<8x32xf32>
    %61 = vector.multi_reduction <add>, %60, %cst_34 [2] : vector<8x32x32xf32> to vector<8x32xf32>
    %62 = vector.shape_cast %61 : vector<8x32xf32> to vector<8x32x1xf32>
    %63 = tpu.reciprocal %62 {approx = true} : vector<8x32x1xf32> -> vector<8x32x1xf32>
    %64 = vector.broadcast %63 : vector<8x32x1xf32> to vector<8x32x32xf32>
    %65 = arith.mulf %60, %64 : vector<8x32x32xf32>
    "tpu.trace_start"() <{level = 10 : i32, message = "bnm,bmd->bnd"}> : () -> ()
    %cst_35 = arith.constant dense<0.000000e+00> : vector<8x32x8xf32>
    %66 = tpu.matmul %65, %43, %cst_35 {dimension_numbers = #tpu.dot_dimension_numbers<[2], [1], [1], [2], [0, 0, 0, 1, 1, 2], [0], [0]>} : vector<8x32x32xf32>, vector<8x32x8xf32>, vector<8x32x8xf32> -> vector<8x32x8xf32>
    "tpu.trace_stop"() : () -> ()
    %67 = vector.shape_cast %66 : vector<8x32x8xf32> to vector<256x8xf32>
    %c0_36 = arith.constant 0 : index
    %c0_37 = arith.constant 0 : index
    %68 = vector.load %arg6[%c0_36, %c0_37] : memref<32x32xf32, #tpu.memory_space<vmem>>, vector<8x32xf32>
    %cst_38 = arith.constant dense<0.000000e+00> : vector<256x32xf32>
    %69 = tpu.matmul %67, %68, %cst_38 {dimension_numbers = #tpu.dot_dimension_numbers<[1], [0], [0], [1], [0, 0, 1, 1], [], []>} : vector<256x8xf32>, vector<8x32xf32>, vector<256x32xf32> -> vector<256x32xf32>
    %70 = vector.shape_cast %69 : vector<256x32xf32> to vector<8x32x32xf32>
    %71 = arith.addf %38, %70 : vector<8x32x32xf32>
    %72 = vector.extract_strided_slice %37 {offsets = [0, 0, 8], sizes = [8, 32, 8], strides = [1, 1, 1]} : vector<8x32x96xf32> to vector<8x32x8xf32>
    %cst_39 = arith.constant 0.353553385 : f32
    %73 = vector.broadcast %cst_39 : f32 to vector<8x32x8xf32>
    %74 = arith.mulf %72, %73 : vector<8x32x8xf32>
    %75 = vector.extract_strided_slice %37 {offsets = [0, 0, 40], sizes = [8, 32, 8], strides = [1, 1, 1]} : vector<8x32x96xf32> to vector<8x32x8xf32>
    %76 = vector.extract_strided_slice %37 {offsets = [0, 0, 72], sizes = [8, 32, 8], strides = [1, 1, 1]} : vector<8x32x96xf32> to vector<8x32x8xf32>
    %77 = vector.shape_cast %74 : vector<8x32x8xf32> to vector<8x1x32x8xf32>
    %c0_40 = arith.constant 0 : index
    %c1 = arith.constant 1 : index
    %c0_41 = arith.constant 0 : index
    %c0_42 = arith.constant 0 : index
    %78 = vector.load %arg16[%c0_40, %c1, %c0_41, %c0_42] : memref<8x4x32x8xf32, #tpu.memory_space<vmem>>, vector<8x1x32x8xf32>
    tpu.vector_store %arg16[%c0_40, %c1, %c0_41, %c0_42], %77 {strides = array<i32>} : memref<8x4x32x8xf32, #tpu.memory_space<vmem>>, vector<8x1x32x8xf32>,
    %79 = vector.shape_cast %75 : vector<8x32x8xf32> to vector<8x1x32x8xf32>
    %c0_43 = arith.constant 0 : index
    %c1_44 = arith.constant 1 : index
    %c0_45 = arith.constant 0 : index
    %c0_46 = arith.constant 0 : index
    %80 = vector.load %arg17[%c0_43, %c1_44, %c0_45, %c0_46] : memref<8x4x32x8xf32, #tpu.memory_space<vmem>>, vector<8x1x32x8xf32>
    tpu.vector_store %arg17[%c0_43, %c1_44, %c0_45, %c0_46], %79 {strides = array<i32>} : memref<8x4x32x8xf32, #tpu.memory_space<vmem>>, vector<8x1x32x8xf32>,
    %81 = vector.shape_cast %76 : vector<8x32x8xf32> to vector<8x1x32x8xf32>
    %c0_47 = arith.constant 0 : index
    %c1_48 = arith.constant 1 : index
    %c0_49 = arith.constant 0 : index
    %c0_50 = arith.constant 0 : index
    %82 = vector.load %arg18[%c0_47, %c1_48, %c0_49, %c0_50] : memref<8x4x32x8xf32, #tpu.memory_space<vmem>>, vector<8x1x32x8xf32>
    tpu.vector_store %arg18[%c0_47, %c1_48, %c0_49, %c0_50], %81 {strides = array<i32>} : memref<8x4x32x8xf32, #tpu.memory_space<vmem>>, vector<8x1x32x8xf32>,
    "tpu.trace_start"() <{level = 10 : i32, message = "bnd,bmd->bnm"}> : () -> ()
    %cst_51 = arith.constant dense<0.000000e+00> : vector<8x32x32xf32>
    %83 = tpu.matmul %74, %75, %cst_51 {dimension_numbers = #tpu.dot_dimension_numbers<[2], [2], [1], [1], [0, 0, 0, 1, 1, 1], [0], [0]>} : vector<8x32x8xf32>, vector<8x32x8xf32>, vector<8x32x32xf32> -> vector<8x32x32xf32>
    "tpu.trace_stop"() : () -> ()
    %c1_52 = arith.constant 1 : index
    %c0_53 = arith.constant 0 : index
    %c0_54 = arith.constant 0 : index
    %84 = vector.load %arg8[%c1_52, %c0_53, %c0_54] : memref<4x32x32xf32, #tpu.memory_space<vmem>>, vector<1x32x32xf32>
    %85 = vector.shape_cast %84 : vector<1x32x32xf32> to vector<32x32xf32>
    %86 = vector.shape_cast %85 : vector<32x32xf32> to vector<1x32x32xf32>
    %87 = vector.broadcast %86 : vector<1x32x32xf32> to vector<8x32x32xf32>
    %88 = arith.addf %83, %87 : vector<8x32x32xf32>
    %cst_55 = arith.constant dense<0xFF800000> : vector<8x32xf32>
    %89 = vector.multi_reduction <maximumf>, %88, %cst_55 [2] : vector<8x32x32xf32> to vector<8x32xf32>
    %90 = vector.shape_cast %89 : vector<8x32xf32> to vector<8x32x1xf32>
    %91 = vector.broadcast %90 : vector<8x32x1xf32> to vector<8x32x32xf32>
    %92 = arith.subf %88, %91 : vector<8x32x32xf32>
    %93 = math.exp %92 : vector<8x32x32xf32>
    %cst_56 = arith.constant dense<0.000000e+00> : vector<8x32xf32>
    %94 = vector.multi_reduction <add>, %93, %cst_56 [2] : vector<8x32x32xf32> to vector<8x32xf32>
    %95 = vector.shape_cast %94 : vector<8x32xf32> to vector<8x32x1xf32>
    %96 = tpu.reciprocal %95 {approx = true} : vector<8x32x1xf32> -> vector<8x32x1xf32>
    %97 = vector.broadcast %96 : vector<8x32x1xf32> to vector<8x32x32xf32>
    %98 = arith.mulf %93, %97 : vector<8x32x32xf32>
    "tpu.trace_start"() <{level = 10 : i32, message = "bnm,bmd->bnd"}> : () -> ()
    %cst_57 = arith.constant dense<0.000000e+00> : vector<8x32x8xf32>
    %99 = tpu.matmul %98, %76, %cst_57 {dimension_numbers = #tpu.dot_dimension_numbers<[2], [1], [1], [2], [0, 0, 0, 1, 1, 2], [0], [0]>} : vector<8x32x32xf32>, vector<8x32x8xf32>, vector<8x32x8xf32> -> vector<8x32x8xf32>
    "tpu.trace_stop"() : () -> ()
    %100 = vector.shape_cast %99 : vector<8x32x8xf32> to vector<256x8xf32>
    %c8 = arith.constant 8 : index
    %c0_58 = arith.constant 0 : index
    %101 = vector.load %arg6[%c8, %c0_58] : memref<32x32xf32, #tpu.memory_space<vmem>>, vector<8x32xf32>
    %cst_59 = arith.constant dense<0.000000e+00> : vector<256x32xf32>
    %102 = tpu.matmul %100, %101, %cst_59 {dimension_numbers = #tpu.dot_dimension_numbers<[1], [0], [0], [1], [0, 0, 1, 1], [], []>} : vector<256x8xf32>, vector<8x32xf32>, vector<256x32xf32> -> vector<256x32xf32>
    %103 = vector.shape_cast %102 : vector<256x32xf32> to vector<8x32x32xf32>
    %104 = arith.addf %71, %103 : vector<8x32x32xf32>
    %105 = vector.extract_strided_slice %37 {offsets = [0, 0, 16], sizes = [8, 32, 8], strides = [1, 1, 1]} : vector<8x32x96xf32> to vector<8x32x8xf32>
    %cst_60 = arith.constant 0.353553385 : f32
    %106 = vector.broadcast %cst_60 : f32 to vector<8x32x8xf32>
    %107 = arith.mulf %105, %106 : vector<8x32x8xf32>
    %108 = vector.extract_strided_slice %37 {offsets = [0, 0, 48], sizes = [8, 32, 8], strides = [1, 1, 1]} : vector<8x32x96xf32> to vector<8x32x8xf32>
    %109 = vector.extract_strided_slice %37 {offsets = [0, 0, 80], sizes = [8, 32, 8], strides = [1, 1, 1]} : vector<8x32x96xf32> to vector<8x32x8xf32>
    %110 = vector.shape_cast %107 : vector<8x32x8xf32> to vector<8x1x32x8xf32>
    %c0_61 = arith.constant 0 : index
    %c2 = arith.constant 2 : index
    %c0_62 = arith.constant 0 : index
    %c0_63 = arith.constant 0 : index
    %111 = vector.load %arg16[%c0_61, %c2, %c0_62, %c0_63] : memref<8x4x32x8xf32, #tpu.memory_space<vmem>>, vector<8x1x32x8xf32>
    tpu.vector_store %arg16[%c0_61, %c2, %c0_62, %c0_63], %110 {strides = array<i32>} : memref<8x4x32x8xf32, #tpu.memory_space<vmem>>, vector<8x1x32x8xf32>,
    %112 = vector.shape_cast %108 : vector<8x32x8xf32> to vector<8x1x32x8xf32>
    %c0_64 = arith.constant 0 : index
    %c2_65 = arith.constant 2 : index
    %c0_66 = arith.constant 0 : index
    %c0_67 = arith.constant 0 : index
    %113 = vector.load %arg17[%c0_64, %c2_65, %c0_66, %c0_67] : memref<8x4x32x8xf32, #tpu.memory_space<vmem>>, vector<8x1x32x8xf32>
    tpu.vector_store %arg17[%c0_64, %c2_65, %c0_66, %c0_67], %112 {strides = array<i32>} : memref<8x4x32x8xf32, #tpu.memory_space<vmem>>, vector<8x1x32x8xf32>,
    %114 = vector.shape_cast %109 : vector<8x32x8xf32> to vector<8x1x32x8xf32>
    %c0_68 = arith.constant 0 : index
    %c2_69 = arith.constant 2 : index
    %c0_70 = arith.constant 0 : index
    %c0_71 = arith.constant 0 : index
    %115 = vector.load %arg18[%c0_68, %c2_69, %c0_70, %c0_71] : memref<8x4x32x8xf32, #tpu.memory_space<vmem>>, vector<8x1x32x8xf32>
    tpu.vector_store %arg18[%c0_68, %c2_69, %c0_70, %c0_71], %114 {strides = array<i32>} : memref<8x4x32x8xf32, #tpu.memory_space<vmem>>, vector<8x1x32x8xf32>,
    "tpu.trace_start"() <{level = 10 : i32, message = "bnd,bmd->bnm"}> : () -> ()
    %cst_72 = arith.constant dense<0.000000e+00> : vector<8x32x32xf32>
    %116 = tpu.matmul %107, %108, %cst_72 {dimension_numbers = #tpu.dot_dimension_numbers<[2], [2], [1], [1], [0, 0, 0, 1, 1, 1], [0], [0]>} : vector<8x32x8xf32>, vector<8x32x8xf32>, vector<8x32x32xf32> -> vector<8x32x32xf32>
    "tpu.trace_stop"() : () -> ()
    %c2_73 = arith.constant 2 : index
    %c0_74 = arith.constant 0 : index
    %c0_75 = arith.constant 0 : index
    %117 = vector.load %arg8[%c2_73, %c0_74, %c0_75] : memref<4x32x32xf32, #tpu.memory_space<vmem>>, vector<1x32x32xf32>
    %118 = vector.shape_cast %117 : vector<1x32x32xf32> to vector<32x32xf32>
    %119 = vector.shape_cast %118 : vector<32x32xf32> to vector<1x32x32xf32>
    %120 = vector.broadcast %119 : vector<1x32x32xf32> to vector<8x32x32xf32>
    %121 = arith.addf %116, %120 : vector<8x32x32xf32>
    %cst_76 = arith.constant dense<0xFF800000> : vector<8x32xf32>
    %122 = vector.multi_reduction <maximumf>, %121, %cst_76 [2] : vector<8x32x32xf32> to vector<8x32xf32>
    %123 = vector.shape_cast %122 : vector<8x32xf32> to vector<8x32x1xf32>
    %124 = vector.broadcast %123 : vector<8x32x1xf32> to vector<8x32x32xf32>
    %125 = arith.subf %121, %124 : vector<8x32x32xf32>
    %126 = math.exp %125 : vector<8x32x32xf32>
    %cst_77 = arith.constant dense<0.000000e+00> : vector<8x32xf32>
    %127 = vector.multi_reduction <add>, %126, %cst_77 [2] : vector<8x32x32xf32> to vector<8x32xf32>
    %128 = vector.shape_cast %127 : vector<8x32xf32> to vector<8x32x1xf32>
    %129 = tpu.reciprocal %128 {approx = true} : vector<8x32x1xf32> -> vector<8x32x1xf32>
    %130 = vector.broadcast %129 : vector<8x32x1xf32> to vector<8x32x32xf32>
    %131 = arith.mulf %126, %130 : vector<8x32x32xf32>
    "tpu.trace_start"() <{level = 10 : i32, message = "bnm,bmd->bnd"}> : () -> ()
    %cst_78 = arith.constant dense<0.000000e+00> : vector<8x32x8xf32>
    %132 = tpu.matmul %131, %109, %cst_78 {dimension_numbers = #tpu.dot_dimension_numbers<[2], [1], [1], [2], [0, 0, 0, 1, 1, 2], [0], [0]>} : vector<8x32x32xf32>, vector<8x32x8xf32>, vector<8x32x8xf32> -> vector<8x32x8xf32>
    "tpu.trace_stop"() : () -> ()
    %133 = vector.shape_cast %132 : vector<8x32x8xf32> to vector<256x8xf32>
    %c16 = arith.constant 16 : index
    %c0_79 = arith.constant 0 : index
    %134 = vector.load %arg6[%c16, %c0_79] : memref<32x32xf32, #tpu.memory_space<vmem>>, vector<8x32xf32>
    %cst_80 = arith.constant dense<0.000000e+00> : vector<256x32xf32>
    %135 = tpu.matmul %133, %134, %cst_80 {dimension_numbers = #tpu.dot_dimension_numbers<[1], [0], [0], [1], [0, 0, 1, 1], [], []>} : vector<256x8xf32>, vector<8x32xf32>, vector<256x32xf32> -> vector<256x32xf32>
    %136 = vector.shape_cast %135 : vector<256x32xf32> to vector<8x32x32xf32>
    %137 = arith.addf %104, %136 : vector<8x32x32xf32>
    %138 = vector.extract_strided_slice %37 {offsets = [0, 0, 24], sizes = [8, 32, 8], strides = [1, 1, 1]} : vector<8x32x96xf32> to vector<8x32x8xf32>
    %cst_81 = arith.constant 0.353553385 : f32
    %139 = vector.broadcast %cst_81 : f32 to vector<8x32x8xf32>
    %140 = arith.mulf %138, %139 : vector<8x32x8xf32>
    %141 = vector.extract_strided_slice %37 {offsets = [0, 0, 56], sizes = [8, 32, 8], strides = [1, 1, 1]} : vector<8x32x96xf32> to vector<8x32x8xf32>
    %142 = vector.extract_strided_slice %37 {offsets = [0, 0, 88], sizes = [8, 32, 8], strides = [1, 1, 1]} : vector<8x32x96xf32> to vector<8x32x8xf32>
    %143 = vector.shape_cast %140 : vector<8x32x8xf32> to vector<8x1x32x8xf32>
    %c0_82 = arith.constant 0 : index
    %c3 = arith.constant 3 : index
    %c0_83 = arith.constant 0 : index
    %c0_84 = arith.constant 0 : index
    %144 = vector.load %arg16[%c0_82, %c3, %c0_83, %c0_84] : memref<8x4x32x8xf32, #tpu.memory_space<vmem>>, vector<8x1x32x8xf32>
    tpu.vector_store %arg16[%c0_82, %c3, %c0_83, %c0_84], %143 {strides = array<i32>} : memref<8x4x32x8xf32, #tpu.memory_space<vmem>>, vector<8x1x32x8xf32>,
    %145 = vector.shape_cast %141 : vector<8x32x8xf32> to vector<8x1x32x8xf32>
    %c0_85 = arith.constant 0 : index
    %c3_86 = arith.constant 3 : index
    %c0_87 = arith.constant 0 : index
    %c0_88 = arith.constant 0 : index
    %146 = vector.load %arg17[%c0_85, %c3_86, %c0_87, %c0_88] : memref<8x4x32x8xf32, #tpu.memory_space<vmem>>, vector<8x1x32x8xf32>
    tpu.vector_store %arg17[%c0_85, %c3_86, %c0_87, %c0_88], %145 {strides = array<i32>} : memref<8x4x32x8xf32, #tpu.memory_space<vmem>>, vector<8x1x32x8xf32>,
    %147 = vector.shape_cast %142 : vector<8x32x8xf32> to vector<8x1x32x8xf32>
    %c0_89 = arith.constant 0 : index
    %c3_90 = arith.constant 3 : index
    %c0_91 = arith.constant 0 : index
    %c0_92 = arith.constant 0 : index
    %148 = vector.load %arg18[%c0_89, %c3_90, %c0_91, %c0_92] : memref<8x4x32x8xf32, #tpu.memory_space<vmem>>, vector<8x1x32x8xf32>
    tpu.vector_store %arg18[%c0_89, %c3_90, %c0_91, %c0_92], %147 {strides = array<i32>} : memref<8x4x32x8xf32, #tpu.memory_space<vmem>>, vector<8x1x32x8xf32>,
    "tpu.trace_start"() <{level = 10 : i32, message = "bnd,bmd->bnm"}> : () -> ()
    %cst_93 = arith.constant dense<0.000000e+00> : vector<8x32x32xf32>
    %149 = tpu.matmul %140, %141, %cst_93 {dimension_numbers = #tpu.dot_dimension_numbers<[2], [2], [1], [1], [0, 0, 0, 1, 1, 1], [0], [0]>} : vector<8x32x8xf32>, vector<8x32x8xf32>, vector<8x32x32xf32> -> vector<8x32x32xf32>
    "tpu.trace_stop"() : () -> ()
    %c3_94 = arith.constant 3 : index
    %c0_95 = arith.constant 0 : index
    %c0_96 = arith.constant 0 : index
    %150 = vector.load %arg8[%c3_94, %c0_95, %c0_96] : memref<4x32x32xf32, #tpu.memory_space<vmem>>, vector<1x32x32xf32>
    %151 = vector.shape_cast %150 : vector<1x32x32xf32> to vector<32x32xf32>
    %152 = vector.shape_cast %151 : vector<32x32xf32> to vector<1x32x32xf32>
    %153 = vector.broadcast %152 : vector<1x32x32xf32> to vector<8x32x32xf32>
    %154 = arith.addf %149, %153 : vector<8x32x32xf32>
    %cst_97 = arith.constant dense<0xFF800000> : vector<8x32xf32>
    %155 = vector.multi_reduction <maximumf>, %154, %cst_97 [2] : vector<8x32x32xf32> to vector<8x32xf32>
    %156 = vector.shape_cast %155 : vector<8x32xf32> to vector<8x32x1xf32>
    %157 = vector.broadcast %156 : vector<8x32x1xf32> to vector<8x32x32xf32>
    %158 = arith.subf %154, %157 : vector<8x32x32xf32>
    %159 = math.exp %158 : vector<8x32x32xf32>
    %cst_98 = arith.constant dense<0.000000e+00> : vector<8x32xf32>
    %160 = vector.multi_reduction <add>, %159, %cst_98 [2] : vector<8x32x32xf32> to vector<8x32xf32>
    %161 = vector.shape_cast %160 : vector<8x32xf32> to vector<8x32x1xf32>
    %162 = tpu.reciprocal %161 {approx = true} : vector<8x32x1xf32> -> vector<8x32x1xf32>
    %163 = vector.broadcast %162 : vector<8x32x1xf32> to vector<8x32x32xf32>
    %164 = arith.mulf %159, %163 : vector<8x32x32xf32>
    "tpu.trace_start"() <{level = 10 : i32, message = "bnm,bmd->bnd"}> : () -> ()
    %cst_99 = arith.constant dense<0.000000e+00> : vector<8x32x8xf32>
    %165 = tpu.matmul %164, %142, %cst_99 {dimension_numbers = #tpu.dot_dimension_numbers<[2], [1], [1], [2], [0, 0, 0, 1, 1, 2], [0], [0]>} : vector<8x32x32xf32>, vector<8x32x8xf32>, vector<8x32x8xf32> -> vector<8x32x8xf32>
    "tpu.trace_stop"() : () -> ()
    %166 = vector.shape_cast %165 : vector<8x32x8xf32> to vector<256x8xf32>
    %c24 = arith.constant 24 : index
    %c0_100 = arith.constant 0 : index
    %167 = vector.load %arg6[%c24, %c0_100] : memref<32x32xf32, #tpu.memory_space<vmem>>, vector<8x32xf32>
    %cst_101 = arith.constant dense<0.000000e+00> : vector<256x32xf32>
    %168 = tpu.matmul %166, %167, %cst_101 {dimension_numbers = #tpu.dot_dimension_numbers<[1], [0], [0], [1], [0, 0, 1, 1], [], []>} : vector<256x8xf32>, vector<8x32xf32>, vector<256x32xf32> -> vector<256x32xf32>
    %169 = vector.shape_cast %168 : vector<256x32xf32> to vector<8x32x32xf32>
    %170 = arith.addf %137, %169 : vector<8x32x32xf32>
    %c0_102 = arith.constant 0 : index
    %c0_103 = arith.constant 0 : index
    %171 = vector.load %arg7[%c0_102, %c0_103] : memref<1x32xf32, #tpu.memory_space<vmem>>, vector<1x32xf32>
    %172 = vector.shape_cast %171 : vector<1x32xf32> to vector<32xf32>
    %173 = vector.shape_cast %172 : vector<32xf32> to vector<1x1x32xf32>
    %174 = vector.broadcast %173 : vector<1x1x32xf32> to vector<8x32x32xf32>
    %175 = arith.addf %170, %174 : vector<8x32x32xf32>
    %176 = arith.addf %0, %175 : vector<8x32x32xf32>
    %cst_104 = arith.constant dense<0.000000e+00> : vector<8x32xf32>
    %177 = vector.multi_reduction <add>, %176, %cst_104 [2] : vector<8x32x32xf32> to vector<8x32xf32>
    %178 = vector.shape_cast %177 : vector<8x32xf32> to vector<8x32x1xf32>
    %cst_105 = arith.constant 3.200000e+01 : f32
    %179 = vector.broadcast %cst_105 : f32 to vector<8x32x1xf32>
    %180 = arith.divf %178, %179 : vector<8x32x1xf32>
    %181 = vector.broadcast %180 : vector<8x32x1xf32> to vector<8x32x32xf32>
    %182 = arith.subf %176, %181 : vector<8x32x32xf32>
    %183 = arith.mulf %182, %182 : vector<8x32x32xf32>
    %cst_106 = arith.constant dense<0.000000e+00> : vector<8x32xf32>
    %184 = vector.multi_reduction <add>, %183, %cst_106 [2] : vector<8x32x32xf32> to vector<8x32xf32>
    %185 = vector.shape_cast %184 : vector<8x32xf32> to vector<8x32x1xf32>
    %cst_107 = arith.constant 3.200000e+01 : f32
    %186 = vector.broadcast %cst_107 : f32 to vector<8x32x1xf32>
    %187 = arith.divf %185, %186 : vector<8x32x1xf32>
    %188 = vector.broadcast %180 : vector<8x32x1xf32> to vector<8x32x32xf32>
    %189 = arith.subf %176, %188 : vector<8x32x32xf32>
    %cst_108 = arith.constant 9.99999974E-6 : f32
    %190 = vector.broadcast %cst_108 : f32 to vector<8x32x1xf32>
    %191 = arith.addf %187, %190 : vector<8x32x1xf32>
    %192 = math.rsqrt %191 : vector<8x32x1xf32>
    %193 = vector.broadcast %192 : vector<8x32x1xf32> to vector<8x32x32xf32>
    %194 = arith.mulf %189, %193 : vector<8x32x32xf32>
    %c0_109 = arith.constant 0 : index
    %c0_110 = arith.constant 0 : index
    %195 = vector.load %arg9[%c0_109, %c0_110] : memref<1x32xf32, #tpu.memory_space<vmem>>, vector<1x32xf32>
    %196 = vector.shape_cast %195 : vector<1x32xf32> to vector<32xf32>
    %197 = vector.shape_cast %196 : vector<32xf32> to vector<1x1x32xf32>
    %198 = vector.broadcast %197 : vector<1x1x32xf32> to vector<8x32x32xf32>
    %199 = arith.mulf %194, %198 : vector<8x32x32xf32>
    %c0_111 = arith.constant 0 : index
    %c0_112 = arith.constant 0 : index
    %200 = vector.load %arg10[%c0_111, %c0_112] : memref<1x32xf32, #tpu.memory_space<vmem>>, vector<1x32xf32>
    %201 = vector.shape_cast %200 : vector<1x32xf32> to vector<32xf32>
    %202 = vector.shape_cast %201 : vector<32xf32> to vector<1x1x32xf32>
    %203 = vector.broadcast %202 : vector<1x1x32xf32> to vector<8x32x32xf32>
    %204 = arith.addf %199, %203 : vector<8x32x32xf32>
    %205 = vector.shape_cast %204 : vector<8x32x32xf32> to vector<256x32xf32>
    %c0_113 = arith.constant 0 : index
    %c0_114 = arith.constant 0 : index
    %206 = vector.load %arg11[%c0_113, %c0_114] : memref<32x128xf32, #tpu.memory_space<vmem>>, vector<32x128xf32>
    %cst_115 = arith.constant dense<0.000000e+00> : vector<256x128xf32>
    %207 = tpu.matmul %205, %206, %cst_115 {dimension_numbers = #tpu.dot_dimension_numbers<[1], [0], [0], [1], [0, 0, 1, 1], [], []>} : vector<256x32xf32>, vector<32x128xf32>, vector<256x128xf32> -> vector<256x128xf32>
    %c0_116 = arith.constant 0 : index
    %c0_117 = arith.constant 0 : index
    %208 = vector.load %arg12[%c0_116, %c0_117] : memref<1x128xf32, #tpu.memory_space<vmem>>, vector<1x128xf32>
    %209 = vector.shape_cast %208 : vector<1x128xf32> to vector<128xf32>
    %210 = vector.shape_cast %209 : vector<128xf32> to vector<1x128xf32>
    %211 = vector.broadcast %210 : vector<1x128xf32> to vector<256x128xf32>
    %212 = arith.addf %207, %211 : vector<256x128xf32>
    %cst_118 = arith.constant 5.000000e-01 : f32
    %213 = vector.broadcast %cst_118 : f32 to vector<256x128xf32>
    %214 = arith.mulf %213, %212 : vector<256x128xf32>
    %cst_119 = arith.constant 4.471500e-02 : f32
    %215 = vector.broadcast %cst_119 : f32 to vector<256x128xf32>
    %216 = arith.mulf %215, %212 : vector<256x128xf32>
    %217 = arith.mulf %216, %212 : vector<256x128xf32>
    %218 = arith.mulf %217, %212 : vector<256x128xf32>
    %219 = arith.addf %212, %218 : vector<256x128xf32>
    %cst_120 = arith.constant 0.797884583 : f32
    %220 = vector.broadcast %cst_120 : f32 to vector<256x128xf32>
    %221 = arith.mulf %220, %219 : vector<256x128xf32>
    %222 = math.tanh %221 : vector<256x128xf32>
    %cst_121 = arith.constant 1.000000e+00 : f32
    %223 = vector.broadcast %cst_121 : f32 to vector<256x128xf32>
    %224 = arith.addf %223, %222 : vector<256x128xf32>
    %225 = arith.mulf %214, %224 : vector<256x128xf32>
    %c0_122 = arith.constant 0 : index
    %c0_123 = arith.constant 0 : index
    %226 = vector.load %arg13[%c0_122, %c0_123] : memref<128x32xf32, #tpu.memory_space<vmem>>, vector<128x32xf32>
    %cst_124 = arith.constant dense<0.000000e+00> : vector<256x32xf32>
    %227 = tpu.matmul %225, %226, %cst_124 {dimension_numbers = #tpu.dot_dimension_numbers<[1], [0], [0], [1], [0, 0, 1, 1], [], []>} : vector<256x128xf32>, vector<128x32xf32>, vector<256x32xf32> -> vector<256x32xf32>
    %c0_125 = arith.constant 0 : index
    %c0_126 = arith.constant 0 : index
    %228 = vector.load %arg14[%c0_125, %c0_126] : memref<1x32xf32, #tpu.memory_space<vmem>>, vector<1x32xf32>
    %229 = vector.shape_cast %228 : vector<1x32xf32> to vector<32xf32>
    %230 = vector.shape_cast %229 : vector<32xf32> to vector<1x32xf32>
    %231 = vector.broadcast %230 : vector<1x32xf32> to vector<256x32xf32>
    %232 = arith.addf %227, %231 : vector<256x32xf32>
    %233 = vector.shape_cast %232 : vector<256x32xf32> to vector<8x32x32xf32>
    %234 = arith.addf %176, %233 : vector<8x32x32xf32>
    %c0_127 = arith.constant 0 : index
    %c0_128 = arith.constant 0 : index
    %c0_129 = arith.constant 0 : index
    %235 = vector.load %arg15[%c0_127, %c0_128, %c0_129] : memref<8x32x32xf32, #tpu.memory_space<vmem>>, vector<8x32x32xf32>
    tpu.vector_store %arg15[%c0_127, %c0_128, %c0_129], %234 {strides = array<i32>} : memref<8x32x32xf32, #tpu.memory_space<vmem>>, vector<8x32x32xf32>,
    return
  }
  func.func @transform_0(%arg0: i32) -> (i32, i32, i32) {
    %c0_i32 = arith.constant 0 : i32
    %c0_i32_0 = arith.constant 0 : i32
    %c0_i32_1 = arith.constant 0 : i32
    return %arg0, %c0_i32, %c0_i32_0 : i32, i32, i32
  }
  func.func @transform_1(%arg0: i32) -> (i32, i32) {
    %c0_i32 = arith.constant 0 : i32
    %c0_i32_0 = arith.constant 0 : i32
    %c0_i32_1 = arith.constant 0 : i32
    return %c0_i32, %c0_i32_0 : i32, i32
  }
  func.func @transform_2(%arg0: i32) -> (i32, i32) {
    %c0_i32 = arith.constant 0 : i32
    %c0_i32_0 = arith.constant 0 : i32
    %c0_i32_1 = arith.constant 0 : i32
    return %c0_i32, %c0_i32_0 : i32, i32
  }
  func.func @transform_3(%arg0: i32) -> (i32, i32) {
    %c0_i32 = arith.constant 0 : i32
    %c0_i32_0 = arith.constant 0 : i32
    %c0_i32_1 = arith.constant 0 : i32
    return %c0_i32, %c0_i32_0 : i32, i32
  }
  func.func @transform_4(%arg0: i32) -> (i32, i32) {
    %c0_i32 = arith.constant 0 : i32
    %c0_i32_0 = arith.constant 0 : i32
    %c0_i32_1 = arith.constant 0 : i32
    return %c0_i32, %c0_i32_0 : i32, i32
  }
  func.func @transform_5(%arg0: i32) -> (i32, i32) {
    %c0_i32 = arith.constant 0 : i32
    %c0_i32_0 = arith.constant 0 : i32
    %c0_i32_1 = arith.constant 0 : i32
    return %c0_i32, %c0_i32_0 : i32, i32
  }
  func.func @transform_6(%arg0: i32) -> (i32, i32) {
    %c0_i32 = arith.constant 0 : i32
    %c0_i32_0 = arith.constant 0 : i32
    %c0_i32_1 = arith.constant 0 : i32
    return %c0_i32, %c0_i32_0 : i32, i32
  }
  func.func @transform_7(%arg0: i32) -> (i32, i32, i32) {
    %c0_i32 = arith.constant 0 : i32
    %c0_i32_0 = arith.constant 0 : i32
    %c0_i32_1 = arith.constant 0 : i32
    %c0_i32_2 = arith.constant 0 : i32
    return %c0_i32, %c0_i32_0, %c0_i32_1 : i32, i32, i32
  }
  func.func @transform_8(%arg0: i32) -> (i32, i32) {
    %c0_i32 = arith.constant 0 : i32
    %c0_i32_0 = arith.constant 0 : i32
    %c0_i32_1 = arith.constant 0 : i32
    return %c0_i32, %c0_i32_0 : i32, i32
  }
  func.func @transform_9(%arg0: i32) -> (i32, i32) {
    %c0_i32 = arith.constant 0 : i32
    %c0_i32_0 = arith.constant 0 : i32
    %c0_i32_1 = arith.constant 0 : i32
    return %c0_i32, %c0_i32_0 : i32, i32
  }
  func.func @transform_10(%arg0: i32) -> (i32, i32) {
    %c0_i32 = arith.constant 0 : i32
    %c0_i32_0 = arith.constant 0 : i32
    %c0_i32_1 = arith.constant 0 : i32
    return %c0_i32, %c0_i32_0 : i32, i32
  }
  func.func @transform_11(%arg0: i32) -> (i32, i32) {
    %c0_i32 = arith.constant 0 : i32
    %c0_i32_0 = arith.constant 0 : i32
    %c0_i32_1 = arith.constant 0 : i32
    return %c0_i32, %c0_i32_0 : i32, i32
  }
  func.func @transform_12(%arg0: i32) -> (i32, i32) {
    %c0_i32 = arith.constant 0 : i32
    %c0_i32_0 = arith.constant 0 : i32
    %c0_i32_1 = arith.constant 0 : i32
    return %c0_i32, %c0_i32_0 : i32, i32
  }
  func.func @transform_13(%arg0: i32) -> (i32, i32) {
    %c0_i32 = arith.constant 0 : i32
    %c0_i32_0 = arith.constant 0 : i32
    %c0_i32_1 = arith.constant 0 : i32
    return %c0_i32, %c0_i32_0 : i32, i32
  }
  func.func @transform_14(%arg0: i32) -> (i32, i32, i32) {
    %c0_i32 = arith.constant 0 : i32
    %c0_i32_0 = arith.constant 0 : i32
    %c0_i32_1 = arith.constant 0 : i32
    return %arg0, %c0_i32, %c0_i32_0 : i32, i32, i32
  }
  func.func @transform_15(%arg0: i32) -> (i32, i32, i32, i32) {
    %c0_i32 = arith.constant 0 : i32
    %c0_i32_0 = arith.constant 0 : i32
    %c0_i32_1 = arith.constant 0 : i32
    %c0_i32_2 = arith.constant 0 : i32
    return %arg0, %c0_i32, %c0_i32_0, %c0_i32_1 : i32, i32, i32, i32
  }
  func.func @transform_16(%arg0: i32) -> (i32, i32, i32, i32) {
    %c0_i32 = arith.constant 0 : i32
    %c0_i32_0 = arith.constant 0 : i32
    %c0_i32_1 = arith.constant 0 : i32
    %c0_i32_2 = arith.constant 0 : i32
    return %arg0, %c0_i32, %c0_i32_0, %c0_i32_1 : i32, i32, i32, i32
  }
  func.func @transform_17(%arg0: i32) -> (i32, i32, i32, i32) {
    %c0_i32 = arith.constant 0 : i32
    %c0_i32_0 = arith.constant 0 : i32
    %c0_i32_1 = arith.constant 0 : i32
    %c0_i32_2 = arith.constant 0 : i32
    return %arg0, %c0_i32, %c0_i32_0, %c0_i32_1 : i32, i32, i32, i32
  }
}

</mosaic_0001>

<llo_original>
// kernel: swin_block_forward.1
$region0: #{swin_block_forward.1}
  #allocation0 [shape = 'u32[]', space=smem, size = 0x4, offset = 0x4, fixed_abs, tag = 'smem constant byte address 0x4 - core index']
  #allocation1 [shape = 'u32[72,128]{1,0:T(1,128)}', space=vmem, size = 0x9000, scoped, tag = 'internal scratch']
  %s0 = inlined_call_operand.vmem [shape: f32[16,32,32], index: 0, kind: input, shape index: {}]
  %s1 = inlined_call_operand.vmem [shape: f32[1,32], index: 1, kind: input, shape index: {}]
  %s2 = inlined_call_operand.vmem [shape: f32[1,32], index: 2, kind: input, shape index: {}]
  %s3 = inlined_call_operand.vmem [shape: f32[32,96], index: 3, kind: input, shape index: {}]
  %s4 = inlined_call_operand.vmem [shape: f32[1,96], index: 4, kind: input, shape index: {}]
  %s5 = inlined_call_operand.vmem [shape: f32[32,32], index: 5, kind: input, shape index: {}]
  %s6 = inlined_call_operand.vmem [shape: f32[1,32], index: 6, kind: input, shape index: {}]
  %s7 = inlined_call_operand.vmem [shape: f32[4,32,32], index: 7, kind: input, shape index: {}]
  %s8 = inlined_call_operand.vmem [shape: f32[1,32], index: 8, kind: input, shape index: {}]
  %s9 = inlined_call_operand.vmem [shape: f32[1,32], index: 9, kind: input, shape index: {}]
  %s10 = inlined_call_operand.vmem [shape: f32[32,128], index: 10, kind: input, shape index: {}]
  %s11 = inlined_call_operand.vmem [shape: f32[1,128], index: 11, kind: input, shape index: {}]
  %s12 = inlined_call_operand.vmem [shape: f32[128,32], index: 12, kind: input, shape index: {}]
  %s13 = inlined_call_operand.vmem [shape: f32[1,32], index: 13, kind: input, shape index: {}]
  %s14 = inlined_call_operand.vmem [shape: f32[16,32,32], index: 14, kind: output, shape index: {0}]
  %s15 = inlined_call_operand.vmem [shape: f32[16,4,32,8], index: 15, kind: output, shape index: {1}]
  %s16 = inlined_call_operand.vmem [shape: f32[16,4,32,8], index: 16, kind: output, shape index: {2}]
  %s17 = inlined_call_operand.vmem [shape: f32[16,4,32,8], index: 17, kind: output, shape index: {3}]
  %18 = xla_tuple %s14, %s15, %s16, %s17
  %s19 = sld [smem:[#allocation0]]
  $region113: #{swin_block_forward.1} parent=0
    _
  %s21 = ssub.s32 1, %s19
  %s22 = scalar_select 0, %s21, %s19
  loop: start=0, step=1, limit=4
  $region2: #{swin_block_forward.1} parent=0 // loop_pre_header
    _
  $region3: #{swin_block_forward.1} parent=0 // loop_header
    %s24 = sphi 0, %s28
    %p25 = scmp.ge.s32.totalorder %s24, 4
    %s34 = sphi 0, %s36
    %s37 = sphi 0, %s34
    %s38 = sphi 0, %s37
    %s54 = sphi 0, %s38
    %s58 = sphi 0, %s58
    %s60 = sphi 0, %s58
    %s61 = sphi 0, %s60
    %s75 = sphi 0, %s61
    %s79 = sphi 0, %s79
    %s81 = sphi 0, %s79
    %s82 = sphi 0, %s81
    %s96 = sphi 0, %s82
    %s100 = sphi 0, %s100
    %s102 = sphi 0, %s100
    %s103 = sphi 0, %s102
    %s117 = sphi 0, %s103
    %s121 = sphi 0, %s121
    %s123 = sphi 0, %s121
    %s124 = sphi 0, %s123
    %s138 = sphi 0, %s124
    %s142 = sphi 0, %s142
    %s144 = sphi 0, %s142
    %s145 = sphi 0, %s144
    %s159 = sphi 0, %s145
    %s163 = sphi 0, %s163
    %s165 = sphi 0, %s163
    %s166 = sphi 0, %s165
    %s180 = sphi 0, %s166
    %s184 = sphi 0, %s184
    %s186 = sphi 0, %s184
    %s187 = sphi 0, %s186
    %s201 = sphi 0, %s187
    %s205 = sphi 0, %s205
    %s207 = sphi 0, %s205
    %s208 = sphi 0, %s207
    %s222 = sphi 0, %s208
    %s226 = sphi 0, %s226
    %s228 = sphi 0, %s226
    %s229 = sphi 0, %s228
    %s243 = sphi 0, %s229
    %s247 = sphi 0, %s247
    %s249 = sphi 0, %s247
    %s250 = sphi 0, %s249
    %s264 = sphi 0, %s250
    %s268 = sphi 0, %s268
    %s270 = sphi 0, %s268
    %s271 = sphi 0, %s270
    %s285 = sphi 0, %s271
    %s289 = sphi 0, %s289
    %s291 = sphi 0, %s289
    %s292 = sphi 0, %s291
    %s306 = sphi 0, %s292
    %s310 = sphi 0, %s310
    %s312 = sphi 0, %s310
    %s313 = sphi 0, %s312
    %s327 = sphi 0, %s313
    %s333 = sphi 0, %s335
    %s336 = sphi 0, %s333
    %s337 = sphi 0, %s336
    %s353 = sphi 0, %s337
    %s359 = sphi 0, %s361
    %s362 = sphi 0, %s359
    %s363 = sphi 0, %s362
    %s379 = sphi 0, %s363
    %s385 = sphi 0, %s387
    %s388 = sphi 0, %s385
    %s389 = sphi 0, %s388
    %s405 = sphi 0, %s389
    %s411 = sphi 0, %s413
    %s414 = sphi 0, %s411
    %s415 = sphi 0, %s414
    %s431 = sphi 0, %s415
  $region4: #{swin_block_forward.1} parent=0 // loop_header_branch
    %27 = sbr.rel (%p25) target = $region8
  $region5: #{swin_block_forward.1} parent=0 // loop_body
    %s29 = ssub.s32 %s24, 1
    %s30 = ssub.s32 %s24, 2
    %s31 = sadd.s32 %s24, 1
    %s32 = ssub.s32 %s24, %s31
    %p33 = scmp.eq.s32.totalorder %s32, 0
    %s35 = sadd.s32 %s34, 1
    %s36 = scalar_select %p33, %s34, %s35
    %p39 = pneg %p33
    %p40 = scmp.eq.s32.totalorder %s24, 1
    %p41 = por %p39, %p40
    %p42 = scmp.ne.s32.totalorder %s34, %s37
    %p43 = scmp.eq.s32.totalorder %s24, 0
    %p44 = por %p42, %p43
    %p45 = scmp.ne.s32.totalorder %s34, %s37
    %p46 = scmp.eq.s32.totalorder %s29, 1
    %p47 = por %p45, %p46
    %p48 = scmp.ne.s32.totalorder %s37, %s38
    %p49 = scmp.eq.s32.totalorder %s29, 0
    %p50 = por %p48, %p49
    %p51 = scmp.ne.s32.totalorder %s37, %s38
    %p52 = scmp.eq.s32.totalorder %s30, 1
    %p53 = por %p51, %p52
    %p55 = scmp.ne.s32.totalorder %s38, %s54
    %p56 = scmp.eq.s32.totalorder %s30, 0
    %p57 = por %p55, %p56
    %s59 = sadd.s32 %s58, 1
    %p62 = scmp.eq.s32.totalorder %s24, 1
    %p63 = scmp.ne.s32.totalorder %s58, %s60
    %p64 = scmp.eq.s32.totalorder %s24, 0
    %p65 = por %p63, %p64
    %p66 = scmp.ne.s32.totalorder %s58, %s60
    %p67 = scmp.eq.s32.totalorder %s29, 1
    %p68 = por %p66, %p67
    %p69 = scmp.ne.s32.totalorder %s60, %s61
    %p70 = scmp.eq.s32.totalorder %s29, 0
    %p71 = por %p69, %p70
    %p72 = scmp.ne.s32.totalorder %s60, %s61
    %p73 = scmp.eq.s32.totalorder %s30, 1
    %p74 = por %p72, %p73
    %p76 = scmp.ne.s32.totalorder %s61, %s75
    %p77 = scmp.eq.s32.totalorder %s30, 0
    %p78 = por %p76, %p77
    %s80 = sadd.s32 %s79, 1
    %p83 = scmp.eq.s32.totalorder %s24, 1
    %p84 = scmp.ne.s32.totalorder %s79, %s81
    %p85 = scmp.eq.s32.totalorder %s24, 0
    %p86 = por %p84, %p85
    %p87 = scmp.ne.s32.totalorder %s79, %s81
    %p88 = scmp.eq.s32.totalorder %s29, 1
    %p89 = por %p87, %p88
    %p90 = scmp.ne.s32.totalorder %s81, %s82
    %p91 = scmp.eq.s32.totalorder %s29, 0
    %p92 = por %p90, %p91
    %p93 = scmp.ne.s32.totalorder %s81, %s82
    %p94 = scmp.eq.s32.totalorder %s30, 1
    %p95 = por %p93, %p94
    %p97 = scmp.ne.s32.totalorder %s82, %s96
    %p98 = scmp.eq.s32.totalorder %s30, 0
    %p99 = por %p97, %p98
    %s101 = sadd.s32 %s100, 1
    %p104 = scmp.eq.s32.totalorder %s24, 1
    %p105 = scmp.ne.s32.totalorder %s100, %s102
    %p106 = scmp.eq.s32.totalorder %s24, 0
    %p107 = por %p105, %p106
    %p108 = scmp.ne.s32.totalorder %s100, %s102
    %p109 = scmp.eq.s32.totalorder %s29, 1
    %p110 = por %p108, %p109
    %p111 = scmp.ne.s32.totalorder %s102, %s103
    %p112 = scmp.eq.s32.totalorder %s29, 0
    %p113 = por %p111, %p112
    %p114 = scmp.ne.s32.totalorder %s102, %s103
    %p115 = scmp.eq.s32.totalorder %s30, 1
    %p116 = por %p114, %p115
    %p118 = scmp.ne.s32.totalorder %s103, %s117
    %p119 = scmp.eq.s32.totalorder %s30, 0
    %p120 = por %p118, %p119
    %s122 = sadd.s32 %s121, 1
    %p125 = scmp.eq.s32.totalorder %s24, 1
    %p126 = scmp.ne.s32.totalorder %s121, %s123
    %p127 = scmp.eq.s32.totalorder %s24, 0
    %p128 = por %p126, %p127
    %p129 = scmp.ne.s32.totalorder %s121, %s123
    %p130 = scmp.eq.s32.totalorder %s29, 1
    %p131 = por %p129, %p130
    %p132 = scmp.ne.s32.totalorder %s123, %s124
    %p133 = scmp.eq.s32.totalorder %s29, 0
    %p134 = por %p132, %p133
    %p135 = scmp.ne.s32.totalorder %s123, %s124
    %p136 = scmp.eq.s32.totalorder %s30, 1
    %p137 = por %p135, %p136
    %p139 = scmp.ne.s32.totalorder %s124, %s138
    %p140 = scmp.eq.s32.totalorder %s30, 0
    %p141 = por %p139, %p140
    %s143 = sadd.s32 %s142, 1
    %p146 = scmp.eq.s32.totalorder %s24, 1
    %p147 = scmp.ne.s32.totalorder %s142, %s144
    %p148 = scmp.eq.s32.totalorder %s24, 0
    %p149 = por %p147, %p148
    %p150 = scmp.ne.s32.totalorder %s142, %s144
    %p151 = scmp.eq.s32.totalorder %s29, 1
    %p152 = por %p150, %p151
    %p153 = scmp.ne.s32.totalorder %s144, %s145
    %p154 = scmp.eq.s32.totalorder %s29, 0
    %p155 = por %p153, %p154
    %p156 = scmp.ne.s32.totalorder %s144, %s145
    %p157 = scmp.eq.s32.totalorder %s30, 1
    %p158 = por %p156, %p157
    %p160 = scmp.ne.s32.totalorder %s145, %s159
    %p161 = scmp.eq.s32.totalorder %s30, 0
    %p162 = por %p160, %p161
    %s164 = sadd.s32 %s163, 1
    %p167 = scmp.eq.s32.totalorder %s24, 1
    %p168 = scmp.ne.s32.totalorder %s163, %s165
    %p169 = scmp.eq.s32.totalorder %s24, 0
    %p170 = por %p168, %p169
    %p171 = scmp.ne.s32.totalorder %s163, %s165
    %p172 = scmp.eq.s32.totalorder %s29, 1
    %p173 = por %p171, %p172
    %p174 = scmp.ne.s32.totalorder %s165, %s166
    %p175 = scmp.eq.s32.totalorder %s29, 0
    %p176 = por %p174, %p175
    %p177 = scmp.ne.s32.totalorder %s165, %s166
    %p178 = scmp.eq.s32.totalorder %s30, 1
    %p179 = por %p177, %p178
    %p181 = scmp.ne.s32.totalorder %s166, %s180
    %p182 = scmp.eq.s32.totalorder %s30, 0
    %p183 = por %p181, %p182
    %s185 = sadd.s32 %s184, 1
    %p188 = scmp.eq.s32.totalorder %s24, 1
    %p189 = scmp.ne.s32.totalorder %s184, %s186
    %p190 = scmp.eq.s32.totalorder %s24, 0
    %p191 = por %p189, %p190
    %p192 = scmp.ne.s32.totalorder %s184, %s186
    %p193 = scmp.eq.s32.totalorder %s29, 1
    %p194 = por %p192, %p193
    %p195 = scmp.ne.s32.totalorder %s186, %s187
    %p196 = scmp.eq.s32.totalorder %s29, 0
    %p197 = por %p195, %p196
    %p198 = scmp.ne.s32.totalorder %s186, %s187
    %p199 = scmp.eq.s32.totalorder %s30, 1
    %p200 = por %p198, %p199
    %p202 = scmp.ne.s32.totalorder %s187, %s201
    %p203 = scmp.eq.s32.totalorder %s30, 0
    %p204 = por %p202, %p203
    %s206 = sadd.s32 %s205, 1
    %p209 = scmp.eq.s32.totalorder %s24, 1
    %p210 = scmp.ne.s32.totalorder %s205, %s207
    %p211 = scmp.eq.s32.totalorder %s24, 0
    %p212 = por %p210, %p211
    %p213 = scmp.ne.s32.totalorder %s205, %s207
    %p214 = scmp.eq.s32.totalorder %s29, 1
    %p215 = por %p213, %p214
    %p216 = scmp.ne.s32.totalorder %s207, %s208
    %p217 = scmp.eq.s32.totalorder %s29, 0
    %p218 = por %p216, %p217
    %p219 = scmp.ne.s32.totalorder %s207, %s208
    %p220 = scmp.eq.s32.totalorder %s30, 1
    %p221 = por %p219, %p220
    %p223 = scmp.ne.s32.totalorder %s208, %s222
    %p224 = scmp.eq.s32.totalorder %s30, 0
    %p225 = por %p223, %p224
    %s227 = sadd.s32 %s226, 1
    %p230 = scmp.eq.s32.totalorder %s24, 1
    %p231 = scmp.ne.s32.totalorder %s226, %s228
    %p232 = scmp.eq.s32.totalorder %s24, 0
    %p233 = por %p231, %p232
    %p234 = scmp.ne.s32.totalorder %s226, %s228
    %p235 = scmp.eq.s32.totalorder %s29, 1
    %p236 = por %p234, %p235
    %p237 = scmp.ne.s32.totalorder %s228, %s229
    %p238 = scmp.eq.s32.totalorder %s29, 0
    %p239 = por %p237, %p238
    %p240 = scmp.ne.s32.totalorder %s228, %s229
    %p241 = scmp.eq.s32.totalorder %s30, 1
    %p242 = por %p240, %p241
    %p244 = scmp.ne.s32.totalorder %s229, %s243
    %p245 = scmp.eq.s32.totalorder %s30, 0
    %p246 = por %p244, %p245
    %s248 = sadd.s32 %s247, 1
    %p251 = scmp.eq.s32.totalorder %s24, 1
    %p252 = scmp.ne.s32.totalorder %s247, %s249
    %p253 = scmp.eq.s32.totalorder %s24, 0
    %p254 = por %p252, %p253
    %p255 = scmp.ne.s32.totalorder %s247, %s249
    %p256 = scmp.eq.s32.totalorder %s29, 1
    %p257 = por %p255, %p256
    %p258 = scmp.ne.s32.totalorder %s249, %s250
    %p259 = scmp.eq.s32.totalorder %s29, 0
    %p260 = por %p258, %p259
    %p261 = scmp.ne.s32.totalorder %s249, %s250
    %p262 = scmp.eq.s32.totalorder %s30, 1
    %p263 = por %p261, %p262
    %p265 = scmp.ne.s32.totalorder %s250, %s264
    %p266 = scmp.eq.s32.totalorder %s30, 0
    %p267 = por %p265, %p266
    %s269 = sadd.s32 %s268, 1
    %p272 = scmp.eq.s32.totalorder %s24, 1
    %p273 = scmp.ne.s32.totalorder %s268, %s270
    %p274 = scmp.eq.s32.totalorder %s24, 0
    %p275 = por %p273, %p274
    %p276 = scmp.ne.s32.totalorder %s268, %s270
    %p277 = scmp.eq.s32.totalorder %s29, 1
    %p278 = por %p276, %p277
    %p279 = scmp.ne.s32.totalorder %s270, %s271
    %p280 = scmp.eq.s32.totalorder %s29, 0
    %p281 = por %p279, %p280
    %p282 = scmp.ne.s32.totalorder %s270, %s271
    %p283 = scmp.eq.s32.totalorder %s30, 1
    %p284 = por %p282, %p283
    %p286 = scmp.ne.s32.totalorder %s271, %s285
    %p287 = scmp.eq.s32.totalorder %s30, 0
    %p288 = por %p286, %p287
    %s290 = sadd.s32 %s289, 1
    %p293 = scmp.eq.s32.totalorder %s24, 1
    %p294 = scmp.ne.s32.totalorder %s289, %s291
    %p295 = scmp.eq.s32.totalorder %s24, 0
    %p296 = por %p294, %p295
    %p297 = scmp.ne.s32.totalorder %s289, %s291
    %p298 = scmp.eq.s32.totalorder %s29, 1
    %p299 = por %p297, %p298
    %p300 = scmp.ne.s32.totalorder %s291, %s292
    %p301 = scmp.eq.s32.totalorder %s29, 0
    %p302 = por %p300, %p301
    %p303 = scmp.ne.s32.totalorder %s291, %s292
    %p304 = scmp.eq.s32.totalorder %s30, 1
    %p305 = por %p303, %p304
    %p307 = scmp.ne.s32.totalorder %s292, %s306
    %p308 = scmp.eq.s32.totalorder %s30, 0
    %p309 = por %p307, %p308
    %s311 = sadd.s32 %s310, 1
    %p314 = scmp.eq.s32.totalorder %s24, 1
    %p315 = scmp.ne.s32.totalorder %s310, %s312
    %p316 = scmp.eq.s32.totalorder %s24, 0
    %p317 = por %p315, %p316
    %p318 = scmp.ne.s32.totalorder %s310, %s312
    %p319 = scmp.eq.s32.totalorder %s29, 1
    %p320 = por %p318, %p319
    %p321 = scmp.ne.s32.totalorder %s312, %s313
    %p322 = scmp.eq.s32.totalorder %s29, 0
    %p323 = por %p321, %p322
    %p324 = scmp.ne.s32.totalorder %s312, %s313
    %p325 = scmp.eq.s32.totalorder %s30, 1
    %p326 = por %p324, %p325
    %p328 = scmp.ne.s32.totalorder %s313, %s327
    %p329 = scmp.eq.s32.totalorder %s30, 0
    %p330 = por %p328, %p329
    %s331 = ssub.s32 %s24, %s31
    %p332 = scmp.eq.s32.totalorder %s331, 0
    %s334 = sadd.s32 %s333, 1
    %s335 = scalar_select %p332, %s333, %s334
    %p338 = pneg %p332
    %p339 = scmp.eq.s32.totalorder %s24, 1
    %p340 = por %p338, %p339
    %p341 = scmp.ne.s32.totalorder %s333, %s336
    %p342 = scmp.eq.s32.totalorder %s24, 0
    %p343 = por %p341, %p342
    %p344 = scmp.ne.s32.totalorder %s333, %s336
    %p345 = scmp.eq.s32.totalorder %s29, 1
    %p346 = por %p344, %p345
    %p347 = scmp.ne.s32.totalorder %s336, %s337
    %p348 = scmp.eq.s32.totalorder %s29, 0
    %p349 = por %p347, %p348
    %p350 = scmp.ne.s32.totalorder %s336, %s337
    %p351 = scmp.eq.s32.totalorder %s30, 1
    %p352 = por %p350, %p351
    %p354 = scmp.ne.s32.totalorder %s337, %s353
    %p355 = scmp.eq.s32.totalorder %s30, 0
    %p356 = por %p354, %p355
    %s357 = ssub.s32 %s24, %s31
    %p358 = scmp.eq.s32.totalorder %s357, 0
    %s360 = sadd.s32 %s359, 1
    %s361 = scalar_select %p358, %s359, %s360
    %p364 = pneg %p358
    %p365 = scmp.eq.s32.totalorder %s24, 1
    %p366 = por %p364, %p365
    %p367 = scmp.ne.s32.totalorder %s359, %s362
    %p368 = scmp.eq.s32.totalorder %s24, 0
    %p369 = por %p367, %p368
    %p370 = scmp.ne.s32.totalorder %s359, %s362
    %p371 = scmp.eq.s32.totalorder %s29, 1
    %p372 = por %p370, %p371
    %p373 = scmp.ne.s32.totalorder %s362, %s363
    %p374 = scmp.eq.s32.totalorder %s29, 0
    %p375 = por %p373, %p374
    %p376 = scmp.ne.s32.totalorder %s362, %s363
    %p377 = scmp.eq.s32.totalorder %s30, 1
    %p378 = por %p376, %p377
    %p380 = scmp.ne.s32.totalorder %s363, %s379
    %p381 = scmp.eq.s32.totalorder %s30, 0
    %p382 = por %p380, %p381
    %s383 = ssub.s32 %s24, %s31
    %p384 = scmp.eq.s32.totalorder %s383, 0
    %s386 = sadd.s32 %s385, 1
    %s387 = scalar_select %p384, %s385, %s386
    %p390 = pneg %p384
    %p391 = scmp.eq.s32.totalorder %s24, 1
    %p392 = por %p390, %p391
    %p393 = scmp.ne.s32.totalorder %s385, %s388
    %p394 = scmp.eq.s32.totalorder %s24, 0
    %p395 = por %p393, %p394
    %p396 = scmp.ne.s32.totalorder %s385, %s388
    %p397 = scmp.eq.s32.totalorder %s29, 1
    %p398 = por %p396, %p397
    %p399 = scmp.ne.s32.totalorder %s388, %s389
    %p400 = scmp.eq.s32.totalorder %s29, 0
    %p401 = por %p399, %p400
    %p402 = scmp.ne.s32.totalorder %s388, %s389
    %p403 = scmp.eq.s32.totalorder %s30, 1
    %p404 = por %p402, %p403
    %p406 = scmp.ne.s32.totalorder %s389, %s405
    %p407 = scmp.eq.s32.totalorder %s30, 0
    %p408 = por %p406, %p407
    %s409 = ssub.s32 %s24, %s31
    %p410 = scmp.eq.s32.totalorder %s409, 0
    %s412 = sadd.s32 %s411, 1
    %s413 = scalar_select %p410, %s411, %s412
    %p416 = pneg %p410
    %p417 = scmp.eq.s32.totalorder %s24, 1
    %p418 = por %p416, %p417
    %p419 = scmp.ne.s32.totalorder %s411, %s414
    %p420 = scmp.eq.s32.totalorder %s24, 0
    %p421 = por %p419, %p420
    %p422 = scmp.ne.s32.totalorder %s411, %s414
    %p423 = scmp.eq.s32.totalorder %s29, 1
    %p424 = por %p422, %p423
    %p425 = scmp.ne.s32.totalorder %s414, %s415
    %p426 = scmp.eq.s32.totalorder %s29, 0
    %p427 = por %p425, %p426
    %p428 = scmp.ne.s32.totalorder %s414, %s415
    %p429 = scmp.eq.s32.totalorder %s30, 1
    %p430 = por %p428, %p429
    %p432 = scmp.ne.s32.totalorder %s415, %s431
    %p433 = scmp.eq.s32.totalorder %s30, 0
    %p434 = por %p432, %p433
    %p435 = scmp.le.s32.totalorder 1, %s24
    %p436 = scmp.lt.s32.totalorder %s24, 3
    %p437 = pnand %p435, %p436
    %p438 = pneg %p437
    // Predicated region
    $region9: #{swin_block_forward.1} parent=5 // pred_check
      _
    $region10: #{swin_block_forward.1} parent=5 // pred_check_branch
      %440 = sbr.rel (%p437) target = $region12
    $region11: #{swin_block_forward.1} parent=5 // pred_region
      %s441 = ssub.s32 %s24, 1
      // Predicated region
      $region13: #{swin_block_forward.1} parent=11 // pred_check
        %p442 = pneg %p71
      $region14: #{swin_block_forward.1} parent=11 // pred_check_branch
        %444 = sbr.rel (%p442) target = $region16
      $region15: #{swin_block_forward.1} parent=11 // pred_region
        _
      $region16: #{swin_block_forward.1} parent=11 // pred_fallthru
        _
      // Predicated region
      $region17: #{swin_block_forward.1} parent=11 // pred_check
        %p445 = pneg %p92
      $region18: #{swin_block_forward.1} parent=11 // pred_check_branch
        %447 = sbr.rel (%p445) target = $region20
      $region19: #{swin_block_forward.1} parent=11 // pred_region
        _
      $region20: #{swin_block_forward.1} parent=11 // pred_fallthru
        _
      // Predicated region
      $region21: #{swin_block_forward.1} parent=11 // pred_check
        %p448 = pneg %p113
      $region22: #{swin_block_forward.1} parent=11 // pred_check_branch
        %450 = sbr.rel (%p448) target = $region24
      $region23: #{swin_block_forward.1} parent=11 // pred_region
        _
      $region24: #{swin_block_forward.1} parent=11 // pred_fallthru
        _
      // Predicated region
      $region25: #{swin_block_forward.1} parent=11 // pred_check
        %p451 = pneg %p134
      $region26: #{swin_block_forward.1} parent=11 // pred_check_branch
        %453 = sbr.rel (%p451) target = $region28
      $region27: #{swin_block_forward.1} parent=11 // pred_region
        _
      $region28: #{swin_block_forward.1} parent=11 // pred_fallthru
        _
      // Predicated region
      $region29: #{swin_block_forward.1} parent=11 // pred_check
        %p454 = pneg %p155
      $region30: #{swin_block_forward.1} parent=11 // pred_check_branch
        %456 = sbr.rel (%p454) target = $region32
      $region31: #{swin_block_forward.1} parent=11 // pred_region
        _
      $region32: #{swin_block_forward.1} parent=11 // pred_fallthru
        _
      // Predicated region
      $region33: #{swin_block_forward.1} parent=11 // pred_check
        %p457 = pneg %p176
      $region34: #{swin_block_forward.1} parent=11 // pred_check_branch
        %459 = sbr.rel (%p457) target = $region36
      $region35: #{swin_block_forward.1} parent=11 // pred_region
        _
      $region36: #{swin_block_forward.1} parent=11 // pred_fallthru
        _
      // Predicated region
      $region37: #{swin_block_forward.1} parent=11 // pred_check
        %p460 = pneg %p197
      $region38: #{swin_block_forward.1} parent=11 // pred_check_branch
        %462 = sbr.rel (%p460) target = $region40
      $region39: #{swin_block_forward.1} parent=11 // pred_region
        _
      $region40: #{swin_block_forward.1} parent=11 // pred_fallthru
        _
      // Predicated region
      $region41: #{swin_block_forward.1} parent=11 // pred_check
        %p463 = pneg %p218
      $region42: #{swin_block_forward.1} parent=11 // pred_check_branch
        %465 = sbr.rel (%p463) target = $region44
      $region43: #{swin_block_forward.1} parent=11 // pred_region
        _
      $region44: #{swin_block_forward.1} parent=11 // pred_fallthru
        _
      // Predicated region
      $region45: #{swin_block_forward.1} parent=11 // pred_check
        %p466 = pneg %p239
      $region46: #{swin_block_forward.1} parent=11 // pred_check_branch
        %468 = sbr.rel (%p466) target = $region48
      $region47: #{swin_block_forward.1} parent=11 // pred_region
        _
      $region48: #{swin_block_forward.1} parent=11 // pred_fallthru
        _
      // Predicated region
      $region49: #{swin_block_forward.1} parent=11 // pred_check
        %p469 = pneg %p260
      $region50: #{swin_block_forward.1} parent=11 // pred_check_branch
        %471 = sbr.rel (%p469) target = $region52
      $region51: #{swin_block_forward.1} parent=11 // pred_region
        _
      $region52: #{swin_block_forward.1} parent=11 // pred_fallthru
        _
      // Predicated region
      $region53: #{swin_block_forward.1} parent=11 // pred_check
        %p472 = pneg %p281
      $region54: #{swin_block_forward.1} parent=11 // pred_check_branch
        %474 = sbr.rel (%p472) target = $region56
      $region55: #{swin_block_forward.1} parent=11 // pred_region
        _
      $region56: #{swin_block_forward.1} parent=11 // pred_fallthru
        _
      // Predicated region
      $region57: #{swin_block_forward.1} parent=11 // pred_check
        %p475 = pneg %p302
      $region58: #{swin_block_forward.1} parent=11 // pred_check_branch
        %477 = sbr.rel (%p475) target = $region60
      $region59: #{swin_block_forward.1} parent=11 // pred_region
        _
      $region60: #{swin_block_forward.1} parent=11 // pred_fallthru
        _
      // Predicated region
      $region61: #{swin_block_forward.1} parent=11 // pred_check
        %p478 = pneg %p323
      $region62: #{swin_block_forward.1} parent=11 // pred_check_branch
        %480 = sbr.rel (%p478) target = $region64
      $region63: #{swin_block_forward.1} parent=11 // pred_region
        _
      $region64: #{swin_block_forward.1} parent=11 // pred_fallthru
        _
    $region12: #{swin_block_forward.1} parent=5 // pred_fallthru
      _
    %p481 = scmp.lt.s32.totalorder %s24, 2
    // Predicated region
    $region65: #{swin_block_forward.1} parent=5 // pred_check
      %p482 = pneg %p481
    $region66: #{swin_block_forward.1} parent=5 // pred_check_branch
      %484 = sbr.rel (%p482) target = $region68
    $region67: #{swin_block_forward.1} parent=5 // pred_region
      // Predicated region
      $region69: #{swin_block_forward.1} parent=67 // pred_check
        %p485 = pneg %p44
      $region70: #{swin_block_forward.1} parent=67 // pred_check_branch
        %487 = sbr.rel (%p485) target = $region72
      $region71: #{swin_block_forward.1} parent=67 // pred_region
        %s488 = smul.u32 8, %s24
        %p489 = scmp.lt.s32.totalorder %s488, 15
        %s490 = scalar_select %p489, %s488, 15
        %s491 = smul.addr %s490, 4
        %s492 = smul.addr %s491, 8
        %s493 = scalar_lea.vmem %s0, %s492
        %s494 = smul.u32 8, %s24
      $region72: #{swin_block_forward.1} parent=67 // pred_fallthru
        _
    $region68: #{swin_block_forward.1} parent=5 // pred_fallthru
      _
    %p495 = scmp.le.s32.totalorder 1, %s24
    %p496 = scmp.lt.s32.totalorder %s24, 3
    %p497 = pnand %p495, %p496
    %p498 = pneg %p497
    // Predicated region
    $region73: #{swin_block_forward.1} parent=5 // pred_check
      _
    $region74: #{swin_block_forward.1} parent=5 // pred_check_branch
      %500 = sbr.rel (%p497) target = $region76
    $region75: #{swin_block_forward.1} parent=5 // pred_region
      %s501 = ssub.s32 %s24, 1
      %s502 = smul.u32 8, %s29
      %p503 = scmp.lt.s32.totalorder %s502, 15
      %s504 = scalar_select %p503, %s502, 15
      %s505 = smul.addr %s504, 4
      %s506 = smul.addr %s505, 8
      %s507 = scalar_lea.vmem %s0, %s506
      %p508 = pneg %p50
      %p509 = pneg %p47
      %p510 = pneg %p71
      %p511 = pneg %p68
      %p512 = pneg %p92
      %p513 = pneg %p89
      %p514 = pneg %p113
      %p515 = pneg %p110
      %p516 = pneg %p134
      %p517 = pneg %p131
      %p518 = pneg %p155
      %p519 = pneg %p152
      %p520 = pneg %p176
      %p521 = pneg %p173
      %p522 = pneg %p197
      %p523 = pneg %p194
      %p524 = pneg %p218
      %p525 = pneg %p215
      %p526 = pneg %p239
      %p527 = pneg %p236
      %p528 = pneg %p260
      %p529 = pneg %p257
      %p530 = pneg %p281
      %p531 = pneg %p278
      %p532 = pneg %p302
      %p533 = pneg %p299
      %p534 = pneg %p323
      %p535 = pneg %p320
      %p536 = pneg %p349
      %p537 = pneg %p346
      %s538 = smul.u32 8, %s29
      %p539 = scmp.lt.s32.totalorder %s538, 15
      %s540 = scalar_select %p539, %s538, 15
      %s541 = smul.addr %s540, 4
      %s542 = smul.addr %s541, 8
      %s543 = scalar_lea.vmem %s14, %s542
      %p544 = pneg %p375
      %p545 = pneg %p372
      %s546 = smul.u32 8, %s29
      %p547 = scmp.lt.s32.totalorder %s546, 15
      %s548 = scalar_select %p547, %s546, 15
      %s549 = smul.addr %s548, 16
      %s550 = smul.addr %s549, 8
      %s551 = scalar_lea.vmem %s15, %s550
      %p552 = pneg %p401
      %p553 = pneg %p398
      %s554 = smul.u32 8, %s29
      %p555 = scmp.lt.s32.totalorder %s554, 15
      %s556 = scalar_select %p555, %s554, 15
      %s557 = smul.addr %s556, 16
      %s558 = smul.addr %s557, 8
      %s559 = scalar_lea.vmem %s16, %s558
      %p560 = pneg %p427
      %p561 = pneg %p424
      %s562 = smul.u32 8, %s29
      %p563 = scmp.lt.s32.totalorder %s562, 15
      %s564 = scalar_select %p563, %s562, 15
      %s565 = smul.addr %s564, 16
      %s566 = smul.addr %s565, 8
      %s567 = scalar_lea.vmem %s17, %s566
      %s568 = smul.u32 8, %s29
      %p569 = scmp.lt.s32.totalorder %s568, 15
      %s570 = scalar_select %p569, %s568, 15
      %s571 = smul.addr %s570, 4
      %s572 = smul.addr %s571, 8
      %s573 = scalar_lea.vmem %s0, %s572
      %s574 = smul.u32 8, %s29
      %s575 = smul.u32 8, %s29
      %p576 = scmp.lt.s32.totalorder %s575, 15
      %s577 = scalar_select %p576, %s575, 15
      %s578 = smul.addr %s577, 4
      %s579 = smul.addr %s578, 8
      %s580 = scalar_lea.vmem %s14, %s579
      %s581 = smul.u32 8, %s29
      %s582 = smul.u32 8, %s29
      %p583 = scmp.lt.s32.totalorder %s582, 15
      %s584 = scalar_select %p583, %s582, 15
      %s585 = smul.addr %s584, 16
      %s586 = smul.addr %s585, 8
      %s587 = scalar_lea.vmem %s15, %s586
      %s588 = smul.u32 8, %s29
      %s589 = smul.u32 8, %s29
      %p590 = scmp.lt.s32.totalorder %s589, 15
      %s591 = scalar_select %p590, %s589, 15
      %s592 = smul.addr %s591, 16
      %s593 = smul.addr %s592, 8
      %s594 = scalar_lea.vmem %s16, %s593
      %s595 = smul.u32 8, %s29
      %s596 = smul.u32 8, %s29
      %p597 = scmp.lt.s32.totalorder %s596, 15
      %s598 = scalar_select %p597, %s596, 15
      %s599 = smul.addr %s598, 16
      %s600 = smul.addr %s599, 8
      %s601 = scalar_lea.vmem %s17, %s600
      %s602 = smul.u32 8, %s29
      %v603 = vld [vmem:[%s573] sm:$0xff]
      %v604 = vld [vmem:[%s573 + $0x8] sm:$0xff]
      %v605 = vld [vmem:[%s573 + $0x10] sm:$0xff]
      %v606 = vld [vmem:[%s573 + $0x18] sm:$0xff]
      %v607 = vld [vmem:[%s573 + $0x20] sm:$0xff]
      %v608 = vld [vmem:[%s573 + $0x28] sm:$0xff]
      %v609 = vld [vmem:[%s573 + $0x30] sm:$0xff]
      %v610 = vld [vmem:[%s573 + $0x38] sm:$0xff]
      %v611 = vld [vmem:[%s573 + $0x40] sm:$0xff]
      %v612 = vld [vmem:[%s573 + $0x48] sm:$0xff]
      %v613 = vld [vmem:[%s573 + $0x50] sm:$0xff]
      %v614 = vld [vmem:[%s573 + $0x58] sm:$0xff]
      %v615 = vld [vmem:[%s573 + $0x60] sm:$0xff]
      %v616 = vld [vmem:[%s573 + $0x68] sm:$0xff]
      %v617 = vld [vmem:[%s573 + $0x70] sm:$0xff]
      %v618 = vld [vmem:[%s573 + $0x78] sm:$0xff]
      %v619 = vld [vmem:[%s573 + $0x80] sm:$0xff]
      %v620 = vld [vmem:[%s573 + $0x88] sm:$0xff]
      %v621 = vld [vmem:[%s573 + $0x90] sm:$0xff]
      %v622 = vld [vmem:[%s573 + $0x98] sm:$0xff]
      %v623 = vld [vmem:[%s573 + $0xa0] sm:$0xff]
      %v624 = vld [vmem:[%s573 + $0xa8] sm:$0xff]
      %v625 = vld [vmem:[%s573 + $0xb0] sm:$0xff]
      %v626 = vld [vmem:[%s573 + $0xb8] sm:$0xff]
      %v627 = vld [vmem:[%s573 + $0xc0] sm:$0xff]
      %v628 = vld [vmem:[%s573 + $0xc8] sm:$0xff]
      %v629 = vld [vmem:[%s573 + $0xd0] sm:$0xff]
      %v630 = vld [vmem:[%s573 + $0xd8] sm:$0xff]
      %v631 = vld [vmem:[%s573 + $0xe0] sm:$0xff]
      %v632 = vld [vmem:[%s573 + $0xe8] sm:$0xff]
      %v633 = vld [vmem:[%s573 + $0xf0] sm:$0xff]
      %v634 = vld [vmem:[%s573 + $0xf8] sm:$0xff]
      %vm635 = vcmask 261120
      %v636 = vsel %vm635, %v603, 0.0
      %637 = vadd.xlane.f32.xlu0 %v636
      %v638 = vpop.xlane.xlu0 %637
      %v639 = vsel %vm635, %v604, 0.0
      %640 = vadd.xlane.f32.xlu0 %v639
      %v641 = vpop.xlane.xlu0 %640
      %v642 = vsel %vm635, %v605, 0.0
      %643 = vadd.xlane.f32.xlu0 %v642
      %v644 = vpop.xlane.xlu0 %643
      %v645 = vsel %vm635, %v606, 0.0
      %646 = vadd.xlane.f32.xlu0 %v645
      %v647 = vpop.xlane.xlu0 %646
      %v648 = vsel %vm635, %v607, 0.0
      %649 = vadd.xlane.f32.xlu0 %v648
      %v650 = vpop.xlane.xlu0 %649
      %v651 = vsel %vm635, %v608, 0.0
      %652 = vadd.xlane.f32.xlu0 %v651
      %v653 = vpop.xlane.xlu0 %652
      %v654 = vsel %vm635, %v609, 0.0
      %655 = vadd.xlane.f32.xlu0 %v654
      %v656 = vpop.xlane.xlu0 %655
      %v657 = vsel %vm635, %v610, 0.0
      %658 = vadd.xlane.f32.xlu0 %v657
      %v659 = vpop.xlane.xlu0 %658
      %v660 = vsel %vm635, %v611, 0.0
      %661 = vadd.xlane.f32.xlu0 %v660
      %v662 = vpop.xlane.xlu0 %661
      %v663 = vsel %vm635, %v612, 0.0
      %664 = vadd.xlane.f32.xlu0 %v663
      %v665 = vpop.xlane.xlu0 %664
      %v666 = vsel %vm635, %v613, 0.0
      %667 = vadd.xlane.f32.xlu0 %v666
      %v668 = vpop.xlane.xlu0 %667
      %v669 = vsel %vm635, %v614, 0.0
      %670 = vadd.xlane.f32.xlu0 %v669
      %v671 = vpop.xlane.xlu0 %670
      %v672 = vsel %vm635, %v615, 0.0
      %673 = vadd.xlane.f32.xlu0 %v672
      %v674 = vpop.xlane.xlu0 %673
      %v675 = vsel %vm635, %v616, 0.0
      %676 = vadd.xlane.f32.xlu0 %v675
      %v677 = vpop.xlane.xlu0 %676
      %v678 = vsel %vm635, %v617, 0.0
      %679 = vadd.xlane.f32.xlu0 %v678
      %v680 = vpop.xlane.xlu0 %679
      %v681 = vsel %vm635, %v618, 0.0
      %682 = vadd.xlane.f32.xlu0 %v681
      %v683 = vpop.xlane.xlu0 %682
      %v684 = vsel %vm635, %v619, 0.0
      %685 = vadd.xlane.f32.xlu0 %v684
      %v686 = vpop.xlane.xlu0 %685
      %v687 = vsel %vm635, %v620, 0.0
      %688 = vadd.xlane.f32.xlu0 %v687
      %v689 = vpop.xlane.xlu0 %688
      %v690 = vsel %vm635, %v621, 0.0
      %691 = vadd.xlane.f32.xlu0 %v690
      %v692 = vpop.xlane.xlu0 %691
      %v693 = vsel %vm635, %v622, 0.0
      %694 = vadd.xlane.f32.xlu0 %v693
      %v695 = vpop.xlane.xlu0 %694
      %v696 = vsel %vm635, %v623, 0.0
      %697 = vadd.xlane.f32.xlu0 %v696
      %v698 = vpop.xlane.xlu0 %697
      %v699 = vsel %vm635, %v624, 0.0
      %700 = vadd.xlane.f32.xlu0 %v699
      %v701 = vpop.xlane.xlu0 %700
      %v702 = vsel %vm635, %v625, 0.0
      %703 = vadd.xlane.f32.xlu0 %v702
      %v704 = vpop.xlane.xlu0 %703
      %v705 = vsel %vm635, %v626, 0.0
      %706 = vadd.xlane.f32.xlu0 %v705
      %v707 = vpop.xlane.xlu0 %706
      %v708 = vsel %vm635, %v627, 0.0
      %709 = vadd.xlane.f32.xlu0 %v708
      %v710 = vpop.xlane.xlu0 %709
      %v711 = vsel %vm635, %v628, 0.0
      %712 = vadd.xlane.f32.xlu0 %v711
      %v713 = vpop.xlane.xlu0 %712
      %v714 = vsel %vm635, %v629, 0.0
      %715 = vadd.xlane.f32.xlu0 %v714
      %v716 = vpop.xlane.xlu0 %715
      %v717 = vsel %vm635, %v630, 0.0
      %718 = vadd.xlane.f32.xlu0 %v717
      %v719 = vpop.xlane.xlu0 %718
      %v720 = vsel %vm635, %v631, 0.0
      %721 = vadd.xlane.f32.xlu0 %v720
      %v722 = vpop.xlane.xlu0 %721
      %v723 = vsel %vm635, %v632, 0.0
      %724 = vadd.xlane.f32.xlu0 %v723
      %v725 = vpop.xlane.xlu0 %724
      %v726 = vsel %vm635, %v633, 0.0
      %727 = vadd.xlane.f32.xlu0 %v726
      %v728 = vpop.xlane.xlu0 %727
      %v729 = vsel %vm635, %v634, 0.0
      %730 = vadd.xlane.f32.xlu0 %v729
      %v731 = vpop.xlane.xlu0 %730
      %v732 = vrcp.pop 32.0
      %v733 = vmul.f32 32.0, %v732
      %v734 = vsub.f32 1.0, %v733
      %v735 = vmul.f32 %v732, %v734
      %v736 = vadd.f32 %v732, %v735
      %vm737 = vweird.f32 %v732
      %v738 = vsel %vm737, %v732, %v736
      %v739 = vmul.f32 %v638, %v738
      %v740 = vmul.f32 %v641, %v738
      %v741 = vmul.f32 %v644, %v738
      %v742 = vmul.f32 %v647, %v738
      %v743 = vmul.f32 %v650, %v738
      %v744 = vmul.f32 %v653, %v738
      %v745 = vmul.f32 %v656, %v738
      %v746 = vmul.f32 %v659, %v738
      %v747 = vmul.f32 %v662, %v738
      %v748 = vmul.f32 %v665, %v738
      %v749 = vmul.f32 %v668, %v738
      %v750 = vmul.f32 %v671, %v738
      %v751 = vmul.f32 %v674, %v738
      %v752 = vmul.f32 %v677, %v738
      %v753 = vmul.f32 %v680, %v738
      %v754 = vmul.f32 %v683, %v738
      %v755 = vmul.f32 %v686, %v738
      %v756 = vmul.f32 %v689, %v738
      %v757 = vmul.f32 %v692, %v738
      %v758 = vmul.f32 %v695, %v738
      %v759 = vmul.f32 %v698, %v738
      %v760 = vmul.f32 %v701, %v738
      %v761 = vmul.f32 %v704, %v738
      %v762 = vmul.f32 %v707, %v738
      %v763 = vmul.f32 %v710, %v738
      %v764 = vmul.f32 %v713, %v738
      %v765 = vmul.f32 %v716, %v738
      %v766 = vmul.f32 %v719, %v738
      %v767 = vmul.f32 %v722, %v738
      %v768 = vmul.f32 %v725, %v738
      %v769 = vmul.f32 %v728, %v738
      %v770 = vmul.f32 %v731, %v738
      %v771 = vsub.f32 %v603, %v739
      %v772 = vsub.f32 %v604, %v740
      %v773 = vsub.f32 %v605, %v741
      %v774 = vsub.f32 %v606, %v742
      %v775 = vsub.f32 %v607, %v743
      %v776 = vsub.f32 %v608, %v744
      %v777 = vsub.f32 %v609, %v745
      %v778 = vsub.f32 %v610, %v746
      %v779 = vsub.f32 %v611, %v747
      %v780 = vsub.f32 %v612, %v748
      %v781 = vsub.f32 %v613, %v749
      %v782 = vsub.f32 %v614, %v750
      %v783 = vsub.f32 %v615, %v751
      %v784 = vsub.f32 %v616, %v752
      %v785 = vsub.f32 %v617, %v753
      %v786 = vsub.f32 %v618, %v754
      %v787 = vsub.f32 %v619, %v755
      %v788 = vsub.f32 %v620, %v756
      %v789 = vsub.f32 %v621, %v757
      %v790 = vsub.f32 %v622, %v758
      %v791 = vsub.f32 %v623, %v759
      %v792 = vsub.f32 %v624, %v760
      %v793 = vsub.f32 %v625, %v761
      %v794 = vsub.f32 %v626, %v762
      %v795 = vsub.f32 %v627, %v763
      %v796 = vsub.f32 %v628, %v764
      %v797 = vsub.f32 %v629, %v765
      %v798 = vsub.f32 %v630, %v766
      %v799 = vsub.f32 %v631, %v767
      %v800 = vsub.f32 %v632, %v768
      %v801 = vsub.f32 %v633, %v769
      %v802 = vsub.f32 %v634, %v770
      %v803 = vmul.f32 %v771, %v771
      %v804 = vmul.f32 %v772, %v772
      %v805 = vmul.f32 %v773, %v773
      %v806 = vmul.f32 %v774, %v774
      %v807 = vmul.f32 %v775, %v775
      %v808 = vmul.f32 %v776, %v776
      %v809 = vmul.f32 %v777, %v777
      %v810 = vmul.f32 %v778, %v778
      %v811 = vmul.f32 %v779, %v779
      %v812 = vmul.f32 %v780, %v780
      %v813 = vmul.f32 %v781, %v781
      %v814 = vmul.f32 %v782, %v782
      %v815 = vmul.f32 %v783, %v783
      %v816 = vmul.f32 %v784, %v784
      %v817 = vmul.f32 %v785, %v785
      %v818 = vmul.f32 %v786, %v786
      %v819 = vmul.f32 %v787, %v787
      %v820 = vmul.f32 %v788, %v788
      %v821 = vmul.f32 %v789, %v789
      %v822 = vmul.f32 %v790, %v790
      %v823 = vmul.f32 %v791, %v791
      %v824 = vmul.f32 %v792, %v792
      %v825 = vmul.f32 %v793, %v793
      %v826 = vmul.f32 %v794, %v794
      %v827 = vmul.f32 %v795, %v795
      %v828 = vmul.f32 %v796, %v796
      %v829 = vmul.f32 %v797, %v797
      %v830 = vmul.f32 %v798, %v798
      %v831 = vmul.f32 %v799, %v799
      %v832 = vmul.f32 %v800, %v800
      %v833 = vmul.f32 %v801, %v801
      %v834 = vmul.f32 %v802, %v802
      %v835 = vsel %vm635, %v803, 0.0
      %836 = vadd.xlane.f32.xlu0 %v835
      %v837 = vpop.xlane.xlu0 %836
      %v838 = vsel %vm635, %v804, 0.0
      %839 = vadd.xlane.f32.xlu0 %v838
      %v840 = vpop.xlane.xlu0 %839
      %v841 = vsel %vm635, %v805, 0.0
      %842 = vadd.xlane.f32.xlu0 %v841
      %v843 = vpop.xlane.xlu0 %842
      %v844 = vsel %vm635, %v806, 0.0
      %845 = vadd.xlane.f32.xlu0 %v844
      %v846 = vpop.xlane.xlu0 %845
      %v847 = vsel %vm635, %v807, 0.0
      %848 = vadd.xlane.f32.xlu0 %v847
      %v849 = vpop.xlane.xlu0 %848
      %v850 = vsel %vm635, %v808, 0.0
      %851 = vadd.xlane.f32.xlu0 %v850
      %v852 = vpop.xlane.xlu0 %851
      %v853 = vsel %vm635, %v809, 0.0
      %854 = vadd.xlane.f32.xlu0 %v853
      %v855 = vpop.xlane.xlu0 %854
      %v856 = vsel %vm635, %v810, 0.0
      %857 = vadd.xlane.f32.xlu0 %v856
      %v858 = vpop.xlane.xlu0 %857
      %v859 = vsel %vm635, %v811, 0.0
      %860 = vadd.xlane.f32.xlu0 %v859
      %v861 = vpop.xlane.xlu0 %860
      %v862 = vsel %vm635, %v812, 0.0
      %863 = vadd.xlane.f32.xlu0 %v862
      %v864 = vpop.xlane.xlu0 %863
      %v865 = vsel %vm635, %v813, 0.0
      %866 = vadd.xlane.f32.xlu0 %v865
      %v867 = vpop.xlane.xlu0 %866
      %v868 = vsel %vm635, %v814, 0.0
      %869 = vadd.xlane.f32.xlu0 %v868
      %v870 = vpop.xlane.xlu0 %869
      %v871 = vsel %vm635, %v815, 0.0
      %872 = vadd.xlane.f32.xlu0 %v871
      %v873 = vpop.xlane.xlu0 %872
      %v874 = vsel %vm635, %v816, 0.0
      %875 = vadd.xlane.f32.xlu0 %v874
      %v876 = vpop.xlane.xlu0 %875
      %v877 = vsel %vm635, %v817, 0.0
      %878 = vadd.xlane.f32.xlu0 %v877
      %v879 = vpop.xlane.xlu0 %878
      %v880 = vsel %vm635, %v818, 0.0
      %881 = vadd.xlane.f32.xlu0 %v880
      %v882 = vpop.xlane.xlu0 %881
      %v883 = vsel %vm635, %v819, 0.0
      %884 = vadd.xlane.f32.xlu0 %v883
      %v885 = vpop.xlane.xlu0 %884
      %v886 = vsel %vm635, %v820, 0.0
      %887 = vadd.xlane.f32.xlu0 %v886
      %v888 = vpop.xlane.xlu0 %887
      %v889 = vsel %vm635, %v821, 0.0
      %890 = vadd.xlane.f32.xlu0 %v889
      %v891 = vpop.xlane.xlu0 %890
      %v892 = vsel %vm635, %v822, 0.0
      %893 = vadd.xlane.f32.xlu0 %v892
      %v894 = vpop.xlane.xlu0 %893
      %v895 = vsel %vm635, %v823, 0.0
      %896 = vadd.xlane.f32.xlu0 %v895
      %v897 = vpop.xlane.xlu0 %896
      %v898 = vsel %vm635, %v824, 0.0
      %899 = vadd.xlane.f32.xlu0 %v898
      %v900 = vpop.xlane.xlu0 %899
      %v901 = vsel %vm635, %v825, 0.0
      %902 = vadd.xlane.f32.xlu0 %v901
      %v903 = vpop.xlane.xlu0 %902
      %v904 = vsel %vm635, %v826, 0.0
      %905 = vadd.xlane.f32.xlu0 %v904
      %v906 = vpop.xlane.xlu0 %905
      %v907 = vsel %vm635, %v827, 0.0
      %908 = vadd.xlane.f32.xlu0 %v907
      %v909 = vpop.xlane.xlu0 %908
      %v910 = vsel %vm635, %v828, 0.0
      %911 = vadd.xlane.f32.xlu0 %v910
      %v912 = vpop.xlane.xlu0 %911
      %v913 = vsel %vm635, %v829, 0.0
      %914 = vadd.xlane.f32.xlu0 %v913
      %v915 = vpop.xlane.xlu0 %914
      %v916 = vsel %vm635, %v830, 0.0
      %917 = vadd.xlane.f32.xlu0 %v916
      %v918 = vpop.xlane.xlu0 %917
      %v919 = vsel %vm635, %v831, 0.0
      %920 = vadd.xlane.f32.xlu0 %v919
      %v921 = vpop.xlane.xlu0 %920
      %v922 = vsel %vm635, %v832, 0.0
      %923 = vadd.xlane.f32.xlu0 %v922
      %v924 = vpop.xlane.xlu0 %923
      %v925 = vsel %vm635, %v833, 0.0
      %926 = vadd.xlane.f32.xlu0 %v925
      %v927 = vpop.xlane.xlu0 %926
      %v928 = vsel %vm635, %v834, 0.0
      %929 = vadd.xlane.f32.xlu0 %v928
      %v930 = vpop.xlane.xlu0 %929
      %v931 = vmul.f32 %v837, %v738
      %v932 = vmul.f32 %v840, %v738
      %v933 = vmul.f32 %v843, %v738
      %v934 = vmul.f32 %v846, %v738
      %v935 = vmul.f32 %v849, %v738
      %v936 = vmul.f32 %v852, %v738
      %v937 = vmul.f32 %v855, %v738
      %v938 = vmul.f32 %v858, %v738
      %v939 = vmul.f32 %v861, %v738
      %v940 = vmul.f32 %v864, %v738
      %v941 = vmul.f32 %v867, %v738
      %v942 = vmul.f32 %v870, %v738
      %v943 = vmul.f32 %v873, %v738
      %v944 = vmul.f32 %v876, %v738
      %v945 = vmul.f32 %v879, %v738
      %v946 = vmul.f32 %v882, %v738
      %v947 = vmul.f32 %v885, %v738
      %v948 = vmul.f32 %v888, %v738
      %v949 = vmul.f32 %v891, %v738
      %v950 = vmul.f32 %v894, %v738
      %v951 = vmul.f32 %v897, %v738
      %v952 = vmul.f32 %v900, %v738
      %v953 = vmul.f32 %v903, %v738
      %v954 = vmul.f32 %v906, %v738
      %v955 = vmul.f32 %v909, %v738
      %v956 = vmul.f32 %v912, %v738
      %v957 = vmul.f32 %v915, %v738
      %v958 = vmul.f32 %v918, %v738
      %v959 = vmul.f32 %v921, %v738
      %v960 = vmul.f32 %v924, %v738
      %v961 = vmul.f32 %v927, %v738
      %v962 = vmul.f32 %v930, %v738
      %v963 = vadd.f32 %v931, 1e-05
      %v964 = vadd.f32 %v932, 1e-05
      %v965 = vadd.f32 %v933, 1e-05
      %v966 = vadd.f32 %v934, 1e-05
      %v967 = vadd.f32 %v935, 1e-05
      %v968 = vadd.f32 %v936, 1e-05
      %v969 = vadd.f32 %v937, 1e-05
      %v970 = vadd.f32 %v938, 1e-05
      %v971 = vadd.f32 %v939, 1e-05
      %v972 = vadd.f32 %v940, 1e-05
      %v973 = vadd.f32 %v941, 1e-05
      %v974 = vadd.f32 %v942, 1e-05
      %v975 = vadd.f32 %v943, 1e-05
      %v976 = vadd.f32 %v944, 1e-05
      %v977 = vadd.f32 %v945, 1e-05
      %v978 = vadd.f32 %v946, 1e-05
      %v979 = vadd.f32 %v947, 1e-05
      %v980 = vadd.f32 %v948, 1e-05
      %v981 = vadd.f32 %v949, 1e-05
      %v982 = vadd.f32 %v950, 1e-05
      %v983 = vadd.f32 %v951, 1e-05
      %v984 = vadd.f32 %v952, 1e-05
      %v985 = vadd.f32 %v953, 1e-05
      %v986 = vadd.f32 %v954, 1e-05
      %v987 = vadd.f32 %v955, 1e-05
      %v988 = vadd.f32 %v956, 1e-05
      %v989 = vadd.f32 %v957, 1e-05
      %v990 = vadd.f32 %v958, 1e-05
      %v991 = vadd.f32 %v959, 1e-05
      %v992 = vadd.f32 %v960, 1e-05
      %v993 = vadd.f32 %v961, 1e-05
      %v994 = vadd.f32 %v962, 1e-05
      %v995 = vrsqrt.pop %v963
      %v996 = vmul.f32 %v995, %v963
      %v997 = vmul.f32 %v996, %v995
      %v998 = vmul.f32 0.5, %v997
      %v999 = vsub.f32 1.5, %v998
      %v1000 = vmul.f32 %v995, %v999
      %vm1001 = vweird.f32 %v963
      %vm1002 = vweird.f32 %v995
      %vm1003 = vmor %vm1001, %vm1002
      %v1004 = vsel %vm1003, %v995, %v1000
      %v1005 = vrsqrt.pop %v964
      %v1006 = vmul.f32 %v1005, %v964
      %v1007 = vmul.f32 %v1006, %v1005
      %v1008 = vmul.f32 0.5, %v1007
      %v1009 = vsub.f32 1.5, %v1008
      %v1010 = vmul.f32 %v1005, %v1009
      %vm1011 = vweird.f32 %v964
      %vm1012 = vweird.f32 %v1005
      %vm1013 = vmor %vm1011, %vm1012
      %v1014 = vsel %vm1013, %v1005, %v1010
      %v1015 = vrsqrt.pop %v965
      %v1016 = vmul.f32 %v1015, %v965
      %v1017 = vmul.f32 %v1016, %v1015
      %v1018 = vmul.f32 0.5, %v1017
      %v1019 = vsub.f32 1.5, %v1018
      %v1020 = vmul.f32 %v1015, %v1019
      %vm1021 = vweird.f32 %v965
      %vm1022 = vweird.f32 %v1015
      %vm1023 = vmor %vm1021, %vm1022
      %v1024 = vsel %vm1023, %v1015, %v1020
      %v1025 = vrsqrt.pop %v966
      %v1026 = vmul.f32 %v1025, %v966
      %v1027 = vmul.f32 %v1026, %v1025
      %v1028 = vmul.f32 0.5, %v1027
      %v1029 = vsub.f32 1.5, %v1028
      %v1030 = vmul.f32 %v1025, %v1029
      %vm1031 = vweird.f32 %v966
      %vm1032 = vweird.f32 %v1025
      %vm1033 = vmor %vm1031, %vm1032
      %v1034 = vsel %vm1033, %v1025, %v1030
      %v1035 = vrsqrt.pop %v967
      %v1036 = vmul.f32 %v1035, %v967
      %v1037 = vmul.f32 %v1036, %v1035
      %v1038 = vmul.f32 0.5, %v1037
      %v1039 = vsub.f32 1.5, %v1038
      %v1040 = vmul.f32 %v1035, %v1039
      %vm1041 = vweird.f32 %v967
      %vm1042 = vweird.f32 %v1035
      %vm1043 = vmor %vm1041, %vm1042
      %v1044 = vsel %vm1043, %v1035, %v1040
      %v1045 = vrsqrt.pop %v968
      %v1046 = vmul.f32 %v1045, %v968
      %v1047 = vmul.f32 %v1046, %v1045
      %v1048 = vmul.f32 0.5, %v1047
      %v1049 = vsub.f32 1.5, %v1048
      %v1050 = vmul.f32 %v1045, %v1049
      %vm1051 = vweird.f32 %v968
      %vm1052 = vweird.f32 %v1045
      %vm1053 = vmor %vm1051, %vm1052
      %v1054 = vsel %vm1053, %v1045, %v1050
      %v1055 = vrsqrt.pop %v969
      %v1056 = vmul.f32 %v1055, %v969
      %v1057 = vmul.f32 %v1056, %v1055
      %v1058 = vmul.f32 0.5, %v1057
      %v1059 = vsub.f32 1.5, %v1058
      %v1060 = vmul.f32 %v1055, %v1059
      %vm1061 = vweird.f32 %v969
      %vm1062 = vweird.f32 %v1055
      %vm1063 = vmor %vm1061, %vm1062
      %v1064 = vsel %vm1063, %v1055, %v1060
      %v1065 = vrsqrt.pop %v970
      %v1066 = vmul.f32 %v1065, %v970
      %v1067 = vmul.f32 %v1066, %v1065
      %v1068 = vmul.f32 0.5, %v1067
      %v1069 = vsub.f32 1.5, %v1068
      %v1070 = vmul.f32 %v1065, %v1069
      %vm1071 = vweird.f32 %v970
      %vm1072 = vweird.f32 %v1065
      %vm1073 = vmor %vm1071, %vm1072
      %v1074 = vsel %vm1073, %v1065, %v1070
      %v1075 = vrsqrt.pop %v971
      %v1076 = vmul.f32 %v1075, %v971
      %v1077 = vmul.f32 %v1076, %v1075
      %v1078 = vmul.f32 0.5, %v1077
      %v1079 = vsub.f32 1.5, %v1078
      %v1080 = vmul.f32 %v1075, %v1079
      %vm1081 = vweird.f32 %v971
      %vm1082 = vweird.f32 %v1075
      %vm1083 = vmor %vm1081, %vm1082
      %v1084 = vsel %vm1083, %v1075, %v1080
      %v1085 = vrsqrt.pop %v972
      %v1086 = vmul.f32 %v1085, %v972
      %v1087 = vmul.f32 %v1086, %v1085
      %v1088 = vmul.f32 0.5, %v1087
      %v1089 = vsub.f32 1.5, %v1088
      %v1090 = vmul.f32 %v1085, %v1089
      %vm1091 = vweird.f32 %v972
      %vm1092 = vweird.f32 %v1085
      %vm1093 = vmor %vm1091, %vm1092
      %v1094 = vsel %vm1093, %v1085, %v1090
      %v1095 = vrsqrt.pop %v973
      %v1096 = vmul.f32 %v1095, %v973
      %v1097 = vmul.f32 %v1096, %v1095
      %v1098 = vmul.f32 0.5, %v1097
      %v1099 = vsub.f32 1.5, %v1098
      %v1100 = vmul.f32 %v1095, %v1099
      %vm1101 = vweird.f32 %v973
      %vm1102 = vweird.f32 %v1095
      %vm1103 = vmor %vm1101, %vm1102
      %v1104 = vsel %vm1103, %v1095, %v1100
      %v1105 = vrsqrt.pop %v974
      %v1106 = vmul.f32 %v1105, %v974
      %v1107 = vmul.f32 %v1106, %v1105
      %v1108 = vmul.f32 0.5, %v1107
      %v1109 = vsub.f32 1.5, %v1108
      %v1110 = vmul.f32 %v1105, %v1109
      %vm1111 = vweird.f32 %v974
      %vm1112 = vweird.f32 %v1105
      %vm1113 = vmor %vm1111, %vm1112
      %v1114 = vsel %vm1113, %v1105, %v1110
      %v1115 = vrsqrt.pop %v975
      %v1116 = vmul.f32 %v1115, %v975
      %v1117 = vmul.f32 %v1116, %v1115
      %v1118 = vmul.f32 0.5, %v1117
      %v1119 = vsub.f32 1.5, %v1118
      %v1120 = vmul.f32 %v1115, %v1119
      %vm1121 = vweird.f32 %v975
      %vm1122 = vweird.f32 %v1115
      %vm1123 = vmor %vm1121, %vm1122
      %v1124 = vsel %vm1123, %v1115, %v1120
      %v1125 = vrsqrt.pop %v976
      %v1126 = vmul.f32 %v1125, %v976
      %v1127 = vmul.f32 %v1126, %v1125
      %v1128 = vmul.f32 0.5, %v1127
      %v1129 = vsub.f32 1.5, %v1128
      %v1130 = vmul.f32 %v1125, %v1129
      %vm1131 = vweird.f32 %v976
      %vm1132 = vweird.f32 %v1125
      %vm1133 = vmor %vm1131, %vm1132
      %v1134 = vsel %vm1133, %v1125, %v1130
      %v1135 = vrsqrt.pop %v977
      %v1136 = vmul.f32 %v1135, %v977
      %v1137 = vmul.f32 %v1136, %v1135
      %v1138 = vmul.f32 0.5, %v1137
      %v1139 = vsub.f32 1.5, %v1138
      %v1140 = vmul.f32 %v1135, %v1139
      %vm1141 = vweird.f32 %v977
      %vm1142 = vweird.f32 %v1135
      %vm1143 = vmor %vm1141, %vm1142
      %v1144 = vsel %vm1143, %v1135, %v1140
      %v1145 = vrsqrt.pop %v978
      %v1146 = vmul.f32 %v1145, %v978
      %v1147 = vmul.f32 %v1146, %v1145
      %v1148 = vmul.f32 0.5, %v1147
      %v1149 = vsub.f32 1.5, %v1148
      %v1150 = vmul.f32 %v1145, %v1149
      %vm1151 = vweird.f32 %v978
      %vm1152 = vweird.f32 %v1145
      %vm1153 = vmor %vm1151, %vm1152
      %v1154 = vsel %vm1153, %v1145, %v1150
      %v1155 = vrsqrt.pop %v979
      %v1156 = vmul.f32 %v1155, %v979
      %v1157 = vmul.f32 %v1156, %v1155
      %v1158 = vmul.f32 0.5, %v1157
      %v1159 = vsub.f32 1.5, %v1158
      %v1160 = vmul.f32 %v1155, %v1159
      %vm1161 = vweird.f32 %v979
      %vm1162 = vweird.f32 %v1155
      %vm1163 = vmor %vm1161, %vm1162
      %v1164 = vsel %vm1163, %v1155, %v1160
      %v1165 = vrsqrt.pop %v980
      %v1166 = vmul.f32 %v1165, %v980
      %v1167 = vmul.f32 %v1166, %v1165
      %v1168 = vmul.f32 0.5, %v1167
      %v1169 = vsub.f32 1.5, %v1168
      %v1170 = vmul.f32 %v1165, %v1169
      %vm1171 = vweird.f32 %v980
      %vm1172 = vweird.f32 %v1165
      %vm1173 = vmor %vm1171, %vm1172
      %v1174 = vsel %vm1173, %v1165, %v1170
      %v1175 = vrsqrt.pop %v981
      %v1176 = vmul.f32 %v1175, %v981
      %v1177 = vmul.f32 %v1176, %v1175
      %v1178 = vmul.f32 0.5, %v1177
      %v1179 = vsub.f32 1.5, %v1178
      %v1180 = vmul.f32 %v1175, %v1179
      %vm1181 = vweird.f32 %v981
      %vm1182 = vweird.f32 %v1175
      %vm1183 = vmor %vm1181, %vm1182
      %v1184 = vsel %vm1183, %v1175, %v1180
      %v1185 = vrsqrt.pop %v982
      %v1186 = vmul.f32 %v1185, %v982
      %v1187 = vmul.f32 %v1186, %v1185
      %v1188 = vmul.f32 0.5, %v1187
      %v1189 = vsub.f32 1.5, %v1188
      %v1190 = vmul.f32 %v1185, %v1189
      %vm1191 = vweird.f32 %v982
      %vm1192 = vweird.f32 %v1185
      %vm1193 = vmor %vm1191, %vm1192
      %v1194 = vsel %vm1193, %v1185, %v1190
      %v1195 = vrsqrt.pop %v983
      %v1196 = vmul.f32 %v1195, %v983
      %v1197 = vmul.f32 %v1196, %v1195
      %v1198 = vmul.f32 0.5, %v1197
      %v1199 = vsub.f32 1.5, %v1198
      %v1200 = vmul.f32 %v1195, %v1199
      %vm1201 = vweird.f32 %v983
      %vm1202 = vweird.f32 %v1195
      %vm1203 = vmor %vm1201, %vm1202
      %v1204 = vsel %vm1203, %v1195, %v1200
      %v1205 = vrsqrt.pop %v984
      %v1206 = vmul.f32 %v1205, %v984
      %v1207 = vmul.f32 %v1206, %v1205
      %v1208 = vmul.f32 0.5, %v1207
      %v1209 = vsub.f32 1.5, %v1208
      %v1210 = vmul.f32 %v1205, %v1209
      %vm1211 = vweird.f32 %v984
      %vm1212 = vweird.f32 %v1205
      %vm1213 = vmor %vm1211, %vm1212
      %v1214 = vsel %vm1213, %v1205, %v1210
      %v1215 = vrsqrt.pop %v985
      %v1216 = vmul.f32 %v1215, %v985
      %v1217 = vmul.f32 %v1216, %v1215
      %v1218 = vmul.f32 0.5, %v1217
      %v1219 = vsub.f32 1.5, %v1218
      %v1220 = vmul.f32 %v1215, %v1219
      %vm1221 = vweird.f32 %v985
      %vm1222 = vweird.f32 %v1215
      %vm1223 = vmor %vm1221, %vm1222
      %v1224 = vsel %vm1223, %v1215, %v1220
      %v1225 = vrsqrt.pop %v986
      %v1226 = vmul.f32 %v1225, %v986
      %v1227 = vmul.f32 %v1226, %v1225
      %v1228 = vmul.f32 0.5, %v1227
      %v1229 = vsub.f32 1.5, %v1228
      %v1230 = vmul.f32 %v1225, %v1229
      %vm1231 = vweird.f32 %v986
      %vm1232 = vweird.f32 %v1225
      %vm1233 = vmor %vm1231, %vm1232
      %v1234 = vsel %vm1233, %v1225, %v1230
      %v1235 = vrsqrt.pop %v987
      %v1236 = vmul.f32 %v1235, %v987
      %v1237 = vmul.f32 %v1236, %v1235
      %v1238 = vmul.f32 0.5, %v1237
      %v1239 = vsub.f32 1.5, %v1238
      %v1240 = vmul.f32 %v1235, %v1239
      %vm1241 = vweird.f32 %v987
      %vm1242 = vweird.f32 %v1235
      %vm1243 = vmor %vm1241, %vm1242
      %v1244 = vsel %vm1243, %v1235, %v1240
      %v1245 = vrsqrt.pop %v988
      %v1246 = vmul.f32 %v1245, %v988
      %v1247 = vmul.f32 %v1246, %v1245
      %v1248 = vmul.f32 0.5, %v1247
      %v1249 = vsub.f32 1.5, %v1248
      %v1250 = vmul.f32 %v1245, %v1249
      %vm1251 = vweird.f32 %v988
      %vm1252 = vweird.f32 %v1245
      %vm1253 = vmor %vm1251, %vm1252
      %v1254 = vsel %vm1253, %v1245, %v1250
      %v1255 = vrsqrt.pop %v989
      %v1256 = vmul.f32 %v1255, %v989
      %v1257 = vmul.f32 %v1256, %v1255
      %v1258 = vmul.f32 0.5, %v1257
      %v1259 = vsub.f32 1.5, %v1258
      %v1260 = vmul.f32 %v1255, %v1259
      %vm1261 = vweird.f32 %v989
      %vm1262 = vweird.f32 %v1255
      %vm1263 = vmor %vm1261, %vm1262
      %v1264 = vsel %vm1263, %v1255, %v1260
      %v1265 = vrsqrt.pop %v990
      %v1266 = vmul.f32 %v1265, %v990
      %v1267 = vmul.f32 %v1266, %v1265
      %v1268 = vmul.f32 0.5, %v1267
      %v1269 = vsub.f32 1.5, %v1268
      %v1270 = vmul.f32 %v1265, %v1269
      %vm1271 = vweird.f32 %v990
      %vm1272 = vweird.f32 %v1265
      %vm1273 = vmor %vm1271, %vm1272
      %v1274 = vsel %vm1273, %v1265, %v1270
      %v1275 = vrsqrt.pop %v991
      %v1276 = vmul.f32 %v1275, %v991
      %v1277 = vmul.f32 %v1276, %v1275
      %v1278 = vmul.f32 0.5, %v1277
      %v1279 = vsub.f32 1.5, %v1278
      %v1280 = vmul.f32 %v1275, %v1279
      %vm1281 = vweird.f32 %v991
      %vm1282 = vweird.f32 %v1275
      %vm1283 = vmor %vm1281, %vm1282
      %v1284 = vsel %vm1283, %v1275, %v1280
      %v1285 = vrsqrt.pop %v992
      %v1286 = vmul.f32 %v1285, %v992
      %v1287 = vmul.f32 %v1286, %v1285
      %v1288 = vmul.f32 0.5, %v1287
      %v1289 = vsub.f32 1.5, %v1288
      %v1290 = vmul.f32 %v1285, %v1289
      %vm1291 = vweird.f32 %v992
      %vm1292 = vweird.f32 %v1285
      %vm1293 = vmor %vm1291, %vm1292
      %v1294 = vsel %vm1293, %v1285, %v1290
      %v1295 = vrsqrt.pop %v993
      %v1296 = vmul.f32 %v1295, %v993
      %v1297 = vmul.f32 %v1296, %v1295
      %v1298 = vmul.f32 0.5, %v1297
      %v1299 = vsub.f32 1.5, %v1298
      %v1300 = vmul.f32 %v1295, %v1299
      %vm1301 = vweird.f32 %v993
      %vm1302 = vweird.f32 %v1295
      %vm1303 = vmor %vm1301, %vm1302
      %v1304 = vsel %vm1303, %v1295, %v1300
      %v1305 = vrsqrt.pop %v994
      %v1306 = vmul.f32 %v1305, %v994
      %v1307 = vmul.f32 %v1306, %v1305
      %v1308 = vmul.f32 0.5, %v1307
      %v1309 = vsub.f32 1.5, %v1308
      %v1310 = vmul.f32 %v1305, %v1309
      %vm1311 = vweird.f32 %v994
      %vm1312 = vweird.f32 %v1305
      %vm1313 = vmor %vm1311, %vm1312
      %v1314 = vsel %vm1313, %v1305, %v1310
      %v1315 = vmul.f32 %v771, %v1004
      %v1316 = vmul.f32 %v772, %v1014
      %v1317 = vmul.f32 %v773, %v1024
      %v1318 = vmul.f32 %v774, %v1034
      %v1319 = vmul.f32 %v775, %v1044
      %v1320 = vmul.f32 %v776, %v1054
      %v1321 = vmul.f32 %v777, %v1064
      %v1322 = vmul.f32 %v778, %v1074
      %v1323 = vmul.f32 %v779, %v1084
      %v1324 = vmul.f32 %v780, %v1094
      %v1325 = vmul.f32 %v781, %v1104
      %v1326 = vmul.f32 %v782, %v1114
      %v1327 = vmul.f32 %v783, %v1124
      %v1328 = vmul.f32 %v784, %v1134
      %v1329 = vmul.f32 %v785, %v1144
      %v1330 = vmul.f32 %v786, %v1154
      %v1331 = vmul.f32 %v787, %v1164
      %v1332 = vmul.f32 %v788, %v1174
      %v1333 = vmul.f32 %v789, %v1184
      %v1334 = vmul.f32 %v790, %v1194
      %v1335 = vmul.f32 %v791, %v1204
      %v1336 = vmul.f32 %v792, %v1214
      %v1337 = vmul.f32 %v793, %v1224
      %v1338 = vmul.f32 %v794, %v1234
      %v1339 = vmul.f32 %v795, %v1244
      %v1340 = vmul.f32 %v796, %v1254
      %v1341 = vmul.f32 %v797, %v1264
      %v1342 = vmul.f32 %v798, %v1274
      %v1343 = vmul.f32 %v799, %v1284
      %v1344 = vmul.f32 %v800, %v1294
      %v1345 = vmul.f32 %v801, %v1304
      %v1346 = vmul.f32 %v802, %v1314
      %v1347 = vld [vmem:[%s1] sm:$0x1]
      %v1349 = vperm.slane %v1347, 0
      %v1351 = vmul.f32 %v1315, %v1349
      %v1352 = vmul.f32 %v1316, %v1349
      %v1353 = vmul.f32 %v1317, %v1349
      %v1354 = vmul.f32 %v1318, %v1349
      %v1355 = vmul.f32 %v1319, %v1349
      %v1356 = vmul.f32 %v1320, %v1349
      %v1357 = vmul.f32 %v1321, %v1349
      %v1358 = vmul.f32 %v1322, %v1349
      %v1359 = vmul.f32 %v1323, %v1349
      %v1360 = vmul.f32 %v1324, %v1349
      %v1361 = vmul.f32 %v1325, %v1349
      %v1362 = vmul.f32 %v1326, %v1349
      %v1363 = vmul.f32 %v1327, %v1349
      %v1364 = vmul.f32 %v1328, %v1349
      %v1365 = vmul.f32 %v1329, %v1349
      %v1366 = vmul.f32 %v1330, %v1349
      %v1367 = vmul.f32 %v1331, %v1349
      %v1368 = vmul.f32 %v1332, %v1349
      %v1369 = vmul.f32 %v1333, %v1349
      %v1370 = vmul.f32 %v1334, %v1349
      %v1371 = vmul.f32 %v1335, %v1349
      %v1372 = vmul.f32 %v1336, %v1349
      %v1373 = vmul.f32 %v1337, %v1349
      %v1374 = vmul.f32 %v1338, %v1349
      %v1375 = vmul.f32 %v1339, %v1349
      %v1376 = vmul.f32 %v1340, %v1349
      %v1377 = vmul.f32 %v1341, %v1349
      %v1378 = vmul.f32 %v1342, %v1349
      %v1379 = vmul.f32 %v1343, %v1349
      %v1380 = vmul.f32 %v1344, %v1349
      %v1381 = vmul.f32 %v1345, %v1349
      %v1382 = vmul.f32 %v1346, %v1349
      %v1383 = vld [vmem:[%s2] sm:$0x1]
      %v1385 = vperm.slane %v1383, 0
      %v1387 = vadd.f32 %v1351, %v1385
      %v1388 = vadd.f32 %v1352, %v1385
      %v1389 = vadd.f32 %v1353, %v1385
      %v1390 = vadd.f32 %v1354, %v1385
      %v1391 = vadd.f32 %v1355, %v1385
      %v1392 = vadd.f32 %v1356, %v1385
      %v1393 = vadd.f32 %v1357, %v1385
      %v1394 = vadd.f32 %v1358, %v1385
      %v1395 = vadd.f32 %v1359, %v1385
      %v1396 = vadd.f32 %v1360, %v1385
      %v1397 = vadd.f32 %v1361, %v1385
      %v1398 = vadd.f32 %v1362, %v1385
      %v1399 = vadd.f32 %v1363, %v1385
      %v1400 = vadd.f32 %v1364, %v1385
      %v1401 = vadd.f32 %v1365, %v1385
      %v1402 = vadd.f32 %v1366, %v1385
      %v1403 = vadd.f32 %v1367, %v1385
      %v1404 = vadd.f32 %v1368, %v1385
      %v1405 = vadd.f32 %v1369, %v1385
      %v1406 = vadd.f32 %v1370, %v1385
      %v1407 = vadd.f32 %v1371, %v1385
      %v1408 = vadd.f32 %v1372, %v1385
      %v1409 = vadd.f32 %v1373, %v1385
      %v1410 = vadd.f32 %v1374, %v1385
      %v1411 = vadd.f32 %v1375, %v1385
      %v1412 = vadd.f32 %v1376, %v1385
      %v1413 = vadd.f32 %v1377, %v1385
      %v1414 = vadd.f32 %v1378, %v1385
      %v1415 = vadd.f32 %v1379, %v1385
      %v1416 = vadd.f32 %v1380, %v1385
      %v1417 = vadd.f32 %v1381, %v1385
      %v1418 = vadd.f32 %v1382, %v1385
      %v1419 = vld [vmem:[%s3] sm:$0xff]
      %v1420 = vld [vmem:[%s3 + $0x8] sm:$0xff]
      %v1421 = vld [vmem:[%s3 + $0x10] sm:$0xff]
      %v1422 = vld [vmem:[%s3 + $0x18] sm:$0xff]
      %v1423 = vld [vmem:[%s4] sm:$0x1]
      %v1425 = vperm.slane %v1423, 0
      %v1428 = vsel %vm635, %v1387, 0
      %v1431 = vsel %vm635, %v1388, 0
      %v1434 = vsel %vm635, %v1389, 0
      %v1437 = vsel %vm635, %v1390, 0
      %v1440 = vsel %vm635, %v1391, 0
      %v1443 = vsel %vm635, %v1392, 0
      %v1446 = vsel %vm635, %v1393, 0
      %v1449 = vsel %vm635, %v1394, 0
      %v1452 = vsel %vm635, %v1395, 0
      %v1455 = vsel %vm635, %v1396, 0
      %v1458 = vsel %vm635, %v1397, 0
      %v1461 = vsel %vm635, %v1398, 0
      %v1464 = vsel %vm635, %v1399, 0
      %v1467 = vsel %vm635, %v1400, 0
      %v1470 = vsel %vm635, %v1401, 0
      %v1473 = vsel %vm635, %v1402, 0
      %v1476 = vsel %vm635, %v1403, 0
      %v1479 = vsel %vm635, %v1404, 0
      %v1482 = vsel %vm635, %v1405, 0
      %v1485 = vsel %vm635, %v1406, 0
      %v1488 = vsel %vm635, %v1407, 0
      %v1491 = vsel %vm635, %v1408, 0
      %v1494 = vsel %vm635, %v1409, 0
      %v1497 = vsel %vm635, %v1410, 0
      %v1500 = vsel %vm635, %v1411, 0
      %v1503 = vsel %vm635, %v1412, 0
      %v1506 = vsel %vm635, %v1413, 0
      %v1509 = vsel %vm635, %v1414, 0
      %v1512 = vsel %vm635, %v1415, 0
      %v1515 = vsel %vm635, %v1416, 0
      %v1518 = vsel %vm635, %v1417, 0
      %v1521 = vsel %vm635, %v1418, 0
      %1523 = vmatpush.msra.mxu0 0.0
      %1524 = vmatpush.msra.mxu0 0.0
      %1525 = vmatpush.msra.mxu0 0.0
      %1526 = vmatpush.msra.mxu0 0.0
      %1527 = vmatpush.msra.mxu0 0.0
      %1528 = vmatpush.msra.mxu0 0.0
      %1529 = vmatpush.msra.mxu0 0.0
      %1530 = vmatpush.msra.mxu0 0.0
      %1531 = vmatpush.msra.mxu0 0.0
      %1532 = vmatpush.msra.mxu0 0.0
      %1533 = vmatpush.msra.mxu0 0.0
      %1534 = vmatpush.msra.mxu0 0.0
      %1535 = vmatpush.msra.mxu0 %v1422
      %1536 = vmatpush.msra.mxu0 %v1421
      %1537 = vmatpush.msra.mxu0 %v1420
      %1538 = vmatpush.msra.mxu0 %v1419
      %1539 = vmatmul.f32.gmra.mxu0 %v1428
      %v1540 = vpop.f32.mrf.mxu0
      %v1541 = vadd.f32 %v1425, %v1540
      %1542 = vmatmul.f32.gmra.mxu0 %v1431
      %v1543 = vpop.f32.mrf.mxu0
      %v1544 = vadd.f32 %v1425, %v1543
      %1545 = vmatmul.f32.gmra.mxu0 %v1434
      %v1546 = vpop.f32.mrf.mxu0
      %v1547 = vadd.f32 %v1425, %v1546
      %1548 = vmatmul.f32.gmra.mxu0 %v1437
      %v1549 = vpop.f32.mrf.mxu0
      %v1550 = vadd.f32 %v1425, %v1549
      %1551 = vmatmul.f32.gmra.mxu0 %v1440
      %v1552 = vpop.f32.mrf.mxu0
      %v1553 = vadd.f32 %v1425, %v1552
      %1554 = vmatmul.f32.gmra.mxu0 %v1443
      %v1555 = vpop.f32.mrf.mxu0
      %v1556 = vadd.f32 %v1425, %v1555
      %1557 = vmatmul.f32.gmra.mxu0 %v1446
      %v1558 = vpop.f32.mrf.mxu0
      %v1559 = vadd.f32 %v1425, %v1558
      %1560 = vmatmul.f32.gmra.mxu0 %v1449
      %v1561 = vpop.f32.mrf.mxu0
      %v1562 = vadd.f32 %v1425, %v1561
      %1563 = vmatmul.f32.gmra.mxu0 %v1452
      %v1564 = vpop.f32.mrf.mxu0
      %v1565 = vadd.f32 %v1425, %v1564
      %1566 = vmatmul.f32.gmra.mxu0 %v1455
      %v1567 = vpop.f32.mrf.mxu0
      %v1568 = vadd.f32 %v1425, %v1567
      %1569 = vmatmul.f32.gmra.mxu0 %v1458
      %v1570 = vpop.f32.mrf.mxu0
      %v1571 = vadd.f32 %v1425, %v1570
      %1572 = vmatmul.f32.gmra.mxu0 %v1461
      %v1573 = vpop.f32.mrf.mxu0
      %v1574 = vadd.f32 %v1425, %v1573
      %1575 = vmatmul.f32.gmra.mxu0 %v1464
      %v1576 = vpop.f32.mrf.mxu0
      %v1577 = vadd.f32 %v1425, %v1576
      %1578 = vmatmul.f32.gmra.mxu0 %v1467
      %v1579 = vpop.f32.mrf.mxu0
      %v1580 = vadd.f32 %v1425, %v1579
      %1581 = vmatmul.f32.gmra.mxu0 %v1470
      %v1582 = vpop.f32.mrf.mxu0
      %v1583 = vadd.f32 %v1425, %v1582
      %1584 = vmatmul.f32.gmra.mxu0 %v1473
      %v1585 = vpop.f32.mrf.mxu0
      %v1586 = vadd.f32 %v1425, %v1585
      %1587 = vmatmul.f32.gmra.mxu0 %v1476
      %v1588 = vpop.f32.mrf.mxu0
      %v1589 = vadd.f32 %v1425, %v1588
      %1590 = vmatmul.f32.gmra.mxu0 %v1479
      %v1591 = vpop.f32.mrf.mxu0
      %v1592 = vadd.f32 %v1425, %v1591
      %1593 = vmatmul.f32.gmra.mxu0 %v1482
      %v1594 = vpop.f32.mrf.mxu0
      %v1595 = vadd.f32 %v1425, %v1594
      %1596 = vmatmul.f32.gmra.mxu0 %v1485
      %v1597 = vpop.f32.mrf.mxu0
      %v1598 = vadd.f32 %v1425, %v1597
      %1599 = vmatmul.f32.gmra.mxu0 %v1488
      %v1600 = vpop.f32.mrf.mxu0
      %v1601 = vadd.f32 %v1425, %v1600
      %1602 = vmatmul.f32.gmra.mxu0 %v1491
      %v1603 = vpop.f32.mrf.mxu0
      %v1604 = vadd.f32 %v1425, %v1603
      %1605 = vmatmul.f32.gmra.mxu0 %v1494
      %v1606 = vpop.f32.mrf.mxu0
      %v1607 = vadd.f32 %v1425, %v1606
      %1608 = vmatmul.f32.gmra.mxu0 %v1497
      %v1609 = vpop.f32.mrf.mxu0
      %v1610 = vadd.f32 %v1425, %v1609
      %1611 = vmatmul.f32.gmra.mxu0 %v1500
      %v1612 = vpop.f32.mrf.mxu0
      %v1613 = vadd.f32 %v1425, %v1612
      %1614 = vmatmul.f32.gmra.mxu0 %v1503
      %v1615 = vpop.f32.mrf.mxu0
      %v1616 = vadd.f32 %v1425, %v1615
      %1617 = vmatmul.f32.gmra.mxu0 %v1506
      %v1618 = vpop.f32.mrf.mxu0
      %v1619 = vadd.f32 %v1425, %v1618
      %1620 = vmatmul.f32.gmra.mxu0 %v1509
      %v1621 = vpop.f32.mrf.mxu0
      %v1622 = vadd.f32 %v1425, %v1621
      %1623 = vmatmul.f32.gmra.mxu0 %v1512
      %v1624 = vpop.f32.mrf.mxu0
      %v1625 = vadd.f32 %v1425, %v1624
      %1626 = vmatmul.f32.gmra.mxu0 %v1515
      %v1627 = vpop.f32.mrf.mxu0
      %v1628 = vadd.f32 %v1425, %v1627
      %1629 = vmatmul.f32.gmra.mxu0 %v1518
      %v1630 = vpop.f32.mrf.mxu0
      %v1631 = vadd.f32 %v1425, %v1630
      %1632 = vmatmul.f32.gmra.mxu0 %v1521
      %v1633 = vpop.f32.mrf.mxu0
      %v1634 = vadd.f32 %v1425, %v1633
      %1635 = vdwg.mxu0
      %v1636 = vmul.f32 %v1541, 0.35355338
      %v1637 = vmul.f32 %v1544, 0.35355338
      %v1638 = vmul.f32 %v1547, 0.35355338
      %v1639 = vmul.f32 %v1550, 0.35355338
      %v1640 = vmul.f32 %v1553, 0.35355338
      %v1641 = vmul.f32 %v1556, 0.35355338
      %v1642 = vmul.f32 %v1559, 0.35355338
      %v1643 = vmul.f32 %v1562, 0.35355338
      %v1644 = vmul.f32 %v1565, 0.35355338
      %v1645 = vmul.f32 %v1568, 0.35355338
      %v1646 = vmul.f32 %v1571, 0.35355338
      %v1647 = vmul.f32 %v1574, 0.35355338
      %v1648 = vmul.f32 %v1577, 0.35355338
      %v1649 = vmul.f32 %v1580, 0.35355338
      %v1650 = vmul.f32 %v1583, 0.35355338
      %v1651 = vmul.f32 %v1586, 0.35355338
      %v1652 = vmul.f32 %v1589, 0.35355338
      %v1653 = vmul.f32 %v1592, 0.35355338
      %v1654 = vmul.f32 %v1595, 0.35355338
      %v1655 = vmul.f32 %v1598, 0.35355338
      %v1656 = vmul.f32 %v1601, 0.35355338
      %v1657 = vmul.f32 %v1604, 0.35355338
      %v1658 = vmul.f32 %v1607, 0.35355338
      %v1659 = vmul.f32 %v1610, 0.35355338
      %v1660 = vmul.f32 %v1613, 0.35355338
      %v1661 = vmul.f32 %v1616, 0.35355338
      %v1662 = vmul.f32 %v1619, 0.35355338
      %v1663 = vmul.f32 %v1622, 0.35355338
      %v1664 = vmul.f32 %v1625, 0.35355338
      %v1665 = vmul.f32 %v1628, 0.35355338
      %v1666 = vmul.f32 %v1631, 0.35355338
      %v1667 = vmul.f32 %v1634, 0.35355338
      %vm1668 = vcmask 64512
      %1669 = vst.msk [vmem:[%s587] sm:$0xff] %vm1668, %v1636
      %1670 = vst.msk [vmem:[%s587 + $0x8] sm:$0xff] %vm1668, %v1637
      %1671 = vst.msk [vmem:[%s587 + $0x10] sm:$0xff] %vm1668, %v1638
      %1672 = vst.msk [vmem:[%s587 + $0x18] sm:$0xff] %vm1668, %v1639
      %1673 = vst.msk [vmem:[%s587 + $0x80] sm:$0xff] %vm1668, %v1640
      %1674 = vst.msk [vmem:[%s587 + $0x88] sm:$0xff] %vm1668, %v1641
      %1675 = vst.msk [vmem:[%s587 + $0x90] sm:$0xff] %vm1668, %v1642
      %1676 = vst.msk [vmem:[%s587 + $0x98] sm:$0xff] %vm1668, %v1643
      %1677 = vst.msk [vmem:[%s587 + $0x100] sm:$0xff] %vm1668, %v1644
      %1678 = vst.msk [vmem:[%s587 + $0x108] sm:$0xff] %vm1668, %v1645
      %1679 = vst.msk [vmem:[%s587 + $0x110] sm:$0xff] %vm1668, %v1646
      %1680 = vst.msk [vmem:[%s587 + $0x118] sm:$0xff] %vm1668, %v1647
      %1681 = vst.msk [vmem:[%s587 + $0x180] sm:$0xff] %vm1668, %v1648
      %1682 = vst.msk [vmem:[%s587 + $0x188] sm:$0xff] %vm1668, %v1649
      %1683 = vst.msk [vmem:[%s587 + $0x190] sm:$0xff] %vm1668, %v1650
      %1684 = vst.msk [vmem:[%s587 + $0x198] sm:$0xff] %vm1668, %v1651
      %1685 = vst.msk [vmem:[%s587 + $0x200] sm:$0xff] %vm1668, %v1652
      %1686 = vst.msk [vmem:[%s587 + $0x208] sm:$0xff] %vm1668, %v1653
      %1687 = vst.msk [vmem:[%s587 + $0x210] sm:$0xff] %vm1668, %v1654
      %1688 = vst.msk [vmem:[%s587 + $0x218] sm:$0xff] %vm1668, %v1655
      %1689 = vst.msk [vmem:[%s587 + $0x280] sm:$0xff] %vm1668, %v1656
      %1690 = vst.msk [vmem:[%s587 + $0x288] sm:$0xff] %vm1668, %v1657
      %1691 = vst.msk [vmem:[%s587 + $0x290] sm:$0xff] %vm1668, %v1658
      %1692 = vst.msk [vmem:[%s587 + $0x298] sm:$0xff] %vm1668, %v1659
      %1693 = vst.msk [vmem:[%s587 + $0x300] sm:$0xff] %vm1668, %v1660
      %1694 = vst.msk [vmem:[%s587 + $0x308] sm:$0xff] %vm1668, %v1661
      %1695 = vst.msk [vmem:[%s587 + $0x310] sm:$0xff] %vm1668, %v1662
      %1696 = vst.msk [vmem:[%s587 + $0x318] sm:$0xff] %vm1668, %v1663
      %1697 = vst.msk [vmem:[%s587 + $0x380] sm:$0xff] %vm1668, %v1664
      %1698 = vst.msk [vmem:[%s587 + $0x388] sm:$0xff] %vm1668, %v1665
      %1699 = vst.msk [vmem:[%s587 + $0x390] sm:$0xff] %vm1668, %v1666
      %1700 = vst.msk [vmem:[%s587 + $0x398] sm:$0xff] %vm1668, %v1667
      %1733 = vrot.lane.b32.xlu0 %v1541, 96
      %v1734 = vpop.permute.xlu0 %1733
      %1735 = vrot.lane.b32.xlu0 %v1544, 96
      %v1736 = vpop.permute.xlu0 %1735
      %1737 = vrot.lane.b32.xlu0 %v1547, 96
      %v1738 = vpop.permute.xlu0 %1737
      %1739 = vrot.lane.b32.xlu0 %v1550, 96
      %v1740 = vpop.permute.xlu0 %1739
      %1741 = vrot.lane.b32.xlu0 %v1553, 96
      %v1742 = vpop.permute.xlu0 %1741
      %1743 = vrot.lane.b32.xlu0 %v1556, 96
      %v1744 = vpop.permute.xlu0 %1743
      %1745 = vrot.lane.b32.xlu0 %v1559, 96
      %v1746 = vpop.permute.xlu0 %1745
      %1747 = vrot.lane.b32.xlu0 %v1562, 96
      %v1748 = vpop.permute.xlu0 %1747
      %1749 = vrot.lane.b32.xlu0 %v1565, 96
      %v1750 = vpop.permute.xlu0 %1749
      %1751 = vrot.lane.b32.xlu0 %v1568, 96
      %v1752 = vpop.permute.xlu0 %1751
      %1753 = vrot.lane.b32.xlu0 %v1571, 96
      %v1754 = vpop.permute.xlu0 %1753
      %1755 = vrot.lane.b32.xlu0 %v1574, 96
      %v1756 = vpop.permute.xlu0 %1755
      %1757 = vrot.lane.b32.xlu0 %v1577, 96
      %v1758 = vpop.permute.xlu0 %1757
      %1759 = vrot.lane.b32.xlu0 %v1580, 96
      %v1760 = vpop.permute.xlu0 %1759
      %1761 = vrot.lane.b32.xlu0 %v1583, 96
      %v1762 = vpop.permute.xlu0 %1761
      %1763 = vrot.lane.b32.xlu0 %v1586, 96
      %v1764 = vpop.permute.xlu0 %1763
      %1765 = vrot.lane.b32.xlu0 %v1589, 96
      %v1766 = vpop.permute.xlu0 %1765
      %1767 = vrot.lane.b32.xlu0 %v1592, 96
      %v1768 = vpop.permute.xlu0 %1767
      %1769 = vrot.lane.b32.xlu0 %v1595, 96
      %v1770 = vpop.permute.xlu0 %1769
      %1771 = vrot.lane.b32.xlu0 %v1598, 96
      %v1772 = vpop.permute.xlu0 %1771
      %1773 = vrot.lane.b32.xlu0 %v1601, 96
      %v1774 = vpop.permute.xlu0 %1773
      %1775 = vrot.lane.b32.xlu0 %v1604, 96
      %v1776 = vpop.permute.xlu0 %1775
      %1777 = vrot.lane.b32.xlu0 %v1607, 96
      %v1778 = vpop.permute.xlu0 %1777
      %1779 = vrot.lane.b32.xlu0 %v1610, 96
      %v1780 = vpop.permute.xlu0 %1779
      %1781 = vrot.lane.b32.xlu0 %v1613, 96
      %v1782 = vpop.permute.xlu0 %1781
      %1783 = vrot.lane.b32.xlu0 %v1616, 96
      %v1784 = vpop.permute.xlu0 %1783
      %1785 = vrot.lane.b32.xlu0 %v1619, 96
      %v1786 = vpop.permute.xlu0 %1785
      %1787 = vrot.lane.b32.xlu0 %v1622, 96
      %v1788 = vpop.permute.xlu0 %1787
      %1789 = vrot.lane.b32.xlu0 %v1625, 96
      %v1790 = vpop.permute.xlu0 %1789
      %1791 = vrot.lane.b32.xlu0 %v1628, 96
      %v1792 = vpop.permute.xlu0 %1791
      %1793 = vrot.lane.b32.xlu0 %v1631, 96
      %v1794 = vpop.permute.xlu0 %1793
      %1795 = vrot.lane.b32.xlu0 %v1634, 96
      %v1796 = vpop.permute.xlu0 %1795
      %1829 = vst.msk [vmem:[%s594] sm:$0xff] %vm1668, %v1734
      %1830 = vst.msk [vmem:[%s594 + $0x8] sm:$0xff] %vm1668, %v1736
      %1831 = vst.msk [vmem:[%s594 + $0x10] sm:$0xff] %vm1668, %v1738
      %1832 = vst.msk [vmem:[%s594 + $0x18] sm:$0xff] %vm1668, %v1740
      %1833 = vst.msk [vmem:[%s594 + $0x80] sm:$0xff] %vm1668, %v1742
      %1834 = vst.msk [vmem:[%s594 + $0x88] sm:$0xff] %vm1668, %v1744
      %1835 = vst.msk [vmem:[%s594 + $0x90] sm:$0xff] %vm1668, %v1746
      %1836 = vst.msk [vmem:[%s594 + $0x98] sm:$0xff] %vm1668, %v1748
      %1837 = vst.msk [vmem:[%s594 + $0x100] sm:$0xff] %vm1668, %v1750
      %1838 = vst.msk [vmem:[%s594 + $0x108] sm:$0xff] %vm1668, %v1752
      %1839 = vst.msk [vmem:[%s594 + $0x110] sm:$0xff] %vm1668, %v1754
      %1840 = vst.msk [vmem:[%s594 + $0x118] sm:$0xff] %vm1668, %v1756
      %1841 = vst.msk [vmem:[%s594 + $0x180] sm:$0xff] %vm1668, %v1758
      %1842 = vst.msk [vmem:[%s594 + $0x188] sm:$0xff] %vm1668, %v1760
      %1843 = vst.msk [vmem:[%s594 + $0x190] sm:$0xff] %vm1668, %v1762
      %1844 = vst.msk [vmem:[%s594 + $0x198] sm:$0xff] %vm1668, %v1764
      %1845 = vst.msk [vmem:[%s594 + $0x200] sm:$0xff] %vm1668, %v1766
      %1846 = vst.msk [vmem:[%s594 + $0x208] sm:$0xff] %vm1668, %v1768
      %1847 = vst.msk [vmem:[%s594 + $0x210] sm:$0xff] %vm1668, %v1770
      %1848 = vst.msk [vmem:[%s594 + $0x218] sm:$0xff] %vm1668, %v1772
      %1849 = vst.msk [vmem:[%s594 + $0x280] sm:$0xff] %vm1668, %v1774
      %1850 = vst.msk [vmem:[%s594 + $0x288] sm:$0xff] %vm1668, %v1776
      %1851 = vst.msk [vmem:[%s594 + $0x290] sm:$0xff] %vm1668, %v1778
      %1852 = vst.msk [vmem:[%s594 + $0x298] sm:$0xff] %vm1668, %v1780
      %1853 = vst.msk [vmem:[%s594 + $0x300] sm:$0xff] %vm1668, %v1782
      %1854 = vst.msk [vmem:[%s594 + $0x308] sm:$0xff] %vm1668, %v1784
      %1855 = vst.msk [vmem:[%s594 + $0x310] sm:$0xff] %vm1668, %v1786
      %1856 = vst.msk [vmem:[%s594 + $0x318] sm:$0xff] %vm1668, %v1788
      %1857 = vst.msk [vmem:[%s594 + $0x380] sm:$0xff] %vm1668, %v1790
      %1858 = vst.msk [vmem:[%s594 + $0x388] sm:$0xff] %vm1668, %v1792
      %1859 = vst.msk [vmem:[%s594 + $0x390] sm:$0xff] %vm1668, %v1794
      %1860 = vst.msk [vmem:[%s594 + $0x398] sm:$0xff] %vm1668, %v1796
      %1861 = vrot.lane.b32.xlu0 %v1541, 64
      %v1862 = vpop.permute.xlu0 %1861
      %1863 = vrot.lane.b32.xlu0 %v1544, 64
      %v1864 = vpop.permute.xlu0 %1863
      %1865 = vrot.lane.b32.xlu0 %v1547, 64
      %v1866 = vpop.permute.xlu0 %1865
      %1867 = vrot.lane.b32.xlu0 %v1550, 64
      %v1868 = vpop.permute.xlu0 %1867
      %1869 = vrot.lane.b32.xlu0 %v1553, 64
      %v1870 = vpop.permute.xlu0 %1869
      %1871 = vrot.lane.b32.xlu0 %v1556, 64
      %v1872 = vpop.permute.xlu0 %1871
      %1873 = vrot.lane.b32.xlu0 %v1559, 64
      %v1874 = vpop.permute.xlu0 %1873
      %1875 = vrot.lane.b32.xlu0 %v1562, 64
      %v1876 = vpop.permute.xlu0 %1875
      %1877 = vrot.lane.b32.xlu0 %v1565, 64
      %v1878 = vpop.permute.xlu0 %1877
      %1879 = vrot.lane.b32.xlu0 %v1568, 64
      %v1880 = vpop.permute.xlu0 %1879
      %1881 = vrot.lane.b32.xlu0 %v1571, 64
      %v1882 = vpop.permute.xlu0 %1881
      %1883 = vrot.lane.b32.xlu0 %v1574, 64
      %v1884 = vpop.permute.xlu0 %1883
      %1885 = vrot.lane.b32.xlu0 %v1577, 64
      %v1886 = vpop.permute.xlu0 %1885
      %1887 = vrot.lane.b32.xlu0 %v1580, 64
      %v1888 = vpop.permute.xlu0 %1887
      %1889 = vrot.lane.b32.xlu0 %v1583, 64
      %v1890 = vpop.permute.xlu0 %1889
      %1891 = vrot.lane.b32.xlu0 %v1586, 64
      %v1892 = vpop.permute.xlu0 %1891
      %1893 = vrot.lane.b32.xlu0 %v1589, 64
      %v1894 = vpop.permute.xlu0 %1893
      %1895 = vrot.lane.b32.xlu0 %v1592, 64
      %v1896 = vpop.permute.xlu0 %1895
      %1897 = vrot.lane.b32.xlu0 %v1595, 64
      %v1898 = vpop.permute.xlu0 %1897
      %1899 = vrot.lane.b32.xlu0 %v1598, 64
      %v1900 = vpop.permute.xlu0 %1899
      %1901 = vrot.lane.b32.xlu0 %v1601, 64
      %v1902 = vpop.permute.xlu0 %1901
      %1903 = vrot.lane.b32.xlu0 %v1604, 64
      %v1904 = vpop.permute.xlu0 %1903
      %1905 = vrot.lane.b32.xlu0 %v1607, 64
      %v1906 = vpop.permute.xlu0 %1905
      %1907 = vrot.lane.b32.xlu0 %v1610, 64
      %v1908 = vpop.permute.xlu0 %1907
      %1909 = vrot.lane.b32.xlu0 %v1613, 64
      %v1910 = vpop.permute.xlu0 %1909
      %1911 = vrot.lane.b32.xlu0 %v1616, 64
      %v1912 = vpop.permute.xlu0 %1911
      %1913 = vrot.lane.b32.xlu0 %v1619, 64
      %v1914 = vpop.permute.xlu0 %1913
      %1915 = vrot.lane.b32.xlu0 %v1622, 64
      %v1916 = vpop.permute.xlu0 %1915
      %1917 = vrot.lane.b32.xlu0 %v1625, 64
      %v1918 = vpop.permute.xlu0 %1917
      %1919 = vrot.lane.b32.xlu0 %v1628, 64
      %v1920 = vpop.permute.xlu0 %1919
      %1921 = vrot.lane.b32.xlu0 %v1631, 64
      %v1922 = vpop.permute.xlu0 %1921
      %1923 = vrot.lane.b32.xlu0 %v1634, 64
      %v1924 = vpop.permute.xlu0 %1923
      %1957 = vst.msk [vmem:[%s601] sm:$0xff] %vm1668, %v1862
      %1958 = vst.msk [vmem:[%s601 + $0x8] sm:$0xff] %vm1668, %v1864
      %1959 = vst.msk [vmem:[%s601 + $0x10] sm:$0xff] %vm1668, %v1866
      %1960 = vst.msk [vmem:[%s601 + $0x18] sm:$0xff] %vm1668, %v1868
      %1961 = vst.msk [vmem:[%s601 + $0x80] sm:$0xff] %vm1668, %v1870
      %1962 = vst.msk [vmem:[%s601 + $0x88] sm:$0xff] %vm1668, %v1872
      %1963 = vst.msk [vmem:[%s601 + $0x90] sm:$0xff] %vm1668, %v1874
      %1964 = vst.msk [vmem:[%s601 + $0x98] sm:$0xff] %vm1668, %v1876
      %1965 = vst.msk [vmem:[%s601 + $0x100] sm:$0xff] %vm1668, %v1878
      %1966 = vst.msk [vmem:[%s601 + $0x108] sm:$0xff] %vm1668, %v1880
      %1967 = vst.msk [vmem:[%s601 + $0x110] sm:$0xff] %vm1668, %v1882
      %1968 = vst.msk [vmem:[%s601 + $0x118] sm:$0xff] %vm1668, %v1884
      %1969 = vst.msk [vmem:[%s601 + $0x180] sm:$0xff] %vm1668, %v1886
      %1970 = vst.msk [vmem:[%s601 + $0x188] sm:$0xff] %vm1668, %v1888
      %1971 = vst.msk [vmem:[%s601 + $0x190] sm:$0xff] %vm1668, %v1890
      %1972 = vst.msk [vmem:[%s601 + $0x198] sm:$0xff] %vm1668, %v1892
      %1973 = vst.msk [vmem:[%s601 + $0x200] sm:$0xff] %vm1668, %v1894
      %1974 = vst.msk [vmem:[%s601 + $0x208] sm:$0xff] %vm1668, %v1896
      %1975 = vst.msk [vmem:[%s601 + $0x210] sm:$0xff] %vm1668, %v1898
      %1976 = vst.msk [vmem:[%s601 + $0x218] sm:$0xff] %vm1668, %v1900
      %1977 = vst.msk [vmem:[%s601 + $0x280] sm:$0xff] %vm1668, %v1902
      %1978 = vst.msk [vmem:[%s601 + $0x288] sm:$0xff] %vm1668, %v1904
      %1979 = vst.msk [vmem:[%s601 + $0x290] sm:$0xff] %vm1668, %v1906
      %1980 = vst.msk [vmem:[%s601 + $0x298] sm:$0xff] %vm1668, %v1908
      %1981 = vst.msk [vmem:[%s601 + $0x300] sm:$0xff] %vm1668, %v1910
      %1982 = vst.msk [vmem:[%s601 + $0x308] sm:$0xff] %vm1668, %v1912
      %1983 = vst.msk [vmem:[%s601 + $0x310] sm:$0xff] %vm1668, %v1914
      %1984 = vst.msk [vmem:[%s601 + $0x318] sm:$0xff] %vm1668, %v1916
      %1985 = vst.msk [vmem:[%s601 + $0x380] sm:$0xff] %vm1668, %v1918
      %1986 = vst.msk [vmem:[%s601 + $0x388] sm:$0xff] %vm1668, %v1920
      %1987 = vst.msk [vmem:[%s601 + $0x390] sm:$0xff] %vm1668, %v1922
      %1988 = vst.msk [vmem:[%s601 + $0x398] sm:$0xff] %vm1668, %v1924
      %v1989 = vld [vmem:[%s7] sm:$0xff]
      %v1990 = vld [vmem:[%s7 + $0x8] sm:$0xff]
      %v1991 = vld [vmem:[%s7 + $0x10] sm:$0xff]
      %v1992 = vld [vmem:[%s7 + $0x18] sm:$0xff]
      %v1994 = vsel %vm1668, %v1636, 0
      %v1997 = vsel %vm1668, %v1637, 0
      %v2000 = vsel %vm1668, %v1638, 0
      %v2003 = vsel %vm1668, %v1639, 0
      %v2005 = vsel %vm1668, %v1734, 0
      %v2007 = vsel %vm1668, %v1736, 0
      %v2009 = vsel %vm1668, %v1738, 0
      %v2011 = vsel %vm1668, %v1740, 0
      %2013 = vmatpush.xpose.msra.mxu0 0.0
      %2014 = vmatpush.xpose.msra.mxu0 0.0
      %2015 = vmatpush.xpose.msra.mxu0 0.0
      %2016 = vmatpush.xpose.msra.mxu0 0.0
      %2017 = vmatpush.xpose.msra.mxu0 0.0
      %2018 = vmatpush.xpose.msra.mxu0 0.0
      %2019 = vmatpush.xpose.msra.mxu0 0.0
      %2020 = vmatpush.xpose.msra.mxu0 0.0
      %2021 = vmatpush.xpose.msra.mxu0 0.0
      %2022 = vmatpush.xpose.msra.mxu0 0.0
      %2023 = vmatpush.xpose.msra.mxu0 0.0
      %2024 = vmatpush.xpose.msra.mxu0 0.0
      %2025 = vmatpush.xpose.msra.mxu0 %v2011
      %2026 = vmatpush.xpose.msra.mxu0 %v2009
      %2027 = vmatpush.xpose.msra.mxu0 %v2007
      %2028 = vmatpush.xpose.msra.mxu0 %v2005
      %2029 = vmatmul.f32.gmra.mxu0 %v1994
      %v2030 = vpop.f32.mrf.mxu0
      %v2031 = vadd.f32 %v1989, %v2030
      %2032 = vmatmul.f32.gmra.mxu0 %v1997
      %v2033 = vpop.f32.mrf.mxu0
      %v2034 = vadd.f32 %v1990, %v2033
      %2035 = vmatmul.f32.gmra.mxu0 %v2000
      %v2036 = vpop.f32.mrf.mxu0
      %v2037 = vadd.f32 %v1991, %v2036
      %2038 = vmatmul.f32.gmra.mxu0 %v2003
      %v2039 = vpop.f32.mrf.mxu0
      %v2040 = vadd.f32 %v1992, %v2039
      %2041 = vdwg.mxu0
      %v2043 = vsel %vm1668, %v1640, 0
      %v2046 = vsel %vm1668, %v1641, 0
      %v2049 = vsel %vm1668, %v1642, 0
      %v2052 = vsel %vm1668, %v1643, 0
      %v2054 = vsel %vm1668, %v1742, 0
      %v2056 = vsel %vm1668, %v1744, 0
      %v2058 = vsel %vm1668, %v1746, 0
      %v2060 = vsel %vm1668, %v1748, 0
      %2062 = vmatpush.xpose.msra.mxu0 0.0
      %2063 = vmatpush.xpose.msra.mxu0 0.0
      %2064 = vmatpush.xpose.msra.mxu0 0.0
      %2065 = vmatpush.xpose.msra.mxu0 0.0
      %2066 = vmatpush.xpose.msra.mxu0 0.0
      %2067 = vmatpush.xpose.msra.mxu0 0.0
      %2068 = vmatpush.xpose.msra.mxu0 0.0
      %2069 = vmatpush.xpose.msra.mxu0 0.0
      %2070 = vmatpush.xpose.msra.mxu0 0.0
      %2071 = vmatpush.xpose.msra.mxu0 0.0
      %2072 = vmatpush.xpose.msra.mxu0 0.0
      %2073 = vmatpush.xpose.msra.mxu0 0.0
      %2074 = vmatpush.xpose.msra.mxu0 %v2060
      %2075 = vmatpush.xpose.msra.mxu0 %v2058
      %2076 = vmatpush.xpose.msra.mxu0 %v2056
      %2077 = vmatpush.xpose.msra.mxu0 %v2054
      %2078 = vmatmul.f32.gmra.mxu0 %v2043
      %v2079 = vpop.f32.mrf.mxu0
      %v2080 = vadd.f32 %v1989, %v2079
      %2081 = vmatmul.f32.gmra.mxu0 %v2046
      %v2082 = vpop.f32.mrf.mxu0
      %v2083 = vadd.f32 %v1990, %v2082
      %2084 = vmatmul.f32.gmra.mxu0 %v2049
      %v2085 = vpop.f32.mrf.mxu0
      %v2086 = vadd.f32 %v1991, %v2085
      %2087 = vmatmul.f32.gmra.mxu0 %v2052
      %v2088 = vpop.f32.mrf.mxu0
      %v2089 = vadd.f32 %v1992, %v2088
      %2090 = vdwg.mxu0
      %v2092 = vsel %vm1668, %v1644, 0
      %v2095 = vsel %vm1668, %v1645, 0
      %v2098 = vsel %vm1668, %v1646, 0
      %v2101 = vsel %vm1668, %v1647, 0
      %v2103 = vsel %vm1668, %v1750, 0
      %v2105 = vsel %vm1668, %v1752, 0
      %v2107 = vsel %vm1668, %v1754, 0
      %v2109 = vsel %vm1668, %v1756, 0
      %2111 = vmatpush.xpose.msra.mxu0 0.0
      %2112 = vmatpush.xpose.msra.mxu0 0.0
      %2113 = vmatpush.xpose.msra.mxu0 0.0
      %2114 = vmatpush.xpose.msra.mxu0 0.0
      %2115 = vmatpush.xpose.msra.mxu0 0.0
      %2116 = vmatpush.xpose.msra.mxu0 0.0
      %2117 = vmatpush.xpose.msra.mxu0 0.0
      %2118 = vmatpush.xpose.msra.mxu0 0.0
      %2119 = vmatpush.xpose.msra.mxu0 0.0
      %2120 = vmatpush.xpose.msra.mxu0 0.0
      %2121 = vmatpush.xpose.msra.mxu0 0.0
      %2122 = vmatpush.xpose.msra.mxu0 0.0
      %2123 = vmatpush.xpose.msra.mxu0 %v2109
      %2124 = vmatpush.xpose.msra.mxu0 %v2107
      %2125 = vmatpush.xpose.msra.mxu0 %v2105
      %2126 = vmatpush.xpose.msra.mxu0 %v2103
      %2127 = vmatmul.f32.gmra.mxu0 %v2092
      %v2128 = vpop.f32.mrf.mxu0
      %v2129 = vadd.f32 %v1989, %v2128
      %2130 = vmatmul.f32.gmra.mxu0 %v2095
      %v2131 = vpop.f32.mrf.mxu0
      %v2132 = vadd.f32 %v1990, %v2131
      %2133 = vmatmul.f32.gmra.mxu0 %v2098
      %v2134 = vpop.f32.mrf.mxu0
      %v2135 = vadd.f32 %v1991, %v2134
      %2136 = vmatmul.f32.gmra.mxu0 %v2101
      %v2137 = vpop.f32.mrf.mxu0
      %v2138 = vadd.f32 %v1992, %v2137
      %2139 = vdwg.mxu0
      %v2141 = vsel %vm1668, %v1648, 0
      %v2144 = vsel %vm1668, %v1649, 0
      %v2147 = vsel %vm1668, %v1650, 0
      %v2150 = vsel %vm1668, %v1651, 0
      %v2152 = vsel %vm1668, %v1758, 0
      %v2154 = vsel %vm1668, %v1760, 0
      %v2156 = vsel %vm1668, %v1762, 0
      %v2158 = vsel %vm1668, %v1764, 0
      %2160 = vmatpush.xpose.msra.mxu0 0.0
      %2161 = vmatpush.xpose.msra.mxu0 0.0
      %2162 = vmatpush.xpose.msra.mxu0 0.0
      %2163 = vmatpush.xpose.msra.mxu0 0.0
      %2164 = vmatpush.xpose.msra.mxu0 0.0
      %2165 = vmatpush.xpose.msra.mxu0 0.0
      %2166 = vmatpush.xpose.msra.mxu0 0.0
      %2167 = vmatpush.xpose.msra.mxu0 0.0
      %2168 = vmatpush.xpose.msra.mxu0 0.0
      %2169 = vmatpush.xpose.msra.mxu0 0.0
      %2170 = vmatpush.xpose.msra.mxu0 0.0
      %2171 = vmatpush.xpose.msra.mxu0 0.0
      %2172 = vmatpush.xpose.msra.mxu0 %v2158
      %2173 = vmatpush.xpose.msra.mxu0 %v2156
      %2174 = vmatpush.xpose.msra.mxu0 %v2154
      %2175 = vmatpush.xpose.msra.mxu0 %v2152
      %2176 = vmatmul.f32.gmra.mxu0 %v2141
      %v2177 = vpop.f32.mrf.mxu0
      %v2178 = vadd.f32 %v1989, %v2177
      %2179 = vmatmul.f32.gmra.mxu0 %v2144
      %v2180 = vpop.f32.mrf.mxu0
      %v2181 = vadd.f32 %v1990, %v2180
      %2182 = vmatmul.f32.gmra.mxu0 %v2147
      %v2183 = vpop.f32.mrf.mxu0
      %v2184 = vadd.f32 %v1991, %v2183
      %2185 = vmatmul.f32.gmra.mxu0 %v2150
      %v2186 = vpop.f32.mrf.mxu0
      %v2187 = vadd.f32 %v1992, %v2186
      %2188 = vdwg.mxu0
      %v2190 = vsel %vm1668, %v1652, 0
      %v2193 = vsel %vm1668, %v1653, 0
      %v2196 = vsel %vm1668, %v1654, 0
      %v2199 = vsel %vm1668, %v1655, 0
      %v2201 = vsel %vm1668, %v1766, 0
      %v2203 = vsel %vm1668, %v1768, 0
      %v2205 = vsel %vm1668, %v1770, 0
      %v2207 = vsel %vm1668, %v1772, 0
      %2209 = vmatpush.xpose.msra.mxu0 0.0
      %2210 = vmatpush.xpose.msra.mxu0 0.0
      %2211 = vmatpush.xpose.msra.mxu0 0.0
      %2212 = vmatpush.xpose.msra.mxu0 0.0
      %2213 = vmatpush.xpose.msra.mxu0 0.0
      %2214 = vmatpush.xpose.msra.mxu0 0.0
      %2215 = vmatpush.xpose.msra.mxu0 0.0
      %2216 = vmatpush.xpose.msra.mxu0 0.0
      %2217 = vmatpush.xpose.msra.mxu0 0.0
      %2218 = vmatpush.xpose.msra.mxu0 0.0
      %2219 = vmatpush.xpose.msra.mxu0 0.0
      %2220 = vmatpush.xpose.msra.mxu0 0.0
      %2221 = vmatpush.xpose.msra.mxu0 %v2207
      %2222 = vmatpush.xpose.msra.mxu0 %v2205
      %2223 = vmatpush.xpose.msra.mxu0 %v2203
      %2224 = vmatpush.xpose.msra.mxu0 %v2201
      %2225 = vmatmul.f32.gmra.mxu0 %v2190
      %v2226 = vpop.f32.mrf.mxu0
      %v2227 = vadd.f32 %v1989, %v2226
      %2228 = vmatmul.f32.gmra.mxu0 %v2193
      %v2229 = vpop.f32.mrf.mxu0
      %v2230 = vadd.f32 %v1990, %v2229
      %2231 = vmatmul.f32.gmra.mxu0 %v2196
      %v2232 = vpop.f32.mrf.mxu0
      %v2233 = vadd.f32 %v1991, %v2232
      %2234 = vmatmul.f32.gmra.mxu0 %v2199
      %v2235 = vpop.f32.mrf.mxu0
      %v2236 = vadd.f32 %v1992, %v2235
      %2237 = vdwg.mxu0
      %v2239 = vsel %vm1668, %v1656, 0
      %v2242 = vsel %vm1668, %v1657, 0
      %v2245 = vsel %vm1668, %v1658, 0
      %v2248 = vsel %vm1668, %v1659, 0
      %v2250 = vsel %vm1668, %v1774, 0
      %v2252 = vsel %vm1668, %v1776, 0
      %v2254 = vsel %vm1668, %v1778, 0
      %v2256 = vsel %vm1668, %v1780, 0
      %2258 = vmatpush.xpose.msra.mxu0 0.0
      %2259 = vmatpush.xpose.msra.mxu0 0.0
      %2260 = vmatpush.xpose.msra.mxu0 0.0
      %2261 = vmatpush.xpose.msra.mxu0 0.0
      %2262 = vmatpush.xpose.msra.mxu0 0.0
      %2263 = vmatpush.xpose.msra.mxu0 0.0
      %2264 = vmatpush.xpose.msra.mxu0 0.0
      %2265 = vmatpush.xpose.msra.mxu0 0.0
      %2266 = vmatpush.xpose.msra.mxu0 0.0
      %2267 = vmatpush.xpose.msra.mxu0 0.0
      %2268 = vmatpush.xpose.msra.mxu0 0.0
      %2269 = vmatpush.xpose.msra.mxu0 0.0
      %2270 = vmatpush.xpose.msra.mxu0 %v2256
      %2271 = vmatpush.xpose.msra.mxu0 %v2254
      %2272 = vmatpush.xpose.msra.mxu0 %v2252
      %2273 = vmatpush.xpose.msra.mxu0 %v2250
      %2274 = vmatmul.f32.gmra.mxu0 %v2239
      %v2275 = vpop.f32.mrf.mxu0
      %v2276 = vadd.f32 %v1989, %v2275
      %2277 = vmatmul.f32.gmra.mxu0 %v2242
      %v2278 = vpop.f32.mrf.mxu0
      %v2279 = vadd.f32 %v1990, %v2278
      %2280 = vmatmul.f32.gmra.mxu0 %v2245
      %v2281 = vpop.f32.mrf.mxu0
      %v2282 = vadd.f32 %v1991, %v2281
      %2283 = vmatmul.f32.gmra.mxu0 %v2248
      %v2284 = vpop.f32.mrf.mxu0
      %v2285 = vadd.f32 %v1992, %v2284
      %2286 = vdwg.mxu0
      %v2288 = vsel %vm1668, %v1660, 0
      %v2291 = vsel %vm1668, %v1661, 0
      %v2294 = vsel %vm1668, %v1662, 0
      %v2297 = vsel %vm1668, %v1663, 0
      %v2299 = vsel %vm1668, %v1782, 0
      %v2301 = vsel %vm1668, %v1784, 0
      %v2303 = vsel %vm1668, %v1786, 0
      %v2305 = vsel %vm1668, %v1788, 0
      %2307 = vmatpush.xpose.msra.mxu0 0.0
      %2308 = vmatpush.xpose.msra.mxu0 0.0
      %2309 = vmatpush.xpose.msra.mxu0 0.0
      %2310 = vmatpush.xpose.msra.mxu0 0.0
      %2311 = vmatpush.xpose.msra.mxu0 0.0
      %2312 = vmatpush.xpose.msra.mxu0 0.0
      %2313 = vmatpush.xpose.msra.mxu0 0.0
      %2314 = vmatpush.xpose.msra.mxu0 0.0
      %2315 = vmatpush.xpose.msra.mxu0 0.0
      %2316 = vmatpush.xpose.msra.mxu0 0.0
      %2317 = vmatpush.xpose.msra.mxu0 0.0
      %2318 = vmatpush.xpose.msra.mxu0 0.0
      %2319 = vmatpush.xpose.msra.mxu0 %v2305
      %2320 = vmatpush.xpose.msra.mxu0 %v2303
      %2321 = vmatpush.xpose.msra.mxu0 %v2301
      %2322 = vmatpush.xpose.msra.mxu0 %v2299
      %2323 = vmatmul.f32.gmra.mxu0 %v2288
      %v2324 = vpop.f32.mrf.mxu0
      %v2325 = vadd.f32 %v1989, %v2324
      %2326 = vmatmul.f32.gmra.mxu0 %v2291
      %v2327 = vpop.f32.mrf.mxu0
      %v2328 = vadd.f32 %v1990, %v2327
      %2329 = vmatmul.f32.gmra.mxu0 %v2294
      %v2330 = vpop.f32.mrf.mxu0
      %v2331 = vadd.f32 %v1991, %v2330
      %2332 = vmatmul.f32.gmra.mxu0 %v2297
      %v2333 = vpop.f32.mrf.mxu0
      %v2334 = vadd.f32 %v1992, %v2333
      %2335 = vdwg.mxu0
      %v2337 = vsel %vm1668, %v1664, 0
      %v2340 = vsel %vm1668, %v1665, 0
      %v2343 = vsel %vm1668, %v1666, 0
      %v2346 = vsel %vm1668, %v1667, 0
      %v2348 = vsel %vm1668, %v1790, 0
      %v2350 = vsel %vm1668, %v1792, 0
      %v2352 = vsel %vm1668, %v1794, 0
      %v2354 = vsel %vm1668, %v1796, 0
      %2356 = vmatpush.xpose.msra.mxu0 0.0
      %2357 = vmatpush.xpose.msra.mxu0 0.0
      %2358 = vmatpush.xpose.msra.mxu0 0.0
      %2359 = vmatpush.xpose.msra.mxu0 0.0
      %2360 = vmatpush.xpose.msra.mxu0 0.0
      %2361 = vmatpush.xpose.msra.mxu0 0.0
      %2362 = vmatpush.xpose.msra.mxu0 0.0
      %2363 = vmatpush.xpose.msra.mxu0 0.0
      %2364 = vmatpush.xpose.msra.mxu0 0.0
      %2365 = vmatpush.xpose.msra.mxu0 0.0
      %2366 = vmatpush.xpose.msra.mxu0 0.0
      %2367 = vmatpush.xpose.msra.mxu0 0.0
      %2368 = vmatpush.xpose.msra.mxu0 %v2354
      %2369 = vmatpush.xpose.msra.mxu0 %v2352
      %2370 = vmatpush.xpose.msra.mxu0 %v2350
      %2371 = vmatpush.xpose.msra.mxu0 %v2348
      %2372 = vmatmul.f32.gmra.mxu0 %v2337
      %v2373 = vpop.f32.mrf.mxu0
      %v2374 = vadd.f32 %v1989, %v2373
      %2375 = vmatmul.f32.gmra.mxu0 %v2340
      %v2376 = vpop.f32.mrf.mxu0
      %v2377 = vadd.f32 %v1990, %v2376
      %2378 = vmatmul.f32.gmra.mxu0 %v2343
      %v2379 = vpop.f32.mrf.mxu0
      %v2380 = vadd.f32 %v1991, %v2379
      %2381 = vmatmul.f32.gmra.mxu0 %v2346
      %v2382 = vpop.f32.mrf.mxu0
      %v2383 = vadd.f32 %v1992, %v2382
      %2384 = vdwg.mxu0
      %v2385 = vsel %vm635, %v2031, -inf
      %2386 = vmax.xlane.f32.xlu0 %v2385
      %v2387 = vpop.xlane.xlu0 %2386
      %v2388 = vsel %vm635, %v2034, -inf
      %2389 = vmax.xlane.f32.xlu0 %v2388
      %v2390 = vpop.xlane.xlu0 %2389
      %v2391 = vsel %vm635, %v2037, -inf
      %2392 = vmax.xlane.f32.xlu0 %v2391
      %v2393 = vpop.xlane.xlu0 %2392
      %v2394 = vsel %vm635, %v2040, -inf
      %2395 = vmax.xlane.f32.xlu0 %v2394
      %v2396 = vpop.xlane.xlu0 %2395
      %v2397 = vsel %vm635, %v2080, -inf
      %2398 = vmax.xlane.f32.xlu0 %v2397
      %v2399 = vpop.xlane.xlu0 %2398
      %v2400 = vsel %vm635, %v2083, -inf
      %2401 = vmax.xlane.f32.xlu0 %v2400
      %v2402 = vpop.xlane.xlu0 %2401
      %v2403 = vsel %vm635, %v2086, -inf
      %2404 = vmax.xlane.f32.xlu0 %v2403
      %v2405 = vpop.xlane.xlu0 %2404
      %v2406 = vsel %vm635, %v2089, -inf
      %2407 = vmax.xlane.f32.xlu0 %v2406
      %v2408 = vpop.xlane.xlu0 %2407
      %v2409 = vsel %vm635, %v2129, -inf
      %2410 = vmax.xlane.f32.xlu0 %v2409
      %v2411 = vpop.xlane.xlu0 %2410
      %v2412 = vsel %vm635, %v2132, -inf
      %2413 = vmax.xlane.f32.xlu0 %v2412
      %v2414 = vpop.xlane.xlu0 %2413
      %v2415 = vsel %vm635, %v2135, -inf
      %2416 = vmax.xlane.f32.xlu0 %v2415
      %v2417 = vpop.xlane.xlu0 %2416
      %v2418 = vsel %vm635, %v2138, -inf
      %2419 = vmax.xlane.f32.xlu0 %v2418
      %v2420 = vpop.xlane.xlu0 %2419
      %v2421 = vsel %vm635, %v2178, -inf
      %2422 = vmax.xlane.f32.xlu0 %v2421
      %v2423 = vpop.xlane.xlu0 %2422
      %v2424 = vsel %vm635, %v2181, -inf
      %2425 = vmax.xlane.f32.xlu0 %v2424
      %v2426 = vpop.xlane.xlu0 %2425
      %v2427 = vsel %vm635, %v2184, -inf
      %2428 = vmax.xlane.f32.xlu0 %v2427
      %v2429 = vpop.xlane.xlu0 %2428
      %v2430 = vsel %vm635, %v2187, -inf
      %2431 = vmax.xlane.f32.xlu0 %v2430
      %v2432 = vpop.xlane.xlu0 %2431
      %v2433 = vsel %vm635, %v2227, -inf
      %2434 = vmax.xlane.f32.xlu0 %v2433
      %v2435 = vpop.xlane.xlu0 %2434
      %v2436 = vsel %vm635, %v2230, -inf
      %2437 = vmax.xlane.f32.xlu0 %v2436
      %v2438 = vpop.xlane.xlu0 %2437
      %v2439 = vsel %vm635, %v2233, -inf
      %2440 = vmax.xlane.f32.xlu0 %v2439
      %v2441 = vpop.xlane.xlu0 %2440
      %v2442 = vsel %vm635, %v2236, -inf
      %2443 = vmax.xlane.f32.xlu0 %v2442
      %v2444 = vpop.xlane.xlu0 %2443
      %v2445 = vsel %vm635, %v2276, -inf
      %2446 = vmax.xlane.f32.xlu0 %v2445
      %v2447 = vpop.xlane.xlu0 %2446
      %v2448 = vsel %vm635, %v2279, -inf
      %2449 = vmax.xlane.f32.xlu0 %v2448
      %v2450 = vpop.xlane.xlu0 %2449
      %v2451 = vsel %vm635, %v2282, -inf
      %2452 = vmax.xlane.f32.xlu0 %v2451
      %v2453 = vpop.xlane.xlu0 %2452
      %v2454 = vsel %vm635, %v2285, -inf
      %2455 = vmax.xlane.f32.xlu0 %v2454
      %v2456 = vpop.xlane.xlu0 %2455
      %v2457 = vsel %vm635, %v2325, -inf
      %2458 = vmax.xlane.f32.xlu0 %v2457
      %v2459 = vpop.xlane.xlu0 %2458
      %v2460 = vsel %vm635, %v2328, -inf
      %2461 = vmax.xlane.f32.xlu0 %v2460
      %v2462 = vpop.xlane.xlu0 %2461
      %v2463 = vsel %vm635, %v2331, -inf
      %2464 = vmax.xlane.f32.xlu0 %v2463
      %v2465 = vpop.xlane.xlu0 %2464
      %v2466 = vsel %vm635, %v2334, -inf
      %2467 = vmax.xlane.f32.xlu0 %v2466
      %v2468 = vpop.xlane.xlu0 %2467
      %v2469 = vsel %vm635, %v2374, -inf
      %2470 = vmax.xlane.f32.xlu0 %v2469
      %v2471 = vpop.xlane.xlu0 %2470
      %v2472 = vsel %vm635, %v2377, -inf
      %2473 = vmax.xlane.f32.xlu0 %v2472
      %v2474 = vpop.xlane.xlu0 %2473
      %v2475 = vsel %vm635, %v2380, -inf
      %2476 = vmax.xlane.f32.xlu0 %v2475
      %v2477 = vpop.xlane.xlu0 %2476
      %v2478 = vsel %vm635, %v2383, -inf
      %2479 = vmax.xlane.f32.xlu0 %v2478
      %v2480 = vpop.xlane.xlu0 %2479
      %v2481 = vsub.f32 %v2031, %v2387
      %v2482 = vsub.f32 %v2034, %v2390
      %v2483 = vsub.f32 %v2037, %v2393
      %v2484 = vsub.f32 %v2040, %v2396
      %v2485 = vsub.f32 %v2080, %v2399
      %v2486 = vsub.f32 %v2083, %v2402
      %v2487 = vsub.f32 %v2086, %v2405
      %v2488 = vsub.f32 %v2089, %v2408
      %v2489 = vsub.f32 %v2129, %v2411
      %v2490 = vsub.f32 %v2132, %v2414
      %v2491 = vsub.f32 %v2135, %v2417
      %v2492 = vsub.f32 %v2138, %v2420
      %v2493 = vsub.f32 %v2178, %v2423
      %v2494 = vsub.f32 %v2181, %v2426
      %v2495 = vsub.f32 %v2184, %v2429
      %v2496 = vsub.f32 %v2187, %v2432
      %v2497 = vsub.f32 %v2227, %v2435
      %v2498 = vsub.f32 %v2230, %v2438
      %v2499 = vsub.f32 %v2233, %v2441
      %v2500 = vsub.f32 %v2236, %v2444
      %v2501 = vsub.f32 %v2276, %v2447
      %v2502 = vsub.f32 %v2279, %v2450
      %v2503 = vsub.f32 %v2282, %v2453
      %v2504 = vsub.f32 %v2285, %v2456
      %v2505 = vsub.f32 %v2325, %v2459
      %v2506 = vsub.f32 %v2328, %v2462
      %v2507 = vsub.f32 %v2331, %v2465
      %v2508 = vsub.f32 %v2334, %v2468
      %v2509 = vsub.f32 %v2374, %v2471
      %v2510 = vsub.f32 %v2377, %v2474
      %v2511 = vsub.f32 %v2380, %v2477
      %v2512 = vsub.f32 %v2383, %v2480
      %v2513 = vmul.f32 %v2481, 1.442695
      %v2514 = vpow.pop %v2513
      %v2515 = vmul.f32 %v2482, 1.442695
      %v2516 = vpow.pop %v2515
      %v2517 = vmul.f32 %v2483, 1.442695
      %v2518 = vpow.pop %v2517
      %v2519 = vmul.f32 %v2484, 1.442695
      %v2520 = vpow.pop %v2519
      %v2521 = vmul.f32 %v2485, 1.442695
      %v2522 = vpow.pop %v2521
      %v2523 = vmul.f32 %v2486, 1.442695
      %v2524 = vpow.pop %v2523
      %v2525 = vmul.f32 %v2487, 1.442695
      %v2526 = vpow.pop %v2525
      %v2527 = vmul.f32 %v2488, 1.442695
      %v2528 = vpow.pop %v2527
      %v2529 = vmul.f32 %v2489, 1.442695
      %v2530 = vpow.pop %v2529
      %v2531 = vmul.f32 %v2490, 1.442695
      %v2532 = vpow.pop %v2531
      %v2533 = vmul.f32 %v2491, 1.442695
      %v2534 = vpow.pop %v2533
      %v2535 = vmul.f32 %v2492, 1.442695
      %v2536 = vpow.pop %v2535
      %v2537 = vmul.f32 %v2493, 1.442695
      %v2538 = vpow.pop %v2537
      %v2539 = vmul.f32 %v2494, 1.442695
      %v2540 = vpow.pop %v2539
      %v2541 = vmul.f32 %v2495, 1.442695
      %v2542 = vpow.pop %v2541
      %v2543 = vmul.f32 %v2496, 1.442695
      %v2544 = vpow.pop %v2543
      %v2545 = vmul.f32 %v2497, 1.442695
      %v2546 = vpow.pop %v2545
      %v2547 = vmul.f32 %v2498, 1.442695
      %v2548 = vpow.pop %v2547
      %v2549 = vmul.f32 %v2499, 1.442695
      %v2550 = vpow.pop %v2549
      %v2551 = vmul.f32 %v2500, 1.442695
      %v2552 = vpow.pop %v2551
      %v2553 = vmul.f32 %v2501, 1.442695
      %v2554 = vpow.pop %v2553
      %v2555 = vmul.f32 %v2502, 1.442695
      %v2556 = vpow.pop %v2555
      %v2557 = vmul.f32 %v2503, 1.442695
      %v2558 = vpow.pop %v2557
      %v2559 = vmul.f32 %v2504, 1.442695
      %v2560 = vpow.pop %v2559
      %v2561 = vmul.f32 %v2505, 1.442695
      %v2562 = vpow.pop %v2561
      %v2563 = vmul.f32 %v2506, 1.442695
      %v2564 = vpow.pop %v2563
      %v2565 = vmul.f32 %v2507, 1.442695
      %v2566 = vpow.pop %v2565
      %v2567 = vmul.f32 %v2508, 1.442695
      %v2568 = vpow.pop %v2567
      %v2569 = vmul.f32 %v2509, 1.442695
      %v2570 = vpow.pop %v2569
      %v2571 = vmul.f32 %v2510, 1.442695
      %v2572 = vpow.pop %v2571
      %v2573 = vmul.f32 %v2511, 1.442695
      %v2574 = vpow.pop %v2573
      %v2575 = vmul.f32 %v2512, 1.442695
      %v2576 = vpow.pop %v2575
      %v2577 = vsel %vm635, %v2514, 0.0
      %2578 = vadd.xlane.f32.xlu0 %v2577
      %v2579 = vpop.xlane.xlu0 %2578
      %v2580 = vsel %vm635, %v2516, 0.0
      %2581 = vadd.xlane.f32.xlu0 %v2580
      %v2582 = vpop.xlane.xlu0 %2581
      %v2583 = vsel %vm635, %v2518, 0.0
      %2584 = vadd.xlane.f32.xlu0 %v2583
      %v2585 = vpop.xlane.xlu0 %2584
      %v2586 = vsel %vm635, %v2520, 0.0
      %2587 = vadd.xlane.f32.xlu0 %v2586
      %v2588 = vpop.xlane.xlu0 %2587
      %v2589 = vsel %vm635, %v2522, 0.0
      %2590 = vadd.xlane.f32.xlu0 %v2589
      %v2591 = vpop.xlane.xlu0 %2590
      %v2592 = vsel %vm635, %v2524, 0.0
      %2593 = vadd.xlane.f32.xlu0 %v2592
      %v2594 = vpop.xlane.xlu0 %2593
      %v2595 = vsel %vm635, %v2526, 0.0
      %2596 = vadd.xlane.f32.xlu0 %v2595
      %v2597 = vpop.xlane.xlu0 %2596
      %v2598 = vsel %vm635, %v2528, 0.0
      %2599 = vadd.xlane.f32.xlu0 %v2598
      %v2600 = vpop.xlane.xlu0 %2599
      %v2601 = vsel %vm635, %v2530, 0.0
      %2602 = vadd.xlane.f32.xlu0 %v2601
      %v2603 = vpop.xlane.xlu0 %2602
      %v2604 = vsel %vm635, %v2532, 0.0
      %2605 = vadd.xlane.f32.xlu0 %v2604
      %v2606 = vpop.xlane.xlu0 %2605
      %v2607 = vsel %vm635, %v2534, 0.0
      %2608 = vadd.xlane.f32.xlu0 %v2607
      %v2609 = vpop.xlane.xlu0 %2608
      %v2610 = vsel %vm635, %v2536, 0.0
      %2611 = vadd.xlane.f32.xlu0 %v2610
      %v2612 = vpop.xlane.xlu0 %2611
      %v2613 = vsel %vm635, %v2538, 0.0
      %2614 = vadd.xlane.f32.xlu0 %v2613
      %v2615 = vpop.xlane.xlu0 %2614
      %v2616 = vsel %vm635, %v2540, 0.0
      %2617 = vadd.xlane.f32.xlu0 %v2616
      %v2618 = vpop.xlane.xlu0 %2617
      %v2619 = vsel %vm635, %v2542, 0.0
      %2620 = vadd.xlane.f32.xlu0 %v2619
      %v2621 = vpop.xlane.xlu0 %2620
      %v2622 = vsel %vm635, %v2544, 0.0
      %2623 = vadd.xlane.f32.xlu0 %v2622
      %v2624 = vpop.xlane.xlu0 %2623
      %v2625 = vsel %vm635, %v2546, 0.0
      %2626 = vadd.xlane.f32.xlu0 %v2625
      %v2627 = vpop.xlane.xlu0 %2626
      %v2628 = vsel %vm635, %v2548, 0.0
      %2629 = vadd.xlane.f32.xlu0 %v2628
      %v2630 = vpop.xlane.xlu0 %2629
      %v2631 = vsel %vm635, %v2550, 0.0
      %2632 = vadd.xlane.f32.xlu0 %v2631
      %v2633 = vpop.xlane.xlu0 %2632
      %v2634 = vsel %vm635, %v2552, 0.0
      %2635 = vadd.xlane.f32.xlu0 %v2634
      %v2636 = vpop.xlane.xlu0 %2635
      %v2637 = vsel %vm635, %v2554, 0.0
      %2638 = vadd.xlane.f32.xlu0 %v2637
      %v2639 = vpop.xlane.xlu0 %2638
      %v2640 = vsel %vm635, %v2556, 0.0
      %2641 = vadd.xlane.f32.xlu0 %v2640
      %v2642 = vpop.xlane.xlu0 %2641
      %v2643 = vsel %vm635, %v2558, 0.0
      %2644 = vadd.xlane.f32.xlu0 %v2643
      %v2645 = vpop.xlane.xlu0 %2644
      %v2646 = vsel %vm635, %v2560, 0.0
      %2647 = vadd.xlane.f32.xlu0 %v2646
      %v2648 = vpop.xlane.xlu0 %2647
      %v2649 = vsel %vm635, %v2562, 0.0
      %2650 = vadd.xlane.f32.xlu0 %v2649
      %v2651 = vpop.xlane.xlu0 %2650
      %v2652 = vsel %vm635, %v2564, 0.0
      %2653 = vadd.xlane.f32.xlu0 %v2652
      %v2654 = vpop.xlane.xlu0 %2653
      %v2655 = vsel %vm635, %v2566, 0.0
      %2656 = vadd.xlane.f32.xlu0 %v2655
      %v2657 = vpop.xlane.xlu0 %2656
      %v2658 = vsel %vm635, %v2568, 0.0
      %2659 = vadd.xlane.f32.xlu0 %v2658
      %v2660 = vpop.xlane.xlu0 %2659
      %v2661 = vsel %vm635, %v2570, 0.0
      %2662 = vadd.xlane.f32.xlu0 %v2661
      %v2663 = vpop.xlane.xlu0 %2662
      %v2664 = vsel %vm635, %v2572, 0.0
      %2665 = vadd.xlane.f32.xlu0 %v2664
      %v2666 = vpop.xlane.xlu0 %2665
      %v2667 = vsel %vm635, %v2574, 0.0
      %2668 = vadd.xlane.f32.xlu0 %v2667
      %v2669 = vpop.xlane.xlu0 %2668
      %v2670 = vsel %vm635, %v2576, 0.0
      %2671 = vadd.xlane.f32.xlu0 %v2670
      %v2672 = vpop.xlane.xlu0 %2671
      %v2673 = vrcp.pop %v2579
      %v2674 = vrcp.pop %v2582
      %v2675 = vrcp.pop %v2585
      %v2676 = vrcp.pop %v2588
      %v2677 = vrcp.pop %v2591
      %v2678 = vrcp.pop %v2594
      %v2679 = vrcp.pop %v2597
      %v2680 = vrcp.pop %v2600
      %v2681 = vrcp.pop %v2603
      %v2682 = vrcp.pop %v2606
      %v2683 = vrcp.pop %v2609
      %v2684 = vrcp.pop %v2612
      %v2685 = vrcp.pop %v2615
      %v2686 = vrcp.pop %v2618
      %v2687 = vrcp.pop %v2621
      %v2688 = vrcp.pop %v2624
      %v2689 = vrcp.pop %v2627
      %v2690 = vrcp.pop %v2630
      %v2691 = vrcp.pop %v2633
      %v2692 = vrcp.pop %v2636
      %v2693 = vrcp.pop %v2639
      %v2694 = vrcp.pop %v2642
      %v2695 = vrcp.pop %v2645
      %v2696 = vrcp.pop %v2648
      %v2697 = vrcp.pop %v2651
      %v2698 = vrcp.pop %v2654
      %v2699 = vrcp.pop %v2657
      %v2700 = vrcp.pop %v2660
      %v2701 = vrcp.pop %v2663
      %v2702 = vrcp.pop %v2666
      %v2703 = vrcp.pop %v2669
      %v2704 = vrcp.pop %v2672
      %v2705 = vmul.f32 %v2514, %v2673
      %v2706 = vmul.f32 %v2516, %v2674
      %v2707 = vmul.f32 %v2518, %v2675
      %v2708 = vmul.f32 %v2520, %v2676
      %v2709 = vmul.f32 %v2522, %v2677
      %v2710 = vmul.f32 %v2524, %v2678
      %v2711 = vmul.f32 %v2526, %v2679
      %v2712 = vmul.f32 %v2528, %v2680
      %v2713 = vmul.f32 %v2530, %v2681
      %v2714 = vmul.f32 %v2532, %v2682
      %v2715 = vmul.f32 %v2534, %v2683
      %v2716 = vmul.f32 %v2536, %v2684
      %v2717 = vmul.f32 %v2538, %v2685
      %v2718 = vmul.f32 %v2540, %v2686
      %v2719 = vmul.f32 %v2542, %v2687
      %v2720 = vmul.f32 %v2544, %v2688
      %v2721 = vmul.f32 %v2546, %v2689
      %v2722 = vmul.f32 %v2548, %v2690
      %v2723 = vmul.f32 %v2550, %v2691
      %v2724 = vmul.f32 %v2552, %v2692
      %v2725 = vmul.f32 %v2554, %v2693
      %v2726 = vmul.f32 %v2556, %v2694
      %v2727 = vmul.f32 %v2558, %v2695
      %v2728 = vmul.f32 %v2560, %v2696
      %v2729 = vmul.f32 %v2562, %v2697
      %v2730 = vmul.f32 %v2564, %v2698
      %v2731 = vmul.f32 %v2566, %v2699
      %v2732 = vmul.f32 %v2568, %v2700
      %v2733 = vmul.f32 %v2570, %v2701
      %v2734 = vmul.f32 %v2572, %v2702
      %v2735 = vmul.f32 %v2574, %v2703
      %v2736 = vmul.f32 %v2576, %v2704
      %v2738 = vsel %vm635, %v2705, 0
      %v2741 = vsel %vm635, %v2706, 0
      %v2744 = vsel %vm635, %v2707, 0
      %v2747 = vsel %vm635, %v2708, 0
      %2749 = vmatpush.msra.mxu0 0.0
      %2750 = vmatpush.msra.mxu0 0.0
      %2751 = vmatpush.msra.mxu0 0.0
      %2752 = vmatpush.msra.mxu0 0.0
      %2753 = vmatpush.msra.mxu0 0.0
      %2754 = vmatpush.msra.mxu0 0.0
      %2755 = vmatpush.msra.mxu0 0.0
      %2756 = vmatpush.msra.mxu0 0.0
      %2757 = vmatpush.msra.mxu0 0.0
      %2758 = vmatpush.msra.mxu0 0.0
      %2759 = vmatpush.msra.mxu0 0.0
      %2760 = vmatpush.msra.mxu0 0.0
      %2761 = vmatpush.msra.mxu0 %v1868
      %2762 = vmatpush.msra.mxu0 %v1866
      %2763 = vmatpush.msra.mxu0 %v1864
      %2764 = vmatpush.msra.mxu0 %v1862
      %2765 = vmatmul.f32.gmra.mxu0 %v2738
      %v2766 = vpop.f32.mrf.mxu0
      %v2767 = vadd.f32 0.0, %v2766
      %2768 = vmatmul.f32.gmra.mxu0 %v2741
      %v2769 = vpop.f32.mrf.mxu0
      %v2770 = vadd.f32 0.0, %v2769
      %2771 = vmatmul.f32.gmra.mxu0 %v2744
      %v2772 = vpop.f32.mrf.mxu0
      %v2773 = vadd.f32 0.0, %v2772
      %2774 = vmatmul.f32.gmra.mxu0 %v2747
      %v2775 = vpop.f32.mrf.mxu0
      %v2776 = vadd.f32 0.0, %v2775
      %2777 = vdwg.mxu0
      %v2779 = vsel %vm635, %v2709, 0
      %v2782 = vsel %vm635, %v2710, 0
      %v2785 = vsel %vm635, %v2711, 0
      %v2788 = vsel %vm635, %v2712, 0
      %2790 = vmatpush.msra.mxu0 0.0
      %2791 = vmatpush.msra.mxu0 0.0
      %2792 = vmatpush.msra.mxu0 0.0
      %2793 = vmatpush.msra.mxu0 0.0
      %2794 = vmatpush.msra.mxu0 0.0
      %2795 = vmatpush.msra.mxu0 0.0
      %2796 = vmatpush.msra.mxu0 0.0
      %2797 = vmatpush.msra.mxu0 0.0
      %2798 = vmatpush.msra.mxu0 0.0
      %2799 = vmatpush.msra.mxu0 0.0
      %2800 = vmatpush.msra.mxu0 0.0
      %2801 = vmatpush.msra.mxu0 0.0
      %2802 = vmatpush.msra.mxu0 %v1876
      %2803 = vmatpush.msra.mxu0 %v1874
      %2804 = vmatpush.msra.mxu0 %v1872
      %2805 = vmatpush.msra.mxu0 %v1870
      %2806 = vmatmul.f32.gmra.mxu0 %v2779
      %v2807 = vpop.f32.mrf.mxu0
      %v2808 = vadd.f32 0.0, %v2807
      %2809 = vmatmul.f32.gmra.mxu0 %v2782
      %v2810 = vpop.f32.mrf.mxu0
      %v2811 = vadd.f32 0.0, %v2810
      %2812 = vmatmul.f32.gmra.mxu0 %v2785
      %v2813 = vpop.f32.mrf.mxu0
      %v2814 = vadd.f32 0.0, %v2813
      %2815 = vmatmul.f32.gmra.mxu0 %v2788
      %v2816 = vpop.f32.mrf.mxu0
      %v2817 = vadd.f32 0.0, %v2816
      %2818 = vdwg.mxu0
      %v2820 = vsel %vm635, %v2713, 0
      %v2823 = vsel %vm635, %v2714, 0
      %v2826 = vsel %vm635, %v2715, 0
      %v2829 = vsel %vm635, %v2716, 0
      %2831 = vmatpush.msra.mxu0 0.0
      %2832 = vmatpush.msra.mxu0 0.0
      %2833 = vmatpush.msra.mxu0 0.0
      %2834 = vmatpush.msra.mxu0 0.0
      %2835 = vmatpush.msra.mxu0 0.0
      %2836 = vmatpush.msra.mxu0 0.0
      %2837 = vmatpush.msra.mxu0 0.0
      %2838 = vmatpush.msra.mxu0 0.0
      %2839 = vmatpush.msra.mxu0 0.0
      %2840 = vmatpush.msra.mxu0 0.0
      %2841 = vmatpush.msra.mxu0 0.0
      %2842 = vmatpush.msra.mxu0 0.0
      %2843 = vmatpush.msra.mxu0 %v1884
      %2844 = vmatpush.msra.mxu0 %v1882
      %2845 = vmatpush.msra.mxu0 %v1880
      %2846 = vmatpush.msra.mxu0 %v1878
      %2847 = vmatmul.f32.gmra.mxu0 %v2820
      %v2848 = vpop.f32.mrf.mxu0
      %v2849 = vadd.f32 0.0, %v2848
      %2850 = vmatmul.f32.gmra.mxu0 %v2823
      %v2851 = vpop.f32.mrf.mxu0
      %v2852 = vadd.f32 0.0, %v2851
      %2853 = vmatmul.f32.gmra.mxu0 %v2826
      %v2854 = vpop.f32.mrf.mxu0
      %v2855 = vadd.f32 0.0, %v2854
      %2856 = vmatmul.f32.gmra.mxu0 %v2829
      %v2857 = vpop.f32.mrf.mxu0
      %v2858 = vadd.f32 0.0, %v2857
      %2859 = vdwg.mxu0
      %v2861 = vsel %vm635, %v2717, 0
      %v2864 = vsel %vm635, %v2718, 0
      %v2867 = vsel %vm635, %v2719, 0
      %v2870 = vsel %vm635, %v2720, 0
      %2872 = vmatpush.msra.mxu0 0.0
      %2873 = vmatpush.msra.mxu0 0.0
      %2874 = vmatpush.msra.mxu0 0.0
      %2875 = vmatpush.msra.mxu0 0.0
      %2876 = vmatpush.msra.mxu0 0.0
      %2877 = vmatpush.msra.mxu0 0.0
      %2878 = vmatpush.msra.mxu0 0.0
      %2879 = vmatpush.msra.mxu0 0.0
      %2880 = vmatpush.msra.mxu0 0.0
      %2881 = vmatpush.msra.mxu0 0.0
      %2882 = vmatpush.msra.mxu0 0.0
      %2883 = vmatpush.msra.mxu0 0.0
      %2884 = vmatpush.msra.mxu0 %v1892
      %2885 = vmatpush.msra.mxu0 %v1890
      %2886 = vmatpush.msra.mxu0 %v1888
      %2887 = vmatpush.msra.mxu0 %v1886
      %2888 = vmatmul.f32.gmra.mxu0 %v2861
      %v2889 = vpop.f32.mrf.mxu0
      %v2890 = vadd.f32 0.0, %v2889
      %2891 = vmatmul.f32.gmra.mxu0 %v2864
      %v2892 = vpop.f32.mrf.mxu0
      %v2893 = vadd.f32 0.0, %v2892
      %2894 = vmatmul.f32.gmra.mxu0 %v2867
      %v2895 = vpop.f32.mrf.mxu0
      %v2896 = vadd.f32 0.0, %v2895
      %2897 = vmatmul.f32.gmra.mxu0 %v2870
      %v2898 = vpop.f32.mrf.mxu0
      %v2899 = vadd.f32 0.0, %v2898
      %2900 = vdwg.mxu0
      %v2902 = vsel %vm635, %v2721, 0
      %v2905 = vsel %vm635, %v2722, 0
      %v2908 = vsel %vm635, %v2723, 0
      %v2911 = vsel %vm635, %v2724, 0
      %2913 = vmatpush.msra.mxu0 0.0
      %2914 = vmatpush.msra.mxu0 0.0
      %2915 = vmatpush.msra.mxu0 0.0
      %2916 = vmatpush.msra.mxu0 0.0
      %2917 = vmatpush.msra.mxu0 0.0
      %2918 = vmatpush.msra.mxu0 0.0
      %2919 = vmatpush.msra.mxu0 0.0
      %2920 = vmatpush.msra.mxu0 0.0
      %2921 = vmatpush.msra.mxu0 0.0
      %2922 = vmatpush.msra.mxu0 0.0
      %2923 = vmatpush.msra.mxu0 0.0
      %2924 = vmatpush.msra.mxu0 0.0
      %2925 = vmatpush.msra.mxu0 %v1900
      %2926 = vmatpush.msra.mxu0 %v1898
      %2927 = vmatpush.msra.mxu0 %v1896
      %2928 = vmatpush.msra.mxu0 %v1894
      %2929 = vmatmul.f32.gmra.mxu0 %v2902
      %v2930 = vpop.f32.mrf.mxu0
      %v2931 = vadd.f32 0.0, %v2930
      %2932 = vmatmul.f32.gmra.mxu0 %v2905
      %v2933 = vpop.f32.mrf.mxu0
      %v2934 = vadd.f32 0.0, %v2933
      %2935 = vmatmul.f32.gmra.mxu0 %v2908
      %v2936 = vpop.f32.mrf.mxu0
      %v2937 = vadd.f32 0.0, %v2936
      %2938 = vmatmul.f32.gmra.mxu0 %v2911
      %v2939 = vpop.f32.mrf.mxu0
      %v2940 = vadd.f32 0.0, %v2939
      %2941 = vdwg.mxu0
      %v2943 = vsel %vm635, %v2725, 0
      %v2946 = vsel %vm635, %v2726, 0
      %v2949 = vsel %vm635, %v2727, 0
      %v2952 = vsel %vm635, %v2728, 0
      %2954 = vmatpush.msra.mxu0 0.0
      %2955 = vmatpush.msra.mxu0 0.0
      %2956 = vmatpush.msra.mxu0 0.0
      %2957 = vmatpush.msra.mxu0 0.0
      %2958 = vmatpush.msra.mxu0 0.0
      %2959 = vmatpush.msra.mxu0 0.0
      %2960 = vmatpush.msra.mxu0 0.0
      %2961 = vmatpush.msra.mxu0 0.0
      %2962 = vmatpush.msra.mxu0 0.0
      %2963 = vmatpush.msra.mxu0 0.0
      %2964 = vmatpush.msra.mxu0 0.0
      %2965 = vmatpush.msra.mxu0 0.0
      %2966 = vmatpush.msra.mxu0 %v1908
      %2967 = vmatpush.msra.mxu0 %v1906
      %2968 = vmatpush.msra.mxu0 %v1904
      %2969 = vmatpush.msra.mxu0 %v1902
      %2970 = vmatmul.f32.gmra.mxu0 %v2943
      %v2971 = vpop.f32.mrf.mxu0
      %v2972 = vadd.f32 0.0, %v2971
      %2973 = vmatmul.f32.gmra.mxu0 %v2946
      %v2974 = vpop.f32.mrf.mxu0
      %v2975 = vadd.f32 0.0, %v2974
      %2976 = vmatmul.f32.gmra.mxu0 %v2949
      %v2977 = vpop.f32.mrf.mxu0
      %v2978 = vadd.f32 0.0, %v2977
      %2979 = vmatmul.f32.gmra.mxu0 %v2952
      %v2980 = vpop.f32.mrf.mxu0
      %v2981 = vadd.f32 0.0, %v2980
      %2982 = vdwg.mxu0
      %v2984 = vsel %vm635, %v2729, 0
      %v2987 = vsel %vm635, %v2730, 0
      %v2990 = vsel %vm635, %v2731, 0
      %v2993 = vsel %vm635, %v2732, 0
      %2995 = vmatpush.msra.mxu0 0.0
      %2996 = vmatpush.msra.mxu0 0.0
      %2997 = vmatpush.msra.mxu0 0.0
      %2998 = vmatpush.msra.mxu0 0.0
      %2999 = vmatpush.msra.mxu0 0.0
      %3000 = vmatpush.msra.mxu0 0.0
      %3001 = vmatpush.msra.mxu0 0.0
      %3002 = vmatpush.msra.mxu0 0.0
      %3003 = vmatpush.msra.mxu0 0.0
      %3004 = vmatpush.msra.mxu0 0.0
      %3005 = vmatpush.msra.mxu0 0.0
      %3006 = vmatpush.msra.mxu0 0.0
      %3007 = vmatpush.msra.mxu0 %v1916
      %3008 = vmatpush.msra.mxu0 %v1914
      %3009 = vmatpush.msra.mxu0 %v1912
      %3010 = vmatpush.msra.mxu0 %v1910
      %3011 = vmatmul.f32.gmra.mxu0 %v2984
      %v3012 = vpop.f32.mrf.mxu0
      %v3013 = vadd.f32 0.0, %v3012
      %3014 = vmatmul.f32.gmra.mxu0 %v2987
      %v3015 = vpop.f32.mrf.mxu0
      %v3016 = vadd.f32 0.0, %v3015
      %3017 = vmatmul.f32.gmra.mxu0 %v2990
      %v3018 = vpop.f32.mrf.mxu0
      %v3019 = vadd.f32 0.0, %v3018
      %3020 = vmatmul.f32.gmra.mxu0 %v2993
      %v3021 = vpop.f32.mrf.mxu0
      %v3022 = vadd.f32 0.0, %v3021
      %3023 = vdwg.mxu0
      %v3025 = vsel %vm635, %v2733, 0
      %v3028 = vsel %vm635, %v2734, 0
      %v3031 = vsel %vm635, %v2735, 0
      %v3034 = vsel %vm635, %v2736, 0
      %3036 = vmatpush.msra.mxu0 0.0
      %3037 = vmatpush.msra.mxu0 0.0
      %3038 = vmatpush.msra.mxu0 0.0
      %3039 = vmatpush.msra.mxu0 0.0
      %3040 = vmatpush.msra.mxu0 0.0
      %3041 = vmatpush.msra.mxu0 0.0
      %3042 = vmatpush.msra.mxu0 0.0
      %3043 = vmatpush.msra.mxu0 0.0
      %3044 = vmatpush.msra.mxu0 0.0
      %3045 = vmatpush.msra.mxu0 0.0
      %3046 = vmatpush.msra.mxu0 0.0
      %3047 = vmatpush.msra.mxu0 0.0
      %3048 = vmatpush.msra.mxu0 %v1924
      %3049 = vmatpush.msra.mxu0 %v1922
      %3050 = vmatpush.msra.mxu0 %v1920
      %3051 = vmatpush.msra.mxu0 %v1918
      %3052 = vmatmul.f32.gmra.mxu0 %v3025
      %v3053 = vpop.f32.mrf.mxu0
      %v3054 = vadd.f32 0.0, %v3053
      %3055 = vmatmul.f32.gmra.mxu0 %v3028
      %v3056 = vpop.f32.mrf.mxu0
      %v3057 = vadd.f32 0.0, %v3056
      %3058 = vmatmul.f32.gmra.mxu0 %v3031
      %v3059 = vpop.f32.mrf.mxu0
      %v3060 = vadd.f32 0.0, %v3059
      %3061 = vmatmul.f32.gmra.mxu0 %v3034
      %v3062 = vpop.f32.mrf.mxu0
      %v3063 = vadd.f32 0.0, %v3062
      %3064 = vdwg.mxu0
      %v3065 = vld [vmem:[%s5] sm:$0xff]
      %v3067 = vsel %vm1668, %v2767, 0
      %v3070 = vsel %vm1668, %v2770, 0
      %v3073 = vsel %vm1668, %v2773, 0
      %v3076 = vsel %vm1668, %v2776, 0
      %v3079 = vsel %vm1668, %v2808, 0
      %v3082 = vsel %vm1668, %v2811, 0
      %v3085 = vsel %vm1668, %v2814, 0
      %v3088 = vsel %vm1668, %v2817, 0
      %v3091 = vsel %vm1668, %v2849, 0
      %v3094 = vsel %vm1668, %v2852, 0
      %v3097 = vsel %vm1668, %v2855, 0
      %v3100 = vsel %vm1668, %v2858, 0
      %v3103 = vsel %vm1668, %v2890, 0
      %v3106 = vsel %vm1668, %v2893, 0
      %v3109 = vsel %vm1668, %v2896, 0
      %v3112 = vsel %vm1668, %v2899, 0
      %v3115 = vsel %vm1668, %v2931, 0
      %v3118 = vsel %vm1668, %v2934, 0
      %v3121 = vsel %vm1668, %v2937, 0
      %v3124 = vsel %vm1668, %v2940, 0
      %v3127 = vsel %vm1668, %v2972, 0
      %v3130 = vsel %vm1668, %v2975, 0
      %v3133 = vsel %vm1668, %v2978, 0
      %v3136 = vsel %vm1668, %v2981, 0
      %v3139 = vsel %vm1668, %v3013, 0
      %v3142 = vsel %vm1668, %v3016, 0
      %v3145 = vsel %vm1668, %v3019, 0
      %v3148 = vsel %vm1668, %v3022, 0
      %v3151 = vsel %vm1668, %v3054, 0
      %v3154 = vsel %vm1668, %v3057, 0
      %v3157 = vsel %vm1668, %v3060, 0
      %v3160 = vsel %vm1668, %v3063, 0
      %3162 = vmatpush.msra.mxu0 0.0
      %3163 = vmatpush.msra.mxu0 0.0
      %3164 = vmatpush.msra.mxu0 0.0
      %3165 = vmatpush.msra.mxu0 0.0
      %3166 = vmatpush.msra.mxu0 0.0
      %3167 = vmatpush.msra.mxu0 0.0
      %3168 = vmatpush.msra.mxu0 0.0
      %3169 = vmatpush.msra.mxu0 0.0
      %3170 = vmatpush.msra.mxu0 0.0
      %3171 = vmatpush.msra.mxu0 0.0
      %3172 = vmatpush.msra.mxu0 0.0
      %3173 = vmatpush.msra.mxu0 0.0
      %3174 = vmatpush.msra.mxu0 0.0
      %3175 = vmatpush.msra.mxu0 0.0
      %3176 = vmatpush.msra.mxu0 0.0
      %3177 = vmatpush.msra.mxu0 %v3065
      %3178 = vmatmul.f32.gmra.mxu0 %v3067
      %v3179 = vpop.f32.mrf.mxu0
      %v3180 = vadd.f32 0.0, %v3179
      %3181 = vmatmul.f32.gmra.mxu0 %v3070
      %v3182 = vpop.f32.mrf.mxu0
      %v3183 = vadd.f32 0.0, %v3182
      %3184 = vmatmul.f32.gmra.mxu0 %v3073
      %v3185 = vpop.f32.mrf.mxu0
      %v3186 = vadd.f32 0.0, %v3185
      %3187 = vmatmul.f32.gmra.mxu0 %v3076
      %v3188 = vpop.f32.mrf.mxu0
      %v3189 = vadd.f32 0.0, %v3188
      %3190 = vmatmul.f32.gmra.mxu0 %v3079
      %v3191 = vpop.f32.mrf.mxu0
      %v3192 = vadd.f32 0.0, %v3191
      %3193 = vmatmul.f32.gmra.mxu0 %v3082
      %v3194 = vpop.f32.mrf.mxu0
      %v3195 = vadd.f32 0.0, %v3194
      %3196 = vmatmul.f32.gmra.mxu0 %v3085
      %v3197 = vpop.f32.mrf.mxu0
      %v3198 = vadd.f32 0.0, %v3197
      %3199 = vmatmul.f32.gmra.mxu0 %v3088
      %v3200 = vpop.f32.mrf.mxu0
      %v3201 = vadd.f32 0.0, %v3200
      %3202 = vmatmul.f32.gmra.mxu0 %v3091
      %v3203 = vpop.f32.mrf.mxu0
      %v3204 = vadd.f32 0.0, %v3203
      %3205 = vmatmul.f32.gmra.mxu0 %v3094
      %v3206 = vpop.f32.mrf.mxu0
      %v3207 = vadd.f32 0.0, %v3206
      %3208 = vmatmul.f32.gmra.mxu0 %v3097
      %v3209 = vpop.f32.mrf.mxu0
      %v3210 = vadd.f32 0.0, %v3209
      %3211 = vmatmul.f32.gmra.mxu0 %v3100
      %v3212 = vpop.f32.mrf.mxu0
      %v3213 = vadd.f32 0.0, %v3212
      %3214 = vmatmul.f32.gmra.mxu0 %v3103
      %v3215 = vpop.f32.mrf.mxu0
      %v3216 = vadd.f32 0.0, %v3215
      %3217 = vmatmul.f32.gmra.mxu0 %v3106
      %v3218 = vpop.f32.mrf.mxu0
      %v3219 = vadd.f32 0.0, %v3218
      %3220 = vmatmul.f32.gmra.mxu0 %v3109
      %v3221 = vpop.f32.mrf.mxu0
      %v3222 = vadd.f32 0.0, %v3221
      %3223 = vmatmul.f32.gmra.mxu0 %v3112
      %v3224 = vpop.f32.mrf.mxu0
      %v3225 = vadd.f32 0.0, %v3224
      %3226 = vmatmul.f32.gmra.mxu0 %v3115
      %v3227 = vpop.f32.mrf.mxu0
      %v3228 = vadd.f32 0.0, %v3227
      %3229 = vmatmul.f32.gmra.mxu0 %v3118
      %v3230 = vpop.f32.mrf.mxu0
      %v3231 = vadd.f32 0.0, %v3230
      %3232 = vmatmul.f32.gmra.mxu0 %v3121
      %v3233 = vpop.f32.mrf.mxu0
      %v3234 = vadd.f32 0.0, %v3233
      %3235 = vmatmul.f32.gmra.mxu0 %v3124
      %v3236 = vpop.f32.mrf.mxu0
      %v3237 = vadd.f32 0.0, %v3236
      %3238 = vmatmul.f32.gmra.mxu0 %v3127
      %v3239 = vpop.f32.mrf.mxu0
      %v3240 = vadd.f32 0.0, %v3239
      %3241 = vmatmul.f32.gmra.mxu0 %v3130
      %v3242 = vpop.f32.mrf.mxu0
      %v3243 = vadd.f32 0.0, %v3242
      %3244 = vmatmul.f32.gmra.mxu0 %v3133
      %v3245 = vpop.f32.mrf.mxu0
      %v3246 = vadd.f32 0.0, %v3245
      %3247 = vmatmul.f32.gmra.mxu0 %v3136
      %v3248 = vpop.f32.mrf.mxu0
      %v3249 = vadd.f32 0.0, %v3248
      %3250 = vmatmul.f32.gmra.mxu0 %v3139
      %v3251 = vpop.f32.mrf.mxu0
      %v3252 = vadd.f32 0.0, %v3251
      %3253 = vmatmul.f32.gmra.mxu0 %v3142
      %v3254 = vpop.f32.mrf.mxu0
      %v3255 = vadd.f32 0.0, %v3254
      %3256 = vmatmul.f32.gmra.mxu0 %v3145
      %v3257 = vpop.f32.mrf.mxu0
      %v3258 = vadd.f32 0.0, %v3257
      %3259 = vmatmul.f32.gmra.mxu0 %v3148
      %v3260 = vpop.f32.mrf.mxu0
      %v3261 = vadd.f32 0.0, %v3260
      %3262 = vmatmul.f32.gmra.mxu0 %v3151
      %v3263 = vpop.f32.mrf.mxu0
      %v3264 = vadd.f32 0.0, %v3263
      %3265 = vmatmul.f32.gmra.mxu0 %v3154
      %v3266 = vpop.f32.mrf.mxu0
      %v3267 = vadd.f32 0.0, %v3266
      %3268 = vmatmul.f32.gmra.mxu0 %v3157
      %v3269 = vpop.f32.mrf.mxu0
      %v3270 = vadd.f32 0.0, %v3269
      %3271 = vmatmul.f32.gmra.mxu0 %v3160
      %v3272 = vpop.f32.mrf.mxu0
      %v3273 = vadd.f32 0.0, %v3272
      %3274 = vdwg.mxu0
      %v3275 = vadd.f32 %v3180, 0.0
      %v3276 = vadd.f32 %v3183, 0.0
      %v3277 = vadd.f32 %v3186, 0.0
      %v3278 = vadd.f32 %v3189, 0.0
      %v3279 = vadd.f32 %v3192, 0.0
      %v3280 = vadd.f32 %v3195, 0.0
      %v3281 = vadd.f32 %v3198, 0.0
      %v3282 = vadd.f32 %v3201, 0.0
      %v3283 = vadd.f32 %v3204, 0.0
      %v3284 = vadd.f32 %v3207, 0.0
      %v3285 = vadd.f32 %v3210, 0.0
      %v3286 = vadd.f32 %v3213, 0.0
      %v3287 = vadd.f32 %v3216, 0.0
      %v3288 = vadd.f32 %v3219, 0.0
      %v3289 = vadd.f32 %v3222, 0.0
      %v3290 = vadd.f32 %v3225, 0.0
      %v3291 = vadd.f32 %v3228, 0.0
      %v3292 = vadd.f32 %v3231, 0.0
      %v3293 = vadd.f32 %v3234, 0.0
      %v3294 = vadd.f32 %v3237, 0.0
      %v3295 = vadd.f32 %v3240, 0.0
      %v3296 = vadd.f32 %v3243, 0.0
      %v3297 = vadd.f32 %v3246, 0.0
      %v3298 = vadd.f32 %v3249, 0.0
      %v3299 = vadd.f32 %v3252, 0.0
      %v3300 = vadd.f32 %v3255, 0.0
      %v3301 = vadd.f32 %v3258, 0.0
      %v3302 = vadd.f32 %v3261, 0.0
      %v3303 = vadd.f32 %v3264, 0.0
      %v3304 = vadd.f32 %v3267, 0.0
      %v3305 = vadd.f32 %v3270, 0.0
      %v3306 = vadd.f32 %v3273, 0.0
      %3307 = vrot.lane.b32.xlu0 %v1636, 120
      %v3308 = vpop.permute.xlu0 %3307
      %3309 = vrot.lane.b32.xlu0 %v1637, 120
      %v3310 = vpop.permute.xlu0 %3309
      %3311 = vrot.lane.b32.xlu0 %v1638, 120
      %v3312 = vpop.permute.xlu0 %3311
      %3313 = vrot.lane.b32.xlu0 %v1639, 120
      %v3314 = vpop.permute.xlu0 %3313
      %3315 = vrot.lane.b32.xlu0 %v1640, 120
      %v3316 = vpop.permute.xlu0 %3315
      %3317 = vrot.lane.b32.xlu0 %v1641, 120
      %v3318 = vpop.permute.xlu0 %3317
      %3319 = vrot.lane.b32.xlu0 %v1642, 120
      %v3320 = vpop.permute.xlu0 %3319
      %3321 = vrot.lane.b32.xlu0 %v1643, 120
      %v3322 = vpop.permute.xlu0 %3321
      %3323 = vrot.lane.b32.xlu0 %v1644, 120
      %v3324 = vpop.permute.xlu0 %3323
      %3325 = vrot.lane.b32.xlu0 %v1645, 120
      %v3326 = vpop.permute.xlu0 %3325
      %3327 = vrot.lane.b32.xlu0 %v1646, 120
      %v3328 = vpop.permute.xlu0 %3327
      %3329 = vrot.lane.b32.xlu0 %v1647, 120
      %v3330 = vpop.permute.xlu0 %3329
      %3331 = vrot.lane.b32.xlu0 %v1648, 120
      %v3332 = vpop.permute.xlu0 %3331
      %3333 = vrot.lane.b32.xlu0 %v1649, 120
      %v3334 = vpop.permute.xlu0 %3333
      %3335 = vrot.lane.b32.xlu0 %v1650, 120
      %v3336 = vpop.permute.xlu0 %3335
      %3337 = vrot.lane.b32.xlu0 %v1651, 120
      %v3338 = vpop.permute.xlu0 %3337
      %3339 = vrot.lane.b32.xlu0 %v1652, 120
      %v3340 = vpop.permute.xlu0 %3339
      %3341 = vrot.lane.b32.xlu0 %v1653, 120
      %v3342 = vpop.permute.xlu0 %3341
      %3343 = vrot.lane.b32.xlu0 %v1654, 120
      %v3344 = vpop.permute.xlu0 %3343
      %3345 = vrot.lane.b32.xlu0 %v1655, 120
      %v3346 = vpop.permute.xlu0 %3345
      %3347 = vrot.lane.b32.xlu0 %v1656, 120
      %v3348 = vpop.permute.xlu0 %3347
      %3349 = vrot.lane.b32.xlu0 %v1657, 120
      %v3350 = vpop.permute.xlu0 %3349
      %3351 = vrot.lane.b32.xlu0 %v1658, 120
      %v3352 = vpop.permute.xlu0 %3351
      %3353 = vrot.lane.b32.xlu0 %v1659, 120
      %v3354 = vpop.permute.xlu0 %3353
      %3355 = vrot.lane.b32.xlu0 %v1660, 120
      %v3356 = vpop.permute.xlu0 %3355
      %3357 = vrot.lane.b32.xlu0 %v1661, 120
      %v3358 = vpop.permute.xlu0 %3357
      %3359 = vrot.lane.b32.xlu0 %v1662, 120
      %v3360 = vpop.permute.xlu0 %3359
      %3361 = vrot.lane.b32.xlu0 %v1663, 120
      %v3362 = vpop.permute.xlu0 %3361
      %3363 = vrot.lane.b32.xlu0 %v1664, 120
      %v3364 = vpop.permute.xlu0 %3363
      %3365 = vrot.lane.b32.xlu0 %v1665, 120
      %v3366 = vpop.permute.xlu0 %3365
      %3367 = vrot.lane.b32.xlu0 %v1666, 120
      %v3368 = vpop.permute.xlu0 %3367
      %3369 = vrot.lane.b32.xlu0 %v1667, 120
      %v3370 = vpop.permute.xlu0 %3369
      %s3403 = scalar_lea.vmem %s587, 32
      %3404 = vst.msk [vmem:[%s3403] sm:$0xff] %vm1668, %v3308
      %3405 = vst.msk [vmem:[%s3403 + $0x8] sm:$0xff] %vm1668, %v3310
      %3406 = vst.msk [vmem:[%s3403 + $0x10] sm:$0xff] %vm1668, %v3312
      %3407 = vst.msk [vmem:[%s3403 + $0x18] sm:$0xff] %vm1668, %v3314
      %3408 = vst.msk [vmem:[%s3403 + $0x80] sm:$0xff] %vm1668, %v3316
      %3409 = vst.msk [vmem:[%s3403 + $0x88] sm:$0xff] %vm1668, %v3318
      %3410 = vst.msk [vmem:[%s3403 + $0x90] sm:$0xff] %vm1668, %v3320
      %3411 = vst.msk [vmem:[%s3403 + $0x98] sm:$0xff] %vm1668, %v3322
      %3412 = vst.msk [vmem:[%s3403 + $0x100] sm:$0xff] %vm1668, %v3324
      %3413 = vst.msk [vmem:[%s3403 + $0x108] sm:$0xff] %vm1668, %v3326
      %3414 = vst.msk [vmem:[%s3403 + $0x110] sm:$0xff] %vm1668, %v3328
      %3415 = vst.msk [vmem:[%s3403 + $0x118] sm:$0xff] %vm1668, %v3330
      %3416 = vst.msk [vmem:[%s3403 + $0x180] sm:$0xff] %vm1668, %v3332
      %3417 = vst.msk [vmem:[%s3403 + $0x188] sm:$0xff] %vm1668, %v3334
      %3418 = vst.msk [vmem:[%s3403 + $0x190] sm:$0xff] %vm1668, %v3336
      %3419 = vst.msk [vmem:[%s3403 + $0x198] sm:$0xff] %vm1668, %v3338
      %3420 = vst.msk [vmem:[%s3403 + $0x200] sm:$0xff] %vm1668, %v3340
      %3421 = vst.msk [vmem:[%s3403 + $0x208] sm:$0xff] %vm1668, %v3342
      %3422 = vst.msk [vmem:[%s3403 + $0x210] sm:$0xff] %vm1668, %v3344
      %3423 = vst.msk [vmem:[%s3403 + $0x218] sm:$0xff] %vm1668, %v3346
      %3424 = vst.msk [vmem:[%s3403 + $0x280] sm:$0xff] %vm1668, %v3348
      %3425 = vst.msk [vmem:[%s3403 + $0x288] sm:$0xff] %vm1668, %v3350
      %3426 = vst.msk [vmem:[%s3403 + $0x290] sm:$0xff] %vm1668, %v3352
      %3427 = vst.msk [vmem:[%s3403 + $0x298] sm:$0xff] %vm1668, %v3354
      %3428 = vst.msk [vmem:[%s3403 + $0x300] sm:$0xff] %vm1668, %v3356
      %3429 = vst.msk [vmem:[%s3403 + $0x308] sm:$0xff] %vm1668, %v3358
      %3430 = vst.msk [vmem:[%s3403 + $0x310] sm:$0xff] %vm1668, %v3360
      %3431 = vst.msk [vmem:[%s3403 + $0x318] sm:$0xff] %vm1668, %v3362
      %3432 = vst.msk [vmem:[%s3403 + $0x380] sm:$0xff] %vm1668, %v3364
      %3433 = vst.msk [vmem:[%s3403 + $0x388] sm:$0xff] %vm1668, %v3366
      %3434 = vst.msk [vmem:[%s3403 + $0x390] sm:$0xff] %vm1668, %v3368
      %3435 = vst.msk [vmem:[%s3403 + $0x398] sm:$0xff] %vm1668, %v3370
      %3436 = vrot.lane.b32.xlu0 %v1541, 88
      %v3437 = vpop.permute.xlu0 %3436
      %3438 = vrot.lane.b32.xlu0 %v1544, 88
      %v3439 = vpop.permute.xlu0 %3438
      %3440 = vrot.lane.b32.xlu0 %v1547, 88
      %v3441 = vpop.permute.xlu0 %3440
      %3442 = vrot.lane.b32.xlu0 %v1550, 88
      %v3443 = vpop.permute.xlu0 %3442
      %3444 = vrot.lane.b32.xlu0 %v1553, 88
      %v3445 = vpop.permute.xlu0 %3444
      %3446 = vrot.lane.b32.xlu0 %v1556, 88
      %v3447 = vpop.permute.xlu0 %3446
      %3448 = vrot.lane.b32.xlu0 %v1559, 88
      %v3449 = vpop.permute.xlu0 %3448
      %3450 = vrot.lane.b32.xlu0 %v1562, 88
      %v3451 = vpop.permute.xlu0 %3450
      %3452 = vrot.lane.b32.xlu0 %v1565, 88
      %v3453 = vpop.permute.xlu0 %3452
      %3454 = vrot.lane.b32.xlu0 %v1568, 88
      %v3455 = vpop.permute.xlu0 %3454
      %3456 = vrot.lane.b32.xlu0 %v1571, 88
      %v3457 = vpop.permute.xlu0 %3456
      %3458 = vrot.lane.b32.xlu0 %v1574, 88
      %v3459 = vpop.permute.xlu0 %3458
      %3460 = vrot.lane.b32.xlu0 %v1577, 88
      %v3461 = vpop.permute.xlu0 %3460
      %3462 = vrot.lane.b32.xlu0 %v1580, 88
      %v3463 = vpop.permute.xlu0 %3462
      %3464 = vrot.lane.b32.xlu0 %v1583, 88
      %v3465 = vpop.permute.xlu0 %3464
      %3466 = vrot.lane.b32.xlu0 %v1586, 88
      %v3467 = vpop.permute.xlu0 %3466
      %3468 = vrot.lane.b32.xlu0 %v1589, 88
      %v3469 = vpop.permute.xlu0 %3468
      %3470 = vrot.lane.b32.xlu0 %v1592, 88
      %v3471 = vpop.permute.xlu0 %3470
      %3472 = vrot.lane.b32.xlu0 %v1595, 88
      %v3473 = vpop.permute.xlu0 %3472
      %3474 = vrot.lane.b32.xlu0 %v1598, 88
      %v3475 = vpop.permute.xlu0 %3474
      %3476 = vrot.lane.b32.xlu0 %v1601, 88
      %v3477 = vpop.permute.xlu0 %3476
      %3478 = vrot.lane.b32.xlu0 %v1604, 88
      %v3479 = vpop.permute.xlu0 %3478
      %3480 = vrot.lane.b32.xlu0 %v1607, 88
      %v3481 = vpop.permute.xlu0 %3480
      %3482 = vrot.lane.b32.xlu0 %v1610, 88
      %v3483 = vpop.permute.xlu0 %3482
      %3484 = vrot.lane.b32.xlu0 %v1613, 88
      %v3485 = vpop.permute.xlu0 %3484
      %3486 = vrot.lane.b32.xlu0 %v1616, 88
      %v3487 = vpop.permute.xlu0 %3486
      %3488 = vrot.lane.b32.xlu0 %v1619, 88
      %v3489 = vpop.permute.xlu0 %3488
      %3490 = vrot.lane.b32.xlu0 %v1622, 88
      %v3491 = vpop.permute.xlu0 %3490
      %3492 = vrot.lane.b32.xlu0 %v1625, 88
      %v3493 = vpop.permute.xlu0 %3492
      %3494 = vrot.lane.b32.xlu0 %v1628, 88
      %v3495 = vpop.permute.xlu0 %3494
      %3496 = vrot.lane.b32.xlu0 %v1631, 88
      %v3497 = vpop.permute.xlu0 %3496
      %3498 = vrot.lane.b32.xlu0 %v1634, 88
      %v3499 = vpop.permute.xlu0 %3498
      %s3532 = scalar_lea.vmem %s594, 32
      %3533 = vst.msk [vmem:[%s3532] sm:$0xff] %vm1668, %v3437
      %3534 = vst.msk [vmem:[%s3532 + $0x8] sm:$0xff] %vm1668, %v3439
      %3535 = vst.msk [vmem:[%s3532 + $0x10] sm:$0xff] %vm1668, %v3441
      %3536 = vst.msk [vmem:[%s3532 + $0x18] sm:$0xff] %vm1668, %v3443
      %3537 = vst.msk [vmem:[%s3532 + $0x80] sm:$0xff] %vm1668, %v3445
      %3538 = vst.msk [vmem:[%s3532 + $0x88] sm:$0xff] %vm1668, %v3447
      %3539 = vst.msk [vmem:[%s3532 + $0x90] sm:$0xff] %vm1668, %v3449
      %3540 = vst.msk [vmem:[%s3532 + $0x98] sm:$0xff] %vm1668, %v3451
      %3541 = vst.msk [vmem:[%s3532 + $0x100] sm:$0xff] %vm1668, %v3453
      %3542 = vst.msk [vmem:[%s3532 + $0x108] sm:$0xff] %vm1668, %v3455
      %3543 = vst.msk [vmem:[%s3532 + $0x110] sm:$0xff] %vm1668, %v3457
      %3544 = vst.msk [vmem:[%s3532 + $0x118] sm:$0xff] %vm1668, %v3459
      %3545 = vst.msk [vmem:[%s3532 + $0x180] sm:$0xff] %vm1668, %v3461
      %3546 = vst.msk [vmem:[%s3532 + $0x188] sm:$0xff] %vm1668, %v3463
      %3547 = vst.msk [vmem:[%s3532 + $0x190] sm:$0xff] %vm1668, %v3465
      %3548 = vst.msk [vmem:[%s3532 + $0x198] sm:$0xff] %vm1668, %v3467
      %3549 = vst.msk [vmem:[%s3532 + $0x200] sm:$0xff] %vm1668, %v3469
      %3550 = vst.msk [vmem:[%s3532 + $0x208] sm:$0xff] %vm1668, %v3471
      %3551 = vst.msk [vmem:[%s3532 + $0x210] sm:$0xff] %vm1668, %v3473
      %3552 = vst.msk [vmem:[%s3532 + $0x218] sm:$0xff] %vm1668, %v3475
      %3553 = vst.msk [vmem:[%s3532 + $0x280] sm:$0xff] %vm1668, %v3477
      %3554 = vst.msk [vmem:[%s3532 + $0x288] sm:$0xff] %vm1668, %v3479
      %3555 = vst.msk [vmem:[%s3532 + $0x290] sm:$0xff] %vm1668, %v3481
      %3556 = vst.msk [vmem:[%s3532 + $0x298] sm:$0xff] %vm1668, %v3483
      %3557 = vst.msk [vmem:[%s3532 + $0x300] sm:$0xff] %vm1668, %v3485
      %3558 = vst.msk [vmem:[%s3532 + $0x308] sm:$0xff] %vm1668, %v3487
      %3559 = vst.msk [vmem:[%s3532 + $0x310] sm:$0xff] %vm1668, %v3489
      %3560 = vst.msk [vmem:[%s3532 + $0x318] sm:$0xff] %vm1668, %v3491
      %3561 = vst.msk [vmem:[%s3532 + $0x380] sm:$0xff] %vm1668, %v3493
      %3562 = vst.msk [vmem:[%s3532 + $0x388] sm:$0xff] %vm1668, %v3495
      %3563 = vst.msk [vmem:[%s3532 + $0x390] sm:$0xff] %vm1668, %v3497
      %3564 = vst.msk [vmem:[%s3532 + $0x398] sm:$0xff] %vm1668, %v3499
      %3565 = vrot.lane.b32.xlu0 %v1541, 56
      %v3566 = vpop.permute.xlu0 %3565
      %3567 = vrot.lane.b32.xlu0 %v1544, 56
      %v3568 = vpop.permute.xlu0 %3567
      %3569 = vrot.lane.b32.xlu0 %v1547, 56
      %v3570 = vpop.permute.xlu0 %3569
      %3571 = vrot.lane.b32.xlu0 %v1550, 56
      %v3572 = vpop.permute.xlu0 %3571
      %3573 = vrot.lane.b32.xlu0 %v1553, 56
      %v3574 = vpop.permute.xlu0 %3573
      %3575 = vrot.lane.b32.xlu0 %v1556, 56
      %v3576 = vpop.permute.xlu0 %3575
      %3577 = vrot.lane.b32.xlu0 %v1559, 56
      %v3578 = vpop.permute.xlu0 %3577
      %3579 = vrot.lane.b32.xlu0 %v1562, 56
      %v3580 = vpop.permute.xlu0 %3579
      %3581 = vrot.lane.b32.xlu0 %v1565, 56
      %v3582 = vpop.permute.xlu0 %3581
      %3583 = vrot.lane.b32.xlu0 %v1568, 56
      %v3584 = vpop.permute.xlu0 %3583
      %3585 = vrot.lane.b32.xlu0 %v1571, 56
      %v3586 = vpop.permute.xlu0 %3585
      %3587 = vrot.lane.b32.xlu0 %v1574, 56
      %v3588 = vpop.permute.xlu0 %3587
      %3589 = vrot.lane.b32.xlu0 %v1577, 56
      %v3590 = vpop.permute.xlu0 %3589
      %3591 = vrot.lane.b32.xlu0 %v1580, 56
      %v3592 = vpop.permute.xlu0 %3591
      %3593 = vrot.lane.b32.xlu0 %v1583, 56
      %v3594 = vpop.permute.xlu0 %3593
      %3595 = vrot.lane.b32.xlu0 %v1586, 56
      %v3596 = vpop.permute.xlu0 %3595
      %3597 = vrot.lane.b32.xlu0 %v1589, 56
      %v3598 = vpop.permute.xlu0 %3597
      %3599 = vrot.lane.b32.xlu0 %v1592, 56
      %v3600 = vpop.permute.xlu0 %3599
      %3601 = vrot.lane.b32.xlu0 %v1595, 56
      %v3602 = vpop.permute.xlu0 %3601
      %3603 = vrot.lane.b32.xlu0 %v1598, 56
      %v3604 = vpop.permute.xlu0 %3603
      %3605 = vrot.lane.b32.xlu0 %v1601, 56
      %v3606 = vpop.permute.xlu0 %3605
      %3607 = vrot.lane.b32.xlu0 %v1604, 56
      %v3608 = vpop.permute.xlu0 %3607
      %3609 = vrot.lane.b32.xlu0 %v1607, 56
      %v3610 = vpop.permute.xlu0 %3609
      %3611 = vrot.lane.b32.xlu0 %v1610, 56
      %v3612 = vpop.permute.xlu0 %3611
      %3613 = vrot.lane.b32.xlu0 %v1613, 56
      %v3614 = vpop.permute.xlu0 %3613
      %3615 = vrot.lane.b32.xlu0 %v1616, 56
      %v3616 = vpop.permute.xlu0 %3615
      %3617 = vrot.lane.b32.xlu0 %v1619, 56
      %v3618 = vpop.permute.xlu0 %3617
      %3619 = vrot.lane.b32.xlu0 %v1622, 56
      %v3620 = vpop.permute.xlu0 %3619
      %3621 = vrot.lane.b32.xlu0 %v1625, 56
      %v3622 = vpop.permute.xlu0 %3621
      %3623 = vrot.lane.b32.xlu0 %v1628, 56
      %v3624 = vpop.permute.xlu0 %3623
      %3625 = vrot.lane.b32.xlu0 %v1631, 56
      %v3626 = vpop.permute.xlu0 %3625
      %3627 = vrot.lane.b32.xlu0 %v1634, 56
      %v3628 = vpop.permute.xlu0 %3627
      %s3661 = scalar_lea.vmem %s601, 32
      %3662 = vst.msk [vmem:[%s3661] sm:$0xff] %vm1668, %v3566
      %3663 = vst.msk [vmem:[%s3661 + $0x8] sm:$0xff] %vm1668, %v3568
      %3664 = vst.msk [vmem:[%s3661 + $0x10] sm:$0xff] %vm1668, %v3570
      %3665 = vst.msk [vmem:[%s3661 + $0x18] sm:$0xff] %vm1668, %v3572
      %3666 = vst.msk [vmem:[%s3661 + $0x80] sm:$0xff] %vm1668, %v3574
      %3667 = vst.msk [vmem:[%s3661 + $0x88] sm:$0xff] %vm1668, %v3576
      %3668 = vst.msk [vmem:[%s3661 + $0x90] sm:$0xff] %vm1668, %v3578
      %3669 = vst.msk [vmem:[%s3661 + $0x98] sm:$0xff] %vm1668, %v3580
      %3670 = vst.msk [vmem:[%s3661 + $0x100] sm:$0xff] %vm1668, %v3582
      %3671 = vst.msk [vmem:[%s3661 + $0x108] sm:$0xff] %vm1668, %v3584
      %3672 = vst.msk [vmem:[%s3661 + $0x110] sm:$0xff] %vm1668, %v3586
      %3673 = vst.msk [vmem:[%s3661 + $0x118] sm:$0xff] %vm1668, %v3588
      %3674 = vst.msk [vmem:[%s3661 + $0x180] sm:$0xff] %vm1668, %v3590
      %3675 = vst.msk [vmem:[%s3661 + $0x188] sm:$0xff] %vm1668, %v3592
      %3676 = vst.msk [vmem:[%s3661 + $0x190] sm:$0xff] %vm1668, %v3594
      %3677 = vst.msk [vmem:[%s3661 + $0x198] sm:$0xff] %vm1668, %v3596
      %3678 = vst.msk [vmem:[%s3661 + $0x200] sm:$0xff] %vm1668, %v3598
      %3679 = vst.msk [vmem:[%s3661 + $0x208] sm:$0xff] %vm1668, %v3600
      %3680 = vst.msk [vmem:[%s3661 + $0x210] sm:$0xff] %vm1668, %v3602
      %3681 = vst.msk [vmem:[%s3661 + $0x218] sm:$0xff] %vm1668, %v3604
      %3682 = vst.msk [vmem:[%s3661 + $0x280] sm:$0xff] %vm1668, %v3606
      %3683 = vst.msk [vmem:[%s3661 + $0x288] sm:$0xff] %vm1668, %v3608
      %3684 = vst.msk [vmem:[%s3661 + $0x290] sm:$0xff] %vm1668, %v3610
      %3685 = vst.msk [vmem:[%s3661 + $0x298] sm:$0xff] %vm1668, %v3612
      %3686 = vst.msk [vmem:[%s3661 + $0x300] sm:$0xff] %vm1668, %v3614
      %3687 = vst.msk [vmem:[%s3661 + $0x308] sm:$0xff] %vm1668, %v3616
      %3688 = vst.msk [vmem:[%s3661 + $0x310] sm:$0xff] %vm1668, %v3618
      %3689 = vst.msk [vmem:[%s3661 + $0x318] sm:$0xff] %vm1668, %v3620
      %3690 = vst.msk [vmem:[%s3661 + $0x380] sm:$0xff] %vm1668, %v3622
      %3691 = vst.msk [vmem:[%s3661 + $0x388] sm:$0xff] %vm1668, %v3624
      %3692 = vst.msk [vmem:[%s3661 + $0x390] sm:$0xff] %vm1668, %v3626
      %3693 = vst.msk [vmem:[%s3661 + $0x398] sm:$0xff] %vm1668, %v3628
      %s3694 = scalar_lea.vmem %s7, 32
      %v3695 = vld [vmem:[%s3694] sm:$0xff]
      %v3696 = vld [vmem:[%s3694 + $0x8] sm:$0xff]
      %v3697 = vld [vmem:[%s3694 + $0x10] sm:$0xff]
      %v3698 = vld [vmem:[%s3694 + $0x18] sm:$0xff]
      %v3699 = vsel %vm1668, %v3308, 0
      %v3701 = vsel %vm1668, %v3310, 0
      %v3703 = vsel %vm1668, %v3312, 0
      %v3705 = vsel %vm1668, %v3314, 0
      %v3707 = vsel %vm1668, %v3437, 0
      %v3709 = vsel %vm1668, %v3439, 0
      %v3711 = vsel %vm1668, %v3441, 0
      %v3713 = vsel %vm1668, %v3443, 0
      %3715 = vmatpush.xpose.msra.mxu0 0.0
      %3716 = vmatpush.xpose.msra.mxu0 0.0
      %3717 = vmatpush.xpose.msra.mxu0 0.0
      %3718 = vmatpush.xpose.msra.mxu0 0.0
      %3719 = vmatpush.xpose.msra.mxu0 0.0
      %3720 = vmatpush.xpose.msra.mxu0 0.0
      %3721 = vmatpush.xpose.msra.mxu0 0.0
      %3722 = vmatpush.xpose.msra.mxu0 0.0
      %3723 = vmatpush.xpose.msra.mxu0 0.0
      %3724 = vmatpush.xpose.msra.mxu0 0.0
      %3725 = vmatpush.xpose.msra.mxu0 0.0
      %3726 = vmatpush.xpose.msra.mxu0 0.0
      %3727 = vmatpush.xpose.msra.mxu0 %v3713
      %3728 = vmatpush.xpose.msra.mxu0 %v3711
      %3729 = vmatpush.xpose.msra.mxu0 %v3709
      %3730 = vmatpush.xpose.msra.mxu0 %v3707
      %3731 = vmatmul.f32.gmra.mxu0 %v3699
      %v3732 = vpop.f32.mrf.mxu0
      %v3733 = vadd.f32 %v3695, %v3732
      %3734 = vmatmul.f32.gmra.mxu0 %v3701
      %v3735 = vpop.f32.mrf.mxu0
      %v3736 = vadd.f32 %v3696, %v3735
      %3737 = vmatmul.f32.gmra.mxu0 %v3703
      %v3738 = vpop.f32.mrf.mxu0
      %v3739 = vadd.f32 %v3697, %v3738
      %3740 = vmatmul.f32.gmra.mxu0 %v3705
      %v3741 = vpop.f32.mrf.mxu0
      %v3742 = vadd.f32 %v3698, %v3741
      %3743 = vdwg.mxu0
      %v3744 = vsel %vm1668, %v3316, 0
      %v3746 = vsel %vm1668, %v3318, 0
      %v3748 = vsel %vm1668, %v3320, 0
      %v3750 = vsel %vm1668, %v3322, 0
      %v3752 = vsel %vm1668, %v3445, 0
      %v3754 = vsel %vm1668, %v3447, 0
      %v3756 = vsel %vm1668, %v3449, 0
      %v3758 = vsel %vm1668, %v3451, 0
      %3760 = vmatpush.xpose.msra.mxu0 0.0
      %3761 = vmatpush.xpose.msra.mxu0 0.0
      %3762 = vmatpush.xpose.msra.mxu0 0.0
      %3763 = vmatpush.xpose.msra.mxu0 0.0
      %3764 = vmatpush.xpose.msra.mxu0 0.0
      %3765 = vmatpush.xpose.msra.mxu0 0.0
      %3766 = vmatpush.xpose.msra.mxu0 0.0
      %3767 = vmatpush.xpose.msra.mxu0 0.0
      %3768 = vmatpush.xpose.msra.mxu0 0.0
      %3769 = vmatpush.xpose.msra.mxu0 0.0
      %3770 = vmatpush.xpose.msra.mxu0 0.0
      %3771 = vmatpush.xpose.msra.mxu0 0.0
      %3772 = vmatpush.xpose.msra.mxu0 %v3758
      %3773 = vmatpush.xpose.msra.mxu0 %v3756
      %3774 = vmatpush.xpose.msra.mxu0 %v3754
      %3775 = vmatpush.xpose.msra.mxu0 %v3752
      %3776 = vmatmul.f32.gmra.mxu0 %v3744
      %v3777 = vpop.f32.mrf.mxu0
      %v3778 = vadd.f32 %v3695, %v3777
      %3779 = vmatmul.f32.gmra.mxu0 %v3746
      %v3780 = vpop.f32.mrf.mxu0
      %v3781 = vadd.f32 %v3696, %v3780
      %3782 = vmatmul.f32.gmra.mxu0 %v3748
      %v3783 = vpop.f32.mrf.mxu0
      %v3784 = vadd.f32 %v3697, %v3783
      %3785 = vmatmul.f32.gmra.mxu0 %v3750
      %v3786 = vpop.f32.mrf.mxu0
      %v3787 = vadd.f32 %v3698, %v3786
      %3788 = vdwg.mxu0
      %v3789 = vsel %vm1668, %v3324, 0
      %v3791 = vsel %vm1668, %v3326, 0
      %v3793 = vsel %vm1668, %v3328, 0
      %v3795 = vsel %vm1668, %v3330, 0
      %v3797 = vsel %vm1668, %v3453, 0
      %v3799 = vsel %vm1668, %v3455, 0
      %v3801 = vsel %vm1668, %v3457, 0
      %v3803 = vsel %vm1668, %v3459, 0
      %3805 = vmatpush.xpose.msra.mxu0 0.0
      %3806 = vmatpush.xpose.msra.mxu0 0.0
      %3807 = vmatpush.xpose.msra.mxu0 0.0
      %3808 = vmatpush.xpose.msra.mxu0 0.0
      %3809 = vmatpush.xpose.msra.mxu0 0.0
      %3810 = vmatpush.xpose.msra.mxu0 0.0
      %3811 = vmatpush.xpose.msra.mxu0 0.0
      %3812 = vmatpush.xpose.msra.mxu0 0.0
      %3813 = vmatpush.xpose.msra.mxu0 0.0
      %3814 = vmatpush.xpose.msra.mxu0 0.0
      %3815 = vmatpush.xpose.msra.mxu0 0.0
      %3816 = vmatpush.xpose.msra.mxu0 0.0
      %3817 = vmatpush.xpose.msra.mxu0 %v3803
      %3818 = vmatpush.xpose.msra.mxu0 %v3801
      %3819 = vmatpush.xpose.msra.mxu0 %v3799
      %3820 = vmatpush.xpose.msra.mxu0 %v3797
      %3821 = vmatmul.f32.gmra.mxu0 %v3789
      %v3822 = vpop.f32.mrf.mxu0
      %v3823 = vadd.f32 %v3695, %v3822
      %3824 = vmatmul.f32.gmra.mxu0 %v3791
      %v3825 = vpop.f32.mrf.mxu0
      %v3826 = vadd.f32 %v3696, %v3825
      %3827 = vmatmul.f32.gmra.mxu0 %v3793
      %v3828 = vpop.f32.mrf.mxu0
      %v3829 = vadd.f32 %v3697, %v3828
      %3830 = vmatmul.f32.gmra.mxu0 %v3795
      %v3831 = vpop.f32.mrf.mxu0
      %v3832 = vadd.f32 %v3698, %v3831
      %3833 = vdwg.mxu0
      %v3834 = vsel %vm1668, %v3332, 0
      %v3836 = vsel %vm1668, %v3334, 0
      %v3838 = vsel %vm1668, %v3336, 0
      %v3840 = vsel %vm1668, %v3338, 0
      %v3842 = vsel %vm1668, %v3461, 0
      %v3844 = vsel %vm1668, %v3463, 0
      %v3846 = vsel %vm1668, %v3465, 0
      %v3848 = vsel %vm1668, %v3467, 0
      %3850 = vmatpush.xpose.msra.mxu0 0.0
      %3851 = vmatpush.xpose.msra.mxu0 0.0
      %3852 = vmatpush.xpose.msra.mxu0 0.0
      %3853 = vmatpush.xpose.msra.mxu0 0.0
      %3854 = vmatpush.xpose.msra.mxu0 0.0
      %3855 = vmatpush.xpose.msra.mxu0 0.0
      %3856 = vmatpush.xpose.msra.mxu0 0.0
      %3857 = vmatpush.xpose.msra.mxu0 0.0
      %3858 = vmatpush.xpose.msra.mxu0 0.0
      %3859 = vmatpush.xpose.msra.mxu0 0.0
      %3860 = vmatpush.xpose.msra.mxu0 0.0
      %3861 = vmatpush.xpose.msra.mxu0 0.0
      %3862 = vmatpush.xpose.msra.mxu0 %v3848
      %3863 = vmatpush.xpose.msra.mxu0 %v3846
      %3864 = vmatpush.xpose.msra.mxu0 %v3844
      %3865 = vmatpush.xpose.msra.mxu0 %v3842
      %3866 = vmatmul.f32.gmra.mxu0 %v3834
      %v3867 = vpop.f32.mrf.mxu0
      %v3868 = vadd.f32 %v3695, %v3867
      %3869 = vmatmul.f32.gmra.mxu0 %v3836
      %v3870 = vpop.f32.mrf.mxu0
      %v3871 = vadd.f32 %v3696, %v3870
      %3872 = vmatmul.f32.gmra.mxu0 %v3838
      %v3873 = vpop.f32.mrf.mxu0
      %v3874 = vadd.f32 %v3697, %v3873
      %3875 = vmatmul.f32.gmra.mxu0 %v3840
      %v3876 = vpop.f32.mrf.mxu0
      %v3877 = vadd.f32 %v3698, %v3876
      %3878 = vdwg.mxu0
      %v3879 = vsel %vm1668, %v3340, 0
      %v3881 = vsel %vm1668, %v3342, 0
      %v3883 = vsel %vm1668, %v3344, 0
      %v3885 = vsel %vm1668, %v3346, 0
      %v3887 = vsel %vm1668, %v3469, 0
      %v3889 = vsel %vm1668, %v3471, 0
      %v3891 = vsel %vm1668, %v3473, 0
      %v3893 = vsel %vm1668, %v3475, 0
      %3895 = vmatpush.xpose.msra.mxu0 0.0
      %3896 = vmatpush.xpose.msra.mxu0 0.0
      %3897 = vmatpush.xpose.msra.mxu0 0.0
      %3898 = vmatpush.xpose.msra.mxu0 0.0
      %3899 = vmatpush.xpose.msra.mxu0 0.0
      %3900 = vmatpush.xpose.msra.mxu0 0.0
      %3901 = vmatpush.xpose.msra.mxu0 0.0
      %3902 = vmatpush.xpose.msra.mxu0 0.0
      %3903 = vmatpush.xpose.msra.mxu0 0.0
      %3904 = vmatpush.xpose.msra.mxu0 0.0
      %3905 = vmatpush.xpose.msra.mxu0 0.0
      %3906 = vmatpush.xpose.msra.mxu0 0.0
      %3907 = vmatpush.xpose.msra.mxu0 %v3893
      %3908 = vmatpush.xpose.msra.mxu0 %v3891
      %3909 = vmatpush.xpose.msra.mxu0 %v3889
      %3910 = vmatpush.xpose.msra.mxu0 %v3887
      %3911 = vmatmul.f32.gmra.mxu0 %v3879
      %v3912 = vpop.f32.mrf.mxu0
      %v3913 = vadd.f32 %v3695, %v3912
      %3914 = vmatmul.f32.gmra.mxu0 %v3881
      %v3915 = vpop.f32.mrf.mxu0
      %v3916 = vadd.f32 %v3696, %v3915
      %3917 = vmatmul.f32.gmra.mxu0 %v3883
      %v3918 = vpop.f32.mrf.mxu0
      %v3919 = vadd.f32 %v3697, %v3918
      %3920 = vmatmul.f32.gmra.mxu0 %v3885
      %v3921 = vpop.f32.mrf.mxu0
      %v3922 = vadd.f32 %v3698, %v3921
      %3923 = vdwg.mxu0
      %v3924 = vsel %vm1668, %v3348, 0
      %v3926 = vsel %vm1668, %v3350, 0
      %v3928 = vsel %vm1668, %v3352, 0
      %v3930 = vsel %vm1668, %v3354, 0
      %v3932 = vsel %vm1668, %v3477, 0
      %v3934 = vsel %vm1668, %v3479, 0
      %v3936 = vsel %vm1668, %v3481, 0
      %v3938 = vsel %vm1668, %v3483, 0
      %3940 = vmatpush.xpose.msra.mxu0 0.0
      %3941 = vmatpush.xpose.msra.mxu0 0.0
      %3942 = vmatpush.xpose.msra.mxu0 0.0
      %3943 = vmatpush.xpose.msra.mxu0 0.0
      %3944 = vmatpush.xpose.msra.mxu0 0.0
      %3945 = vmatpush.xpose.msra.mxu0 0.0
      %3946 = vmatpush.xpose.msra.mxu0 0.0
      %3947 = vmatpush.xpose.msra.mxu0 0.0
      %3948 = vmatpush.xpose.msra.mxu0 0.0
      %3949 = vmatpush.xpose.msra.mxu0 0.0
      %3950 = vmatpush.xpose.msra.mxu0 0.0
      %3951 = vmatpush.xpose.msra.mxu0 0.0
      %3952 = vmatpush.xpose.msra.mxu0 %v3938
      %3953 = vmatpush.xpose.msra.mxu0 %v3936
      %3954 = vmatpush.xpose.msra.mxu0 %v3934
      %3955 = vmatpush.xpose.msra.mxu0 %v3932
      %3956 = vmatmul.f32.gmra.mxu0 %v3924
      %v3957 = vpop.f32.mrf.mxu0
      %v3958 = vadd.f32 %v3695, %v3957
      %3959 = vmatmul.f32.gmra.mxu0 %v3926
      %v3960 = vpop.f32.mrf.mxu0
      %v3961 = vadd.f32 %v3696, %v3960
      %3962 = vmatmul.f32.gmra.mxu0 %v3928
      %v3963 = vpop.f32.mrf.mxu0
      %v3964 = vadd.f32 %v3697, %v3963
      %3965 = vmatmul.f32.gmra.mxu0 %v3930
      %v3966 = vpop.f32.mrf.mxu0
      %v3967 = vadd.f32 %v3698, %v3966
      %3968 = vdwg.mxu0
      %v3969 = vsel %vm1668, %v3356, 0
      %v3971 = vsel %vm1668, %v3358, 0
      %v3973 = vsel %vm1668, %v3360, 0
      %v3975 = vsel %vm1668, %v3362, 0
      %v3977 = vsel %vm1668, %v3485, 0
      %v3979 = vsel %vm1668, %v3487, 0
      %v3981 = vsel %vm1668, %v3489, 0
      %v3983 = vsel %vm1668, %v3491, 0
      %3985 = vmatpush.xpose.msra.mxu0 0.0
      %3986 = vmatpush.xpose.msra.mxu0 0.0
      %3987 = vmatpush.xpose.msra.mxu0 0.0
      %3988 = vmatpush.xpose.msra.mxu0 0.0
      %3989 = vmatpush.xpose.msra.mxu0 0.0
      %3990 = vmatpush.xpose.msra.mxu0 0.0
      %3991 = vmatpush.xpose.msra.mxu0 0.0
      %3992 = vmatpush.xpose.msra.mxu0 0.0
      %3993 = vmatpush.xpose.msra.mxu0 0.0
      %3994 = vmatpush.xpose.msra.mxu0 0.0
      %3995 = vmatpush.xpose.msra.mxu0 0.0
      %3996 = vmatpush.xpose.msra.mxu0 0.0
      %3997 = vmatpush.xpose.msra.mxu0 %v3983
      %3998 = vmatpush.xpose.msra.mxu0 %v3981
      %3999 = vmatpush.xpose.msra.mxu0 %v3979
      %4000 = vmatpush.xpose.msra.mxu0 %v3977
      %4001 = vmatmul.f32.gmra.mxu0 %v3969
      %v4002 = vpop.f32.mrf.mxu0
      %v4003 = vadd.f32 %v3695, %v4002
      %4004 = vmatmul.f32.gmra.mxu0 %v3971
      %v4005 = vpop.f32.mrf.mxu0
      %v4006 = vadd.f32 %v3696, %v4005
      %4007 = vmatmul.f32.gmra.mxu0 %v3973
      %v4008 = vpop.f32.mrf.mxu0
      %v4009 = vadd.f32 %v3697, %v4008
      %4010 = vmatmul.f32.gmra.mxu0 %v3975
      %v4011 = vpop.f32.mrf.mxu0
      %v4012 = vadd.f32 %v3698, %v4011
      %4013 = vdwg.mxu0
      %v4014 = vsel %vm1668, %v3364, 0
      %v4016 = vsel %vm1668, %v3366, 0
      %v4018 = vsel %vm1668, %v3368, 0
      %v4020 = vsel %vm1668, %v3370, 0
      %v4022 = vsel %vm1668, %v3493, 0
      %v4024 = vsel %vm1668, %v3495, 0
      %v4026 = vsel %vm1668, %v3497, 0
      %v4028 = vsel %vm1668, %v3499, 0
      %4030 = vmatpush.xpose.msra.mxu0 0.0
      %4031 = vmatpush.xpose.msra.mxu0 0.0
      %4032 = vmatpush.xpose.msra.mxu0 0.0
      %4033 = vmatpush.xpose.msra.mxu0 0.0
      %4034 = vmatpush.xpose.msra.mxu0 0.0
      %4035 = vmatpush.xpose.msra.mxu0 0.0
      %4036 = vmatpush.xpose.msra.mxu0 0.0
      %4037 = vmatpush.xpose.msra.mxu0 0.0
      %4038 = vmatpush.xpose.msra.mxu0 0.0
      %4039 = vmatpush.xpose.msra.mxu0 0.0
      %4040 = vmatpush.xpose.msra.mxu0 0.0
      %4041 = vmatpush.xpose.msra.mxu0 0.0
      %4042 = vmatpush.xpose.msra.mxu0 %v4028
      %4043 = vmatpush.xpose.msra.mxu0 %v4026
      %4044 = vmatpush.xpose.msra.mxu0 %v4024
      %4045 = vmatpush.xpose.msra.mxu0 %v4022
      %4046 = vmatmul.f32.gmra.mxu0 %v4014
      %v4047 = vpop.f32.mrf.mxu0
      %v4048 = vadd.f32 %v3695, %v4047
      %4049 = vmatmul.f32.gmra.mxu0 %v4016
      %v4050 = vpop.f32.mrf.mxu0
      %v4051 = vadd.f32 %v3696, %v4050
      %4052 = vmatmul.f32.gmra.mxu0 %v4018
      %v4053 = vpop.f32.mrf.mxu0
      %v4054 = vadd.f32 %v3697, %v4053
      %4055 = vmatmul.f32.gmra.mxu0 %v4020
      %v4056 = vpop.f32.mrf.mxu0
      %v4057 = vadd.f32 %v3698, %v4056
      %4058 = vdwg.mxu0
      %v4059 = vsel %vm635, %v3733, -inf
      %4060 = vmax.xlane.f32.xlu0 %v4059
      %v4061 = vpop.xlane.xlu0 %4060
      %v4062 = vsel %vm635, %v3736, -inf
      %4063 = vmax.xlane.f32.xlu0 %v4062
      %v4064 = vpop.xlane.xlu0 %4063
      %v4065 = vsel %vm635, %v3739, -inf
      %4066 = vmax.xlane.f32.xlu0 %v4065
      %v4067 = vpop.xlane.xlu0 %4066
      %v4068 = vsel %vm635, %v3742, -inf
      %4069 = vmax.xlane.f32.xlu0 %v4068
      %v4070 = vpop.xlane.xlu0 %4069
      %v4071 = vsel %vm635, %v3778, -inf
      %4072 = vmax.xlane.f32.xlu0 %v4071
      %v4073 = vpop.xlane.xlu0 %4072
      %v4074 = vsel %vm635, %v3781, -inf
      %4075 = vmax.xlane.f32.xlu0 %v4074
      %v4076 = vpop.xlane.xlu0 %4075
      %v4077 = vsel %vm635, %v3784, -inf
      %4078 = vmax.xlane.f32.xlu0 %v4077
      %v4079 = vpop.xlane.xlu0 %4078
      %v4080 = vsel %vm635, %v3787, -inf
      %4081 = vmax.xlane.f32.xlu0 %v4080
      %v4082 = vpop.xlane.xlu0 %4081
      %v4083 = vsel %vm635, %v3823, -inf
      %4084 = vmax.xlane.f32.xlu0 %v4083
      %v4085 = vpop.xlane.xlu0 %4084
      %v4086 = vsel %vm635, %v3826, -inf
      %4087 = vmax.xlane.f32.xlu0 %v4086
      %v4088 = vpop.xlane.xlu0 %4087
      %v4089 = vsel %vm635, %v3829, -inf
      %4090 = vmax.xlane.f32.xlu0 %v4089
      %v4091 = vpop.xlane.xlu0 %4090
      %v4092 = vsel %vm635, %v3832, -inf
      %4093 = vmax.xlane.f32.xlu0 %v4092
      %v4094 = vpop.xlane.xlu0 %4093
      %v4095 = vsel %vm635, %v3868, -inf
      %4096 = vmax.xlane.f32.xlu0 %v4095
      %v4097 = vpop.xlane.xlu0 %4096
      %v4098 = vsel %vm635, %v3871, -inf
      %4099 = vmax.xlane.f32.xlu0 %v4098
      %v4100 = vpop.xlane.xlu0 %4099
      %v4101 = vsel %vm635, %v3874, -inf
      %4102 = vmax.xlane.f32.xlu0 %v4101
      %v4103 = vpop.xlane.xlu0 %4102
      %v4104 = vsel %vm635, %v3877, -inf
      %4105 = vmax.xlane.f32.xlu0 %v4104
      %v4106 = vpop.xlane.xlu0 %4105
      %v4107 = vsel %vm635, %v3913, -inf
      %4108 = vmax.xlane.f32.xlu0 %v4107
      %v4109 = vpop.xlane.xlu0 %4108
      %v4110 = vsel %vm635, %v3916, -inf
      %4111 = vmax.xlane.f32.xlu0 %v4110
      %v4112 = vpop.xlane.xlu0 %4111
      %v4113 = vsel %vm635, %v3919, -inf
      %4114 = vmax.xlane.f32.xlu0 %v4113
      %v4115 = vpop.xlane.xlu0 %4114
      %v4116 = vsel %vm635, %v3922, -inf
      %4117 = vmax.xlane.f32.xlu0 %v4116
      %v4118 = vpop.xlane.xlu0 %4117
      %v4119 = vsel %vm635, %v3958, -inf
      %4120 = vmax.xlane.f32.xlu0 %v4119
      %v4121 = vpop.xlane.xlu0 %4120
      %v4122 = vsel %vm635, %v3961, -inf
      %4123 = vmax.xlane.f32.xlu0 %v4122
      %v4124 = vpop.xlane.xlu0 %4123
      %v4125 = vsel %vm635, %v3964, -inf
      %4126 = vmax.xlane.f32.xlu0 %v4125
      %v4127 = vpop.xlane.xlu0 %4126
      %v4128 = vsel %vm635, %v3967, -inf
      %4129 = vmax.xlane.f32.xlu0 %v4128
      %v4130 = vpop.xlane.xlu0 %4129
      %v4131 = vsel %vm635, %v4003, -inf
      %4132 = vmax.xlane.f32.xlu0 %v4131
      %v4133 = vpop.xlane.xlu0 %4132
      %v4134 = vsel %vm635, %v4006, -inf
      %4135 = vmax.xlane.f32.xlu0 %v4134
      %v4136 = vpop.xlane.xlu0 %4135
      %v4137 = vsel %vm635, %v4009, -inf
      %4138 = vmax.xlane.f32.xlu0 %v4137
      %v4139 = vpop.xlane.xlu0 %4138
      %v4140 = vsel %vm635, %v4012, -inf
      %4141 = vmax.xlane.f32.xlu0 %v4140
      %v4142 = vpop.xlane.xlu0 %4141
      %v4143 = vsel %vm635, %v4048, -inf
      %4144 = vmax.xlane.f32.xlu0 %v4143
      %v4145 = vpop.xlane.xlu0 %4144
      %v4146 = vsel %vm635, %v4051, -inf
      %4147 = vmax.xlane.f32.xlu0 %v4146
      %v4148 = vpop.xlane.xlu0 %4147
      %v4149 = vsel %vm635, %v4054, -inf
      %4150 = vmax.xlane.f32.xlu0 %v4149
      %v4151 = vpop.xlane.xlu0 %4150
      %v4152 = vsel %vm635, %v4057, -inf
      %4153 = vmax.xlane.f32.xlu0 %v4152
      %v4154 = vpop.xlane.xlu0 %4153
      %v4155 = vsub.f32 %v3733, %v4061
      %v4156 = vsub.f32 %v3736, %v4064
      %v4157 = vsub.f32 %v3739, %v4067
      %v4158 = vsub.f32 %v3742, %v4070
      %v4159 = vsub.f32 %v3778, %v4073
      %v4160 = vsub.f32 %v3781, %v4076
      %v4161 = vsub.f32 %v3784, %v4079
      %v4162 = vsub.f32 %v3787, %v4082
      %v4163 = vsub.f32 %v3823, %v4085
      %v4164 = vsub.f32 %v3826, %v4088
      %v4165 = vsub.f32 %v3829, %v4091
      %v4166 = vsub.f32 %v3832, %v4094
      %v4167 = vsub.f32 %v3868, %v4097
      %v4168 = vsub.f32 %v3871, %v4100
      %v4169 = vsub.f32 %v3874, %v4103
      %v4170 = vsub.f32 %v3877, %v4106
      %v4171 = vsub.f32 %v3913, %v4109
      %v4172 = vsub.f32 %v3916, %v4112
      %v4173 = vsub.f32 %v3919, %v4115
      %v4174 = vsub.f32 %v3922, %v4118
      %v4175 = vsub.f32 %v3958, %v4121
      %v4176 = vsub.f32 %v3961, %v4124
      %v4177 = vsub.f32 %v3964, %v4127
      %v4178 = vsub.f32 %v3967, %v4130
      %v4179 = vsub.f32 %v4003, %v4133
      %v4180 = vsub.f32 %v4006, %v4136
      %v4181 = vsub.f32 %v4009, %v4139
      %v4182 = vsub.f32 %v4012, %v4142
      %v4183 = vsub.f32 %v4048, %v4145
      %v4184 = vsub.f32 %v4051, %v4148
      %v4185 = vsub.f32 %v4054, %v4151
      %v4186 = vsub.f32 %v4057, %v4154
      %v4187 = vmul.f32 %v4155, 1.442695
      %v4188 = vpow.pop %v4187
      %v4189 = vmul.f32 %v4156, 1.442695
      %v4190 = vpow.pop %v4189
      %v4191 = vmul.f32 %v4157, 1.442695
      %v4192 = vpow.pop %v4191
      %v4193 = vmul.f32 %v4158, 1.442695
      %v4194 = vpow.pop %v4193
      %v4195 = vmul.f32 %v4159, 1.442695
      %v4196 = vpow.pop %v4195
      %v4197 = vmul.f32 %v4160, 1.442695
      %v4198 = vpow.pop %v4197
      %v4199 = vmul.f32 %v4161, 1.442695
      %v4200 = vpow.pop %v4199
      %v4201 = vmul.f32 %v4162, 1.442695
      %v4202 = vpow.pop %v4201
      %v4203 = vmul.f32 %v4163, 1.442695
      %v4204 = vpow.pop %v4203
      %v4205 = vmul.f32 %v4164, 1.442695
      %v4206 = vpow.pop %v4205
      %v4207 = vmul.f32 %v4165, 1.442695
      %v4208 = vpow.pop %v4207
      %v4209 = vmul.f32 %v4166, 1.442695
      %v4210 = vpow.pop %v4209
      %v4211 = vmul.f32 %v4167, 1.442695
      %v4212 = vpow.pop %v4211
      %v4213 = vmul.f32 %v4168, 1.442695
      %v4214 = vpow.pop %v4213
      %v4215 = vmul.f32 %v4169, 1.442695
      %v4216 = vpow.pop %v4215
      %v4217 = vmul.f32 %v4170, 1.442695
      %v4218 = vpow.pop %v4217
      %v4219 = vmul.f32 %v4171, 1.442695
      %v4220 = vpow.pop %v4219
      %v4221 = vmul.f32 %v4172, 1.442695
      %v4222 = vpow.pop %v4221
      %v4223 = vmul.f32 %v4173, 1.442695
      %v4224 = vpow.pop %v4223
      %v4225 = vmul.f32 %v4174, 1.442695
      %v4226 = vpow.pop %v4225
      %v4227 = vmul.f32 %v4175, 1.442695
      %v4228 = vpow.pop %v4227
      %v4229 = vmul.f32 %v4176, 1.442695
      %v4230 = vpow.pop %v4229
      %v4231 = vmul.f32 %v4177, 1.442695
      %v4232 = vpow.pop %v4231
      %v4233 = vmul.f32 %v4178, 1.442695
      %v4234 = vpow.pop %v4233
      %v4235 = vmul.f32 %v4179, 1.442695
      %v4236 = vpow.pop %v4235
      %v4237 = vmul.f32 %v4180, 1.442695
      %v4238 = vpow.pop %v4237
      %v4239 = vmul.f32 %v4181, 1.442695
      %v4240 = vpow.pop %v4239
      %v4241 = vmul.f32 %v4182, 1.442695
      %v4242 = vpow.pop %v4241
      %v4243 = vmul.f32 %v4183, 1.442695
      %v4244 = vpow.pop %v4243
      %v4245 = vmul.f32 %v4184, 1.442695
      %v4246 = vpow.pop %v4245
      %v4247 = vmul.f32 %v4185, 1.442695
      %v4248 = vpow.pop %v4247
      %v4249 = vmul.f32 %v4186, 1.442695
      %v4250 = vpow.pop %v4249
      %v4251 = vsel %vm635, %v4188, 0.0
      %4252 = vadd.xlane.f32.xlu0 %v4251
      %v4253 = vpop.xlane.xlu0 %4252
      %v4254 = vsel %vm635, %v4190, 0.0
      %4255 = vadd.xlane.f32.xlu0 %v4254
      %v4256 = vpop.xlane.xlu0 %4255
      %v4257 = vsel %vm635, %v4192, 0.0
      %4258 = vadd.xlane.f32.xlu0 %v4257
      %v4259 = vpop.xlane.xlu0 %4258
      %v4260 = vsel %vm635, %v4194, 0.0
      %4261 = vadd.xlane.f32.xlu0 %v4260
      %v4262 = vpop.xlane.xlu0 %4261
      %v4263 = vsel %vm635, %v4196, 0.0
      %4264 = vadd.xlane.f32.xlu0 %v4263
      %v4265 = vpop.xlane.xlu0 %4264
      %v4266 = vsel %vm635, %v4198, 0.0
      %4267 = vadd.xlane.f32.xlu0 %v4266
      %v4268 = vpop.xlane.xlu0 %4267
      %v4269 = vsel %vm635, %v4200, 0.0
      %4270 = vadd.xlane.f32.xlu0 %v4269
      %v4271 = vpop.xlane.xlu0 %4270
      %v4272 = vsel %vm635, %v4202, 0.0
      %4273 = vadd.xlane.f32.xlu0 %v4272
      %v4274 = vpop.xlane.xlu0 %4273
      %v4275 = vsel %vm635, %v4204, 0.0
      %4276 = vadd.xlane.f32.xlu0 %v4275
      %v4277 = vpop.xlane.xlu0 %4276
      %v4278 = vsel %vm635, %v4206, 0.0
      %4279 = vadd.xlane.f32.xlu0 %v4278
      %v4280 = vpop.xlane.xlu0 %4279
      %v4281 = vsel %vm635, %v4208, 0.0
      %4282 = vadd.xlane.f32.xlu0 %v4281
      %v4283 = vpop.xlane.xlu0 %4282
      %v4284 = vsel %vm635, %v4210, 0.0
      %4285 = vadd.xlane.f32.xlu0 %v4284
      %v4286 = vpop.xlane.xlu0 %4285
      %v4287 = vsel %vm635, %v4212, 0.0
      %4288 = vadd.xlane.f32.xlu0 %v4287
      %v4289 = vpop.xlane.xlu0 %4288
      %v4290 = vsel %vm635, %v4214, 0.0
      %4291 = vadd.xlane.f32.xlu0 %v4290
      %v4292 = vpop.xlane.xlu0 %4291
      %v4293 = vsel %vm635, %v4216, 0.0
      %4294 = vadd.xlane.f32.xlu0 %v4293
      %v4295 = vpop.xlane.xlu0 %4294
      %v4296 = vsel %vm635, %v4218, 0.0
      %4297 = vadd.xlane.f32.xlu0 %v4296
      %v4298 = vpop.xlane.xlu0 %4297
      %v4299 = vsel %vm635, %v4220, 0.0
      %4300 = vadd.xlane.f32.xlu0 %v4299
      %v4301 = vpop.xlane.xlu0 %4300
      %v4302 = vsel %vm635, %v4222, 0.0
      %4303 = vadd.xlane.f32.xlu0 %v4302
      %v4304 = vpop.xlane.xlu0 %4303
      %v4305 = vsel %vm635, %v4224, 0.0
      %4306 = vadd.xlane.f32.xlu0 %v4305
      %v4307 = vpop.xlane.xlu0 %4306
      %v4308 = vsel %vm635, %v4226, 0.0
      %4309 = vadd.xlane.f32.xlu0 %v4308
      %v4310 = vpop.xlane.xlu0 %4309
      %v4311 = vsel %vm635, %v4228, 0.0
      %4312 = vadd.xlane.f32.xlu0 %v4311
      %v4313 = vpop.xlane.xlu0 %4312
      %v4314 = vsel %vm635, %v4230, 0.0
      %4315 = vadd.xlane.f32.xlu0 %v4314
      %v4316 = vpop.xlane.xlu0 %4315
      %v4317 = vsel %vm635, %v4232, 0.0
      %4318 = vadd.xlane.f32.xlu0 %v4317
      %v4319 = vpop.xlane.xlu0 %4318
      %v4320 = vsel %vm635, %v4234, 0.0
      %4321 = vadd.xlane.f32.xlu0 %v4320
      %v4322 = vpop.xlane.xlu0 %4321
      %v4323 = vsel %vm635, %v4236, 0.0
      %4324 = vadd.xlane.f32.xlu0 %v4323
      %v4325 = vpop.xlane.xlu0 %4324
      %v4326 = vsel %vm635, %v4238, 0.0
      %4327 = vadd.xlane.f32.xlu0 %v4326
      %v4328 = vpop.xlane.xlu0 %4327
      %v4329 = vsel %vm635, %v4240, 0.0
      %4330 = vadd.xlane.f32.xlu0 %v4329
      %v4331 = vpop.xlane.xlu0 %4330
      %v4332 = vsel %vm635, %v4242, 0.0
      %4333 = vadd.xlane.f32.xlu0 %v4332
      %v4334 = vpop.xlane.xlu0 %4333
      %v4335 = vsel %vm635, %v4244, 0.0
      %4336 = vadd.xlane.f32.xlu0 %v4335
      %v4337 = vpop.xlane.xlu0 %4336
      %v4338 = vsel %vm635, %v4246, 0.0
      %4339 = vadd.xlane.f32.xlu0 %v4338
      %v4340 = vpop.xlane.xlu0 %4339
      %v4341 = vsel %vm635, %v4248, 0.0
      %4342 = vadd.xlane.f32.xlu0 %v4341
      %v4343 = vpop.xlane.xlu0 %4342
      %v4344 = vsel %vm635, %v4250, 0.0
      %4345 = vadd.xlane.f32.xlu0 %v4344
      %v4346 = vpop.xlane.xlu0 %4345
      %v4347 = vrcp.pop %v4253
      %v4348 = vrcp.pop %v4256
      %v4349 = vrcp.pop %v4259
      %v4350 = vrcp.pop %v4262
      %v4351 = vrcp.pop %v4265
      %v4352 = vrcp.pop %v4268
      %v4353 = vrcp.pop %v4271
      %v4354 = vrcp.pop %v4274
      %v4355 = vrcp.pop %v4277
      %v4356 = vrcp.pop %v4280
      %v4357 = vrcp.pop %v4283
      %v4358 = vrcp.pop %v4286
      %v4359 = vrcp.pop %v4289
      %v4360 = vrcp.pop %v4292
      %v4361 = vrcp.pop %v4295
      %v4362 = vrcp.pop %v4298
      %v4363 = vrcp.pop %v4301
      %v4364 = vrcp.pop %v4304
      %v4365 = vrcp.pop %v4307
      %v4366 = vrcp.pop %v4310
      %v4367 = vrcp.pop %v4313
      %v4368 = vrcp.pop %v4316
      %v4369 = vrcp.pop %v4319
      %v4370 = vrcp.pop %v4322
      %v4371 = vrcp.pop %v4325
      %v4372 = vrcp.pop %v4328
      %v4373 = vrcp.pop %v4331
      %v4374 = vrcp.pop %v4334
      %v4375 = vrcp.pop %v4337
      %v4376 = vrcp.pop %v4340
      %v4377 = vrcp.pop %v4343
      %v4378 = vrcp.pop %v4346
      %v4379 = vmul.f32 %v4188, %v4347
      %v4380 = vmul.f32 %v4190, %v4348
      %v4381 = vmul.f32 %v4192, %v4349
      %v4382 = vmul.f32 %v4194, %v4350
      %v4383 = vmul.f32 %v4196, %v4351
      %v4384 = vmul.f32 %v4198, %v4352
      %v4385 = vmul.f32 %v4200, %v4353
      %v4386 = vmul.f32 %v4202, %v4354
      %v4387 = vmul.f32 %v4204, %v4355
      %v4388 = vmul.f32 %v4206, %v4356
      %v4389 = vmul.f32 %v4208, %v4357
      %v4390 = vmul.f32 %v4210, %v4358
      %v4391 = vmul.f32 %v4212, %v4359
      %v4392 = vmul.f32 %v4214, %v4360
      %v4393 = vmul.f32 %v4216, %v4361
      %v4394 = vmul.f32 %v4218, %v4362
      %v4395 = vmul.f32 %v4220, %v4363
      %v4396 = vmul.f32 %v4222, %v4364
      %v4397 = vmul.f32 %v4224, %v4365
      %v4398 = vmul.f32 %v4226, %v4366
      %v4399 = vmul.f32 %v4228, %v4367
      %v4400 = vmul.f32 %v4230, %v4368
      %v4401 = vmul.f32 %v4232, %v4369
      %v4402 = vmul.f32 %v4234, %v4370
      %v4403 = vmul.f32 %v4236, %v4371
      %v4404 = vmul.f32 %v4238, %v4372
      %v4405 = vmul.f32 %v4240, %v4373
      %v4406 = vmul.f32 %v4242, %v4374
      %v4407 = vmul.f32 %v4244, %v4375
      %v4408 = vmul.f32 %v4246, %v4376
      %v4409 = vmul.f32 %v4248, %v4377
      %v4410 = vmul.f32 %v4250, %v4378
      %v4412 = vsel %vm635, %v4379, 0
      %v4415 = vsel %vm635, %v4380, 0
      %v4418 = vsel %vm635, %v4381, 0
      %v4421 = vsel %vm635, %v4382, 0
      %4423 = vmatpush.msra.mxu0 0.0
      %4424 = vmatpush.msra.mxu0 0.0
      %4425 = vmatpush.msra.mxu0 0.0
      %4426 = vmatpush.msra.mxu0 0.0
      %4427 = vmatpush.msra.mxu0 0.0
      %4428 = vmatpush.msra.mxu0 0.0
      %4429 = vmatpush.msra.mxu0 0.0
      %4430 = vmatpush.msra.mxu0 0.0
      %4431 = vmatpush.msra.mxu0 0.0
      %4432 = vmatpush.msra.mxu0 0.0
      %4433 = vmatpush.msra.mxu0 0.0
      %4434 = vmatpush.msra.mxu0 0.0
      %4435 = vmatpush.msra.mxu0 %v3572
      %4436 = vmatpush.msra.mxu0 %v3570
      %4437 = vmatpush.msra.mxu0 %v3568
      %4438 = vmatpush.msra.mxu0 %v3566
      %4439 = vmatmul.f32.gmra.mxu0 %v4412
      %v4440 = vpop.f32.mrf.mxu0
      %v4441 = vadd.f32 0.0, %v4440
      %4442 = vmatmul.f32.gmra.mxu0 %v4415
      %v4443 = vpop.f32.mrf.mxu0
      %v4444 = vadd.f32 0.0, %v4443
      %4445 = vmatmul.f32.gmra.mxu0 %v4418
      %v4446 = vpop.f32.mrf.mxu0
      %v4447 = vadd.f32 0.0, %v4446
      %4448 = vmatmul.f32.gmra.mxu0 %v4421
      %v4449 = vpop.f32.mrf.mxu0
      %v4450 = vadd.f32 0.0, %v4449
      %4451 = vdwg.mxu0
      %v4453 = vsel %vm635, %v4383, 0
      %v4456 = vsel %vm635, %v4384, 0
      %v4459 = vsel %vm635, %v4385, 0
      %v4462 = vsel %vm635, %v4386, 0
      %4464 = vmatpush.msra.mxu0 0.0
      %4465 = vmatpush.msra.mxu0 0.0
      %4466 = vmatpush.msra.mxu0 0.0
      %4467 = vmatpush.msra.mxu0 0.0
      %4468 = vmatpush.msra.mxu0 0.0
      %4469 = vmatpush.msra.mxu0 0.0
      %4470 = vmatpush.msra.mxu0 0.0
      %4471 = vmatpush.msra.mxu0 0.0
      %4472 = vmatpush.msra.mxu0 0.0
      %4473 = vmatpush.msra.mxu0 0.0
      %4474 = vmatpush.msra.mxu0 0.0
      %4475 = vmatpush.msra.mxu0 0.0
      %4476 = vmatpush.msra.mxu0 %v3580
      %4477 = vmatpush.msra.mxu0 %v3578
      %4478 = vmatpush.msra.mxu0 %v3576
      %4479 = vmatpush.msra.mxu0 %v3574
      %4480 = vmatmul.f32.gmra.mxu0 %v4453
      %v4481 = vpop.f32.mrf.mxu0
      %v4482 = vadd.f32 0.0, %v4481
      %4483 = vmatmul.f32.gmra.mxu0 %v4456
      %v4484 = vpop.f32.mrf.mxu0
      %v4485 = vadd.f32 0.0, %v4484
      %4486 = vmatmul.f32.gmra.mxu0 %v4459
      %v4487 = vpop.f32.mrf.mxu0
      %v4488 = vadd.f32 0.0, %v4487
      %4489 = vmatmul.f32.gmra.mxu0 %v4462
      %v4490 = vpop.f32.mrf.mxu0
      %v4491 = vadd.f32 0.0, %v4490
      %4492 = vdwg.mxu0
      %v4494 = vsel %vm635, %v4387, 0
      %v4497 = vsel %vm635, %v4388, 0
      %v4500 = vsel %vm635, %v4389, 0
      %v4503 = vsel %vm635, %v4390, 0
      %4505 = vmatpush.msra.mxu0 0.0
      %4506 = vmatpush.msra.mxu0 0.0
      %4507 = vmatpush.msra.mxu0 0.0
      %4508 = vmatpush.msra.mxu0 0.0
      %4509 = vmatpush.msra.mxu0 0.0
      %4510 = vmatpush.msra.mxu0 0.0
      %4511 = vmatpush.msra.mxu0 0.0
      %4512 = vmatpush.msra.mxu0 0.0
      %4513 = vmatpush.msra.mxu0 0.0
      %4514 = vmatpush.msra.mxu0 0.0
      %4515 = vmatpush.msra.mxu0 0.0
      %4516 = vmatpush.msra.mxu0 0.0
      %4517 = vmatpush.msra.mxu0 %v3588
      %4518 = vmatpush.msra.mxu0 %v3586
      %4519 = vmatpush.msra.mxu0 %v3584
      %4520 = vmatpush.msra.mxu0 %v3582
      %4521 = vmatmul.f32.gmra.mxu0 %v4494
      %v4522 = vpop.f32.mrf.mxu0
      %v4523 = vadd.f32 0.0, %v4522
      %4524 = vmatmul.f32.gmra.mxu0 %v4497
      %v4525 = vpop.f32.mrf.mxu0
      %v4526 = vadd.f32 0.0, %v4525
      %4527 = vmatmul.f32.gmra.mxu0 %v4500
      %v4528 = vpop.f32.mrf.mxu0
      %v4529 = vadd.f32 0.0, %v4528
      %4530 = vmatmul.f32.gmra.mxu0 %v4503
      %v4531 = vpop.f32.mrf.mxu0
      %v4532 = vadd.f32 0.0, %v4531
      %4533 = vdwg.mxu0
      %v4535 = vsel %vm635, %v4391, 0
      %v4538 = vsel %vm635, %v4392, 0
      %v4541 = vsel %vm635, %v4393, 0
      %v4544 = vsel %vm635, %v4394, 0
      %4546 = vmatpush.msra.mxu0 0.0
      %4547 = vmatpush.msra.mxu0 0.0
      %4548 = vmatpush.msra.mxu0 0.0
      %4549 = vmatpush.msra.mxu0 0.0
      %4550 = vmatpush.msra.mxu0 0.0
      %4551 = vmatpush.msra.mxu0 0.0
      %4552 = vmatpush.msra.mxu0 0.0
      %4553 = vmatpush.msra.mxu0 0.0
      %4554 = vmatpush.msra.mxu0 0.0
      %4555 = vmatpush.msra.mxu0 0.0
      %4556 = vmatpush.msra.mxu0 0.0
      %4557 = vmatpush.msra.mxu0 0.0
      %4558 = vmatpush.msra.mxu0 %v3596
      %4559 = vmatpush.msra.mxu0 %v3594
      %4560 = vmatpush.msra.mxu0 %v3592
      %4561 = vmatpush.msra.mxu0 %v3590
      %4562 = vmatmul.f32.gmra.mxu0 %v4535
      %v4563 = vpop.f32.mrf.mxu0
      %v4564 = vadd.f32 0.0, %v4563
      %4565 = vmatmul.f32.gmra.mxu0 %v4538
      %v4566 = vpop.f32.mrf.mxu0
      %v4567 = vadd.f32 0.0, %v4566
      %4568 = vmatmul.f32.gmra.mxu0 %v4541
      %v4569 = vpop.f32.mrf.mxu0
      %v4570 = vadd.f32 0.0, %v4569
      %4571 = vmatmul.f32.gmra.mxu0 %v4544
      %v4572 = vpop.f32.mrf.mxu0
      %v4573 = vadd.f32 0.0, %v4572
      %4574 = vdwg.mxu0
      %v4576 = vsel %vm635, %v4395, 0
      %v4579 = vsel %vm635, %v4396, 0
      %v4582 = vsel %vm635, %v4397, 0
      %v4585 = vsel %vm635, %v4398, 0
      %4587 = vmatpush.msra.mxu0 0.0
      %4588 = vmatpush.msra.mxu0 0.0
      %4589 = vmatpush.msra.mxu0 0.0
      %4590 = vmatpush.msra.mxu0 0.0
      %4591 = vmatpush.msra.mxu0 0.0
      %4592 = vmatpush.msra.mxu0 0.0
      %4593 = vmatpush.msra.mxu0 0.0
      %4594 = vmatpush.msra.mxu0 0.0
      %4595 = vmatpush.msra.mxu0 0.0
      %4596 = vmatpush.msra.mxu0 0.0
      %4597 = vmatpush.msra.mxu0 0.0
      %4598 = vmatpush.msra.mxu0 0.0
      %4599 = vmatpush.msra.mxu0 %v3604
      %4600 = vmatpush.msra.mxu0 %v3602
      %4601 = vmatpush.msra.mxu0 %v3600
      %4602 = vmatpush.msra.mxu0 %v3598
      %4603 = vmatmul.f32.gmra.mxu0 %v4576
      %v4604 = vpop.f32.mrf.mxu0
      %v4605 = vadd.f32 0.0, %v4604
      %4606 = vmatmul.f32.gmra.mxu0 %v4579
      %v4607 = vpop.f32.mrf.mxu0
      %v4608 = vadd.f32 0.0, %v4607
      %4609 = vmatmul.f32.gmra.mxu0 %v4582
      %v4610 = vpop.f32.mrf.mxu0
      %v4611 = vadd.f32 0.0, %v4610
      %4612 = vmatmul.f32.gmra.mxu0 %v4585
      %v4613 = vpop.f32.mrf.mxu0
      %v4614 = vadd.f32 0.0, %v4613
      %4615 = vdwg.mxu0
      %v4617 = vsel %vm635, %v4399, 0
      %v4620 = vsel %vm635, %v4400, 0
      %v4623 = vsel %vm635, %v4401, 0
      %v4626 = vsel %vm635, %v4402, 0
      %4628 = vmatpush.msra.mxu0 0.0
      %4629 = vmatpush.msra.mxu0 0.0
      %4630 = vmatpush.msra.mxu0 0.0
      %4631 = vmatpush.msra.mxu0 0.0
      %4632 = vmatpush.msra.mxu0 0.0
      %4633 = vmatpush.msra.mxu0 0.0
      %4634 = vmatpush.msra.mxu0 0.0
      %4635 = vmatpush.msra.mxu0 0.0
      %4636 = vmatpush.msra.mxu0 0.0
      %4637 = vmatpush.msra.mxu0 0.0
      %4638 = vmatpush.msra.mxu0 0.0
      %4639 = vmatpush.msra.mxu0 0.0
      %4640 = vmatpush.msra.mxu0 %v3612
      %4641 = vmatpush.msra.mxu0 %v3610
      %4642 = vmatpush.msra.mxu0 %v3608
      %4643 = vmatpush.msra.mxu0 %v3606
      %4644 = vmatmul.f32.gmra.mxu0 %v4617
      %v4645 = vpop.f32.mrf.mxu0
      %v4646 = vadd.f32 0.0, %v4645
      %4647 = vmatmul.f32.gmra.mxu0 %v4620
      %v4648 = vpop.f32.mrf.mxu0
      %v4649 = vadd.f32 0.0, %v4648
      %4650 = vmatmul.f32.gmra.mxu0 %v4623
      %v4651 = vpop.f32.mrf.mxu0
      %v4652 = vadd.f32 0.0, %v4651
      %4653 = vmatmul.f32.gmra.mxu0 %v4626
      %v4654 = vpop.f32.mrf.mxu0
      %v4655 = vadd.f32 0.0, %v4654
      %4656 = vdwg.mxu0
      %v4658 = vsel %vm635, %v4403, 0
      %v4661 = vsel %vm635, %v4404, 0
      %v4664 = vsel %vm635, %v4405, 0
      %v4667 = vsel %vm635, %v4406, 0
      %4669 = vmatpush.msra.mxu0 0.0
      %4670 = vmatpush.msra.mxu0 0.0
      %4671 = vmatpush.msra.mxu0 0.0
      %4672 = vmatpush.msra.mxu0 0.0
      %4673 = vmatpush.msra.mxu0 0.0
      %4674 = vmatpush.msra.mxu0 0.0
      %4675 = vmatpush.msra.mxu0 0.0
      %4676 = vmatpush.msra.mxu0 0.0
      %4677 = vmatpush.msra.mxu0 0.0
      %4678 = vmatpush.msra.mxu0 0.0
      %4679 = vmatpush.msra.mxu0 0.0
      %4680 = vmatpush.msra.mxu0 0.0
      %4681 = vmatpush.msra.mxu0 %v3620
      %4682 = vmatpush.msra.mxu0 %v3618
      %4683 = vmatpush.msra.mxu0 %v3616
      %4684 = vmatpush.msra.mxu0 %v3614
      %4685 = vmatmul.f32.gmra.mxu0 %v4658
      %v4686 = vpop.f32.mrf.mxu0
      %v4687 = vadd.f32 0.0, %v4686
      %4688 = vmatmul.f32.gmra.mxu0 %v4661
      %v4689 = vpop.f32.mrf.mxu0
      %v4690 = vadd.f32 0.0, %v4689
      %4691 = vmatmul.f32.gmra.mxu0 %v4664
      %v4692 = vpop.f32.mrf.mxu0
      %v4693 = vadd.f32 0.0, %v4692
      %4694 = vmatmul.f32.gmra.mxu0 %v4667
      %v4695 = vpop.f32.mrf.mxu0
      %v4696 = vadd.f32 0.0, %v4695
      %4697 = vdwg.mxu0
      %v4699 = vsel %vm635, %v4407, 0
      %v4702 = vsel %vm635, %v4408, 0
      %v4705 = vsel %vm635, %v4409, 0
      %v4708 = vsel %vm635, %v4410, 0
      %4710 = vmatpush.msra.mxu0 0.0
      %4711 = vmatpush.msra.mxu0 0.0
      %4712 = vmatpush.msra.mxu0 0.0
      %4713 = vmatpush.msra.mxu0 0.0
      %4714 = vmatpush.msra.mxu0 0.0
      %4715 = vmatpush.msra.mxu0 0.0
      %4716 = vmatpush.msra.mxu0 0.0
      %4717 = vmatpush.msra.mxu0 0.0
      %4718 = vmatpush.msra.mxu0 0.0
      %4719 = vmatpush.msra.mxu0 0.0
      %4720 = vmatpush.msra.mxu0 0.0
      %4721 = vmatpush.msra.mxu0 0.0
      %4722 = vmatpush.msra.mxu0 %v3628
      %4723 = vmatpush.msra.mxu0 %v3626
      %4724 = vmatpush.msra.mxu0 %v3624
      %4725 = vmatpush.msra.mxu0 %v3622
      %4726 = vmatmul.f32.gmra.mxu0 %v4699
      %v4727 = vpop.f32.mrf.mxu0
      %v4728 = vadd.f32 0.0, %v4727
      %4729 = vmatmul.f32.gmra.mxu0 %v4702
      %v4730 = vpop.f32.mrf.mxu0
      %v4731 = vadd.f32 0.0, %v4730
      %4732 = vmatmul.f32.gmra.mxu0 %v4705
      %v4733 = vpop.f32.mrf.mxu0
      %v4734 = vadd.f32 0.0, %v4733
      %4735 = vmatmul.f32.gmra.mxu0 %v4708
      %v4736 = vpop.f32.mrf.mxu0
      %v4737 = vadd.f32 0.0, %v4736
      %4738 = vdwg.mxu0
      %v4739 = vld [vmem:[%s5 + $0x8] sm:$0xff]
      %v4741 = vsel %vm1668, %v4441, 0
      %v4744 = vsel %vm1668, %v4444, 0
      %v4747 = vsel %vm1668, %v4447, 0
      %v4750 = vsel %vm1668, %v4450, 0
      %v4753 = vsel %vm1668, %v4482, 0
      %v4756 = vsel %vm1668, %v4485, 0
      %v4759 = vsel %vm1668, %v4488, 0
      %v4762 = vsel %vm1668, %v4491, 0
      %v4765 = vsel %vm1668, %v4523, 0
      %v4768 = vsel %vm1668, %v4526, 0
      %v4771 = vsel %vm1668, %v4529, 0
      %v4774 = vsel %vm1668, %v4532, 0
      %v4777 = vsel %vm1668, %v4564, 0
      %v4780 = vsel %vm1668, %v4567, 0
      %v4783 = vsel %vm1668, %v4570, 0
      %v4786 = vsel %vm1668, %v4573, 0
      %v4789 = vsel %vm1668, %v4605, 0
      %v4792 = vsel %vm1668, %v4608, 0
      %v4795 = vsel %vm1668, %v4611, 0
      %v4798 = vsel %vm1668, %v4614, 0
      %v4801 = vsel %vm1668, %v4646, 0
      %v4804 = vsel %vm1668, %v4649, 0
      %v4807 = vsel %vm1668, %v4652, 0
      %v4810 = vsel %vm1668, %v4655, 0
      %v4813 = vsel %vm1668, %v4687, 0
      %v4816 = vsel %vm1668, %v4690, 0
      %v4819 = vsel %vm1668, %v4693, 0
      %v4822 = vsel %vm1668, %v4696, 0
      %v4825 = vsel %vm1668, %v4728, 0
      %v4828 = vsel %vm1668, %v4731, 0
      %v4831 = vsel %vm1668, %v4734, 0
      %v4834 = vsel %vm1668, %v4737, 0
      %4836 = vmatpush.msra.mxu0 0.0
      %4837 = vmatpush.msra.mxu0 0.0
      %4838 = vmatpush.msra.mxu0 0.0
      %4839 = vmatpush.msra.mxu0 0.0
      %4840 = vmatpush.msra.mxu0 0.0
      %4841 = vmatpush.msra.mxu0 0.0
      %4842 = vmatpush.msra.mxu0 0.0
      %4843 = vmatpush.msra.mxu0 0.0
      %4844 = vmatpush.msra.mxu0 0.0
      %4845 = vmatpush.msra.mxu0 0.0
      %4846 = vmatpush.msra.mxu0 0.0
      %4847 = vmatpush.msra.mxu0 0.0
      %4848 = vmatpush.msra.mxu0 0.0
      %4849 = vmatpush.msra.mxu0 0.0
      %4850 = vmatpush.msra.mxu0 0.0
      %4851 = vmatpush.msra.mxu0 %v4739
      %4852 = vmatmul.f32.gmra.mxu0 %v4741
      %v4853 = vpop.f32.mrf.mxu0
      %v4854 = vadd.f32 0.0, %v4853
      %4855 = vmatmul.f32.gmra.mxu0 %v4744
      %v4856 = vpop.f32.mrf.mxu0
      %v4857 = vadd.f32 0.0, %v4856
      %4858 = vmatmul.f32.gmra.mxu0 %v4747
      %v4859 = vpop.f32.mrf.mxu0
      %v4860 = vadd.f32 0.0, %v4859
      %4861 = vmatmul.f32.gmra.mxu0 %v4750
      %v4862 = vpop.f32.mrf.mxu0
      %v4863 = vadd.f32 0.0, %v4862
      %4864 = vmatmul.f32.gmra.mxu0 %v4753
      %v4865 = vpop.f32.mrf.mxu0
      %v4866 = vadd.f32 0.0, %v4865
      %4867 = vmatmul.f32.gmra.mxu0 %v4756
      %v4868 = vpop.f32.mrf.mxu0
      %v4869 = vadd.f32 0.0, %v4868
      %4870 = vmatmul.f32.gmra.mxu0 %v4759
      %v4871 = vpop.f32.mrf.mxu0
      %v4872 = vadd.f32 0.0, %v4871
      %4873 = vmatmul.f32.gmra.mxu0 %v4762
      %v4874 = vpop.f32.mrf.mxu0
      %v4875 = vadd.f32 0.0, %v4874
      %4876 = vmatmul.f32.gmra.mxu0 %v4765
      %v4877 = vpop.f32.mrf.mxu0
      %v4878 = vadd.f32 0.0, %v4877
      %4879 = vmatmul.f32.gmra.mxu0 %v4768
      %v4880 = vpop.f32.mrf.mxu0
      %v4881 = vadd.f32 0.0, %v4880
      %4882 = vmatmul.f32.gmra.mxu0 %v4771
      %v4883 = vpop.f32.mrf.mxu0
      %v4884 = vadd.f32 0.0, %v4883
      %4885 = vmatmul.f32.gmra.mxu0 %v4774
      %v4886 = vpop.f32.mrf.mxu0
      %v4887 = vadd.f32 0.0, %v4886
      %4888 = vmatmul.f32.gmra.mxu0 %v4777
      %v4889 = vpop.f32.mrf.mxu0
      %v4890 = vadd.f32 0.0, %v4889
      %4891 = vmatmul.f32.gmra.mxu0 %v4780
      %v4892 = vpop.f32.mrf.mxu0
      %v4893 = vadd.f32 0.0, %v4892
      %4894 = vmatmul.f32.gmra.mxu0 %v4783
      %v4895 = vpop.f32.mrf.mxu0
      %v4896 = vadd.f32 0.0, %v4895
      %4897 = vmatmul.f32.gmra.mxu0 %v4786
      %v4898 = vpop.f32.mrf.mxu0
      %v4899 = vadd.f32 0.0, %v4898
      %4900 = vmatmul.f32.gmra.mxu0 %v4789
      %v4901 = vpop.f32.mrf.mxu0
      %v4902 = vadd.f32 0.0, %v4901
      %4903 = vmatmul.f32.gmra.mxu0 %v4792
      %v4904 = vpop.f32.mrf.mxu0
      %v4905 = vadd.f32 0.0, %v4904
      %4906 = vmatmul.f32.gmra.mxu0 %v4795
      %v4907 = vpop.f32.mrf.mxu0
      %v4908 = vadd.f32 0.0, %v4907
      %4909 = vmatmul.f32.gmra.mxu0 %v4798
      %v4910 = vpop.f32.mrf.mxu0
      %v4911 = vadd.f32 0.0, %v4910
      %4912 = vmatmul.f32.gmra.mxu0 %v4801
      %v4913 = vpop.f32.mrf.mxu0
      %v4914 = vadd.f32 0.0, %v4913
      %4915 = vmatmul.f32.gmra.mxu0 %v4804
      %v4916 = vpop.f32.mrf.mxu0
      %v4917 = vadd.f32 0.0, %v4916
      %4918 = vmatmul.f32.gmra.mxu0 %v4807
      %v4919 = vpop.f32.mrf.mxu0
      %v4920 = vadd.f32 0.0, %v4919
      %4921 = vmatmul.f32.gmra.mxu0 %v4810
      %v4922 = vpop.f32.mrf.mxu0
      %v4923 = vadd.f32 0.0, %v4922
      %4924 = vmatmul.f32.gmra.mxu0 %v4813
      %v4925 = vpop.f32.mrf.mxu0
      %v4926 = vadd.f32 0.0, %v4925
      %4927 = vmatmul.f32.gmra.mxu0 %v4816
      %v4928 = vpop.f32.mrf.mxu0
      %v4929 = vadd.f32 0.0, %v4928
      %4930 = vmatmul.f32.gmra.mxu0 %v4819
      %v4931 = vpop.f32.mrf.mxu0
      %v4932 = vadd.f32 0.0, %v4931
      %4933 = vmatmul.f32.gmra.mxu0 %v4822
      %v4934 = vpop.f32.mrf.mxu0
      %v4935 = vadd.f32 0.0, %v4934
      %4936 = vmatmul.f32.gmra.mxu0 %v4825
      %v4937 = vpop.f32.mrf.mxu0
      %v4938 = vadd.f32 0.0, %v4937
      %4939 = vmatmul.f32.gmra.mxu0 %v4828
      %v4940 = vpop.f32.mrf.mxu0
      %v4941 = vadd.f32 0.0, %v4940
      %4942 = vmatmul.f32.gmra.mxu0 %v4831
      %v4943 = vpop.f32.mrf.mxu0
      %v4944 = vadd.f32 0.0, %v4943
      %4945 = vmatmul.f32.gmra.mxu0 %v4834
      %v4946 = vpop.f32.mrf.mxu0
      %v4947 = vadd.f32 0.0, %v4946
      %4948 = vdwg.mxu0
      %v4949 = vadd.f32 %v3275, %v4854
      %v4950 = vadd.f32 %v3276, %v4857
      %v4951 = vadd.f32 %v3277, %v4860
      %v4952 = vadd.f32 %v3278, %v4863
      %v4953 = vadd.f32 %v3279, %v4866
      %v4954 = vadd.f32 %v3280, %v4869
      %v4955 = vadd.f32 %v3281, %v4872
      %v4956 = vadd.f32 %v3282, %v4875
      %v4957 = vadd.f32 %v3283, %v4878
      %v4958 = vadd.f32 %v3284, %v4881
      %v4959 = vadd.f32 %v3285, %v4884
      %v4960 = vadd.f32 %v3286, %v4887
      %v4961 = vadd.f32 %v3287, %v4890
      %v4962 = vadd.f32 %v3288, %v4893
      %v4963 = vadd.f32 %v3289, %v4896
      %v4964 = vadd.f32 %v3290, %v4899
      %v4965 = vadd.f32 %v3291, %v4902
      %v4966 = vadd.f32 %v3292, %v4905
      %v4967 = vadd.f32 %v3293, %v4908
      %v4968 = vadd.f32 %v3294, %v4911
      %v4969 = vadd.f32 %v3295, %v4914
      %v4970 = vadd.f32 %v3296, %v4917
      %v4971 = vadd.f32 %v3297, %v4920
      %v4972 = vadd.f32 %v3298, %v4923
      %v4973 = vadd.f32 %v3299, %v4926
      %v4974 = vadd.f32 %v3300, %v4929
      %v4975 = vadd.f32 %v3301, %v4932
      %v4976 = vadd.f32 %v3302, %v4935
      %v4977 = vadd.f32 %v3303, %v4938
      %v4978 = vadd.f32 %v3304, %v4941
      %v4979 = vadd.f32 %v3305, %v4944
      %v4980 = vadd.f32 %v3306, %v4947
      %4981 = vrot.lane.b32.xlu0 %v1636, 112
      %v4982 = vpop.permute.xlu0 %4981
      %4983 = vrot.lane.b32.xlu0 %v1637, 112
      %v4984 = vpop.permute.xlu0 %4983
      %4985 = vrot.lane.b32.xlu0 %v1638, 112
      %v4986 = vpop.permute.xlu0 %4985
      %4987 = vrot.lane.b32.xlu0 %v1639, 112
      %v4988 = vpop.permute.xlu0 %4987
      %4989 = vrot.lane.b32.xlu0 %v1640, 112
      %v4990 = vpop.permute.xlu0 %4989
      %4991 = vrot.lane.b32.xlu0 %v1641, 112
      %v4992 = vpop.permute.xlu0 %4991
      %4993 = vrot.lane.b32.xlu0 %v1642, 112
      %v4994 = vpop.permute.xlu0 %4993
      %4995 = vrot.lane.b32.xlu0 %v1643, 112
      %v4996 = vpop.permute.xlu0 %4995
      %4997 = vrot.lane.b32.xlu0 %v1644, 112
      %v4998 = vpop.permute.xlu0 %4997
      %4999 = vrot.lane.b32.xlu0 %v1645, 112
      %v5000 = vpop.permute.xlu0 %4999
      %5001 = vrot.lane.b32.xlu0 %v1646, 112
      %v5002 = vpop.permute.xlu0 %5001
      %5003 = vrot.lane.b32.xlu0 %v1647, 112
      %v5004 = vpop.permute.xlu0 %5003
      %5005 = vrot.lane.b32.xlu0 %v1648, 112
      %v5006 = vpop.permute.xlu0 %5005
      %5007 = vrot.lane.b32.xlu0 %v1649, 112
      %v5008 = vpop.permute.xlu0 %5007
      %5009 = vrot.lane.b32.xlu0 %v1650, 112
      %v5010 = vpop.permute.xlu0 %5009
      %5011 = vrot.lane.b32.xlu0 %v1651, 112
      %v5012 = vpop.permute.xlu0 %5011
      %5013 = vrot.lane.b32.xlu0 %v1652, 112
      %v5014 = vpop.permute.xlu0 %5013
      %5015 = vrot.lane.b32.xlu0 %v1653, 112
      %v5016 = vpop.permute.xlu0 %5015
      %5017 = vrot.lane.b32.xlu0 %v1654, 112
      %v5018 = vpop.permute.xlu0 %5017
      %5019 = vrot.lane.b32.xlu0 %v1655, 112
      %v5020 = vpop.permute.xlu0 %5019
      %5021 = vrot.lane.b32.xlu0 %v1656, 112
      %v5022 = vpop.permute.xlu0 %5021
      %5023 = vrot.lane.b32.xlu0 %v1657, 112
      %v5024 = vpop.permute.xlu0 %5023
      %5025 = vrot.lane.b32.xlu0 %v1658, 112
      %v5026 = vpop.permute.xlu0 %5025
      %5027 = vrot.lane.b32.xlu0 %v1659, 112
      %v5028 = vpop.permute.xlu0 %5027
      %5029 = vrot.lane.b32.xlu0 %v1660, 112
      %v5030 = vpop.permute.xlu0 %5029
      %5031 = vrot.lane.b32.xlu0 %v1661, 112
      %v5032 = vpop.permute.xlu0 %5031
      %5033 = vrot.lane.b32.xlu0 %v1662, 112
      %v5034 = vpop.permute.xlu0 %5033
      %5035 = vrot.lane.b32.xlu0 %v1663, 112
      %v5036 = vpop.permute.xlu0 %5035
      %5037 = vrot.lane.b32.xlu0 %v1664, 112
      %v5038 = vpop.permute.xlu0 %5037
      %5039 = vrot.lane.b32.xlu0 %v1665, 112
      %v5040 = vpop.permute.xlu0 %5039
      %5041 = vrot.lane.b32.xlu0 %v1666, 112
      %v5042 = vpop.permute.xlu0 %5041
      %5043 = vrot.lane.b32.xlu0 %v1667, 112
      %v5044 = vpop.permute.xlu0 %5043
      %s5077 = scalar_lea.vmem %s587, 64
      %5078 = vst.msk [vmem:[%s5077] sm:$0xff] %vm1668, %v4982
      %5079 = vst.msk [vmem:[%s5077 + $0x8] sm:$0xff] %vm1668, %v4984
      %5080 = vst.msk [vmem:[%s5077 + $0x10] sm:$0xff] %vm1668, %v4986
      %5081 = vst.msk [vmem:[%s5077 + $0x18] sm:$0xff] %vm1668, %v4988
      %5082 = vst.msk [vmem:[%s5077 + $0x80] sm:$0xff] %vm1668, %v4990
      %5083 = vst.msk [vmem:[%s5077 + $0x88] sm:$0xff] %vm1668, %v4992
      %5084 = vst.msk [vmem:[%s5077 + $0x90] sm:$0xff] %vm1668, %v4994
      %5085 = vst.msk [vmem:[%s5077 + $0x98] sm:$0xff] %vm1668, %v4996
      %5086 = vst.msk [vmem:[%s5077 + $0x100] sm:$0xff] %vm1668, %v4998
      %5087 = vst.msk [vmem:[%s5077 + $0x108] sm:$0xff] %vm1668, %v5000
      %5088 = vst.msk [vmem:[%s5077 + $0x110] sm:$0xff] %vm1668, %v5002
      %5089 = vst.msk [vmem:[%s5077 + $0x118] sm:$0xff] %vm1668, %v5004
      %5090 = vst.msk [vmem:[%s5077 + $0x180] sm:$0xff] %vm1668, %v5006
      %5091 = vst.msk [vmem:[%s5077 + $0x188] sm:$0xff] %vm1668, %v5008
      %5092 = vst.msk [vmem:[%s5077 + $0x190] sm:$0xff] %vm1668, %v5010
      %5093 = vst.msk [vmem:[%s5077 + $0x198] sm:$0xff] %vm1668, %v5012
      %5094 = vst.msk [vmem:[%s5077 + $0x200] sm:$0xff] %vm1668, %v5014
      %5095 = vst.msk [vmem:[%s5077 + $0x208] sm:$0xff] %vm1668, %v5016
      %5096 = vst.msk [vmem:[%s5077 + $0x210] sm:$0xff] %vm1668, %v5018
      %5097 = vst.msk [vmem:[%s5077 + $0x218] sm:$0xff] %vm1668, %v5020
      %5098 = vst.msk [vmem:[%s5077 + $0x280] sm:$0xff] %vm1668, %v5022
      %5099 = vst.msk [vmem:[%s5077 + $0x288] sm:$0xff] %vm1668, %v5024
      %5100 = vst.msk [vmem:[%s5077 + $0x290] sm:$0xff] %vm1668, %v5026
      %5101 = vst.msk [vmem:[%s5077 + $0x298] sm:$0xff] %vm1668, %v5028
      %5102 = vst.msk [vmem:[%s5077 + $0x300] sm:$0xff] %vm1668, %v5030
      %5103 = vst.msk [vmem:[%s5077 + $0x308] sm:$0xff] %vm1668, %v5032
      %5104 = vst.msk [vmem:[%s5077 + $0x310] sm:$0xff] %vm1668, %v5034
      %5105 = vst.msk [vmem:[%s5077 + $0x318] sm:$0xff] %vm1668, %v5036
      %5106 = vst.msk [vmem:[%s5077 + $0x380] sm:$0xff] %vm1668, %v5038
      %5107 = vst.msk [vmem:[%s5077 + $0x388] sm:$0xff] %vm1668, %v5040
      %5108 = vst.msk [vmem:[%s5077 + $0x390] sm:$0xff] %vm1668, %v5042
      %5109 = vst.msk [vmem:[%s5077 + $0x398] sm:$0xff] %vm1668, %v5044
      %5110 = vrot.lane.b32.xlu0 %v1541, 80
      %v5111 = vpop.permute.xlu0 %5110
      %5112 = vrot.lane.b32.xlu0 %v1544, 80
      %v5113 = vpop.permute.xlu0 %5112
      %5114 = vrot.lane.b32.xlu0 %v1547, 80
      %v5115 = vpop.permute.xlu0 %5114
      %5116 = vrot.lane.b32.xlu0 %v1550, 80
      %v5117 = vpop.permute.xlu0 %5116
      %5118 = vrot.lane.b32.xlu0 %v1553, 80
      %v5119 = vpop.permute.xlu0 %5118
      %5120 = vrot.lane.b32.xlu0 %v1556, 80
      %v5121 = vpop.permute.xlu0 %5120
      %5122 = vrot.lane.b32.xlu0 %v1559, 80
      %v5123 = vpop.permute.xlu0 %5122
      %5124 = vrot.lane.b32.xlu0 %v1562, 80
      %v5125 = vpop.permute.xlu0 %5124
      %5126 = vrot.lane.b32.xlu0 %v1565, 80
      %v5127 = vpop.permute.xlu0 %5126
      %5128 = vrot.lane.b32.xlu0 %v1568, 80
      %v5129 = vpop.permute.xlu0 %5128
      %5130 = vrot.lane.b32.xlu0 %v1571, 80
      %v5131 = vpop.permute.xlu0 %5130
      %5132 = vrot.lane.b32.xlu0 %v1574, 80
      %v5133 = vpop.permute.xlu0 %5132
      %5134 = vrot.lane.b32.xlu0 %v1577, 80
      %v5135 = vpop.permute.xlu0 %5134
      %5136 = vrot.lane.b32.xlu0 %v1580, 80
      %v5137 = vpop.permute.xlu0 %5136
      %5138 = vrot.lane.b32.xlu0 %v1583, 80
      %v5139 = vpop.permute.xlu0 %5138
      %5140 = vrot.lane.b32.xlu0 %v1586, 80
      %v5141 = vpop.permute.xlu0 %5140
      %5142 = vrot.lane.b32.xlu0 %v1589, 80
      %v5143 = vpop.permute.xlu0 %5142
      %5144 = vrot.lane.b32.xlu0 %v1592, 80
      %v5145 = vpop.permute.xlu0 %5144
      %5146 = vrot.lane.b32.xlu0 %v1595, 80
      %v5147 = vpop.permute.xlu0 %5146
      %5148 = vrot.lane.b32.xlu0 %v1598, 80
      %v5149 = vpop.permute.xlu0 %5148
      %5150 = vrot.lane.b32.xlu0 %v1601, 80
      %v5151 = vpop.permute.xlu0 %5150
      %5152 = vrot.lane.b32.xlu0 %v1604, 80
      %v5153 = vpop.permute.xlu0 %5152
      %5154 = vrot.lane.b32.xlu0 %v1607, 80
      %v5155 = vpop.permute.xlu0 %5154
      %5156 = vrot.lane.b32.xlu0 %v1610, 80
      %v5157 = vpop.permute.xlu0 %5156
      %5158 = vrot.lane.b32.xlu0 %v1613, 80
      %v5159 = vpop.permute.xlu0 %5158
      %5160 = vrot.lane.b32.xlu0 %v1616, 80
      %v5161 = vpop.permute.xlu0 %5160
      %5162 = vrot.lane.b32.xlu0 %v1619, 80
      %v5163 = vpop.permute.xlu0 %5162
      %5164 = vrot.lane.b32.xlu0 %v1622, 80
      %v5165 = vpop.permute.xlu0 %5164
      %5166 = vrot.lane.b32.xlu0 %v1625, 80
      %v5167 = vpop.permute.xlu0 %5166
      %5168 = vrot.lane.b32.xlu0 %v1628, 80
      %v5169 = vpop.permute.xlu0 %5168
      %5170 = vrot.lane.b32.xlu0 %v1631, 80
      %v5171 = vpop.permute.xlu0 %5170
      %5172 = vrot.lane.b32.xlu0 %v1634, 80
      %v5173 = vpop.permute.xlu0 %5172
      %s5206 = scalar_lea.vmem %s594, 64
      %5207 = vst.msk [vmem:[%s5206] sm:$0xff] %vm1668, %v5111
      %5208 = vst.msk [vmem:[%s5206 + $0x8] sm:$0xff] %vm1668, %v5113
      %5209 = vst.msk [vmem:[%s5206 + $0x10] sm:$0xff] %vm1668, %v5115
      %5210 = vst.msk [vmem:[%s5206 + $0x18] sm:$0xff] %vm1668, %v5117
      %5211 = vst.msk [vmem:[%s5206 + $0x80] sm:$0xff] %vm1668, %v5119
      %5212 = vst.msk [vmem:[%s5206 + $0x88] sm:$0xff] %vm1668, %v5121
      %5213 = vst.msk [vmem:[%s5206 + $0x90] sm:$0xff] %vm1668, %v5123
      %5214 = vst.msk [vmem:[%s5206 + $0x98] sm:$0xff] %vm1668, %v5125
      %5215 = vst.msk [vmem:[%s5206 + $0x100] sm:$0xff] %vm1668, %v5127
      %5216 = vst.msk [vmem:[%s5206 + $0x108] sm:$0xff] %vm1668, %v5129
      %5217 = vst.msk [vmem:[%s5206 + $0x110] sm:$0xff] %vm1668, %v5131
      %5218 = vst.msk [vmem:[%s5206 + $0x118] sm:$0xff] %vm1668, %v5133
      %5219 = vst.msk [vmem:[%s5206 + $0x180] sm:$0xff] %vm1668, %v5135
      %5220 = vst.msk [vmem:[%s5206 + $0x188] sm:$0xff] %vm1668, %v5137
      %5221 = vst.msk [vmem:[%s5206 + $0x190] sm:$0xff] %vm1668, %v5139
      %5222 = vst.msk [vmem:[%s5206 + $0x198] sm:$0xff] %vm1668, %v5141
      %5223 = vst.msk [vmem:[%s5206 + $0x200] sm:$0xff] %vm1668, %v5143
      %5224 = vst.msk [vmem:[%s5206 + $0x208] sm:$0xff] %vm1668, %v5145
      %5225 = vst.msk [vmem:[%s5206 + $0x210] sm:$0xff] %vm1668, %v5147
      %5226 = vst.msk [vmem:[%s5206 + $0x218] sm:$0xff] %vm1668, %v5149
      %5227 = vst.msk [vmem:[%s5206 + $0x280] sm:$0xff] %vm1668, %v5151
      %5228 = vst.msk [vmem:[%s5206 + $0x288] sm:$0xff] %vm1668, %v5153
      %5229 = vst.msk [vmem:[%s5206 + $0x290] sm:$0xff] %vm1668, %v5155
      %5230 = vst.msk [vmem:[%s5206 + $0x298] sm:$0xff] %vm1668, %v5157
      %5231 = vst.msk [vmem:[%s5206 + $0x300] sm:$0xff] %vm1668, %v5159
      %5232 = vst.msk [vmem:[%s5206 + $0x308] sm:$0xff] %vm1668, %v5161
      %5233 = vst.msk [vmem:[%s5206 + $0x310] sm:$0xff] %vm1668, %v5163
      %5234 = vst.msk [vmem:[%s5206 + $0x318] sm:$0xff] %vm1668, %v5165
      %5235 = vst.msk [vmem:[%s5206 + $0x380] sm:$0xff] %vm1668, %v5167
      %5236 = vst.msk [vmem:[%s5206 + $0x388] sm:$0xff] %vm1668, %v5169
      %5237 = vst.msk [vmem:[%s5206 + $0x390] sm:$0xff] %vm1668, %v5171
      %5238 = vst.msk [vmem:[%s5206 + $0x398] sm:$0xff] %vm1668, %v5173
      %5239 = vrot.lane.b32.xlu0 %v1541, 48
      %v5240 = vpop.permute.xlu0 %5239
      %5241 = vrot.lane.b32.xlu0 %v1544, 48
      %v5242 = vpop.permute.xlu0 %5241
      %5243 = vrot.lane.b32.xlu0 %v1547, 48
      %v5244 = vpop.permute.xlu0 %5243
      %5245 = vrot.lane.b32.xlu0 %v1550, 48
      %v5246 = vpop.permute.xlu0 %5245
      %5247 = vrot.lane.b32.xlu0 %v1553, 48
      %v5248 = vpop.permute.xlu0 %5247
      %5249 = vrot.lane.b32.xlu0 %v1556, 48
      %v5250 = vpop.permute.xlu0 %5249
      %5251 = vrot.lane.b32.xlu0 %v1559, 48
      %v5252 = vpop.permute.xlu0 %5251
      %5253 = vrot.lane.b32.xlu0 %v1562, 48
      %v5254 = vpop.permute.xlu0 %5253
      %5255 = vrot.lane.b32.xlu0 %v1565, 48
      %v5256 = vpop.permute.xlu0 %5255
      %5257 = vrot.lane.b32.xlu0 %v1568, 48
      %v5258 = vpop.permute.xlu0 %5257
      %5259 = vrot.lane.b32.xlu0 %v1571, 48
      %v5260 = vpop.permute.xlu0 %5259
      %5261 = vrot.lane.b32.xlu0 %v1574, 48
      %v5262 = vpop.permute.xlu0 %5261
      %5263 = vrot.lane.b32.xlu0 %v1577, 48
      %v5264 = vpop.permute.xlu0 %5263
      %5265 = vrot.lane.b32.xlu0 %v1580, 48
      %v5266 = vpop.permute.xlu0 %5265
      %5267 = vrot.lane.b32.xlu0 %v1583, 48
      %v5268 = vpop.permute.xlu0 %5267
      %5269 = vrot.lane.b32.xlu0 %v1586, 48
      %v5270 = vpop.permute.xlu0 %5269
      %5271 = vrot.lane.b32.xlu0 %v1589, 48
      %v5272 = vpop.permute.xlu0 %5271
      %5273 = vrot.lane.b32.xlu0 %v1592, 48
      %v5274 = vpop.permute.xlu0 %5273
      %5275 = vrot.lane.b32.xlu0 %v1595, 48
      %v5276 = vpop.permute.xlu0 %5275
      %5277 = vrot.lane.b32.xlu0 %v1598, 48
      %v5278 = vpop.permute.xlu0 %5277
      %5279 = vrot.lane.b32.xlu0 %v1601, 48
      %v5280 = vpop.permute.xlu0 %5279
      %5281 = vrot.lane.b32.xlu0 %v1604, 48
      %v5282 = vpop.permute.xlu0 %5281
      %5283 = vrot.lane.b32.xlu0 %v1607, 48
      %v5284 = vpop.permute.xlu0 %5283
      %5285 = vrot.lane.b32.xlu0 %v1610, 48
      %v5286 = vpop.permute.xlu0 %5285
      %5287 = vrot.lane.b32.xlu0 %v1613, 48
      %v5288 = vpop.permute.xlu0 %5287
      %5289 = vrot.lane.b32.xlu0 %v1616, 48
      %v5290 = vpop.permute.xlu0 %5289
      %5291 = vrot.lane.b32.xlu0 %v1619, 48
      %v5292 = vpop.permute.xlu0 %5291
      %5293 = vrot.lane.b32.xlu0 %v1622, 48
      %v5294 = vpop.permute.xlu0 %5293
      %5295 = vrot.lane.b32.xlu0 %v1625, 48
      %v5296 = vpop.permute.xlu0 %5295
      %5297 = vrot.lane.b32.xlu0 %v1628, 48
      %v5298 = vpop.permute.xlu0 %5297
      %5299 = vrot.lane.b32.xlu0 %v1631, 48
      %v5300 = vpop.permute.xlu0 %5299
      %5301 = vrot.lane.b32.xlu0 %v1634, 48
      %v5302 = vpop.permute.xlu0 %5301
      %s5335 = scalar_lea.vmem %s601, 64
      %5336 = vst.msk [vmem:[%s5335] sm:$0xff] %vm1668, %v5240
      %5337 = vst.msk [vmem:[%s5335 + $0x8] sm:$0xff] %vm1668, %v5242
      %5338 = vst.msk [vmem:[%s5335 + $0x10] sm:$0xff] %vm1668, %v5244
      %5339 = vst.msk [vmem:[%s5335 + $0x18] sm:$0xff] %vm1668, %v5246
      %5340 = vst.msk [vmem:[%s5335 + $0x80] sm:$0xff] %vm1668, %v5248
      %5341 = vst.msk [vmem:[%s5335 + $0x88] sm:$0xff] %vm1668, %v5250
      %5342 = vst.msk [vmem:[%s5335 + $0x90] sm:$0xff] %vm1668, %v5252
      %5343 = vst.msk [vmem:[%s5335 + $0x98] sm:$0xff] %vm1668, %v5254
      %5344 = vst.msk [vmem:[%s5335 + $0x100] sm:$0xff] %vm1668, %v5256
      %5345 = vst.msk [vmem:[%s5335 + $0x108] sm:$0xff] %vm1668, %v5258
      %5346 = vst.msk [vmem:[%s5335 + $0x110] sm:$0xff] %vm1668, %v5260
      %5347 = vst.msk [vmem:[%s5335 + $0x118] sm:$0xff] %vm1668, %v5262
      %5348 = vst.msk [vmem:[%s5335 + $0x180] sm:$0xff] %vm1668, %v5264
      %5349 = vst.msk [vmem:[%s5335 + $0x188] sm:$0xff] %vm1668, %v5266
      %5350 = vst.msk [vmem:[%s5335 + $0x190] sm:$0xff] %vm1668, %v5268
      %5351 = vst.msk [vmem:[%s5335 + $0x198] sm:$0xff] %vm1668, %v5270
      %5352 = vst.msk [vmem:[%s5335 + $0x200] sm:$0xff] %vm1668, %v5272
      %5353 = vst.msk [vmem:[%s5335 + $0x208] sm:$0xff] %vm1668, %v5274
      %5354 = vst.msk [vmem:[%s5335 + $0x210] sm:$0xff] %vm1668, %v5276
      %5355 = vst.msk [vmem:[%s5335 + $0x218] sm:$0xff] %vm1668, %v5278
      %5356 = vst.msk [vmem:[%s5335 + $0x280] sm:$0xff] %vm1668, %v5280
      %5357 = vst.msk [vmem:[%s5335 + $0x288] sm:$0xff] %vm1668, %v5282
      %5358 = vst.msk [vmem:[%s5335 + $0x290] sm:$0xff] %vm1668, %v5284
      %5359 = vst.msk [vmem:[%s5335 + $0x298] sm:$0xff] %vm1668, %v5286
      %5360 = vst.msk [vmem:[%s5335 + $0x300] sm:$0xff] %vm1668, %v5288
      %5361 = vst.msk [vmem:[%s5335 + $0x308] sm:$0xff] %vm1668, %v5290
      %5362 = vst.msk [vmem:[%s5335 + $0x310] sm:$0xff] %vm1668, %v5292
      %5363 = vst.msk [vmem:[%s5335 + $0x318] sm:$0xff] %vm1668, %v5294
      %5364 = vst.msk [vmem:[%s5335 + $0x380] sm:$0xff] %vm1668, %v5296
      %5365 = vst.msk [vmem:[%s5335 + $0x388] sm:$0xff] %vm1668, %v5298
      %5366 = vst.msk [vmem:[%s5335 + $0x390] sm:$0xff] %vm1668, %v5300
      %5367 = vst.msk [vmem:[%s5335 + $0x398] sm:$0xff] %vm1668, %v5302
      %s5368 = scalar_lea.vmem %s7, 64
      %v5369 = vld [vmem:[%s5368] sm:$0xff]
      %v5370 = vld [vmem:[%s5368 + $0x8] sm:$0xff]
      %v5371 = vld [vmem:[%s5368 + $0x10] sm:$0xff]
      %v5372 = vld [vmem:[%s5368 + $0x18] sm:$0xff]
      %v5373 = vsel %vm1668, %v4982, 0
      %v5375 = vsel %vm1668, %v4984, 0
      %v5377 = vsel %vm1668, %v4986, 0
      %v5379 = vsel %vm1668, %v4988, 0
      %v5381 = vsel %vm1668, %v5111, 0
      %v5383 = vsel %vm1668, %v5113, 0
      %v5385 = vsel %vm1668, %v5115, 0
      %v5387 = vsel %vm1668, %v5117, 0
      %5389 = vmatpush.xpose.msra.mxu0 0.0
      %5390 = vmatpush.xpose.msra.mxu0 0.0
      %5391 = vmatpush.xpose.msra.mxu0 0.0
      %5392 = vmatpush.xpose.msra.mxu0 0.0
      %5393 = vmatpush.xpose.msra.mxu0 0.0
      %5394 = vmatpush.xpose.msra.mxu0 0.0
      %5395 = vmatpush.xpose.msra.mxu0 0.0
      %5396 = vmatpush.xpose.msra.mxu0 0.0
      %5397 = vmatpush.xpose.msra.mxu0 0.0
      %5398 = vmatpush.xpose.msra.mxu0 0.0
      %5399 = vmatpush.xpose.msra.mxu0 0.0
      %5400 = vmatpush.xpose.msra.mxu0 0.0
      %5401 = vmatpush.xpose.msra.mxu0 %v5387
      %5402 = vmatpush.xpose.msra.mxu0 %v5385
      %5403 = vmatpush.xpose.msra.mxu0 %v5383
      %5404 = vmatpush.xpose.msra.mxu0 %v5381
      %5405 = vmatmul.f32.gmra.mxu0 %v5373
      %v5406 = vpop.f32.mrf.mxu0
      %v5407 = vadd.f32 %v5369, %v5406
      %5408 = vmatmul.f32.gmra.mxu0 %v5375
      %v5409 = vpop.f32.mrf.mxu0
      %v5410 = vadd.f32 %v5370, %v5409
      %5411 = vmatmul.f32.gmra.mxu0 %v5377
      %v5412 = vpop.f32.mrf.mxu0
      %v5413 = vadd.f32 %v5371, %v5412
      %5414 = vmatmul.f32.gmra.mxu0 %v5379
      %v5415 = vpop.f32.mrf.mxu0
      %v5416 = vadd.f32 %v5372, %v5415
      %5417 = vdwg.mxu0
      %v5418 = vsel %vm1668, %v4990, 0
      %v5420 = vsel %vm1668, %v4992, 0
      %v5422 = vsel %vm1668, %v4994, 0
      %v5424 = vsel %vm1668, %v4996, 0
      %v5426 = vsel %vm1668, %v5119, 0
      %v5428 = vsel %vm1668, %v5121, 0
      %v5430 = vsel %vm1668, %v5123, 0
      %v5432 = vsel %vm1668, %v5125, 0
      %5434 = vmatpush.xpose.msra.mxu0 0.0
      %5435 = vmatpush.xpose.msra.mxu0 0.0
      %5436 = vmatpush.xpose.msra.mxu0 0.0
      %5437 = vmatpush.xpose.msra.mxu0 0.0
      %5438 = vmatpush.xpose.msra.mxu0 0.0
      %5439 = vmatpush.xpose.msra.mxu0 0.0
      %5440 = vmatpush.xpose.msra.mxu0 0.0
      %5441 = vmatpush.xpose.msra.mxu0 0.0
      %5442 = vmatpush.xpose.msra.mxu0 0.0
      %5443 = vmatpush.xpose.msra.mxu0 0.0
      %5444 = vmatpush.xpose.msra.mxu0 0.0
      %5445 = vmatpush.xpose.msra.mxu0 0.0
      %5446 = vmatpush.xpose.msra.mxu0 %v5432
      %5447 = vmatpush.xpose.msra.mxu0 %v5430
      %5448 = vmatpush.xpose.msra.mxu0 %v5428
      %5449 = vmatpush.xpose.msra.mxu0 %v5426
      %5450 = vmatmul.f32.gmra.mxu0 %v5418
      %v5451 = vpop.f32.mrf.mxu0
      %v5452 = vadd.f32 %v5369, %v5451
      %5453 = vmatmul.f32.gmra.mxu0 %v5420
      %v5454 = vpop.f32.mrf.mxu0
      %v5455 = vadd.f32 %v5370, %v5454
      %5456 = vmatmul.f32.gmra.mxu0 %v5422
      %v5457 = vpop.f32.mrf.mxu0
      %v5458 = vadd.f32 %v5371, %v5457
      %5459 = vmatmul.f32.gmra.mxu0 %v5424
      %v5460 = vpop.f32.mrf.mxu0
      %v5461 = vadd.f32 %v5372, %v5460
      %5462 = vdwg.mxu0
      %v5463 = vsel %vm1668, %v4998, 0
      %v5465 = vsel %vm1668, %v5000, 0
      %v5467 = vsel %vm1668, %v5002, 0
      %v5469 = vsel %vm1668, %v5004, 0
      %v5471 = vsel %vm1668, %v5127, 0
      %v5473 = vsel %vm1668, %v5129, 0
      %v5475 = vsel %vm1668, %v5131, 0
      %v5477 = vsel %vm1668, %v5133, 0
      %5479 = vmatpush.xpose.msra.mxu0 0.0
      %5480 = vmatpush.xpose.msra.mxu0 0.0
      %5481 = vmatpush.xpose.msra.mxu0 0.0
      %5482 = vmatpush.xpose.msra.mxu0 0.0
      %5483 = vmatpush.xpose.msra.mxu0 0.0
      %5484 = vmatpush.xpose.msra.mxu0 0.0
      %5485 = vmatpush.xpose.msra.mxu0 0.0
      %5486 = vmatpush.xpose.msra.mxu0 0.0
      %5487 = vmatpush.xpose.msra.mxu0 0.0
      %5488 = vmatpush.xpose.msra.mxu0 0.0
      %5489 = vmatpush.xpose.msra.mxu0 0.0
      %5490 = vmatpush.xpose.msra.mxu0 0.0
      %5491 = vmatpush.xpose.msra.mxu0 %v5477
      %5492 = vmatpush.xpose.msra.mxu0 %v5475
      %5493 = vmatpush.xpose.msra.mxu0 %v5473
      %5494 = vmatpush.xpose.msra.mxu0 %v5471
      %5495 = vmatmul.f32.gmra.mxu0 %v5463
      %v5496 = vpop.f32.mrf.mxu0
      %v5497 = vadd.f32 %v5369, %v5496
      %5498 = vmatmul.f32.gmra.mxu0 %v5465
      %v5499 = vpop.f32.mrf.mxu0
      %v5500 = vadd.f32 %v5370, %v5499
      %5501 = vmatmul.f32.gmra.mxu0 %v5467
      %v5502 = vpop.f32.mrf.mxu0
      %v5503 = vadd.f32 %v5371, %v5502
      %5504 = vmatmul.f32.gmra.mxu0 %v5469
      %v5505 = vpop.f32.mrf.mxu0
      %v5506 = vadd.f32 %v5372, %v5505
      %5507 = vdwg.mxu0
      %v5508 = vsel %vm1668, %v5006, 0
      %v5510 = vsel %vm1668, %v5008, 0
      %v5512 = vsel %vm1668, %v5010, 0
      %v5514 = vsel %vm1668, %v5012, 0
      %v5516 = vsel %vm1668, %v5135, 0
      %v5518 = vsel %vm1668, %v5137, 0
      %v5520 = vsel %vm1668, %v5139, 0
      %v5522 = vsel %vm1668, %v5141, 0
      %5524 = vmatpush.xpose.msra.mxu0 0.0
      %5525 = vmatpush.xpose.msra.mxu0 0.0
      %5526 = vmatpush.xpose.msra.mxu0 0.0
      %5527 = vmatpush.xpose.msra.mxu0 0.0
      %5528 = vmatpush.xpose.msra.mxu0 0.0
      %5529 = vmatpush.xpose.msra.mxu0 0.0
      %5530 = vmatpush.xpose.msra.mxu0 0.0
      %5531 = vmatpush.xpose.msra.mxu0 0.0
      %5532 = vmatpush.xpose.msra.mxu0 0.0
      %5533 = vmatpush.xpose.msra.mxu0 0.0
      %5534 = vmatpush.xpose.msra.mxu0 0.0
      %5535 = vmatpush.xpose.msra.mxu0 0.0
      %5536 = vmatpush.xpose.msra.mxu0 %v5522
      %5537 = vmatpush.xpose.msra.mxu0 %v5520
      %5538 = vmatpush.xpose.msra.mxu0 %v5518
      %5539 = vmatpush.xpose.msra.mxu0 %v5516
      %5540 = vmatmul.f32.gmra.mxu0 %v5508
      %v5541 = vpop.f32.mrf.mxu0
      %v5542 = vadd.f32 %v5369, %v5541
      %5543 = vmatmul.f32.gmra.mxu0 %v5510
      %v5544 = vpop.f32.mrf.mxu0
      %v5545 = vadd.f32 %v5370, %v5544
      %5546 = vmatmul.f32.gmra.mxu0 %v5512
      %v5547 = vpop.f32.mrf.mxu0
      %v5548 = vadd.f32 %v5371, %v5547
      %5549 = vmatmul.f32.gmra.mxu0 %v5514
      %v5550 = vpop.f32.mrf.mxu0
      %v5551 = vadd.f32 %v5372, %v5550
      %5552 = vdwg.mxu0
      %v5553 = vsel %vm1668, %v5014, 0
      %v5555 = vsel %vm1668, %v5016, 0
      %v5557 = vsel %vm1668, %v5018, 0
      %v5559 = vsel %vm1668, %v5020, 0
      %v5561 = vsel %vm1668, %v5143, 0
      %v5563 = vsel %vm1668, %v5145, 0
      %v5565 = vsel %vm1668, %v5147, 0
      %v5567 = vsel %vm1668, %v5149, 0
      %5569 = vmatpush.xpose.msra.mxu0 0.0
      %5570 = vmatpush.xpose.msra.mxu0 0.0
      %5571 = vmatpush.xpose.msra.mxu0 0.0
      %5572 = vmatpush.xpose.msra.mxu0 0.0
      %5573 = vmatpush.xpose.msra.mxu0 0.0
      %5574 = vmatpush.xpose.msra.mxu0 0.0
      %5575 = vmatpush.xpose.msra.mxu0 0.0
      %5576 = vmatpush.xpose.msra.mxu0 0.0
      %5577 = vmatpush.xpose.msra.mxu0 0.0
      %5578 = vmatpush.xpose.msra.mxu0 0.0
      %5579 = vmatpush.xpose.msra.mxu0 0.0
      %5580 = vmatpush.xpose.msra.mxu0 0.0
      %5581 = vmatpush.xpose.msra.mxu0 %v5567
      %5582 = vmatpush.xpose.msra.mxu0 %v5565
      %5583 = vmatpush.xpose.msra.mxu0 %v5563
      %5584 = vmatpush.xpose.msra.mxu0 %v5561
      %5585 = vmatmul.f32.gmra.mxu0 %v5553
      %v5586 = vpop.f32.mrf.mxu0
      %v5587 = vadd.f32 %v5369, %v5586
      %5588 = vmatmul.f32.gmra.mxu0 %v5555
      %v5589 = vpop.f32.mrf.mxu0
      %v5590 = vadd.f32 %v5370, %v5589
      %5591 = vmatmul.f32.gmra.mxu0 %v5557
      %v5592 = vpop.f32.mrf.mxu0
      %v5593 = vadd.f32 %v5371, %v5592
      %5594 = vmatmul.f32.gmra.mxu0 %v5559
      %v5595 = vpop.f32.mrf.mxu0
      %v5596 = vadd.f32 %v5372, %v5595
      %5597 = vdwg.mxu0
      %v5598 = vsel %vm1668, %v5022, 0
      %v5600 = vsel %vm1668, %v5024, 0
      %v5602 = vsel %vm1668, %v5026, 0
      %v5604 = vsel %vm1668, %v5028, 0
      %v5606 = vsel %vm1668, %v5151, 0
      %v5608 = vsel %vm1668, %v5153, 0
      %v5610 = vsel %vm1668, %v5155, 0
      %v5612 = vsel %vm1668, %v5157, 0
      %5614 = vmatpush.xpose.msra.mxu0 0.0
      %5615 = vmatpush.xpose.msra.mxu0 0.0
      %5616 = vmatpush.xpose.msra.mxu0 0.0
      %5617 = vmatpush.xpose.msra.mxu0 0.0
      %5618 = vmatpush.xpose.msra.mxu0 0.0
      %5619 = vmatpush.xpose.msra.mxu0 0.0
      %5620 = vmatpush.xpose.msra.mxu0 0.0
      %5621 = vmatpush.xpose.msra.mxu0 0.0
      %5622 = vmatpush.xpose.msra.mxu0 0.0
      %5623 = vmatpush.xpose.msra.mxu0 0.0
      %5624 = vmatpush.xpose.msra.mxu0 0.0
      %5625 = vmatpush.xpose.msra.mxu0 0.0
      %5626 = vmatpush.xpose.msra.mxu0 %v5612
      %5627 = vmatpush.xpose.msra.mxu0 %v5610
      %5628 = vmatpush.xpose.msra.mxu0 %v5608
      %5629 = vmatpush.xpose.msra.mxu0 %v5606
      %5630 = vmatmul.f32.gmra.mxu0 %v5598
      %v5631 = vpop.f32.mrf.mxu0
      %v5632 = vadd.f32 %v5369, %v5631
      %5633 = vmatmul.f32.gmra.mxu0 %v5600
      %v5634 = vpop.f32.mrf.mxu0
      %v5635 = vadd.f32 %v5370, %v5634
      %5636 = vmatmul.f32.gmra.mxu0 %v5602
      %v5637 = vpop.f32.mrf.mxu0
      %v5638 = vadd.f32 %v5371, %v5637
      %5639 = vmatmul.f32.gmra.mxu0 %v5604
      %v5640 = vpop.f32.mrf.mxu0
      %v5641 = vadd.f32 %v5372, %v5640
      %5642 = vdwg.mxu0
      %v5643 = vsel %vm1668, %v5030, 0
      %v5645 = vsel %vm1668, %v5032, 0
      %v5647 = vsel %vm1668, %v5034, 0
      %v5649 = vsel %vm1668, %v5036, 0
      %v5651 = vsel %vm1668, %v5159, 0
      %v5653 = vsel %vm1668, %v5161, 0
      %v5655 = vsel %vm1668, %v5163, 0
      %v5657 = vsel %vm1668, %v5165, 0
      %5659 = vmatpush.xpose.msra.mxu0 0.0
      %5660 = vmatpush.xpose.msra.mxu0 0.0
      %5661 = vmatpush.xpose.msra.mxu0 0.0
      %5662 = vmatpush.xpose.msra.mxu0 0.0
      %5663 = vmatpush.xpose.msra.mxu0 0.0
      %5664 = vmatpush.xpose.msra.mxu0 0.0
      %5665 = vmatpush.xpose.msra.mxu0 0.0
      %5666 = vmatpush.xpose.msra.mxu0 0.0
      %5667 = vmatpush.xpose.msra.mxu0 0.0
      %5668 = vmatpush.xpose.msra.mxu0 0.0
      %5669 = vmatpush.xpose.msra.mxu0 0.0
      %5670 = vmatpush.xpose.msra.mxu0 0.0
      %5671 = vmatpush.xpose.msra.mxu0 %v5657
      %5672 = vmatpush.xpose.msra.mxu0 %v5655
      %5673 = vmatpush.xpose.msra.mxu0 %v5653
      %5674 = vmatpush.xpose.msra.mxu0 %v5651
      %5675 = vmatmul.f32.gmra.mxu0 %v5643
      %v5676 = vpop.f32.mrf.mxu0
      %v5677 = vadd.f32 %v5369, %v5676
      %5678 = vmatmul.f32.gmra.mxu0 %v5645
      %v5679 = vpop.f32.mrf.mxu0
      %v5680 = vadd.f32 %v5370, %v5679
      %5681 = vmatmul.f32.gmra.mxu0 %v5647
      %v5682 = vpop.f32.mrf.mxu0
      %v5683 = vadd.f32 %v5371, %v5682
      %5684 = vmatmul.f32.gmra.mxu0 %v5649
      %v5685 = vpop.f32.mrf.mxu0
      %v5686 = vadd.f32 %v5372, %v5685
      %5687 = vdwg.mxu0
      %v5688 = vsel %vm1668, %v5038, 0
      %v5690 = vsel %vm1668, %v5040, 0
      %v5692 = vsel %vm1668, %v5042, 0
      %v5694 = vsel %vm1668, %v5044, 0
      %v5696 = vsel %vm1668, %v5167, 0
      %v5698 = vsel %vm1668, %v5169, 0
      %v5700 = vsel %vm1668, %v5171, 0
      %v5702 = vsel %vm1668, %v5173, 0
      %5704 = vmatpush.xpose.msra.mxu0 0.0
      %5705 = vmatpush.xpose.msra.mxu0 0.0
      %5706 = vmatpush.xpose.msra.mxu0 0.0
      %5707 = vmatpush.xpose.msra.mxu0 0.0
      %5708 = vmatpush.xpose.msra.mxu0 0.0
      %5709 = vmatpush.xpose.msra.mxu0 0.0
      %5710 = vmatpush.xpose.msra.mxu0 0.0
      %5711 = vmatpush.xpose.msra.mxu0 0.0
      %5712 = vmatpush.xpose.msra.mxu0 0.0
      %5713 = vmatpush.xpose.msra.mxu0 0.0
      %5714 = vmatpush.xpose.msra.mxu0 0.0
      %5715 = vmatpush.xpose.msra.mxu0 0.0
      %5716 = vmatpush.xpose.msra.mxu0 %v5702
      %5717 = vmatpush.xpose.msra.mxu0 %v5700
      %5718 = vmatpush.xpose.msra.mxu0 %v5698
      %5719 = vmatpush.xpose.msra.mxu0 %v5696
      %5720 = vmatmul.f32.gmra.mxu0 %v5688
      %v5721 = vpop.f32.mrf.mxu0
      %v5722 = vadd.f32 %v5369, %v5721
      %5723 = vmatmul.f32.gmra.mxu0 %v5690
      %v5724 = vpop.f32.mrf.mxu0
      %v5725 = vadd.f32 %v5370, %v5724
      %5726 = vmatmul.f32.gmra.mxu0 %v5692
      %v5727 = vpop.f32.mrf.mxu0
      %v5728 = vadd.f32 %v5371, %v5727
      %5729 = vmatmul.f32.gmra.mxu0 %v5694
      %v5730 = vpop.f32.mrf.mxu0
      %v5731 = vadd.f32 %v5372, %v5730
      %5732 = vdwg.mxu0
      %v5733 = vsel %vm635, %v5407, -inf
      %5734 = vmax.xlane.f32.xlu0 %v5733
      %v5735 = vpop.xlane.xlu0 %5734
      %v5736 = vsel %vm635, %v5410, -inf
      %5737 = vmax.xlane.f32.xlu0 %v5736
      %v5738 = vpop.xlane.xlu0 %5737
      %v5739 = vsel %vm635, %v5413, -inf
      %5740 = vmax.xlane.f32.xlu0 %v5739
      %v5741 = vpop.xlane.xlu0 %5740
      %v5742 = vsel %vm635, %v5416, -inf
      %5743 = vmax.xlane.f32.xlu0 %v5742
      %v5744 = vpop.xlane.xlu0 %5743
      %v5745 = vsel %vm635, %v5452, -inf
      %5746 = vmax.xlane.f32.xlu0 %v5745
      %v5747 = vpop.xlane.xlu0 %5746
      %v5748 = vsel %vm635, %v5455, -inf
      %5749 = vmax.xlane.f32.xlu0 %v5748
      %v5750 = vpop.xlane.xlu0 %5749
      %v5751 = vsel %vm635, %v5458, -inf
      %5752 = vmax.xlane.f32.xlu0 %v5751
      %v5753 = vpop.xlane.xlu0 %5752
      %v5754 = vsel %vm635, %v5461, -inf
      %5755 = vmax.xlane.f32.xlu0 %v5754
      %v5756 = vpop.xlane.xlu0 %5755
      %v5757 = vsel %vm635, %v5497, -inf
      %5758 = vmax.xlane.f32.xlu0 %v5757
      %v5759 = vpop.xlane.xlu0 %5758
      %v5760 = vsel %vm635, %v5500, -inf
      %5761 = vmax.xlane.f32.xlu0 %v5760
      %v5762 = vpop.xlane.xlu0 %5761
      %v5763 = vsel %vm635, %v5503, -inf
      %5764 = vmax.xlane.f32.xlu0 %v5763
      %v5765 = vpop.xlane.xlu0 %5764
      %v5766 = vsel %vm635, %v5506, -inf
      %5767 = vmax.xlane.f32.xlu0 %v5766
      %v5768 = vpop.xlane.xlu0 %5767
      %v5769 = vsel %vm635, %v5542, -inf
      %5770 = vmax.xlane.f32.xlu0 %v5769
      %v5771 = vpop.xlane.xlu0 %5770
      %v5772 = vsel %vm635, %v5545, -inf
      %5773 = vmax.xlane.f32.xlu0 %v5772
      %v5774 = vpop.xlane.xlu0 %5773
      %v5775 = vsel %vm635, %v5548, -inf
      %5776 = vmax.xlane.f32.xlu0 %v5775
      %v5777 = vpop.xlane.xlu0 %5776
      %v5778 = vsel %vm635, %v5551, -inf
      %5779 = vmax.xlane.f32.xlu0 %v5778
      %v5780 = vpop.xlane.xlu0 %5779
      %v5781 = vsel %vm635, %v5587, -inf
      %5782 = vmax.xlane.f32.xlu0 %v5781
      %v5783 = vpop.xlane.xlu0 %5782
      %v5784 = vsel %vm635, %v5590, -inf
      %5785 = vmax.xlane.f32.xlu0 %v5784
      %v5786 = vpop.xlane.xlu0 %5785
      %v5787 = vsel %vm635, %v5593, -inf
      %5788 = vmax.xlane.f32.xlu0 %v5787
      %v5789 = vpop.xlane.xlu0 %5788
      %v5790 = vsel %vm635, %v5596, -inf
      %5791 = vmax.xlane.f32.xlu0 %v5790
      %v5792 = vpop.xlane.xlu0 %5791
      %v5793 = vsel %vm635, %v5632, -inf
      %5794 = vmax.xlane.f32.xlu0 %v5793
      %v5795 = vpop.xlane.xlu0 %5794
      %v5796 = vsel %vm635, %v5635, -inf
      %5797 = vmax.xlane.f32.xlu0 %v5796
      %v5798 = vpop.xlane.xlu0 %5797
      %v5799 = vsel %vm635, %v5638, -inf
      %5800 = vmax.xlane.f32.xlu0 %v5799
      %v5801 = vpop.xlane.xlu0 %5800
      %v5802 = vsel %vm635, %v5641, -inf
      %5803 = vmax.xlane.f32.xlu0 %v5802
      %v5804 = vpop.xlane.xlu0 %5803
      %v5805 = vsel %vm635, %v5677, -inf
      %5806 = vmax.xlane.f32.xlu0 %v5805
      %v5807 = vpop.xlane.xlu0 %5806
      %v5808 = vsel %vm635, %v5680, -inf
      %5809 = vmax.xlane.f32.xlu0 %v5808
      %v5810 = vpop.xlane.xlu0 %5809
      %v5811 = vsel %vm635, %v5683, -inf
      %5812 = vmax.xlane.f32.xlu0 %v5811
      %v5813 = vpop.xlane.xlu0 %5812
      %v5814 = vsel %vm635, %v5686, -inf
      %5815 = vmax.xlane.f32.xlu0 %v5814
      %v5816 = vpop.xlane.xlu0 %5815
      %v5817 = vsel %vm635, %v5722, -inf
      %5818 = vmax.xlane.f32.xlu0 %v5817
      %v5819 = vpop.xlane.xlu0 %5818
      %v5820 = vsel %vm635, %v5725, -inf
      %5821 = vmax.xlane.f32.xlu0 %v5820
      %v5822 = vpop.xlane.xlu0 %5821
      %v5823 = vsel %vm635, %v5728, -inf
      %5824 = vmax.xlane.f32.xlu0 %v5823
      %v5825 = vpop.xlane.xlu0 %5824
      %v5826 = vsel %vm635, %v5731, -inf
      %5827 = vmax.xlane.f32.xlu0 %v5826
      %v5828 = vpop.xlane.xlu0 %5827
      %v5829 = vsub.f32 %v5407, %v5735
      %v5830 = vsub.f32 %v5410, %v5738
      %v5831 = vsub.f32 %v5413, %v5741
      %v5832 = vsub.f32 %v5416, %v5744
      %v5833 = vsub.f32 %v5452, %v5747
      %v5834 = vsub.f32 %v5455, %v5750
      %v5835 = vsub.f32 %v5458, %v5753
      %v5836 = vsub.f32 %v5461, %v5756
      %v5837 = vsub.f32 %v5497, %v5759
      %v5838 = vsub.f32 %v5500, %v5762
      %v5839 = vsub.f32 %v5503, %v5765
      %v5840 = vsub.f32 %v5506, %v5768
      %v5841 = vsub.f32 %v5542, %v5771
      %v5842 = vsub.f32 %v5545, %v5774
      %v5843 = vsub.f32 %v5548, %v5777
      %v5844 = vsub.f32 %v5551, %v5780
      %v5845 = vsub.f32 %v5587, %v5783
      %v5846 = vsub.f32 %v5590, %v5786
      %v5847 = vsub.f32 %v5593, %v5789
      %v5848 = vsub.f32 %v5596, %v5792
      %v5849 = vsub.f32 %v5632, %v5795
      %v5850 = vsub.f32 %v5635, %v5798
      %v5851 = vsub.f32 %v5638, %v5801
      %v5852 = vsub.f32 %v5641, %v5804
      %v5853 = vsub.f32 %v5677, %v5807
      %v5854 = vsub.f32 %v5680, %v5810
      %v5855 = vsub.f32 %v5683, %v5813
      %v5856 = vsub.f32 %v5686, %v5816
      %v5857 = vsub.f32 %v5722, %v5819
      %v5858 = vsub.f32 %v5725, %v5822
      %v5859 = vsub.f32 %v5728, %v5825
      %v5860 = vsub.f32 %v5731, %v5828
      %v5861 = vmul.f32 %v5829, 1.442695
      %v5862 = vpow.pop %v5861
      %v5863 = vmul.f32 %v5830, 1.442695
      %v5864 = vpow.pop %v5863
      %v5865 = vmul.f32 %v5831, 1.442695
      %v5866 = vpow.pop %v5865
      %v5867 = vmul.f32 %v5832, 1.442695
      %v5868 = vpow.pop %v5867
      %v5869 = vmul.f32 %v5833, 1.442695
      %v5870 = vpow.pop %v5869
      %v5871 = vmul.f32 %v5834, 1.442695
      %v5872 = vpow.pop %v5871
      %v5873 = vmul.f32 %v5835, 1.442695
      %v5874 = vpow.pop %v5873
      %v5875 = vmul.f32 %v5836, 1.442695
      %v5876 = vpow.pop %v5875
      %v5877 = vmul.f32 %v5837, 1.442695
      %v5878 = vpow.pop %v5877
      %v5879 = vmul.f32 %v5838, 1.442695
      %v5880 = vpow.pop %v5879
      %v5881 = vmul.f32 %v5839, 1.442695
      %v5882 = vpow.pop %v5881
      %v5883 = vmul.f32 %v5840, 1.442695
      %v5884 = vpow.pop %v5883
      %v5885 = vmul.f32 %v5841, 1.442695
      %v5886 = vpow.pop %v5885
      %v5887 = vmul.f32 %v5842, 1.442695
      %v5888 = vpow.pop %v5887
      %v5889 = vmul.f32 %v5843, 1.442695
      %v5890 = vpow.pop %v5889
      %v5891 = vmul.f32 %v5844, 1.442695
      %v5892 = vpow.pop %v5891
      %v5893 = vmul.f32 %v5845, 1.442695
      %v5894 = vpow.pop %v5893
      %v5895 = vmul.f32 %v5846, 1.442695
      %v5896 = vpow.pop %v5895
      %v5897 = vmul.f32 %v5847, 1.442695
      %v5898 = vpow.pop %v5897
      %v5899 = vmul.f32 %v5848, 1.442695
      %v5900 = vpow.pop %v5899
      %v5901 = vmul.f32 %v5849, 1.442695
      %v5902 = vpow.pop %v5901
      %v5903 = vmul.f32 %v5850, 1.442695
      %v5904 = vpow.pop %v5903
      %v5905 = vmul.f32 %v5851, 1.442695
      %v5906 = vpow.pop %v5905
      %v5907 = vmul.f32 %v5852, 1.442695
      %v5908 = vpow.pop %v5907
      %v5909 = vmul.f32 %v5853, 1.442695
      %v5910 = vpow.pop %v5909
      %v5911 = vmul.f32 %v5854, 1.442695
      %v5912 = vpow.pop %v5911
      %v5913 = vmul.f32 %v5855, 1.442695
      %v5914 = vpow.pop %v5913
      %v5915 = vmul.f32 %v5856, 1.442695
      %v5916 = vpow.pop %v5915
      %v5917 = vmul.f32 %v5857, 1.442695
      %v5918 = vpow.pop %v5917
      %v5919 = vmul.f32 %v5858, 1.442695
      %v5920 = vpow.pop %v5919
      %v5921 = vmul.f32 %v5859, 1.442695
      %v5922 = vpow.pop %v5921
      %v5923 = vmul.f32 %v5860, 1.442695
      %v5924 = vpow.pop %v5923
      %v5925 = vsel %vm635, %v5862, 0.0
      %5926 = vadd.xlane.f32.xlu0 %v5925
      %v5927 = vpop.xlane.xlu0 %5926
      %v5928 = vsel %vm635, %v5864, 0.0
      %5929 = vadd.xlane.f32.xlu0 %v5928
      %v5930 = vpop.xlane.xlu0 %5929
      %v5931 = vsel %vm635, %v5866, 0.0
      %5932 = vadd.xlane.f32.xlu0 %v5931
      %v5933 = vpop.xlane.xlu0 %5932
      %v5934 = vsel %vm635, %v5868, 0.0
      %5935 = vadd.xlane.f32.xlu0 %v5934
      %v5936 = vpop.xlane.xlu0 %5935
      %v5937 = vsel %vm635, %v5870, 0.0
      %5938 = vadd.xlane.f32.xlu0 %v5937
      %v5939 = vpop.xlane.xlu0 %5938
      %v5940 = vsel %vm635, %v5872, 0.0
      %5941 = vadd.xlane.f32.xlu0 %v5940
      %v5942 = vpop.xlane.xlu0 %5941
      %v5943 = vsel %vm635, %v5874, 0.0
      %5944 = vadd.xlane.f32.xlu0 %v5943
      %v5945 = vpop.xlane.xlu0 %5944
      %v5946 = vsel %vm635, %v5876, 0.0
      %5947 = vadd.xlane.f32.xlu0 %v5946
      %v5948 = vpop.xlane.xlu0 %5947
      %v5949 = vsel %vm635, %v5878, 0.0
      %5950 = vadd.xlane.f32.xlu0 %v5949
      %v5951 = vpop.xlane.xlu0 %5950
      %v5952 = vsel %vm635, %v5880, 0.0
      %5953 = vadd.xlane.f32.xlu0 %v5952
      %v5954 = vpop.xlane.xlu0 %5953
      %v5955 = vsel %vm635, %v5882, 0.0
      %5956 = vadd.xlane.f32.xlu0 %v5955
      %v5957 = vpop.xlane.xlu0 %5956
      %v5958 = vsel %vm635, %v5884, 0.0
      %5959 = vadd.xlane.f32.xlu0 %v5958
      %v5960 = vpop.xlane.xlu0 %5959
      %v5961 = vsel %vm635, %v5886, 0.0
      %5962 = vadd.xlane.f32.xlu0 %v5961
      %v5963 = vpop.xlane.xlu0 %5962
      %v5964 = vsel %vm635, %v5888, 0.0
      %5965 = vadd.xlane.f32.xlu0 %v5964
      %v5966 = vpop.xlane.xlu0 %5965
      %v5967 = vsel %vm635, %v5890, 0.0
      %5968 = vadd.xlane.f32.xlu0 %v5967
      %v5969 = vpop.xlane.xlu0 %5968
      %v5970 = vsel %vm635, %v5892, 0.0
      %5971 = vadd.xlane.f32.xlu0 %v5970
      %v5972 = vpop.xlane.xlu0 %5971
      %v5973 = vsel %vm635, %v5894, 0.0
      %5974 = vadd.xlane.f32.xlu0 %v5973
      %v5975 = vpop.xlane.xlu0 %5974
      %v5976 = vsel %vm635, %v5896, 0.0
      %5977 = vadd.xlane.f32.xlu0 %v5976
      %v5978 = vpop.xlane.xlu0 %5977
      %v5979 = vsel %vm635, %v5898, 0.0
      %5980 = vadd.xlane.f32.xlu0 %v5979
      %v5981 = vpop.xlane.xlu0 %5980
      %v5982 = vsel %vm635, %v5900, 0.0
      %5983 = vadd.xlane.f32.xlu0 %v5982
      %v5984 = vpop.xlane.xlu0 %5983
      %v5985 = vsel %vm635, %v5902, 0.0
      %5986 = vadd.xlane.f32.xlu0 %v5985
      %v5987 = vpop.xlane.xlu0 %5986
      %v5988 = vsel %vm635, %v5904, 0.0
      %5989 = vadd.xlane.f32.xlu0 %v5988
      %v5990 = vpop.xlane.xlu0 %5989
      %v5991 = vsel %vm635, %v5906, 0.0
      %5992 = vadd.xlane.f32.xlu0 %v5991
      %v5993 = vpop.xlane.xlu0 %5992
      %v5994 = vsel %vm635, %v5908, 0.0
      %5995 = vadd.xlane.f32.xlu0 %v5994
      %v5996 = vpop.xlane.xlu0 %5995
      %v5997 = vsel %vm635, %v5910, 0.0
      %5998 = vadd.xlane.f32.xlu0 %v5997
      %v5999 = vpop.xlane.xlu0 %5998
      %v6000 = vsel %vm635, %v5912, 0.0
      %6001 = vadd.xlane.f32.xlu0 %v6000
      %v6002 = vpop.xlane.xlu0 %6001
      %v6003 = vsel %vm635, %v5914, 0.0
      %6004 = vadd.xlane.f32.xlu0 %v6003
      %v6005 = vpop.xlane.xlu0 %6004
      %v6006 = vsel %vm635, %v5916, 0.0
      %6007 = vadd.xlane.f32.xlu0 %v6006
      %v6008 = vpop.xlane.xlu0 %6007
      %v6009 = vsel %vm635, %v5918, 0.0
      %6010 = vadd.xlane.f32.xlu0 %v6009
      %v6011 = vpop.xlane.xlu0 %6010
      %v6012 = vsel %vm635, %v5920, 0.0
      %6013 = vadd.xlane.f32.xlu0 %v6012
      %v6014 = vpop.xlane.xlu0 %6013
      %v6015 = vsel %vm635, %v5922, 0.0
      %6016 = vadd.xlane.f32.xlu0 %v6015
      %v6017 = vpop.xlane.xlu0 %6016
      %v6018 = vsel %vm635, %v5924, 0.0
      %6019 = vadd.xlane.f32.xlu0 %v6018
      %v6020 = vpop.xlane.xlu0 %6019
      %v6021 = vrcp.pop %v5927
      %v6022 = vrcp.pop %v5930
      %v6023 = vrcp.pop %v5933
      %v6024 = vrcp.pop %v5936
      %v6025 = vrcp.pop %v5939
      %v6026 = vrcp.pop %v5942
      %v6027 = vrcp.pop %v5945
      %v6028 = vrcp.pop %v5948
      %v6029 = vrcp.pop %v5951
      %v6030 = vrcp.pop %v5954
      %v6031 = vrcp.pop %v5957
      %v6032 = vrcp.pop %v5960
      %v6033 = vrcp.pop %v5963
      %v6034 = vrcp.pop %v5966
      %v6035 = vrcp.pop %v5969
      %v6036 = vrcp.pop %v5972
      %v6037 = vrcp.pop %v5975
      %v6038 = vrcp.pop %v5978
      %v6039 = vrcp.pop %v5981
      %v6040 = vrcp.pop %v5984
      %v6041 = vrcp.pop %v5987
      %v6042 = vrcp.pop %v5990
      %v6043 = vrcp.pop %v5993
      %v6044 = vrcp.pop %v5996
      %v6045 = vrcp.pop %v5999
      %v6046 = vrcp.pop %v6002
      %v6047 = vrcp.pop %v6005
      %v6048 = vrcp.pop %v6008
      %v6049 = vrcp.pop %v6011
      %v6050 = vrcp.pop %v6014
      %v6051 = vrcp.pop %v6017
      %v6052 = vrcp.pop %v6020
      %v6053 = vmul.f32 %v5862, %v6021
      %v6054 = vmul.f32 %v5864, %v6022
      %v6055 = vmul.f32 %v5866, %v6023
      %v6056 = vmul.f32 %v5868, %v6024
      %v6057 = vmul.f32 %v5870, %v6025
      %v6058 = vmul.f32 %v5872, %v6026
      %v6059 = vmul.f32 %v5874, %v6027
      %v6060 = vmul.f32 %v5876, %v6028
      %v6061 = vmul.f32 %v5878, %v6029
      %v6062 = vmul.f32 %v5880, %v6030
      %v6063 = vmul.f32 %v5882, %v6031
      %v6064 = vmul.f32 %v5884, %v6032
      %v6065 = vmul.f32 %v5886, %v6033
      %v6066 = vmul.f32 %v5888, %v6034
      %v6067 = vmul.f32 %v5890, %v6035
      %v6068 = vmul.f32 %v5892, %v6036
      %v6069 = vmul.f32 %v5894, %v6037
      %v6070 = vmul.f32 %v5896, %v6038
      %v6071 = vmul.f32 %v5898, %v6039
      %v6072 = vmul.f32 %v5900, %v6040
      %v6073 = vmul.f32 %v5902, %v6041
      %v6074 = vmul.f32 %v5904, %v6042
      %v6075 = vmul.f32 %v5906, %v6043
      %v6076 = vmul.f32 %v5908, %v6044
      %v6077 = vmul.f32 %v5910, %v6045
      %v6078 = vmul.f32 %v5912, %v6046
      %v6079 = vmul.f32 %v5914, %v6047
      %v6080 = vmul.f32 %v5916, %v6048
      %v6081 = vmul.f32 %v5918, %v6049
      %v6082 = vmul.f32 %v5920, %v6050
      %v6083 = vmul.f32 %v5922, %v6051
      %v6084 = vmul.f32 %v5924, %v6052
      %v6086 = vsel %vm635, %v6053, 0
      %v6089 = vsel %vm635, %v6054, 0
      %v6092 = vsel %vm635, %v6055, 0
      %v6095 = vsel %vm635, %v6056, 0
      %6097 = vmatpush.msra.mxu0 0.0
      %6098 = vmatpush.msra.mxu0 0.0
      %6099 = vmatpush.msra.mxu0 0.0
      %6100 = vmatpush.msra.mxu0 0.0
      %6101 = vmatpush.msra.mxu0 0.0
      %6102 = vmatpush.msra.mxu0 0.0
      %6103 = vmatpush.msra.mxu0 0.0
      %6104 = vmatpush.msra.mxu0 0.0
      %6105 = vmatpush.msra.mxu0 0.0
      %6106 = vmatpush.msra.mxu0 0.0
      %6107 = vmatpush.msra.mxu0 0.0
      %6108 = vmatpush.msra.mxu0 0.0
      %6109 = vmatpush.msra.mxu0 %v5246
      %6110 = vmatpush.msra.mxu0 %v5244
      %6111 = vmatpush.msra.mxu0 %v5242
      %6112 = vmatpush.msra.mxu0 %v5240
      %6113 = vmatmul.f32.gmra.mxu0 %v6086
      %v6114 = vpop.f32.mrf.mxu0
      %v6115 = vadd.f32 0.0, %v6114
      %6116 = vmatmul.f32.gmra.mxu0 %v6089
      %v6117 = vpop.f32.mrf.mxu0
      %v6118 = vadd.f32 0.0, %v6117
      %6119 = vmatmul.f32.gmra.mxu0 %v6092
      %v6120 = vpop.f32.mrf.mxu0
      %v6121 = vadd.f32 0.0, %v6120
      %6122 = vmatmul.f32.gmra.mxu0 %v6095
      %v6123 = vpop.f32.mrf.mxu0
      %v6124 = vadd.f32 0.0, %v6123
      %6125 = vdwg.mxu0
      %v6127 = vsel %vm635, %v6057, 0
      %v6130 = vsel %vm635, %v6058, 0
      %v6133 = vsel %vm635, %v6059, 0
      %v6136 = vsel %vm635, %v6060, 0
      %6138 = vmatpush.msra.mxu0 0.0
      %6139 = vmatpush.msra.mxu0 0.0
      %6140 = vmatpush.msra.mxu0 0.0
      %6141 = vmatpush.msra.mxu0 0.0
      %6142 = vmatpush.msra.mxu0 0.0
      %6143 = vmatpush.msra.mxu0 0.0
      %6144 = vmatpush.msra.mxu0 0.0
      %6145 = vmatpush.msra.mxu0 0.0
      %6146 = vmatpush.msra.mxu0 0.0
      %6147 = vmatpush.msra.mxu0 0.0
      %6148 = vmatpush.msra.mxu0 0.0
      %6149 = vmatpush.msra.mxu0 0.0
      %6150 = vmatpush.msra.mxu0 %v5254
      %6151 = vmatpush.msra.mxu0 %v5252
      %6152 = vmatpush.msra.mxu0 %v5250
      %6153 = vmatpush.msra.mxu0 %v5248
      %6154 = vmatmul.f32.gmra.mxu0 %v6127
      %v6155 = vpop.f32.mrf.mxu0
      %v6156 = vadd.f32 0.0, %v6155
      %6157 = vmatmul.f32.gmra.mxu0 %v6130
      %v6158 = vpop.f32.mrf.mxu0
      %v6159 = vadd.f32 0.0, %v6158
      %6160 = vmatmul.f32.gmra.mxu0 %v6133
      %v6161 = vpop.f32.mrf.mxu0
      %v6162 = vadd.f32 0.0, %v6161
      %6163 = vmatmul.f32.gmra.mxu0 %v6136
      %v6164 = vpop.f32.mrf.mxu0
      %v6165 = vadd.f32 0.0, %v6164
      %6166 = vdwg.mxu0
      %v6168 = vsel %vm635, %v6061, 0
      %v6171 = vsel %vm635, %v6062, 0
      %v6174 = vsel %vm635, %v6063, 0
      %v6177 = vsel %vm635, %v6064, 0
      %6179 = vmatpush.msra.mxu0 0.0
      %6180 = vmatpush.msra.mxu0 0.0
      %6181 = vmatpush.msra.mxu0 0.0
      %6182 = vmatpush.msra.mxu0 0.0
      %6183 = vmatpush.msra.mxu0 0.0
      %6184 = vmatpush.msra.mxu0 0.0
      %6185 = vmatpush.msra.mxu0 0.0
      %6186 = vmatpush.msra.mxu0 0.0
      %6187 = vmatpush.msra.mxu0 0.0
      %6188 = vmatpush.msra.mxu0 0.0
      %6189 = vmatpush.msra.mxu0 0.0
      %6190 = vmatpush.msra.mxu0 0.0
      %6191 = vmatpush.msra.mxu0 %v5262
      %6192 = vmatpush.msra.mxu0 %v5260
      %6193 = vmatpush.msra.mxu0 %v5258
      %6194 = vmatpush.msra.mxu0 %v5256
      %6195 = vmatmul.f32.gmra.mxu0 %v6168
      %v6196 = vpop.f32.mrf.mxu0
      %v6197 = vadd.f32 0.0, %v6196
      %6198 = vmatmul.f32.gmra.mxu0 %v6171
      %v6199 = vpop.f32.mrf.mxu0
      %v6200 = vadd.f32 0.0, %v6199
      %6201 = vmatmul.f32.gmra.mxu0 %v6174
      %v6202 = vpop.f32.mrf.mxu0
      %v6203 = vadd.f32 0.0, %v6202
      %6204 = vmatmul.f32.gmra.mxu0 %v6177
      %v6205 = vpop.f32.mrf.mxu0
      %v6206 = vadd.f32 0.0, %v6205
      %6207 = vdwg.mxu0
      %v6209 = vsel %vm635, %v6065, 0
      %v6212 = vsel %vm635, %v6066, 0
      %v6215 = vsel %vm635, %v6067, 0
      %v6218 = vsel %vm635, %v6068, 0
      %6220 = vmatpush.msra.mxu0 0.0
      %6221 = vmatpush.msra.mxu0 0.0
      %6222 = vmatpush.msra.mxu0 0.0
      %6223 = vmatpush.msra.mxu0 0.0
      %6224 = vmatpush.msra.mxu0 0.0
      %6225 = vmatpush.msra.mxu0 0.0
      %6226 = vmatpush.msra.mxu0 0.0
      %6227 = vmatpush.msra.mxu0 0.0
      %6228 = vmatpush.msra.mxu0 0.0
      %6229 = vmatpush.msra.mxu0 0.0
      %6230 = vmatpush.msra.mxu0 0.0
      %6231 = vmatpush.msra.mxu0 0.0
      %6232 = vmatpush.msra.mxu0 %v5270
      %6233 = vmatpush.msra.mxu0 %v5268
      %6234 = vmatpush.msra.mxu0 %v5266
      %6235 = vmatpush.msra.mxu0 %v5264
      %6236 = vmatmul.f32.gmra.mxu0 %v6209
      %v6237 = vpop.f32.mrf.mxu0
      %v6238 = vadd.f32 0.0, %v6237
      %6239 = vmatmul.f32.gmra.mxu0 %v6212
      %v6240 = vpop.f32.mrf.mxu0
      %v6241 = vadd.f32 0.0, %v6240
      %6242 = vmatmul.f32.gmra.mxu0 %v6215
      %v6243 = vpop.f32.mrf.mxu0
      %v6244 = vadd.f32 0.0, %v6243
      %6245 = vmatmul.f32.gmra.mxu0 %v6218
      %v6246 = vpop.f32.mrf.mxu0
      %v6247 = vadd.f32 0.0, %v6246
      %6248 = vdwg.mxu0
      %v6250 = vsel %vm635, %v6069, 0
      %v6253 = vsel %vm635, %v6070, 0
      %v6256 = vsel %vm635, %v6071, 0
      %v6259 = vsel %vm635, %v6072, 0
      %6261 = vmatpush.msra.mxu0 0.0
      %6262 = vmatpush.msra.mxu0 0.0
      %6263 = vmatpush.msra.mxu0 0.0
      %6264 = vmatpush.msra.mxu0 0.0
      %6265 = vmatpush.msra.mxu0 0.0
      %6266 = vmatpush.msra.mxu0 0.0
      %6267 = vmatpush.msra.mxu0 0.0
      %6268 = vmatpush.msra.mxu0 0.0
      %6269 = vmatpush.msra.mxu0 0.0
      %6270 = vmatpush.msra.mxu0 0.0
      %6271 = vmatpush.msra.mxu0 0.0
      %6272 = vmatpush.msra.mxu0 0.0
      %6273 = vmatpush.msra.mxu0 %v5278
      %6274 = vmatpush.msra.mxu0 %v5276
      %6275 = vmatpush.msra.mxu0 %v5274
      %6276 = vmatpush.msra.mxu0 %v5272
      %6277 = vmatmul.f32.gmra.mxu0 %v6250
      %v6278 = vpop.f32.mrf.mxu0
      %v6279 = vadd.f32 0.0, %v6278
      %6280 = vmatmul.f32.gmra.mxu0 %v6253
      %v6281 = vpop.f32.mrf.mxu0
      %v6282 = vadd.f32 0.0, %v6281
      %6283 = vmatmul.f32.gmra.mxu0 %v6256
      %v6284 = vpop.f32.mrf.mxu0
      %v6285 = vadd.f32 0.0, %v6284
      %6286 = vmatmul.f32.gmra.mxu0 %v6259
      %v6287 = vpop.f32.mrf.mxu0
      %v6288 = vadd.f32 0.0, %v6287
      %6289 = vdwg.mxu0
      %v6291 = vsel %vm635, %v6073, 0
      %v6294 = vsel %vm635, %v6074, 0
      %v6297 = vsel %vm635, %v6075, 0
      %v6300 = vsel %vm635, %v6076, 0
      %6302 = vmatpush.msra.mxu0 0.0
      %6303 = vmatpush.msra.mxu0 0.0
      %6304 = vmatpush.msra.mxu0 0.0
      %6305 = vmatpush.msra.mxu0 0.0
      %6306 = vmatpush.msra.mxu0 0.0
      %6307 = vmatpush.msra.mxu0 0.0
      %6308 = vmatpush.msra.mxu0 0.0
      %6309 = vmatpush.msra.mxu0 0.0
      %6310 = vmatpush.msra.mxu0 0.0
      %6311 = vmatpush.msra.mxu0 0.0
      %6312 = vmatpush.msra.mxu0 0.0
      %6313 = vmatpush.msra.mxu0 0.0
      %6314 = vmatpush.msra.mxu0 %v5286
      %6315 = vmatpush.msra.mxu0 %v5284
      %6316 = vmatpush.msra.mxu0 %v5282
      %6317 = vmatpush.msra.mxu0 %v5280
      %6318 = vmatmul.f32.gmra.mxu0 %v6291
      %v6319 = vpop.f32.mrf.mxu0
      %v6320 = vadd.f32 0.0, %v6319
      %6321 = vmatmul.f32.gmra.mxu0 %v6294
      %v6322 = vpop.f32.mrf.mxu0
      %v6323 = vadd.f32 0.0, %v6322
      %6324 = vmatmul.f32.gmra.mxu0 %v6297
      %v6325 = vpop.f32.mrf.mxu0
      %v6326 = vadd.f32 0.0, %v6325
      %6327 = vmatmul.f32.gmra.mxu0 %v6300
      %v6328 = vpop.f32.mrf.mxu0
      %v6329 = vadd.f32 0.0, %v6328
      %6330 = vdwg.mxu0
      %v6332 = vsel %vm635, %v6077, 0
      %v6335 = vsel %vm635, %v6078, 0
      %v6338 = vsel %vm635, %v6079, 0
      %v6341 = vsel %vm635, %v6080, 0
      %6343 = vmatpush.msra.mxu0 0.0
      %6344 = vmatpush.msra.mxu0 0.0
      %6345 = vmatpush.msra.mxu0 0.0
      %6346 = vmatpush.msra.mxu0 0.0
      %6347 = vmatpush.msra.mxu0 0.0
      %6348 = vmatpush.msra.mxu0 0.0
      %6349 = vmatpush.msra.mxu0 0.0
      %6350 = vmatpush.msra.mxu0 0.0
      %6351 = vmatpush.msra.mxu0 0.0
      %6352 = vmatpush.msra.mxu0 0.0
      %6353 = vmatpush.msra.mxu0 0.0
      %6354 = vmatpush.msra.mxu0 0.0
      %6355 = vmatpush.msra.mxu0 %v5294
      %6356 = vmatpush.msra.mxu0 %v5292
      %6357 = vmatpush.msra.mxu0 %v5290
      %6358 = vmatpush.msra.mxu0 %v5288
      %6359 = vmatmul.f32.gmra.mxu0 %v6332
      %v6360 = vpop.f32.mrf.mxu0
      %v6361 = vadd.f32 0.0, %v6360
      %6362 = vmatmul.f32.gmra.mxu0 %v6335
      %v6363 = vpop.f32.mrf.mxu0
      %v6364 = vadd.f32 0.0, %v6363
      %6365 = vmatmul.f32.gmra.mxu0 %v6338
      %v6366 = vpop.f32.mrf.mxu0
      %v6367 = vadd.f32 0.0, %v6366
      %6368 = vmatmul.f32.gmra.mxu0 %v6341
      %v6369 = vpop.f32.mrf.mxu0
      %v6370 = vadd.f32 0.0, %v6369
      %6371 = vdwg.mxu0
      %v6373 = vsel %vm635, %v6081, 0
      %v6376 = vsel %vm635, %v6082, 0
      %v6379 = vsel %vm635, %v6083, 0
      %v6382 = vsel %vm635, %v6084, 0
      %6384 = vmatpush.msra.mxu0 0.0
      %6385 = vmatpush.msra.mxu0 0.0
      %6386 = vmatpush.msra.mxu0 0.0
      %6387 = vmatpush.msra.mxu0 0.0
      %6388 = vmatpush.msra.mxu0 0.0
      %6389 = vmatpush.msra.mxu0 0.0
      %6390 = vmatpush.msra.mxu0 0.0
      %6391 = vmatpush.msra.mxu0 0.0
      %6392 = vmatpush.msra.mxu0 0.0
      %6393 = vmatpush.msra.mxu0 0.0
      %6394 = vmatpush.msra.mxu0 0.0
      %6395 = vmatpush.msra.mxu0 0.0
      %6396 = vmatpush.msra.mxu0 %v5302
      %6397 = vmatpush.msra.mxu0 %v5300
      %6398 = vmatpush.msra.mxu0 %v5298
      %6399 = vmatpush.msra.mxu0 %v5296
      %6400 = vmatmul.f32.gmra.mxu0 %v6373
      %v6401 = vpop.f32.mrf.mxu0
      %v6402 = vadd.f32 0.0, %v6401
      %6403 = vmatmul.f32.gmra.mxu0 %v6376
      %v6404 = vpop.f32.mrf.mxu0
      %v6405 = vadd.f32 0.0, %v6404
      %6406 = vmatmul.f32.gmra.mxu0 %v6379
      %v6407 = vpop.f32.mrf.mxu0
      %v6408 = vadd.f32 0.0, %v6407
      %6409 = vmatmul.f32.gmra.mxu0 %v6382
      %v6410 = vpop.f32.mrf.mxu0
      %v6411 = vadd.f32 0.0, %v6410
      %6412 = vdwg.mxu0
      %v6413 = vld [vmem:[%s5 + $0x10] sm:$0xff]
      %v6415 = vsel %vm1668, %v6115, 0
      %v6418 = vsel %vm1668, %v6118, 0
      %v6421 = vsel %vm1668, %v6121, 0
      %v6424 = vsel %vm1668, %v6124, 0
      %v6427 = vsel %vm1668, %v6156, 0
      %v6430 = vsel %vm1668, %v6159, 0
      %v6433 = vsel %vm1668, %v6162, 0
      %v6436 = vsel %vm1668, %v6165, 0
      %v6439 = vsel %vm1668, %v6197, 0
      %v6442 = vsel %vm1668, %v6200, 0
      %v6445 = vsel %vm1668, %v6203, 0
      %v6448 = vsel %vm1668, %v6206, 0
      %v6451 = vsel %vm1668, %v6238, 0
      %v6454 = vsel %vm1668, %v6241, 0
      %v6457 = vsel %vm1668, %v6244, 0
      %v6460 = vsel %vm1668, %v6247, 0
      %v6463 = vsel %vm1668, %v6279, 0
      %v6466 = vsel %vm1668, %v6282, 0
      %v6469 = vsel %vm1668, %v6285, 0
      %v6472 = vsel %vm1668, %v6288, 0
      %v6475 = vsel %vm1668, %v6320, 0
      %v6478 = vsel %vm1668, %v6323, 0
      %v6481 = vsel %vm1668, %v6326, 0
      %v6484 = vsel %vm1668, %v6329, 0
      %v6487 = vsel %vm1668, %v6361, 0
      %v6490 = vsel %vm1668, %v6364, 0
      %v6493 = vsel %vm1668, %v6367, 0
      %v6496 = vsel %vm1668, %v6370, 0
      %v6499 = vsel %vm1668, %v6402, 0
      %v6502 = vsel %vm1668, %v6405, 0
      %v6505 = vsel %vm1668, %v6408, 0
      %v6508 = vsel %vm1668, %v6411, 0
      %6510 = vmatpush.msra.mxu0 0.0
      %6511 = vmatpush.msra.mxu0 0.0
      %6512 = vmatpush.msra.mxu0 0.0
      %6513 = vmatpush.msra.mxu0 0.0
      %6514 = vmatpush.msra.mxu0 0.0
      %6515 = vmatpush.msra.mxu0 0.0
      %6516 = vmatpush.msra.mxu0 0.0
      %6517 = vmatpush.msra.mxu0 0.0
      %6518 = vmatpush.msra.mxu0 0.0
      %6519 = vmatpush.msra.mxu0 0.0
      %6520 = vmatpush.msra.mxu0 0.0
      %6521 = vmatpush.msra.mxu0 0.0
      %6522 = vmatpush.msra.mxu0 0.0
      %6523 = vmatpush.msra.mxu0 0.0
      %6524 = vmatpush.msra.mxu0 0.0
      %6525 = vmatpush.msra.mxu0 %v6413
      %6526 = vmatmul.f32.gmra.mxu0 %v6415
      %v6527 = vpop.f32.mrf.mxu0
      %v6528 = vadd.f32 0.0, %v6527
      %6529 = vmatmul.f32.gmra.mxu0 %v6418
      %v6530 = vpop.f32.mrf.mxu0
      %v6531 = vadd.f32 0.0, %v6530
      %6532 = vmatmul.f32.gmra.mxu0 %v6421
      %v6533 = vpop.f32.mrf.mxu0
      %v6534 = vadd.f32 0.0, %v6533
      %6535 = vmatmul.f32.gmra.mxu0 %v6424
      %v6536 = vpop.f32.mrf.mxu0
      %v6537 = vadd.f32 0.0, %v6536
      %6538 = vmatmul.f32.gmra.mxu0 %v6427
      %v6539 = vpop.f32.mrf.mxu0
      %v6540 = vadd.f32 0.0, %v6539
      %6541 = vmatmul.f32.gmra.mxu0 %v6430
      %v6542 = vpop.f32.mrf.mxu0
      %v6543 = vadd.f32 0.0, %v6542
      %6544 = vmatmul.f32.gmra.mxu0 %v6433
      %v6545 = vpop.f32.mrf.mxu0
      %v6546 = vadd.f32 0.0, %v6545
      %6547 = vmatmul.f32.gmra.mxu0 %v6436
      %v6548 = vpop.f32.mrf.mxu0
      %v6549 = vadd.f32 0.0, %v6548
      %6550 = vmatmul.f32.gmra.mxu0 %v6439
      %v6551 = vpop.f32.mrf.mxu0
      %v6552 = vadd.f32 0.0, %v6551
      %6553 = vmatmul.f32.gmra.mxu0 %v6442
      %v6554 = vpop.f32.mrf.mxu0
      %v6555 = vadd.f32 0.0, %v6554
      %6556 = vmatmul.f32.gmra.mxu0 %v6445
      %v6557 = vpop.f32.mrf.mxu0
      %v6558 = vadd.f32 0.0, %v6557
      %6559 = vmatmul.f32.gmra.mxu0 %v6448
      %v6560 = vpop.f32.mrf.mxu0
      %v6561 = vadd.f32 0.0, %v6560
      %6562 = vmatmul.f32.gmra.mxu0 %v6451
      %v6563 = vpop.f32.mrf.mxu0
      %v6564 = vadd.f32 0.0, %v6563
      %6565 = vmatmul.f32.gmra.mxu0 %v6454
      %v6566 = vpop.f32.mrf.mxu0
      %v6567 = vadd.f32 0.0, %v6566
      %6568 = vmatmul.f32.gmra.mxu0 %v6457
      %v6569 = vpop.f32.mrf.mxu0
      %v6570 = vadd.f32 0.0, %v6569
      %6571 = vmatmul.f32.gmra.mxu0 %v6460
      %v6572 = vpop.f32.mrf.mxu0
      %v6573 = vadd.f32 0.0, %v6572
      %6574 = vmatmul.f32.gmra.mxu0 %v6463
      %v6575 = vpop.f32.mrf.mxu0
      %v6576 = vadd.f32 0.0, %v6575
      %6577 = vmatmul.f32.gmra.mxu0 %v6466
      %v6578 = vpop.f32.mrf.mxu0
      %v6579 = vadd.f32 0.0, %v6578
      %6580 = vmatmul.f32.gmra.mxu0 %v6469
      %v6581 = vpop.f32.mrf.mxu0
      %v6582 = vadd.f32 0.0, %v6581
      %6583 = vmatmul.f32.gmra.mxu0 %v6472
      %v6584 = vpop.f32.mrf.mxu0
      %v6585 = vadd.f32 0.0, %v6584
      %6586 = vmatmul.f32.gmra.mxu0 %v6475
      %v6587 = vpop.f32.mrf.mxu0
      %v6588 = vadd.f32 0.0, %v6587
      %6589 = vmatmul.f32.gmra.mxu0 %v6478
      %v6590 = vpop.f32.mrf.mxu0
      %v6591 = vadd.f32 0.0, %v6590
      %6592 = vmatmul.f32.gmra.mxu0 %v6481
      %v6593 = vpop.f32.mrf.mxu0
      %v6594 = vadd.f32 0.0, %v6593
      %6595 = vmatmul.f32.gmra.mxu0 %v6484
      %v6596 = vpop.f32.mrf.mxu0
      %v6597 = vadd.f32 0.0, %v6596
      %6598 = vmatmul.f32.gmra.mxu0 %v6487
      %v6599 = vpop.f32.mrf.mxu0
      %v6600 = vadd.f32 0.0, %v6599
      %6601 = vmatmul.f32.gmra.mxu0 %v6490
      %v6602 = vpop.f32.mrf.mxu0
      %v6603 = vadd.f32 0.0, %v6602
      %6604 = vmatmul.f32.gmra.mxu0 %v6493
      %v6605 = vpop.f32.mrf.mxu0
      %v6606 = vadd.f32 0.0, %v6605
      %6607 = vmatmul.f32.gmra.mxu0 %v6496
      %v6608 = vpop.f32.mrf.mxu0
      %v6609 = vadd.f32 0.0, %v6608
      %6610 = vmatmul.f32.gmra.mxu0 %v6499
      %v6611 = vpop.f32.mrf.mxu0
      %v6612 = vadd.f32 0.0, %v6611
      %6613 = vmatmul.f32.gmra.mxu0 %v6502
      %v6614 = vpop.f32.mrf.mxu0
      %v6615 = vadd.f32 0.0, %v6614
      %6616 = vmatmul.f32.gmra.mxu0 %v6505
      %v6617 = vpop.f32.mrf.mxu0
      %v6618 = vadd.f32 0.0, %v6617
      %6619 = vmatmul.f32.gmra.mxu0 %v6508
      %v6620 = vpop.f32.mrf.mxu0
      %v6621 = vadd.f32 0.0, %v6620
      %6622 = vdwg.mxu0
      %v6623 = vadd.f32 %v4949, %v6528
      %v6624 = vadd.f32 %v4950, %v6531
      %v6625 = vadd.f32 %v4951, %v6534
      %v6626 = vadd.f32 %v4952, %v6537
      %v6627 = vadd.f32 %v4953, %v6540
      %v6628 = vadd.f32 %v4954, %v6543
      %v6629 = vadd.f32 %v4955, %v6546
      %v6630 = vadd.f32 %v4956, %v6549
      %v6631 = vadd.f32 %v4957, %v6552
      %v6632 = vadd.f32 %v4958, %v6555
      %v6633 = vadd.f32 %v4959, %v6558
      %v6634 = vadd.f32 %v4960, %v6561
      %v6635 = vadd.f32 %v4961, %v6564
      %v6636 = vadd.f32 %v4962, %v6567
      %v6637 = vadd.f32 %v4963, %v6570
      %v6638 = vadd.f32 %v4964, %v6573
      %v6639 = vadd.f32 %v4965, %v6576
      %v6640 = vadd.f32 %v4966, %v6579
      %v6641 = vadd.f32 %v4967, %v6582
      %v6642 = vadd.f32 %v4968, %v6585
      %v6643 = vadd.f32 %v4969, %v6588
      %v6644 = vadd.f32 %v4970, %v6591
      %v6645 = vadd.f32 %v4971, %v6594
      %v6646 = vadd.f32 %v4972, %v6597
      %v6647 = vadd.f32 %v4973, %v6600
      %v6648 = vadd.f32 %v4974, %v6603
      %v6649 = vadd.f32 %v4975, %v6606
      %v6650 = vadd.f32 %v4976, %v6609
      %v6651 = vadd.f32 %v4977, %v6612
      %v6652 = vadd.f32 %v4978, %v6615
      %v6653 = vadd.f32 %v4979, %v6618
      %v6654 = vadd.f32 %v4980, %v6621
      %6655 = vrot.lane.b32.xlu0 %v1636, 104
      %v6656 = vpop.permute.xlu0 %6655
      %6657 = vrot.lane.b32.xlu0 %v1637, 104
      %v6658 = vpop.permute.xlu0 %6657
      %6659 = vrot.lane.b32.xlu0 %v1638, 104
      %v6660 = vpop.permute.xlu0 %6659
      %6661 = vrot.lane.b32.xlu0 %v1639, 104
      %v6662 = vpop.permute.xlu0 %6661
      %6663 = vrot.lane.b32.xlu0 %v1640, 104
      %v6664 = vpop.permute.xlu0 %6663
      %6665 = vrot.lane.b32.xlu0 %v1641, 104
      %v6666 = vpop.permute.xlu0 %6665
      %6667 = vrot.lane.b32.xlu0 %v1642, 104
      %v6668 = vpop.permute.xlu0 %6667
      %6669 = vrot.lane.b32.xlu0 %v1643, 104
      %v6670 = vpop.permute.xlu0 %6669
      %6671 = vrot.lane.b32.xlu0 %v1644, 104
      %v6672 = vpop.permute.xlu0 %6671
      %6673 = vrot.lane.b32.xlu0 %v1645, 104
      %v6674 = vpop.permute.xlu0 %6673
      %6675 = vrot.lane.b32.xlu0 %v1646, 104
      %v6676 = vpop.permute.xlu0 %6675
      %6677 = vrot.lane.b32.xlu0 %v1647, 104
      %v6678 = vpop.permute.xlu0 %6677
      %6679 = vrot.lane.b32.xlu0 %v1648, 104
      %v6680 = vpop.permute.xlu0 %6679
      %6681 = vrot.lane.b32.xlu0 %v1649, 104
      %v6682 = vpop.permute.xlu0 %6681
      %6683 = vrot.lane.b32.xlu0 %v1650, 104
      %v6684 = vpop.permute.xlu0 %6683
      %6685 = vrot.lane.b32.xlu0 %v1651, 104
      %v6686 = vpop.permute.xlu0 %6685
      %6687 = vrot.lane.b32.xlu0 %v1652, 104
      %v6688 = vpop.permute.xlu0 %6687
      %6689 = vrot.lane.b32.xlu0 %v1653, 104
      %v6690 = vpop.permute.xlu0 %6689
      %6691 = vrot.lane.b32.xlu0 %v1654, 104
      %v6692 = vpop.permute.xlu0 %6691
      %6693 = vrot.lane.b32.xlu0 %v1655, 104
      %v6694 = vpop.permute.xlu0 %6693
      %6695 = vrot.lane.b32.xlu0 %v1656, 104
      %v6696 = vpop.permute.xlu0 %6695
      %6697 = vrot.lane.b32.xlu0 %v1657, 104
      %v6698 = vpop.permute.xlu0 %6697
      %6699 = vrot.lane.b32.xlu0 %v1658, 104
      %v6700 = vpop.permute.xlu0 %6699
      %6701 = vrot.lane.b32.xlu0 %v1659, 104
      %v6702 = vpop.permute.xlu0 %6701
      %6703 = vrot.lane.b32.xlu0 %v1660, 104
      %v6704 = vpop.permute.xlu0 %6703
      %6705 = vrot.lane.b32.xlu0 %v1661, 104
      %v6706 = vpop.permute.xlu0 %6705
      %6707 = vrot.lane.b32.xlu0 %v1662, 104
      %v6708 = vpop.permute.xlu0 %6707
      %6709 = vrot.lane.b32.xlu0 %v1663, 104
      %v6710 = vpop.permute.xlu0 %6709
      %6711 = vrot.lane.b32.xlu0 %v1664, 104
      %v6712 = vpop.permute.xlu0 %6711
      %6713 = vrot.lane.b32.xlu0 %v1665, 104
      %v6714 = vpop.permute.xlu0 %6713
      %6715 = vrot.lane.b32.xlu0 %v1666, 104
      %v6716 = vpop.permute.xlu0 %6715
      %6717 = vrot.lane.b32.xlu0 %v1667, 104
      %v6718 = vpop.permute.xlu0 %6717
      %s6751 = scalar_lea.vmem %s587, 96
      %6752 = vst.msk [vmem:[%s6751] sm:$0xff] %vm1668, %v6656
      %6753 = vst.msk [vmem:[%s6751 + $0x8] sm:$0xff] %vm1668, %v6658
      %6754 = vst.msk [vmem:[%s6751 + $0x10] sm:$0xff] %vm1668, %v6660
      %6755 = vst.msk [vmem:[%s6751 + $0x18] sm:$0xff] %vm1668, %v6662
      %6756 = vst.msk [vmem:[%s6751 + $0x80] sm:$0xff] %vm1668, %v6664
      %6757 = vst.msk [vmem:[%s6751 + $0x88] sm:$0xff] %vm1668, %v6666
      %6758 = vst.msk [vmem:[%s6751 + $0x90] sm:$0xff] %vm1668, %v6668
      %6759 = vst.msk [vmem:[%s6751 + $0x98] sm:$0xff] %vm1668, %v6670
      %6760 = vst.msk [vmem:[%s6751 + $0x100] sm:$0xff] %vm1668, %v6672
      %6761 = vst.msk [vmem:[%s6751 + $0x108] sm:$0xff] %vm1668, %v6674
      %6762 = vst.msk [vmem:[%s6751 + $0x110] sm:$0xff] %vm1668, %v6676
      %6763 = vst.msk [vmem:[%s6751 + $0x118] sm:$0xff] %vm1668, %v6678
      %6764 = vst.msk [vmem:[%s6751 + $0x180] sm:$0xff] %vm1668, %v6680
      %6765 = vst.msk [vmem:[%s6751 + $0x188] sm:$0xff] %vm1668, %v6682
      %6766 = vst.msk [vmem:[%s6751 + $0x190] sm:$0xff] %vm1668, %v6684
      %6767 = vst.msk [vmem:[%s6751 + $0x198] sm:$0xff] %vm1668, %v6686
      %6768 = vst.msk [vmem:[%s6751 + $0x200] sm:$0xff] %vm1668, %v6688
      %6769 = vst.msk [vmem:[%s6751 + $0x208] sm:$0xff] %vm1668, %v6690
      %6770 = vst.msk [vmem:[%s6751 + $0x210] sm:$0xff] %vm1668, %v6692
      %6771 = vst.msk [vmem:[%s6751 + $0x218] sm:$0xff] %vm1668, %v6694
      %6772 = vst.msk [vmem:[%s6751 + $0x280] sm:$0xff] %vm1668, %v6696
      %6773 = vst.msk [vmem:[%s6751 + $0x288] sm:$0xff] %vm1668, %v6698
      %6774 = vst.msk [vmem:[%s6751 + $0x290] sm:$0xff] %vm1668, %v6700
      %6775 = vst.msk [vmem:[%s6751 + $0x298] sm:$0xff] %vm1668, %v6702
      %6776 = vst.msk [vmem:[%s6751 + $0x300] sm:$0xff] %vm1668, %v6704
      %6777 = vst.msk [vmem:[%s6751 + $0x308] sm:$0xff] %vm1668, %v6706
      %6778 = vst.msk [vmem:[%s6751 + $0x310] sm:$0xff] %vm1668, %v6708
      %6779 = vst.msk [vmem:[%s6751 + $0x318] sm:$0xff] %vm1668, %v6710
      %6780 = vst.msk [vmem:[%s6751 + $0x380] sm:$0xff] %vm1668, %v6712
      %6781 = vst.msk [vmem:[%s6751 + $0x388] sm:$0xff] %vm1668, %v6714
      %6782 = vst.msk [vmem:[%s6751 + $0x390] sm:$0xff] %vm1668, %v6716
      %6783 = vst.msk [vmem:[%s6751 + $0x398] sm:$0xff] %vm1668, %v6718
      %6784 = vrot.lane.b32.xlu0 %v1541, 72
      %v6785 = vpop.permute.xlu0 %6784
      %6786 = vrot.lane.b32.xlu0 %v1544, 72
      %v6787 = vpop.permute.xlu0 %6786
      %6788 = vrot.lane.b32.xlu0 %v1547, 72
      %v6789 = vpop.permute.xlu0 %6788
      %6790 = vrot.lane.b32.xlu0 %v1550, 72
      %v6791 = vpop.permute.xlu0 %6790
      %6792 = vrot.lane.b32.xlu0 %v1553, 72
      %v6793 = vpop.permute.xlu0 %6792
      %6794 = vrot.lane.b32.xlu0 %v1556, 72
      %v6795 = vpop.permute.xlu0 %6794
      %6796 = vrot.lane.b32.xlu0 %v1559, 72
      %v6797 = vpop.permute.xlu0 %6796
      %6798 = vrot.lane.b32.xlu0 %v1562, 72
      %v6799 = vpop.permute.xlu0 %6798
      %6800 = vrot.lane.b32.xlu0 %v1565, 72
      %v6801 = vpop.permute.xlu0 %6800
      %6802 = vrot.lane.b32.xlu0 %v1568, 72
      %v6803 = vpop.permute.xlu0 %6802
      %6804 = vrot.lane.b32.xlu0 %v1571, 72
      %v6805 = vpop.permute.xlu0 %6804
      %6806 = vrot.lane.b32.xlu0 %v1574, 72
      %v6807 = vpop.permute.xlu0 %6806
      %6808 = vrot.lane.b32.xlu0 %v1577, 72
      %v6809 = vpop.permute.xlu0 %6808
      %6810 = vrot.lane.b32.xlu0 %v1580, 72
      %v6811 = vpop.permute.xlu0 %6810
      %6812 = vrot.lane.b32.xlu0 %v1583, 72
      %v6813 = vpop.permute.xlu0 %6812
      %6814 = vrot.lane.b32.xlu0 %v1586, 72
      %v6815 = vpop.permute.xlu0 %6814
      %6816 = vrot.lane.b32.xlu0 %v1589, 72
      %v6817 = vpop.permute.xlu0 %6816
      %6818 = vrot.lane.b32.xlu0 %v1592, 72
      %v6819 = vpop.permute.xlu0 %6818
      %6820 = vrot.lane.b32.xlu0 %v1595, 72
      %v6821 = vpop.permute.xlu0 %6820
      %6822 = vrot.lane.b32.xlu0 %v1598, 72
      %v6823 = vpop.permute.xlu0 %6822
      %6824 = vrot.lane.b32.xlu0 %v1601, 72
      %v6825 = vpop.permute.xlu0 %6824
      %6826 = vrot.lane.b32.xlu0 %v1604, 72
      %v6827 = vpop.permute.xlu0 %6826
      %6828 = vrot.lane.b32.xlu0 %v1607, 72
      %v6829 = vpop.permute.xlu0 %6828
      %6830 = vrot.lane.b32.xlu0 %v1610, 72
      %v6831 = vpop.permute.xlu0 %6830
      %6832 = vrot.lane.b32.xlu0 %v1613, 72
      %v6833 = vpop.permute.xlu0 %6832
      %6834 = vrot.lane.b32.xlu0 %v1616, 72
      %v6835 = vpop.permute.xlu0 %6834
      %6836 = vrot.lane.b32.xlu0 %v1619, 72
      %v6837 = vpop.permute.xlu0 %6836
      %6838 = vrot.lane.b32.xlu0 %v1622, 72
      %v6839 = vpop.permute.xlu0 %6838
      %6840 = vrot.lane.b32.xlu0 %v1625, 72
      %v6841 = vpop.permute.xlu0 %6840
      %6842 = vrot.lane.b32.xlu0 %v1628, 72
      %v6843 = vpop.permute.xlu0 %6842
      %6844 = vrot.lane.b32.xlu0 %v1631, 72
      %v6845 = vpop.permute.xlu0 %6844
      %6846 = vrot.lane.b32.xlu0 %v1634, 72
      %v6847 = vpop.permute.xlu0 %6846
      %s6880 = scalar_lea.vmem %s594, 96
      %6881 = vst.msk [vmem:[%s6880] sm:$0xff] %vm1668, %v6785
      %6882 = vst.msk [vmem:[%s6880 + $0x8] sm:$0xff] %vm1668, %v6787
      %6883 = vst.msk [vmem:[%s6880 + $0x10] sm:$0xff] %vm1668, %v6789
      %6884 = vst.msk [vmem:[%s6880 + $0x18] sm:$0xff] %vm1668, %v6791
      %6885 = vst.msk [vmem:[%s6880 + $0x80] sm:$0xff] %vm1668, %v6793
      %6886 = vst.msk [vmem:[%s6880 + $0x88] sm:$0xff] %vm1668, %v6795
      %6887 = vst.msk [vmem:[%s6880 + $0x90] sm:$0xff] %vm1668, %v6797
      %6888 = vst.msk [vmem:[%s6880 + $0x98] sm:$0xff] %vm1668, %v6799
      %6889 = vst.msk [vmem:[%s6880 + $0x100] sm:$0xff] %vm1668, %v6801
      %6890 = vst.msk [vmem:[%s6880 + $0x108] sm:$0xff] %vm1668, %v6803
      %6891 = vst.msk [vmem:[%s6880 + $0x110] sm:$0xff] %vm1668, %v6805
      %6892 = vst.msk [vmem:[%s6880 + $0x118] sm:$0xff] %vm1668, %v6807
      %6893 = vst.msk [vmem:[%s6880 + $0x180] sm:$0xff] %vm1668, %v6809
      %6894 = vst.msk [vmem:[%s6880 + $0x188] sm:$0xff] %vm1668, %v6811
      %6895 = vst.msk [vmem:[%s6880 + $0x190] sm:$0xff] %vm1668, %v6813
      %6896 = vst.msk [vmem:[%s6880 + $0x198] sm:$0xff] %vm1668, %v6815
      %6897 = vst.msk [vmem:[%s6880 + $0x200] sm:$0xff] %vm1668, %v6817
      %6898 = vst.msk [vmem:[%s6880 + $0x208] sm:$0xff] %vm1668, %v6819
      %6899 = vst.msk [vmem:[%s6880 + $0x210] sm:$0xff] %vm1668, %v6821
      %6900 = vst.msk [vmem:[%s6880 + $0x218] sm:$0xff] %vm1668, %v6823
      %6901 = vst.msk [vmem:[%s6880 + $0x280] sm:$0xff] %vm1668, %v6825
      %6902 = vst.msk [vmem:[%s6880 + $0x288] sm:$0xff] %vm1668, %v6827
      %6903 = vst.msk [vmem:[%s6880 + $0x290] sm:$0xff] %vm1668, %v6829
      %6904 = vst.msk [vmem:[%s6880 + $0x298] sm:$0xff] %vm1668, %v6831
      %6905 = vst.msk [vmem:[%s6880 + $0x300] sm:$0xff] %vm1668, %v6833
      %6906 = vst.msk [vmem:[%s6880 + $0x308] sm:$0xff] %vm1668, %v6835
      %6907 = vst.msk [vmem:[%s6880 + $0x310] sm:$0xff] %vm1668, %v6837
      %6908 = vst.msk [vmem:[%s6880 + $0x318] sm:$0xff] %vm1668, %v6839
      %6909 = vst.msk [vmem:[%s6880 + $0x380] sm:$0xff] %vm1668, %v6841
      %6910 = vst.msk [vmem:[%s6880 + $0x388] sm:$0xff] %vm1668, %v6843
      %6911 = vst.msk [vmem:[%s6880 + $0x390] sm:$0xff] %vm1668, %v6845
      %6912 = vst.msk [vmem:[%s6880 + $0x398] sm:$0xff] %vm1668, %v6847
      %6913 = vrot.lane.b32.xlu0 %v1541, 40
      %v6914 = vpop.permute.xlu0 %6913
      %6915 = vrot.lane.b32.xlu0 %v1544, 40
      %v6916 = vpop.permute.xlu0 %6915
      %6917 = vrot.lane.b32.xlu0 %v1547, 40
      %v6918 = vpop.permute.xlu0 %6917
      %6919 = vrot.lane.b32.xlu0 %v1550, 40
      %v6920 = vpop.permute.xlu0 %6919
      %6921 = vrot.lane.b32.xlu0 %v1553, 40
      %v6922 = vpop.permute.xlu0 %6921
      %6923 = vrot.lane.b32.xlu0 %v1556, 40
      %v6924 = vpop.permute.xlu0 %6923
      %6925 = vrot.lane.b32.xlu0 %v1559, 40
      %v6926 = vpop.permute.xlu0 %6925
      %6927 = vrot.lane.b32.xlu0 %v1562, 40
      %v6928 = vpop.permute.xlu0 %6927
      %6929 = vrot.lane.b32.xlu0 %v1565, 40
      %v6930 = vpop.permute.xlu0 %6929
      %6931 = vrot.lane.b32.xlu0 %v1568, 40
      %v6932 = vpop.permute.xlu0 %6931
      %6933 = vrot.lane.b32.xlu0 %v1571, 40
      %v6934 = vpop.permute.xlu0 %6933
      %6935 = vrot.lane.b32.xlu0 %v1574, 40
      %v6936 = vpop.permute.xlu0 %6935
      %6937 = vrot.lane.b32.xlu0 %v1577, 40
      %v6938 = vpop.permute.xlu0 %6937
      %6939 = vrot.lane.b32.xlu0 %v1580, 40
      %v6940 = vpop.permute.xlu0 %6939
      %6941 = vrot.lane.b32.xlu0 %v1583, 40
      %v6942 = vpop.permute.xlu0 %6941
      %6943 = vrot.lane.b32.xlu0 %v1586, 40
      %v6944 = vpop.permute.xlu0 %6943
      %6945 = vrot.lane.b32.xlu0 %v1589, 40
      %v6946 = vpop.permute.xlu0 %6945
      %6947 = vrot.lane.b32.xlu0 %v1592, 40
      %v6948 = vpop.permute.xlu0 %6947
      %6949 = vrot.lane.b32.xlu0 %v1595, 40
      %v6950 = vpop.permute.xlu0 %6949
      %6951 = vrot.lane.b32.xlu0 %v1598, 40
      %v6952 = vpop.permute.xlu0 %6951
      %6953 = vrot.lane.b32.xlu0 %v1601, 40
      %v6954 = vpop.permute.xlu0 %6953
      %6955 = vrot.lane.b32.xlu0 %v1604, 40
      %v6956 = vpop.permute.xlu0 %6955
      %6957 = vrot.lane.b32.xlu0 %v1607, 40
      %v6958 = vpop.permute.xlu0 %6957
      %6959 = vrot.lane.b32.xlu0 %v1610, 40
      %v6960 = vpop.permute.xlu0 %6959
      %6961 = vrot.lane.b32.xlu0 %v1613, 40
      %v6962 = vpop.permute.xlu0 %6961
      %6963 = vrot.lane.b32.xlu0 %v1616, 40
      %v6964 = vpop.permute.xlu0 %6963
      %6965 = vrot.lane.b32.xlu0 %v1619, 40
      %v6966 = vpop.permute.xlu0 %6965
      %6967 = vrot.lane.b32.xlu0 %v1622, 40
      %v6968 = vpop.permute.xlu0 %6967
      %6969 = vrot.lane.b32.xlu0 %v1625, 40
      %v6970 = vpop.permute.xlu0 %6969
      %6971 = vrot.lane.b32.xlu0 %v1628, 40
      %v6972 = vpop.permute.xlu0 %6971
      %6973 = vrot.lane.b32.xlu0 %v1631, 40
      %v6974 = vpop.permute.xlu0 %6973
      %6975 = vrot.lane.b32.xlu0 %v1634, 40
      %v6976 = vpop.permute.xlu0 %6975
      %s7009 = scalar_lea.vmem %s601, 96
      %7010 = vst.msk [vmem:[%s7009] sm:$0xff] %vm1668, %v6914
      %7011 = vst.msk [vmem:[%s7009 + $0x8] sm:$0xff] %vm1668, %v6916
      %7012 = vst.msk [vmem:[%s7009 + $0x10] sm:$0xff] %vm1668, %v6918
      %7013 = vst.msk [vmem:[%s7009 + $0x18] sm:$0xff] %vm1668, %v6920
      %7014 = vst.msk [vmem:[%s7009 + $0x80] sm:$0xff] %vm1668, %v6922
      %7015 = vst.msk [vmem:[%s7009 + $0x88] sm:$0xff] %vm1668, %v6924
      %7016 = vst.msk [vmem:[%s7009 + $0x90] sm:$0xff] %vm1668, %v6926
      %7017 = vst.msk [vmem:[%s7009 + $0x98] sm:$0xff] %vm1668, %v6928
      %7018 = vst.msk [vmem:[%s7009 + $0x100] sm:$0xff] %vm1668, %v6930
      %7019 = vst.msk [vmem:[%s7009 + $0x108] sm:$0xff] %vm1668, %v6932
      %7020 = vst.msk [vmem:[%s7009 + $0x110] sm:$0xff] %vm1668, %v6934
      %7021 = vst.msk [vmem:[%s7009 + $0x118] sm:$0xff] %vm1668, %v6936
      %7022 = vst.msk [vmem:[%s7009 + $0x180] sm:$0xff] %vm1668, %v6938
      %7023 = vst.msk [vmem:[%s7009 + $0x188] sm:$0xff] %vm1668, %v6940
      %7024 = vst.msk [vmem:[%s7009 + $0x190] sm:$0xff] %vm1668, %v6942
      %7025 = vst.msk [vmem:[%s7009 + $0x198] sm:$0xff] %vm1668, %v6944
      %7026 = vst.msk [vmem:[%s7009 + $0x200] sm:$0xff] %vm1668, %v6946
      %7027 = vst.msk [vmem:[%s7009 + $0x208] sm:$0xff] %vm1668, %v6948
      %7028 = vst.msk [vmem:[%s7009 + $0x210] sm:$0xff] %vm1668, %v6950
      %7029 = vst.msk [vmem:[%s7009 + $0x218] sm:$0xff] %vm1668, %v6952
      %7030 = vst.msk [vmem:[%s7009 + $0x280] sm:$0xff] %vm1668, %v6954
      %7031 = vst.msk [vmem:[%s7009 + $0x288] sm:$0xff] %vm1668, %v6956
      %7032 = vst.msk [vmem:[%s7009 + $0x290] sm:$0xff] %vm1668, %v6958
      %7033 = vst.msk [vmem:[%s7009 + $0x298] sm:$0xff] %vm1668, %v6960
      %7034 = vst.msk [vmem:[%s7009 + $0x300] sm:$0xff] %vm1668, %v6962
      %7035 = vst.msk [vmem:[%s7009 + $0x308] sm:$0xff] %vm1668, %v6964
      %7036 = vst.msk [vmem:[%s7009 + $0x310] sm:$0xff] %vm1668, %v6966
      %7037 = vst.msk [vmem:[%s7009 + $0x318] sm:$0xff] %vm1668, %v6968
      %7038 = vst.msk [vmem:[%s7009 + $0x380] sm:$0xff] %vm1668, %v6970
      %7039 = vst.msk [vmem:[%s7009 + $0x388] sm:$0xff] %vm1668, %v6972
      %7040 = vst.msk [vmem:[%s7009 + $0x390] sm:$0xff] %vm1668, %v6974
      %7041 = vst.msk [vmem:[%s7009 + $0x398] sm:$0xff] %vm1668, %v6976
      %s7042 = scalar_lea.vmem %s7, 96
      %v7043 = vld [vmem:[%s7042] sm:$0xff]
      %v7044 = vld [vmem:[%s7042 + $0x8] sm:$0xff]
      %v7045 = vld [vmem:[%s7042 + $0x10] sm:$0xff]
      %v7046 = vld [vmem:[%s7042 + $0x18] sm:$0xff]
      %v7047 = vsel %vm1668, %v6656, 0
      %v7049 = vsel %vm1668, %v6658, 0
      %v7051 = vsel %vm1668, %v6660, 0
      %v7053 = vsel %vm1668, %v6662, 0
      %v7055 = vsel %vm1668, %v6785, 0
      %v7057 = vsel %vm1668, %v6787, 0
      %v7059 = vsel %vm1668, %v6789, 0
      %v7061 = vsel %vm1668, %v6791, 0
      %7063 = vmatpush.xpose.msra.mxu0 0.0
      %7064 = vmatpush.xpose.msra.mxu0 0.0
      %7065 = vmatpush.xpose.msra.mxu0 0.0
      %7066 = vmatpush.xpose.msra.mxu0 0.0
      %7067 = vmatpush.xpose.msra.mxu0 0.0
      %7068 = vmatpush.xpose.msra.mxu0 0.0
      %7069 = vmatpush.xpose.msra.mxu0 0.0
      %7070 = vmatpush.xpose.msra.mxu0 0.0
      %7071 = vmatpush.xpose.msra.mxu0 0.0
      %7072 = vmatpush.xpose.msra.mxu0 0.0
      %7073 = vmatpush.xpose.msra.mxu0 0.0
      %7074 = vmatpush.xpose.msra.mxu0 0.0
      %7075 = vmatpush.xpose.msra.mxu0 %v7061
      %7076 = vmatpush.xpose.msra.mxu0 %v7059
      %7077 = vmatpush.xpose.msra.mxu0 %v7057
      %7078 = vmatpush.xpose.msra.mxu0 %v7055
      %7079 = vmatmul.f32.gmra.mxu0 %v7047
      %v7080 = vpop.f32.mrf.mxu0
      %v7081 = vadd.f32 %v7043, %v7080
      %7082 = vmatmul.f32.gmra.mxu0 %v7049
      %v7083 = vpop.f32.mrf.mxu0
      %v7084 = vadd.f32 %v7044, %v7083
      %7085 = vmatmul.f32.gmra.mxu0 %v7051
      %v7086 = vpop.f32.mrf.mxu0
      %v7087 = vadd.f32 %v7045, %v7086
      %7088 = vmatmul.f32.gmra.mxu0 %v7053
      %v7089 = vpop.f32.mrf.mxu0
      %v7090 = vadd.f32 %v7046, %v7089
      %7091 = vdwg.mxu0
      %v7092 = vsel %vm1668, %v6664, 0
      %v7094 = vsel %vm1668, %v6666, 0
      %v7096 = vsel %vm1668, %v6668, 0
      %v7098 = vsel %vm1668, %v6670, 0
      %v7100 = vsel %vm1668, %v6793, 0
      %v7102 = vsel %vm1668, %v6795, 0
      %v7104 = vsel %vm1668, %v6797, 0
      %v7106 = vsel %vm1668, %v6799, 0
      %7108 = vmatpush.xpose.msra.mxu0 0.0
      %7109 = vmatpush.xpose.msra.mxu0 0.0
      %7110 = vmatpush.xpose.msra.mxu0 0.0
      %7111 = vmatpush.xpose.msra.mxu0 0.0
      %7112 = vmatpush.xpose.msra.mxu0 0.0
      %7113 = vmatpush.xpose.msra.mxu0 0.0
      %7114 = vmatpush.xpose.msra.mxu0 0.0
      %7115 = vmatpush.xpose.msra.mxu0 0.0
      %7116 = vmatpush.xpose.msra.mxu0 0.0
      %7117 = vmatpush.xpose.msra.mxu0 0.0
      %7118 = vmatpush.xpose.msra.mxu0 0.0
      %7119 = vmatpush.xpose.msra.mxu0 0.0
      %7120 = vmatpush.xpose.msra.mxu0 %v7106
      %7121 = vmatpush.xpose.msra.mxu0 %v7104
      %7122 = vmatpush.xpose.msra.mxu0 %v7102
      %7123 = vmatpush.xpose.msra.mxu0 %v7100
      %7124 = vmatmul.f32.gmra.mxu0 %v7092
      %v7125 = vpop.f32.mrf.mxu0
      %v7126 = vadd.f32 %v7043, %v7125
      %7127 = vmatmul.f32.gmra.mxu0 %v7094
      %v7128 = vpop.f32.mrf.mxu0
      %v7129 = vadd.f32 %v7044, %v7128
      %7130 = vmatmul.f32.gmra.mxu0 %v7096
      %v7131 = vpop.f32.mrf.mxu0
      %v7132 = vadd.f32 %v7045, %v7131
      %7133 = vmatmul.f32.gmra.mxu0 %v7098
      %v7134 = vpop.f32.mrf.mxu0
      %v7135 = vadd.f32 %v7046, %v7134
      %7136 = vdwg.mxu0
      %v7137 = vsel %vm1668, %v6672, 0
      %v7139 = vsel %vm1668, %v6674, 0
      %v7141 = vsel %vm1668, %v6676, 0
      %v7143 = vsel %vm1668, %v6678, 0
      %v7145 = vsel %vm1668, %v6801, 0
      %v7147 = vsel %vm1668, %v6803, 0
      %v7149 = vsel %vm1668, %v6805, 0
      %v7151 = vsel %vm1668, %v6807, 0
      %7153 = vmatpush.xpose.msra.mxu0 0.0
      %7154 = vmatpush.xpose.msra.mxu0 0.0
      %7155 = vmatpush.xpose.msra.mxu0 0.0
      %7156 = vmatpush.xpose.msra.mxu0 0.0
      %7157 = vmatpush.xpose.msra.mxu0 0.0
      %7158 = vmatpush.xpose.msra.mxu0 0.0
      %7159 = vmatpush.xpose.msra.mxu0 0.0
      %7160 = vmatpush.xpose.msra.mxu0 0.0
      %7161 = vmatpush.xpose.msra.mxu0 0.0
      %7162 = vmatpush.xpose.msra.mxu0 0.0
      %7163 = vmatpush.xpose.msra.mxu0 0.0
      %7164 = vmatpush.xpose.msra.mxu0 0.0
      %7165 = vmatpush.xpose.msra.mxu0 %v7151
      %7166 = vmatpush.xpose.msra.mxu0 %v7149
      %7167 = vmatpush.xpose.msra.mxu0 %v7147
      %7168 = vmatpush.xpose.msra.mxu0 %v7145
      %7169 = vmatmul.f32.gmra.mxu0 %v7137
      %v7170 = vpop.f32.mrf.mxu0
      %v7171 = vadd.f32 %v7043, %v7170
      %7172 = vmatmul.f32.gmra.mxu0 %v7139
      %v7173 = vpop.f32.mrf.mxu0
      %v7174 = vadd.f32 %v7044, %v7173
      %7175 = vmatmul.f32.gmra.mxu0 %v7141
      %v7176 = vpop.f32.mrf.mxu0
      %v7177 = vadd.f32 %v7045, %v7176
      %7178 = vmatmul.f32.gmra.mxu0 %v7143
      %v7179 = vpop.f32.mrf.mxu0
      %v7180 = vadd.f32 %v7046, %v7179
      %7181 = vdwg.mxu0
      %v7182 = vsel %vm1668, %v6680, 0
      %v7184 = vsel %vm1668, %v6682, 0
      %v7186 = vsel %vm1668, %v6684, 0
      %v7188 = vsel %vm1668, %v6686, 0
      %v7190 = vsel %vm1668, %v6809, 0
      %v7192 = vsel %vm1668, %v6811, 0
      %v7194 = vsel %vm1668, %v6813, 0
      %v7196 = vsel %vm1668, %v6815, 0
      %7198 = vmatpush.xpose.msra.mxu0 0.0
      %7199 = vmatpush.xpose.msra.mxu0 0.0
      %7200 = vmatpush.xpose.msra.mxu0 0.0
      %7201 = vmatpush.xpose.msra.mxu0 0.0
      %7202 = vmatpush.xpose.msra.mxu0 0.0
      %7203 = vmatpush.xpose.msra.mxu0 0.0
      %7204 = vmatpush.xpose.msra.mxu0 0.0
      %7205 = vmatpush.xpose.msra.mxu0 0.0
      %7206 = vmatpush.xpose.msra.mxu0 0.0
      %7207 = vmatpush.xpose.msra.mxu0 0.0
      %7208 = vmatpush.xpose.msra.mxu0 0.0
      %7209 = vmatpush.xpose.msra.mxu0 0.0
      %7210 = vmatpush.xpose.msra.mxu0 %v7196
      %7211 = vmatpush.xpose.msra.mxu0 %v7194
      %7212 = vmatpush.xpose.msra.mxu0 %v7192
      %7213 = vmatpush.xpose.msra.mxu0 %v7190
      %7214 = vmatmul.f32.gmra.mxu0 %v7182
      %v7215 = vpop.f32.mrf.mxu0
      %v7216 = vadd.f32 %v7043, %v7215
      %7217 = vmatmul.f32.gmra.mxu0 %v7184
      %v7218 = vpop.f32.mrf.mxu0
      %v7219 = vadd.f32 %v7044, %v7218
      %7220 = vmatmul.f32.gmra.mxu0 %v7186
      %v7221 = vpop.f32.mrf.mxu0
      %v7222 = vadd.f32 %v7045, %v7221
      %7223 = vmatmul.f32.gmra.mxu0 %v7188
      %v7224 = vpop.f32.mrf.mxu0
      %v7225 = vadd.f32 %v7046, %v7224
      %7226 = vdwg.mxu0
      %v7227 = vsel %vm1668, %v6688, 0
      %v7229 = vsel %vm1668, %v6690, 0
      %v7231 = vsel %vm1668, %v6692, 0
      %v7233 = vsel %vm1668, %v6694, 0
      %v7235 = vsel %vm1668, %v6817, 0
      %v7237 = vsel %vm1668, %v6819, 0
      %v7239 = vsel %vm1668, %v6821, 0
      %v7241 = vsel %vm1668, %v6823, 0
      %7243 = vmatpush.xpose.msra.mxu0 0.0
      %7244 = vmatpush.xpose.msra.mxu0 0.0
      %7245 = vmatpush.xpose.msra.mxu0 0.0
      %7246 = vmatpush.xpose.msra.mxu0 0.0
      %7247 = vmatpush.xpose.msra.mxu0 0.0
      %7248 = vmatpush.xpose.msra.mxu0 0.0
      %7249 = vmatpush.xpose.msra.mxu0 0.0
      %7250 = vmatpush.xpose.msra.mxu0 0.0
      %7251 = vmatpush.xpose.msra.mxu0 0.0
      %7252 = vmatpush.xpose.msra.mxu0 0.0
      %7253 = vmatpush.xpose.msra.mxu0 0.0
      %7254 = vmatpush.xpose.msra.mxu0 0.0
      %7255 = vmatpush.xpose.msra.mxu0 %v7241
      %7256 = vmatpush.xpose.msra.mxu0 %v7239
      %7257 = vmatpush.xpose.msra.mxu0 %v7237
      %7258 = vmatpush.xpose.msra.mxu0 %v7235
      %7259 = vmatmul.f32.gmra.mxu0 %v7227
      %v7260 = vpop.f32.mrf.mxu0
      %v7261 = vadd.f32 %v7043, %v7260
      %7262 = vmatmul.f32.gmra.mxu0 %v7229
      %v7263 = vpop.f32.mrf.mxu0
      %v7264 = vadd.f32 %v7044, %v7263
      %7265 = vmatmul.f32.gmra.mxu0 %v7231
      %v7266 = vpop.f32.mrf.mxu0
      %v7267 = vadd.f32 %v7045, %v7266
      %7268 = vmatmul.f32.gmra.mxu0 %v7233
      %v7269 = vpop.f32.mrf.mxu0
      %v7270 = vadd.f32 %v7046, %v7269
      %7271 = vdwg.mxu0
      %v7272 = vsel %vm1668, %v6696, 0
      %v7274 = vsel %vm1668, %v6698, 0
      %v7276 = vsel %vm1668, %v6700, 0
      %v7278 = vsel %vm1668, %v6702, 0
      %v7280 = vsel %vm1668, %v6825, 0
      %v7282 = vsel %vm1668, %v6827, 0
      %v7284 = vsel %vm1668, %v6829, 0
      %v7286 = vsel %vm1668, %v6831, 0
      %7288 = vmatpush.xpose.msra.mxu0 0.0
      %7289 = vmatpush.xpose.msra.mxu0 0.0
      %7290 = vmatpush.xpose.msra.mxu0 0.0
      %7291 = vmatpush.xpose.msra.mxu0 0.0
      %7292 = vmatpush.xpose.msra.mxu0 0.0
      %7293 = vmatpush.xpose.msra.mxu0 0.0
      %7294 = vmatpush.xpose.msra.mxu0 0.0
      %7295 = vmatpush.xpose.msra.mxu0 0.0
      %7296 = vmatpush.xpose.msra.mxu0 0.0
      %7297 = vmatpush.xpose.msra.mxu0 0.0
      %7298 = vmatpush.xpose.msra.mxu0 0.0
      %7299 = vmatpush.xpose.msra.mxu0 0.0
      %7300 = vmatpush.xpose.msra.mxu0 %v7286
      %7301 = vmatpush.xpose.msra.mxu0 %v7284
      %7302 = vmatpush.xpose.msra.mxu0 %v7282
      %7303 = vmatpush.xpose.msra.mxu0 %v7280
      %7304 = vmatmul.f32.gmra.mxu0 %v7272
      %v7305 = vpop.f32.mrf.mxu0
      %v7306 = vadd.f32 %v7043, %v7305
      %7307 = vmatmul.f32.gmra.mxu0 %v7274
      %v7308 = vpop.f32.mrf.mxu0
      %v7309 = vadd.f32 %v7044, %v7308
      %7310 = vmatmul.f32.gmra.mxu0 %v7276
      %v7311 = vpop.f32.mrf.mxu0
      %v7312 = vadd.f32 %v7045, %v7311
      %7313 = vmatmul.f32.gmra.mxu0 %v7278
      %v7314 = vpop.f32.mrf.mxu0
      %v7315 = vadd.f32 %v7046, %v7314
      %7316 = vdwg.mxu0
      %v7317 = vsel %vm1668, %v6704, 0
      %v7319 = vsel %vm1668, %v6706, 0
      %v7321 = vsel %vm1668, %v6708, 0
      %v7323 = vsel %vm1668, %v6710, 0
      %v7325 = vsel %vm1668, %v6833, 0
      %v7327 = vsel %vm1668, %v6835, 0
      %v7329 = vsel %vm1668, %v6837, 0
      %v7331 = vsel %vm1668, %v6839, 0
      %7333 = vmatpush.xpose.msra.mxu0 0.0
      %7334 = vmatpush.xpose.msra.mxu0 0.0
      %7335 = vmatpush.xpose.msra.mxu0 0.0
      %7336 = vmatpush.xpose.msra.mxu0 0.0
      %7337 = vmatpush.xpose.msra.mxu0 0.0
      %7338 = vmatpush.xpose.msra.mxu0 0.0
      %7339 = vmatpush.xpose.msra.mxu0 0.0
      %7340 = vmatpush.xpose.msra.mxu0 0.0
      %7341 = vmatpush.xpose.msra.mxu0 0.0
      %7342 = vmatpush.xpose.msra.mxu0 0.0
      %7343 = vmatpush.xpose.msra.mxu0 0.0
      %7344 = vmatpush.xpose.msra.mxu0 0.0
      %7345 = vmatpush.xpose.msra.mxu0 %v7331
      %7346 = vmatpush.xpose.msra.mxu0 %v7329
      %7347 = vmatpush.xpose.msra.mxu0 %v7327
      %7348 = vmatpush.xpose.msra.mxu0 %v7325
      %7349 = vmatmul.f32.gmra.mxu0 %v7317
      %v7350 = vpop.f32.mrf.mxu0
      %v7351 = vadd.f32 %v7043, %v7350
      %7352 = vmatmul.f32.gmra.mxu0 %v7319
      %v7353 = vpop.f32.mrf.mxu0
      %v7354 = vadd.f32 %v7044, %v7353
      %7355 = vmatmul.f32.gmra.mxu0 %v7321
      %v7356 = vpop.f32.mrf.mxu0
      %v7357 = vadd.f32 %v7045, %v7356
      %7358 = vmatmul.f32.gmra.mxu0 %v7323
      %v7359 = vpop.f32.mrf.mxu0
      %v7360 = vadd.f32 %v7046, %v7359
      %7361 = vdwg.mxu0
      %v7362 = vsel %vm1668, %v6712, 0
      %v7364 = vsel %vm1668, %v6714, 0
      %v7366 = vsel %vm1668, %v6716, 0
      %v7368 = vsel %vm1668, %v6718, 0
      %v7370 = vsel %vm1668, %v6841, 0
      %v7372 = vsel %vm1668, %v6843, 0
      %v7374 = vsel %vm1668, %v6845, 0
      %v7376 = vsel %vm1668, %v6847, 0
      %7378 = vmatpush.xpose.msra.mxu0 0.0
      %7379 = vmatpush.xpose.msra.mxu0 0.0
      %7380 = vmatpush.xpose.msra.mxu0 0.0
      %7381 = vmatpush.xpose.msra.mxu0 0.0
      %7382 = vmatpush.xpose.msra.mxu0 0.0
      %7383 = vmatpush.xpose.msra.mxu0 0.0
      %7384 = vmatpush.xpose.msra.mxu0 0.0
      %7385 = vmatpush.xpose.msra.mxu0 0.0
      %7386 = vmatpush.xpose.msra.mxu0 0.0
      %7387 = vmatpush.xpose.msra.mxu0 0.0
      %7388 = vmatpush.xpose.msra.mxu0 0.0
      %7389 = vmatpush.xpose.msra.mxu0 0.0
      %7390 = vmatpush.xpose.msra.mxu0 %v7376
      %7391 = vmatpush.xpose.msra.mxu0 %v7374
      %7392 = vmatpush.xpose.msra.mxu0 %v7372
      %7393 = vmatpush.xpose.msra.mxu0 %v7370
      %7394 = vmatmul.f32.gmra.mxu0 %v7362
      %v7395 = vpop.f32.mrf.mxu0
      %v7396 = vadd.f32 %v7043, %v7395
      %7397 = vmatmul.f32.gmra.mxu0 %v7364
      %v7398 = vpop.f32.mrf.mxu0
      %v7399 = vadd.f32 %v7044, %v7398
      %7400 = vmatmul.f32.gmra.mxu0 %v7366
      %v7401 = vpop.f32.mrf.mxu0
      %v7402 = vadd.f32 %v7045, %v7401
      %7403 = vmatmul.f32.gmra.mxu0 %v7368
      %v7404 = vpop.f32.mrf.mxu0
      %v7405 = vadd.f32 %v7046, %v7404
      %7406 = vdwg.mxu0
      %v7407 = vsel %vm635, %v7081, -inf
      %7408 = vmax.xlane.f32.xlu0 %v7407
      %v7409 = vpop.xlane.xlu0 %7408
      %v7410 = vsel %vm635, %v7084, -inf
      %7411 = vmax.xlane.f32.xlu0 %v7410
      %v7412 = vpop.xlane.xlu0 %7411
      %v7413 = vsel %vm635, %v7087, -inf
      %7414 = vmax.xlane.f32.xlu0 %v7413
      %v7415 = vpop.xlane.xlu0 %7414
      %v7416 = vsel %vm635, %v7090, -inf
      %7417 = vmax.xlane.f32.xlu0 %v7416
      %v7418 = vpop.xlane.xlu0 %7417
      %v7419 = vsel %vm635, %v7126, -inf
      %7420 = vmax.xlane.f32.xlu0 %v7419
      %v7421 = vpop.xlane.xlu0 %7420
      %v7422 = vsel %vm635, %v7129, -inf
      %7423 = vmax.xlane.f32.xlu0 %v7422
      %v7424 = vpop.xlane.xlu0 %7423
      %v7425 = vsel %vm635, %v7132, -inf
      %7426 = vmax.xlane.f32.xlu0 %v7425
      %v7427 = vpop.xlane.xlu0 %7426
      %v7428 = vsel %vm635, %v7135, -inf
      %7429 = vmax.xlane.f32.xlu0 %v7428
      %v7430 = vpop.xlane.xlu0 %7429
      %v7431 = vsel %vm635, %v7171, -inf
      %7432 = vmax.xlane.f32.xlu0 %v7431
      %v7433 = vpop.xlane.xlu0 %7432
      %v7434 = vsel %vm635, %v7174, -inf
      %7435 = vmax.xlane.f32.xlu0 %v7434
      %v7436 = vpop.xlane.xlu0 %7435
      %v7437 = vsel %vm635, %v7177, -inf
      %7438 = vmax.xlane.f32.xlu0 %v7437
      %v7439 = vpop.xlane.xlu0 %7438
      %v7440 = vsel %vm635, %v7180, -inf
      %7441 = vmax.xlane.f32.xlu0 %v7440
      %v7442 = vpop.xlane.xlu0 %7441
      %v7443 = vsel %vm635, %v7216, -inf
      %7444 = vmax.xlane.f32.xlu0 %v7443
      %v7445 = vpop.xlane.xlu0 %7444
      %v7446 = vsel %vm635, %v7219, -inf
      %7447 = vmax.xlane.f32.xlu0 %v7446
      %v7448 = vpop.xlane.xlu0 %7447
      %v7449 = vsel %vm635, %v7222, -inf
      %7450 = vmax.xlane.f32.xlu0 %v7449
      %v7451 = vpop.xlane.xlu0 %7450
      %v7452 = vsel %vm635, %v7225, -inf
      %7453 = vmax.xlane.f32.xlu0 %v7452
      %v7454 = vpop.xlane.xlu0 %7453
      %v7455 = vsel %vm635, %v7261, -inf
      %7456 = vmax.xlane.f32.xlu0 %v7455
      %v7457 = vpop.xlane.xlu0 %7456
      %v7458 = vsel %vm635, %v7264, -inf
      %7459 = vmax.xlane.f32.xlu0 %v7458
      %v7460 = vpop.xlane.xlu0 %7459
      %v7461 = vsel %vm635, %v7267, -inf
      %7462 = vmax.xlane.f32.xlu0 %v7461
      %v7463 = vpop.xlane.xlu0 %7462
      %v7464 = vsel %vm635, %v7270, -inf
      %7465 = vmax.xlane.f32.xlu0 %v7464
      %v7466 = vpop.xlane.xlu0 %7465
      %v7467 = vsel %vm635, %v7306, -inf
      %7468 = vmax.xlane.f32.xlu0 %v7467
      %v7469 = vpop.xlane.xlu0 %7468
      %v7470 = vsel %vm635, %v7309, -inf
      %7471 = vmax.xlane.f32.xlu0 %v7470
      %v7472 = vpop.xlane.xlu0 %7471
      %v7473 = vsel %vm635, %v7312, -inf
      %7474 = vmax.xlane.f32.xlu0 %v7473
      %v7475 = vpop.xlane.xlu0 %7474
      %v7476 = vsel %vm635, %v7315, -inf
      %7477 = vmax.xlane.f32.xlu0 %v7476
      %v7478 = vpop.xlane.xlu0 %7477
      %v7479 = vsel %vm635, %v7351, -inf
      %7480 = vmax.xlane.f32.xlu0 %v7479
      %v7481 = vpop.xlane.xlu0 %7480
      %v7482 = vsel %vm635, %v7354, -inf
      %7483 = vmax.xlane.f32.xlu0 %v7482
      %v7484 = vpop.xlane.xlu0 %7483
      %v7485 = vsel %vm635, %v7357, -inf
      %7486 = vmax.xlane.f32.xlu0 %v7485
      %v7487 = vpop.xlane.xlu0 %7486
      %v7488 = vsel %vm635, %v7360, -inf
      %7489 = vmax.xlane.f32.xlu0 %v7488
      %v7490 = vpop.xlane.xlu0 %7489
      %v7491 = vsel %vm635, %v7396, -inf
      %7492 = vmax.xlane.f32.xlu0 %v7491
      %v7493 = vpop.xlane.xlu0 %7492
      %v7494 = vsel %vm635, %v7399, -inf
      %7495 = vmax.xlane.f32.xlu0 %v7494
      %v7496 = vpop.xlane.xlu0 %7495
      %v7497 = vsel %vm635, %v7402, -inf
      %7498 = vmax.xlane.f32.xlu0 %v7497
      %v7499 = vpop.xlane.xlu0 %7498
      %v7500 = vsel %vm635, %v7405, -inf
      %7501 = vmax.xlane.f32.xlu0 %v7500
      %v7502 = vpop.xlane.xlu0 %7501
      %v7503 = vsub.f32 %v7081, %v7409
      %v7504 = vsub.f32 %v7084, %v7412
      %v7505 = vsub.f32 %v7087, %v7415
      %v7506 = vsub.f32 %v7090, %v7418
      %v7507 = vsub.f32 %v7126, %v7421
      %v7508 = vsub.f32 %v7129, %v7424
      %v7509 = vsub.f32 %v7132, %v7427
      %v7510 = vsub.f32 %v7135, %v7430
      %v7511 = vsub.f32 %v7171, %v7433
      %v7512 = vsub.f32 %v7174, %v7436
      %v7513 = vsub.f32 %v7177, %v7439
      %v7514 = vsub.f32 %v7180, %v7442
      %v7515 = vsub.f32 %v7216, %v7445
      %v7516 = vsub.f32 %v7219, %v7448
      %v7517 = vsub.f32 %v7222, %v7451
      %v7518 = vsub.f32 %v7225, %v7454
      %v7519 = vsub.f32 %v7261, %v7457
      %v7520 = vsub.f32 %v7264, %v7460
      %v7521 = vsub.f32 %v7267, %v7463
      %v7522 = vsub.f32 %v7270, %v7466
      %v7523 = vsub.f32 %v7306, %v7469
      %v7524 = vsub.f32 %v7309, %v7472
      %v7525 = vsub.f32 %v7312, %v7475
      %v7526 = vsub.f32 %v7315, %v7478
      %v7527 = vsub.f32 %v7351, %v7481
      %v7528 = vsub.f32 %v7354, %v7484
      %v7529 = vsub.f32 %v7357, %v7487
      %v7530 = vsub.f32 %v7360, %v7490
      %v7531 = vsub.f32 %v7396, %v7493
      %v7532 = vsub.f32 %v7399, %v7496
      %v7533 = vsub.f32 %v7402, %v7499
      %v7534 = vsub.f32 %v7405, %v7502
      %v7535 = vmul.f32 %v7503, 1.442695
      %v7536 = vpow.pop %v7535
      %v7537 = vmul.f32 %v7504, 1.442695
      %v7538 = vpow.pop %v7537
      %v7539 = vmul.f32 %v7505, 1.442695
      %v7540 = vpow.pop %v7539
      %v7541 = vmul.f32 %v7506, 1.442695
      %v7542 = vpow.pop %v7541
      %v7543 = vmul.f32 %v7507, 1.442695
      %v7544 = vpow.pop %v7543
      %v7545 = vmul.f32 %v7508, 1.442695
      %v7546 = vpow.pop %v7545
      %v7547 = vmul.f32 %v7509, 1.442695
      %v7548 = vpow.pop %v7547
      %v7549 = vmul.f32 %v7510, 1.442695
      %v7550 = vpow.pop %v7549
      %v7551 = vmul.f32 %v7511, 1.442695
      %v7552 = vpow.pop %v7551
      %v7553 = vmul.f32 %v7512, 1.442695
      %v7554 = vpow.pop %v7553
      %v7555 = vmul.f32 %v7513, 1.442695
      %v7556 = vpow.pop %v7555
      %v7557 = vmul.f32 %v7514, 1.442695
      %v7558 = vpow.pop %v7557
      %v7559 = vmul.f32 %v7515, 1.442695
      %v7560 = vpow.pop %v7559
      %v7561 = vmul.f32 %v7516, 1.442695
      %v7562 = vpow.pop %v7561
      %v7563 = vmul.f32 %v7517, 1.442695
      %v7564 = vpow.pop %v7563
      %v7565 = vmul.f32 %v7518, 1.442695
      %v7566 = vpow.pop %v7565
      %v7567 = vmul.f32 %v7519, 1.442695
      %v7568 = vpow.pop %v7567
      %v7569 = vmul.f32 %v7520, 1.442695
      %v7570 = vpow.pop %v7569
      %v7571 = vmul.f32 %v7521, 1.442695
      %v7572 = vpow.pop %v7571
      %v7573 = vmul.f32 %v7522, 1.442695
      %v7574 = vpow.pop %v7573
      %v7575 = vmul.f32 %v7523, 1.442695
      %v7576 = vpow.pop %v7575
      %v7577 = vmul.f32 %v7524, 1.442695
      %v7578 = vpow.pop %v7577
      %v7579 = vmul.f32 %v7525, 1.442695
      %v7580 = vpow.pop %v7579
      %v7581 = vmul.f32 %v7526, 1.442695
      %v7582 = vpow.pop %v7581
      %v7583 = vmul.f32 %v7527, 1.442695
      %v7584 = vpow.pop %v7583
      %v7585 = vmul.f32 %v7528, 1.442695
      %v7586 = vpow.pop %v7585
      %v7587 = vmul.f32 %v7529, 1.442695
      %v7588 = vpow.pop %v7587
      %v7589 = vmul.f32 %v7530, 1.442695
      %v7590 = vpow.pop %v7589
      %v7591 = vmul.f32 %v7531, 1.442695
      %v7592 = vpow.pop %v7591
      %v7593 = vmul.f32 %v7532, 1.442695
      %v7594 = vpow.pop %v7593
      %v7595 = vmul.f32 %v7533, 1.442695
      %v7596 = vpow.pop %v7595
      %v7597 = vmul.f32 %v7534, 1.442695
      %v7598 = vpow.pop %v7597
      %v7599 = vsel %vm635, %v7536, 0.0
      %7600 = vadd.xlane.f32.xlu0 %v7599
      %v7601 = vpop.xlane.xlu0 %7600
      %v7602 = vsel %vm635, %v7538, 0.0
      %7603 = vadd.xlane.f32.xlu0 %v7602
      %v7604 = vpop.xlane.xlu0 %7603
      %v7605 = vsel %vm635, %v7540, 0.0
      %7606 = vadd.xlane.f32.xlu0 %v7605
      %v7607 = vpop.xlane.xlu0 %7606
      %v7608 = vsel %vm635, %v7542, 0.0
      %7609 = vadd.xlane.f32.xlu0 %v7608
      %v7610 = vpop.xlane.xlu0 %7609
      %v7611 = vsel %vm635, %v7544, 0.0
      %7612 = vadd.xlane.f32.xlu0 %v7611
      %v7613 = vpop.xlane.xlu0 %7612
      %v7614 = vsel %vm635, %v7546, 0.0
      %7615 = vadd.xlane.f32.xlu0 %v7614
      %v7616 = vpop.xlane.xlu0 %7615
      %v7617 = vsel %vm635, %v7548, 0.0
      %7618 = vadd.xlane.f32.xlu0 %v7617
      %v7619 = vpop.xlane.xlu0 %7618
      %v7620 = vsel %vm635, %v7550, 0.0
      %7621 = vadd.xlane.f32.xlu0 %v7620
      %v7622 = vpop.xlane.xlu0 %7621
      %v7623 = vsel %vm635, %v7552, 0.0
      %7624 = vadd.xlane.f32.xlu0 %v7623
      %v7625 = vpop.xlane.xlu0 %7624
      %v7626 = vsel %vm635, %v7554, 0.0
      %7627 = vadd.xlane.f32.xlu0 %v7626
      %v7628 = vpop.xlane.xlu0 %7627
      %v7629 = vsel %vm635, %v7556, 0.0
      %7630 = vadd.xlane.f32.xlu0 %v7629
      %v7631 = vpop.xlane.xlu0 %7630
      %v7632 = vsel %vm635, %v7558, 0.0
      %7633 = vadd.xlane.f32.xlu0 %v7632
      %v7634 = vpop.xlane.xlu0 %7633
      %v7635 = vsel %vm635, %v7560, 0.0
      %7636 = vadd.xlane.f32.xlu0 %v7635
      %v7637 = vpop.xlane.xlu0 %7636
      %v7638 = vsel %vm635, %v7562, 0.0
      %7639 = vadd.xlane.f32.xlu0 %v7638
      %v7640 = vpop.xlane.xlu0 %7639
      %v7641 = vsel %vm635, %v7564, 0.0
      %7642 = vadd.xlane.f32.xlu0 %v7641
      %v7643 = vpop.xlane.xlu0 %7642
      %v7644 = vsel %vm635, %v7566, 0.0
      %7645 = vadd.xlane.f32.xlu0 %v7644
      %v7646 = vpop.xlane.xlu0 %7645
      %v7647 = vsel %vm635, %v7568, 0.0
      %7648 = vadd.xlane.f32.xlu0 %v7647
      %v7649 = vpop.xlane.xlu0 %7648
      %v7650 = vsel %vm635, %v7570, 0.0
      %7651 = vadd.xlane.f32.xlu0 %v7650
      %v7652 = vpop.xlane.xlu0 %7651
      %v7653 = vsel %vm635, %v7572, 0.0
      %7654 = vadd.xlane.f32.xlu0 %v7653
      %v7655 = vpop.xlane.xlu0 %7654
      %v7656 = vsel %vm635, %v7574, 0.0
      %7657 = vadd.xlane.f32.xlu0 %v7656
      %v7658 = vpop.xlane.xlu0 %7657
      %v7659 = vsel %vm635, %v7576, 0.0
      %7660 = vadd.xlane.f32.xlu0 %v7659
      %v7661 = vpop.xlane.xlu0 %7660
      %v7662 = vsel %vm635, %v7578, 0.0
      %7663 = vadd.xlane.f32.xlu0 %v7662
      %v7664 = vpop.xlane.xlu0 %7663
      %v7665 = vsel %vm635, %v7580, 0.0
      %7666 = vadd.xlane.f32.xlu0 %v7665
      %v7667 = vpop.xlane.xlu0 %7666
      %v7668 = vsel %vm635, %v7582, 0.0
      %7669 = vadd.xlane.f32.xlu0 %v7668
      %v7670 = vpop.xlane.xlu0 %7669
      %v7671 = vsel %vm635, %v7584, 0.0
      %7672 = vadd.xlane.f32.xlu0 %v7671
      %v7673 = vpop.xlane.xlu0 %7672
      %v7674 = vsel %vm635, %v7586, 0.0
      %7675 = vadd.xlane.f32.xlu0 %v7674
      %v7676 = vpop.xlane.xlu0 %7675
      %v7677 = vsel %vm635, %v7588, 0.0
      %7678 = vadd.xlane.f32.xlu0 %v7677
      %v7679 = vpop.xlane.xlu0 %7678
      %v7680 = vsel %vm635, %v7590, 0.0
      %7681 = vadd.xlane.f32.xlu0 %v7680
      %v7682 = vpop.xlane.xlu0 %7681
      %v7683 = vsel %vm635, %v7592, 0.0
      %7684 = vadd.xlane.f32.xlu0 %v7683
      %v7685 = vpop.xlane.xlu0 %7684
      %v7686 = vsel %vm635, %v7594, 0.0
      %7687 = vadd.xlane.f32.xlu0 %v7686
      %v7688 = vpop.xlane.xlu0 %7687
      %v7689 = vsel %vm635, %v7596, 0.0
      %7690 = vadd.xlane.f32.xlu0 %v7689
      %v7691 = vpop.xlane.xlu0 %7690
      %v7692 = vsel %vm635, %v7598, 0.0
      %7693 = vadd.xlane.f32.xlu0 %v7692
      %v7694 = vpop.xlane.xlu0 %7693
      %v7695 = vrcp.pop %v7601
      %v7696 = vrcp.pop %v7604
      %v7697 = vrcp.pop %v7607
      %v7698 = vrcp.pop %v7610
      %v7699 = vrcp.pop %v7613
      %v7700 = vrcp.pop %v7616
      %v7701 = vrcp.pop %v7619
      %v7702 = vrcp.pop %v7622
      %v7703 = vrcp.pop %v7625
      %v7704 = vrcp.pop %v7628
      %v7705 = vrcp.pop %v7631
      %v7706 = vrcp.pop %v7634
      %v7707 = vrcp.pop %v7637
      %v7708 = vrcp.pop %v7640
      %v7709 = vrcp.pop %v7643
      %v7710 = vrcp.pop %v7646
      %v7711 = vrcp.pop %v7649
      %v7712 = vrcp.pop %v7652
      %v7713 = vrcp.pop %v7655
      %v7714 = vrcp.pop %v7658
      %v7715 = vrcp.pop %v7661
      %v7716 = vrcp.pop %v7664
      %v7717 = vrcp.pop %v7667
      %v7718 = vrcp.pop %v7670
      %v7719 = vrcp.pop %v7673
      %v7720 = vrcp.pop %v7676
      %v7721 = vrcp.pop %v7679
      %v7722 = vrcp.pop %v7682
      %v7723 = vrcp.pop %v7685
      %v7724 = vrcp.pop %v7688
      %v7725 = vrcp.pop %v7691
      %v7726 = vrcp.pop %v7694
      %v7727 = vmul.f32 %v7536, %v7695
      %v7728 = vmul.f32 %v7538, %v7696
      %v7729 = vmul.f32 %v7540, %v7697
      %v7730 = vmul.f32 %v7542, %v7698
      %v7731 = vmul.f32 %v7544, %v7699
      %v7732 = vmul.f32 %v7546, %v7700
      %v7733 = vmul.f32 %v7548, %v7701
      %v7734 = vmul.f32 %v7550, %v7702
      %v7735 = vmul.f32 %v7552, %v7703
      %v7736 = vmul.f32 %v7554, %v7704
      %v7737 = vmul.f32 %v7556, %v7705
      %v7738 = vmul.f32 %v7558, %v7706
      %v7739 = vmul.f32 %v7560, %v7707
      %v7740 = vmul.f32 %v7562, %v7708
      %v7741 = vmul.f32 %v7564, %v7709
      %v7742 = vmul.f32 %v7566, %v7710
      %v7743 = vmul.f32 %v7568, %v7711
      %v7744 = vmul.f32 %v7570, %v7712
      %v7745 = vmul.f32 %v7572, %v7713
      %v7746 = vmul.f32 %v7574, %v7714
      %v7747 = vmul.f32 %v7576, %v7715
      %v7748 = vmul.f32 %v7578, %v7716
      %v7749 = vmul.f32 %v7580, %v7717
      %v7750 = vmul.f32 %v7582, %v7718
      %v7751 = vmul.f32 %v7584, %v7719
      %v7752 = vmul.f32 %v7586, %v7720
      %v7753 = vmul.f32 %v7588, %v7721
      %v7754 = vmul.f32 %v7590, %v7722
      %v7755 = vmul.f32 %v7592, %v7723
      %v7756 = vmul.f32 %v7594, %v7724
      %v7757 = vmul.f32 %v7596, %v7725
      %v7758 = vmul.f32 %v7598, %v7726
      %v7760 = vsel %vm635, %v7727, 0
      %v7763 = vsel %vm635, %v7728, 0
      %v7766 = vsel %vm635, %v7729, 0
      %v7769 = vsel %vm635, %v7730, 0
      %7771 = vmatpush.msra.mxu0 0.0
      %7772 = vmatpush.msra.mxu0 0.0
      %7773 = vmatpush.msra.mxu0 0.0
      %7774 = vmatpush.msra.mxu0 0.0
      %7775 = vmatpush.msra.mxu0 0.0
      %7776 = vmatpush.msra.mxu0 0.0
      %7777 = vmatpush.msra.mxu0 0.0
      %7778 = vmatpush.msra.mxu0 0.0
      %7779 = vmatpush.msra.mxu0 0.0
      %7780 = vmatpush.msra.mxu0 0.0
      %7781 = vmatpush.msra.mxu0 0.0
      %7782 = vmatpush.msra.mxu0 0.0
      %7783 = vmatpush.msra.mxu0 %v6920
      %7784 = vmatpush.msra.mxu0 %v6918
      %7785 = vmatpush.msra.mxu0 %v6916
      %7786 = vmatpush.msra.mxu0 %v6914
      %7787 = vmatmul.f32.gmra.mxu0 %v7760
      %v7788 = vpop.f32.mrf.mxu0
      %v7789 = vadd.f32 0.0, %v7788
      %7790 = vmatmul.f32.gmra.mxu0 %v7763
      %v7791 = vpop.f32.mrf.mxu0
      %v7792 = vadd.f32 0.0, %v7791
      %7793 = vmatmul.f32.gmra.mxu0 %v7766
      %v7794 = vpop.f32.mrf.mxu0
      %v7795 = vadd.f32 0.0, %v7794
      %7796 = vmatmul.f32.gmra.mxu0 %v7769
      %v7797 = vpop.f32.mrf.mxu0
      %v7798 = vadd.f32 0.0, %v7797
      %7799 = vdwg.mxu0
      %v7801 = vsel %vm635, %v7731, 0
      %v7804 = vsel %vm635, %v7732, 0
      %v7807 = vsel %vm635, %v7733, 0
      %v7810 = vsel %vm635, %v7734, 0
      %7812 = vmatpush.msra.mxu0 0.0
      %7813 = vmatpush.msra.mxu0 0.0
      %7814 = vmatpush.msra.mxu0 0.0
      %7815 = vmatpush.msra.mxu0 0.0
      %7816 = vmatpush.msra.mxu0 0.0
      %7817 = vmatpush.msra.mxu0 0.0
      %7818 = vmatpush.msra.mxu0 0.0
      %7819 = vmatpush.msra.mxu0 0.0
      %7820 = vmatpush.msra.mxu0 0.0
      %7821 = vmatpush.msra.mxu0 0.0
      %7822 = vmatpush.msra.mxu0 0.0
      %7823 = vmatpush.msra.mxu0 0.0
      %7824 = vmatpush.msra.mxu0 %v6928
      %7825 = vmatpush.msra.mxu0 %v6926
      %7826 = vmatpush.msra.mxu0 %v6924
      %7827 = vmatpush.msra.mxu0 %v6922
      %7828 = vmatmul.f32.gmra.mxu0 %v7801
      %v7829 = vpop.f32.mrf.mxu0
      %v7830 = vadd.f32 0.0, %v7829
      %7831 = vmatmul.f32.gmra.mxu0 %v7804
      %v7832 = vpop.f32.mrf.mxu0
      %v7833 = vadd.f32 0.0, %v7832
      %7834 = vmatmul.f32.gmra.mxu0 %v7807
      %v7835 = vpop.f32.mrf.mxu0
      %v7836 = vadd.f32 0.0, %v7835
      %7837 = vmatmul.f32.gmra.mxu0 %v7810
      %v7838 = vpop.f32.mrf.mxu0
      %v7839 = vadd.f32 0.0, %v7838
      %7840 = vdwg.mxu0
      %v7842 = vsel %vm635, %v7735, 0
      %v7845 = vsel %vm635, %v7736, 0
      %v7848 = vsel %vm635, %v7737, 0
      %v7851 = vsel %vm635, %v7738, 0
      %7853 = vmatpush.msra.mxu0 0.0
      %7854 = vmatpush.msra.mxu0 0.0
      %7855 = vmatpush.msra.mxu0 0.0
      %7856 = vmatpush.msra.mxu0 0.0
      %7857 = vmatpush.msra.mxu0 0.0
      %7858 = vmatpush.msra.mxu0 0.0
      %7859 = vmatpush.msra.mxu0 0.0
      %7860 = vmatpush.msra.mxu0 0.0
      %7861 = vmatpush.msra.mxu0 0.0
      %7862 = vmatpush.msra.mxu0 0.0
      %7863 = vmatpush.msra.mxu0 0.0
      %7864 = vmatpush.msra.mxu0 0.0
      %7865 = vmatpush.msra.mxu0 %v6936
      %7866 = vmatpush.msra.mxu0 %v6934
      %7867 = vmatpush.msra.mxu0 %v6932
      %7868 = vmatpush.msra.mxu0 %v6930
      %7869 = vmatmul.f32.gmra.mxu0 %v7842
      %v7870 = vpop.f32.mrf.mxu0
      %v7871 = vadd.f32 0.0, %v7870
      %7872 = vmatmul.f32.gmra.mxu0 %v7845
      %v7873 = vpop.f32.mrf.mxu0
      %v7874 = vadd.f32 0.0, %v7873
      %7875 = vmatmul.f32.gmra.mxu0 %v7848
      %v7876 = vpop.f32.mrf.mxu0
      %v7877 = vadd.f32 0.0, %v7876
      %7878 = vmatmul.f32.gmra.mxu0 %v7851
      %v7879 = vpop.f32.mrf.mxu0
      %v7880 = vadd.f32 0.0, %v7879
      %7881 = vdwg.mxu0
      %v7883 = vsel %vm635, %v7739, 0
      %v7886 = vsel %vm635, %v7740, 0
      %v7889 = vsel %vm635, %v7741, 0
      %v7892 = vsel %vm635, %v7742, 0
      %7894 = vmatpush.msra.mxu0 0.0
      %7895 = vmatpush.msra.mxu0 0.0
      %7896 = vmatpush.msra.mxu0 0.0
      %7897 = vmatpush.msra.mxu0 0.0
      %7898 = vmatpush.msra.mxu0 0.0
      %7899 = vmatpush.msra.mxu0 0.0
      %7900 = vmatpush.msra.mxu0 0.0
      %7901 = vmatpush.msra.mxu0 0.0
      %7902 = vmatpush.msra.mxu0 0.0
      %7903 = vmatpush.msra.mxu0 0.0
      %7904 = vmatpush.msra.mxu0 0.0
      %7905 = vmatpush.msra.mxu0 0.0
      %7906 = vmatpush.msra.mxu0 %v6944
      %7907 = vmatpush.msra.mxu0 %v6942
      %7908 = vmatpush.msra.mxu0 %v6940
      %7909 = vmatpush.msra.mxu0 %v6938
      %7910 = vmatmul.f32.gmra.mxu0 %v7883
      %v7911 = vpop.f32.mrf.mxu0
      %v7912 = vadd.f32 0.0, %v7911
      %7913 = vmatmul.f32.gmra.mxu0 %v7886
      %v7914 = vpop.f32.mrf.mxu0
      %v7915 = vadd.f32 0.0, %v7914
      %7916 = vmatmul.f32.gmra.mxu0 %v7889
      %v7917 = vpop.f32.mrf.mxu0
      %v7918 = vadd.f32 0.0, %v7917
      %7919 = vmatmul.f32.gmra.mxu0 %v7892
      %v7920 = vpop.f32.mrf.mxu0
      %v7921 = vadd.f32 0.0, %v7920
      %7922 = vdwg.mxu0
      %v7924 = vsel %vm635, %v7743, 0
      %v7927 = vsel %vm635, %v7744, 0
      %v7930 = vsel %vm635, %v7745, 0
      %v7933 = vsel %vm635, %v7746, 0
      %7935 = vmatpush.msra.mxu0 0.0
      %7936 = vmatpush.msra.mxu0 0.0
      %7937 = vmatpush.msra.mxu0 0.0
      %7938 = vmatpush.msra.mxu0 0.0
      %7939 = vmatpush.msra.mxu0 0.0
      %7940 = vmatpush.msra.mxu0 0.0
      %7941 = vmatpush.msra.mxu0 0.0
      %7942 = vmatpush.msra.mxu0 0.0
      %7943 = vmatpush.msra.mxu0 0.0
      %7944 = vmatpush.msra.mxu0 0.0
      %7945 = vmatpush.msra.mxu0 0.0
      %7946 = vmatpush.msra.mxu0 0.0
      %7947 = vmatpush.msra.mxu0 %v6952
      %7948 = vmatpush.msra.mxu0 %v6950
      %7949 = vmatpush.msra.mxu0 %v6948
      %7950 = vmatpush.msra.mxu0 %v6946
      %7951 = vmatmul.f32.gmra.mxu0 %v7924
      %v7952 = vpop.f32.mrf.mxu0
      %v7953 = vadd.f32 0.0, %v7952
      %7954 = vmatmul.f32.gmra.mxu0 %v7927
      %v7955 = vpop.f32.mrf.mxu0
      %v7956 = vadd.f32 0.0, %v7955
      %7957 = vmatmul.f32.gmra.mxu0 %v7930
      %v7958 = vpop.f32.mrf.mxu0
      %v7959 = vadd.f32 0.0, %v7958
      %7960 = vmatmul.f32.gmra.mxu0 %v7933
      %v7961 = vpop.f32.mrf.mxu0
      %v7962 = vadd.f32 0.0, %v7961
      %7963 = vdwg.mxu0
      %v7965 = vsel %vm635, %v7747, 0
      %v7968 = vsel %vm635, %v7748, 0
      %v7971 = vsel %vm635, %v7749, 0
      %v7974 = vsel %vm635, %v7750, 0
      %7976 = vmatpush.msra.mxu0 0.0
      %7977 = vmatpush.msra.mxu0 0.0
      %7978 = vmatpush.msra.mxu0 0.0
      %7979 = vmatpush.msra.mxu0 0.0
      %7980 = vmatpush.msra.mxu0 0.0
      %7981 = vmatpush.msra.mxu0 0.0
      %7982 = vmatpush.msra.mxu0 0.0
      %7983 = vmatpush.msra.mxu0 0.0
      %7984 = vmatpush.msra.mxu0 0.0
      %7985 = vmatpush.msra.mxu0 0.0
      %7986 = vmatpush.msra.mxu0 0.0
      %7987 = vmatpush.msra.mxu0 0.0
      %7988 = vmatpush.msra.mxu0 %v6960
      %7989 = vmatpush.msra.mxu0 %v6958
      %7990 = vmatpush.msra.mxu0 %v6956
      %7991 = vmatpush.msra.mxu0 %v6954
      %7992 = vmatmul.f32.gmra.mxu0 %v7965
      %v7993 = vpop.f32.mrf.mxu0
      %v7994 = vadd.f32 0.0, %v7993
      %7995 = vmatmul.f32.gmra.mxu0 %v7968
      %v7996 = vpop.f32.mrf.mxu0
      %v7997 = vadd.f32 0.0, %v7996
      %7998 = vmatmul.f32.gmra.mxu0 %v7971
      %v7999 = vpop.f32.mrf.mxu0
      %v8000 = vadd.f32 0.0, %v7999
      %8001 = vmatmul.f32.gmra.mxu0 %v7974
      %v8002 = vpop.f32.mrf.mxu0
      %v8003 = vadd.f32 0.0, %v8002
      %8004 = vdwg.mxu0
      %v8006 = vsel %vm635, %v7751, 0
      %v8009 = vsel %vm635, %v7752, 0
      %v8012 = vsel %vm635, %v7753, 0
      %v8015 = vsel %vm635, %v7754, 0
      %8017 = vmatpush.msra.mxu0 0.0
      %8018 = vmatpush.msra.mxu0 0.0
      %8019 = vmatpush.msra.mxu0 0.0
      %8020 = vmatpush.msra.mxu0 0.0
      %8021 = vmatpush.msra.mxu0 0.0
      %8022 = vmatpush.msra.mxu0 0.0
      %8023 = vmatpush.msra.mxu0 0.0
      %8024 = vmatpush.msra.mxu0 0.0
      %8025 = vmatpush.msra.mxu0 0.0
      %8026 = vmatpush.msra.mxu0 0.0
      %8027 = vmatpush.msra.mxu0 0.0
      %8028 = vmatpush.msra.mxu0 0.0
      %8029 = vmatpush.msra.mxu0 %v6968
      %8030 = vmatpush.msra.mxu0 %v6966
      %8031 = vmatpush.msra.mxu0 %v6964
      %8032 = vmatpush.msra.mxu0 %v6962
      %8033 = vmatmul.f32.gmra.mxu0 %v8006
      %v8034 = vpop.f32.mrf.mxu0
      %v8035 = vadd.f32 0.0, %v8034
      %8036 = vmatmul.f32.gmra.mxu0 %v8009
      %v8037 = vpop.f32.mrf.mxu0
      %v8038 = vadd.f32 0.0, %v8037
      %8039 = vmatmul.f32.gmra.mxu0 %v8012
      %v8040 = vpop.f32.mrf.mxu0
      %v8041 = vadd.f32 0.0, %v8040
      %8042 = vmatmul.f32.gmra.mxu0 %v8015
      %v8043 = vpop.f32.mrf.mxu0
      %v8044 = vadd.f32 0.0, %v8043
      %8045 = vdwg.mxu0
      %v8047 = vsel %vm635, %v7755, 0
      %v8050 = vsel %vm635, %v7756, 0
      %v8053 = vsel %vm635, %v7757, 0
      %v8056 = vsel %vm635, %v7758, 0
      %8058 = vmatpush.msra.mxu0 0.0
      %8059 = vmatpush.msra.mxu0 0.0
      %8060 = vmatpush.msra.mxu0 0.0
      %8061 = vmatpush.msra.mxu0 0.0
      %8062 = vmatpush.msra.mxu0 0.0
      %8063 = vmatpush.msra.mxu0 0.0
      %8064 = vmatpush.msra.mxu0 0.0
      %8065 = vmatpush.msra.mxu0 0.0
      %8066 = vmatpush.msra.mxu0 0.0
      %8067 = vmatpush.msra.mxu0 0.0
      %8068 = vmatpush.msra.mxu0 0.0
      %8069 = vmatpush.msra.mxu0 0.0
      %8070 = vmatpush.msra.mxu0 %v6976
      %8071 = vmatpush.msra.mxu0 %v6974
      %8072 = vmatpush.msra.mxu0 %v6972
      %8073 = vmatpush.msra.mxu0 %v6970
      %8074 = vmatmul.f32.gmra.mxu0 %v8047
      %v8075 = vpop.f32.mrf.mxu0
      %v8076 = vadd.f32 0.0, %v8075
      %8077 = vmatmul.f32.gmra.mxu0 %v8050
      %v8078 = vpop.f32.mrf.mxu0
      %v8079 = vadd.f32 0.0, %v8078
      %8080 = vmatmul.f32.gmra.mxu0 %v8053
      %v8081 = vpop.f32.mrf.mxu0
      %v8082 = vadd.f32 0.0, %v8081
      %8083 = vmatmul.f32.gmra.mxu0 %v8056
      %v8084 = vpop.f32.mrf.mxu0
      %v8085 = vadd.f32 0.0, %v8084
      %8086 = vdwg.mxu0
      %v8087 = vld [vmem:[%s5 + $0x18] sm:$0xff]
      %v8089 = vsel %vm1668, %v7789, 0
      %v8092 = vsel %vm1668, %v7792, 0
      %v8095 = vsel %vm1668, %v7795, 0
      %v8098 = vsel %vm1668, %v7798, 0
      %v8101 = vsel %vm1668, %v7830, 0
      %v8104 = vsel %vm1668, %v7833, 0
      %v8107 = vsel %vm1668, %v7836, 0
      %v8110 = vsel %vm1668, %v7839, 0
      %v8113 = vsel %vm1668, %v7871, 0
      %v8116 = vsel %vm1668, %v7874, 0
      %v8119 = vsel %vm1668, %v7877, 0
      %v8122 = vsel %vm1668, %v7880, 0
      %v8125 = vsel %vm1668, %v7912, 0
      %v8128 = vsel %vm1668, %v7915, 0
      %v8131 = vsel %vm1668, %v7918, 0
      %v8134 = vsel %vm1668, %v7921, 0
      %v8137 = vsel %vm1668, %v7953, 0
      %v8140 = vsel %vm1668, %v7956, 0
      %v8143 = vsel %vm1668, %v7959, 0
      %v8146 = vsel %vm1668, %v7962, 0
      %v8149 = vsel %vm1668, %v7994, 0
      %v8152 = vsel %vm1668, %v7997, 0
      %v8155 = vsel %vm1668, %v8000, 0
      %v8158 = vsel %vm1668, %v8003, 0
      %v8161 = vsel %vm1668, %v8035, 0
      %v8164 = vsel %vm1668, %v8038, 0
      %v8167 = vsel %vm1668, %v8041, 0
      %v8170 = vsel %vm1668, %v8044, 0
      %v8173 = vsel %vm1668, %v8076, 0
      %v8176 = vsel %vm1668, %v8079, 0
      %v8179 = vsel %vm1668, %v8082, 0
      %v8182 = vsel %vm1668, %v8085, 0
      %8184 = vmatpush.msra.mxu0 0.0
      %8185 = vmatpush.msra.mxu0 0.0
      %8186 = vmatpush.msra.mxu0 0.0
      %8187 = vmatpush.msra.mxu0 0.0
      %8188 = vmatpush.msra.mxu0 0.0
      %8189 = vmatpush.msra.mxu0 0.0
      %8190 = vmatpush.msra.mxu0 0.0
      %8191 = vmatpush.msra.mxu0 0.0
      %8192 = vmatpush.msra.mxu0 0.0
      %8193 = vmatpush.msra.mxu0 0.0
      %8194 = vmatpush.msra.mxu0 0.0
      %8195 = vmatpush.msra.mxu0 0.0
      %8196 = vmatpush.msra.mxu0 0.0
      %8197 = vmatpush.msra.mxu0 0.0
      %8198 = vmatpush.msra.mxu0 0.0
      %8199 = vmatpush.msra.mxu0 %v8087
      %8200 = vmatmul.f32.gmra.mxu0 %v8089
      %v8201 = vpop.f32.mrf.mxu0
      %v8202 = vadd.f32 0.0, %v8201
      %8203 = vmatmul.f32.gmra.mxu0 %v8092
      %v8204 = vpop.f32.mrf.mxu0
      %v8205 = vadd.f32 0.0, %v8204
      %8206 = vmatmul.f32.gmra.mxu0 %v8095
      %v8207 = vpop.f32.mrf.mxu0
      %v8208 = vadd.f32 0.0, %v8207
      %8209 = vmatmul.f32.gmra.mxu0 %v8098
      %v8210 = vpop.f32.mrf.mxu0
      %v8211 = vadd.f32 0.0, %v8210
      %8212 = vmatmul.f32.gmra.mxu0 %v8101
      %v8213 = vpop.f32.mrf.mxu0
      %v8214 = vadd.f32 0.0, %v8213
      %8215 = vmatmul.f32.gmra.mxu0 %v8104
      %v8216 = vpop.f32.mrf.mxu0
      %v8217 = vadd.f32 0.0, %v8216
      %8218 = vmatmul.f32.gmra.mxu0 %v8107
      %v8219 = vpop.f32.mrf.mxu0
      %v8220 = vadd.f32 0.0, %v8219
      %8221 = vmatmul.f32.gmra.mxu0 %v8110
      %v8222 = vpop.f32.mrf.mxu0
      %v8223 = vadd.f32 0.0, %v8222
      %8224 = vmatmul.f32.gmra.mxu0 %v8113
      %v8225 = vpop.f32.mrf.mxu0
      %v8226 = vadd.f32 0.0, %v8225
      %8227 = vmatmul.f32.gmra.mxu0 %v8116
      %v8228 = vpop.f32.mrf.mxu0
      %v8229 = vadd.f32 0.0, %v8228
      %8230 = vmatmul.f32.gmra.mxu0 %v8119
      %v8231 = vpop.f32.mrf.mxu0
      %v8232 = vadd.f32 0.0, %v8231
      %8233 = vmatmul.f32.gmra.mxu0 %v8122
      %v8234 = vpop.f32.mrf.mxu0
      %v8235 = vadd.f32 0.0, %v8234
      %8236 = vmatmul.f32.gmra.mxu0 %v8125
      %v8237 = vpop.f32.mrf.mxu0
      %v8238 = vadd.f32 0.0, %v8237
      %8239 = vmatmul.f32.gmra.mxu0 %v8128
      %v8240 = vpop.f32.mrf.mxu0
      %v8241 = vadd.f32 0.0, %v8240
      %8242 = vmatmul.f32.gmra.mxu0 %v8131
      %v8243 = vpop.f32.mrf.mxu0
      %v8244 = vadd.f32 0.0, %v8243
      %8245 = vmatmul.f32.gmra.mxu0 %v8134
      %v8246 = vpop.f32.mrf.mxu0
      %v8247 = vadd.f32 0.0, %v8246
      %8248 = vmatmul.f32.gmra.mxu0 %v8137
      %v8249 = vpop.f32.mrf.mxu0
      %v8250 = vadd.f32 0.0, %v8249
      %8251 = vmatmul.f32.gmra.mxu0 %v8140
      %v8252 = vpop.f32.mrf.mxu0
      %v8253 = vadd.f32 0.0, %v8252
      %8254 = vmatmul.f32.gmra.mxu0 %v8143
      %v8255 = vpop.f32.mrf.mxu0
      %v8256 = vadd.f32 0.0, %v8255
      %8257 = vmatmul.f32.gmra.mxu0 %v8146
      %v8258 = vpop.f32.mrf.mxu0
      %v8259 = vadd.f32 0.0, %v8258
      %8260 = vmatmul.f32.gmra.mxu0 %v8149
      %v8261 = vpop.f32.mrf.mxu0
      %v8262 = vadd.f32 0.0, %v8261
      %8263 = vmatmul.f32.gmra.mxu0 %v8152
      %v8264 = vpop.f32.mrf.mxu0
      %v8265 = vadd.f32 0.0, %v8264
      %8266 = vmatmul.f32.gmra.mxu0 %v8155
      %v8267 = vpop.f32.mrf.mxu0
      %v8268 = vadd.f32 0.0, %v8267
      %8269 = vmatmul.f32.gmra.mxu0 %v8158
      %v8270 = vpop.f32.mrf.mxu0
      %v8271 = vadd.f32 0.0, %v8270
      %8272 = vmatmul.f32.gmra.mxu0 %v8161
      %v8273 = vpop.f32.mrf.mxu0
      %v8274 = vadd.f32 0.0, %v8273
      %8275 = vmatmul.f32.gmra.mxu0 %v8164
      %v8276 = vpop.f32.mrf.mxu0
      %v8277 = vadd.f32 0.0, %v8276
      %8278 = vmatmul.f32.gmra.mxu0 %v8167
      %v8279 = vpop.f32.mrf.mxu0
      %v8280 = vadd.f32 0.0, %v8279
      %8281 = vmatmul.f32.gmra.mxu0 %v8170
      %v8282 = vpop.f32.mrf.mxu0
      %v8283 = vadd.f32 0.0, %v8282
      %8284 = vmatmul.f32.gmra.mxu0 %v8173
      %v8285 = vpop.f32.mrf.mxu0
      %v8286 = vadd.f32 0.0, %v8285
      %8287 = vmatmul.f32.gmra.mxu0 %v8176
      %v8288 = vpop.f32.mrf.mxu0
      %v8289 = vadd.f32 0.0, %v8288
      %8290 = vmatmul.f32.gmra.mxu0 %v8179
      %v8291 = vpop.f32.mrf.mxu0
      %v8292 = vadd.f32 0.0, %v8291
      %8293 = vmatmul.f32.gmra.mxu0 %v8182
      %v8294 = vpop.f32.mrf.mxu0
      %v8295 = vadd.f32 0.0, %v8294
      %8296 = vdwg.mxu0
      %v8297 = vadd.f32 %v6623, %v8202
      %v8298 = vadd.f32 %v6624, %v8205
      %v8299 = vadd.f32 %v6625, %v8208
      %v8300 = vadd.f32 %v6626, %v8211
      %v8301 = vadd.f32 %v6627, %v8214
      %v8302 = vadd.f32 %v6628, %v8217
      %v8303 = vadd.f32 %v6629, %v8220
      %v8304 = vadd.f32 %v6630, %v8223
      %v8305 = vadd.f32 %v6631, %v8226
      %v8306 = vadd.f32 %v6632, %v8229
      %v8307 = vadd.f32 %v6633, %v8232
      %v8308 = vadd.f32 %v6634, %v8235
      %v8309 = vadd.f32 %v6635, %v8238
      %v8310 = vadd.f32 %v6636, %v8241
      %v8311 = vadd.f32 %v6637, %v8244
      %v8312 = vadd.f32 %v6638, %v8247
      %v8313 = vadd.f32 %v6639, %v8250
      %v8314 = vadd.f32 %v6640, %v8253
      %v8315 = vadd.f32 %v6641, %v8256
      %v8316 = vadd.f32 %v6642, %v8259
      %v8317 = vadd.f32 %v6643, %v8262
      %v8318 = vadd.f32 %v6644, %v8265
      %v8319 = vadd.f32 %v6645, %v8268
      %v8320 = vadd.f32 %v6646, %v8271
      %v8321 = vadd.f32 %v6647, %v8274
      %v8322 = vadd.f32 %v6648, %v8277
      %v8323 = vadd.f32 %v6649, %v8280
      %v8324 = vadd.f32 %v6650, %v8283
      %v8325 = vadd.f32 %v6651, %v8286
      %v8326 = vadd.f32 %v6652, %v8289
      %v8327 = vadd.f32 %v6653, %v8292
      %v8328 = vadd.f32 %v6654, %v8295
      %v8329 = vld [vmem:[%s6] sm:$0x1]
      %v8331 = vperm.slane %v8329, 0
      %v8333 = vadd.f32 %v8297, %v8331
      %v8334 = vadd.f32 %v8298, %v8331
      %v8335 = vadd.f32 %v8299, %v8331
      %v8336 = vadd.f32 %v8300, %v8331
      %v8337 = vadd.f32 %v8301, %v8331
      %v8338 = vadd.f32 %v8302, %v8331
      %v8339 = vadd.f32 %v8303, %v8331
      %v8340 = vadd.f32 %v8304, %v8331
      %v8341 = vadd.f32 %v8305, %v8331
      %v8342 = vadd.f32 %v8306, %v8331
      %v8343 = vadd.f32 %v8307, %v8331
      %v8344 = vadd.f32 %v8308, %v8331
      %v8345 = vadd.f32 %v8309, %v8331
      %v8346 = vadd.f32 %v8310, %v8331
      %v8347 = vadd.f32 %v8311, %v8331
      %v8348 = vadd.f32 %v8312, %v8331
      %v8349 = vadd.f32 %v8313, %v8331
      %v8350 = vadd.f32 %v8314, %v8331
      %v8351 = vadd.f32 %v8315, %v8331
      %v8352 = vadd.f32 %v8316, %v8331
      %v8353 = vadd.f32 %v8317, %v8331
      %v8354 = vadd.f32 %v8318, %v8331
      %v8355 = vadd.f32 %v8319, %v8331
      %v8356 = vadd.f32 %v8320, %v8331
      %v8357 = vadd.f32 %v8321, %v8331
      %v8358 = vadd.f32 %v8322, %v8331
      %v8359 = vadd.f32 %v8323, %v8331
      %v8360 = vadd.f32 %v8324, %v8331
      %v8361 = vadd.f32 %v8325, %v8331
      %v8362 = vadd.f32 %v8326, %v8331
      %v8363 = vadd.f32 %v8327, %v8331
      %v8364 = vadd.f32 %v8328, %v8331
      %v8365 = vadd.f32 %v603, %v8333
      %v8366 = vadd.f32 %v604, %v8334
      %v8367 = vadd.f32 %v605, %v8335
      %v8368 = vadd.f32 %v606, %v8336
      %v8369 = vadd.f32 %v607, %v8337
      %v8370 = vadd.f32 %v608, %v8338
      %v8371 = vadd.f32 %v609, %v8339
      %v8372 = vadd.f32 %v610, %v8340
      %v8373 = vadd.f32 %v611, %v8341
      %v8374 = vadd.f32 %v612, %v8342
      %v8375 = vadd.f32 %v613, %v8343
      %v8376 = vadd.f32 %v614, %v8344
      %v8377 = vadd.f32 %v615, %v8345
      %v8378 = vadd.f32 %v616, %v8346
      %v8379 = vadd.f32 %v617, %v8347
      %v8380 = vadd.f32 %v618, %v8348
      %v8381 = vadd.f32 %v619, %v8349
      %v8382 = vadd.f32 %v620, %v8350
      %v8383 = vadd.f32 %v621, %v8351
      %v8384 = vadd.f32 %v622, %v8352
      %v8385 = vadd.f32 %v623, %v8353
      %v8386 = vadd.f32 %v624, %v8354
      %v8387 = vadd.f32 %v625, %v8355
      %v8388 = vadd.f32 %v626, %v8356
      %v8389 = vadd.f32 %v627, %v8357
      %v8390 = vadd.f32 %v628, %v8358
      %v8391 = vadd.f32 %v629, %v8359
      %v8392 = vadd.f32 %v630, %v8360
      %v8393 = vadd.f32 %v631, %v8361
      %v8394 = vadd.f32 %v632, %v8362
      %v8395 = vadd.f32 %v633, %v8363
      %v8396 = vadd.f32 %v634, %v8364
      %v8397 = vsel %vm635, %v8365, 0.0
      %8398 = vadd.xlane.f32.xlu0 %v8397
      %v8399 = vpop.xlane.xlu0 %8398
      %v8400 = vsel %vm635, %v8366, 0.0
      %8401 = vadd.xlane.f32.xlu0 %v8400
      %v8402 = vpop.xlane.xlu0 %8401
      %v8403 = vsel %vm635, %v8367, 0.0
      %8404 = vadd.xlane.f32.xlu0 %v8403
      %v8405 = vpop.xlane.xlu0 %8404
      %v8406 = vsel %vm635, %v8368, 0.0
      %8407 = vadd.xlane.f32.xlu0 %v8406
      %v8408 = vpop.xlane.xlu0 %8407
      %v8409 = vsel %vm635, %v8369, 0.0
      %8410 = vadd.xlane.f32.xlu0 %v8409
      %v8411 = vpop.xlane.xlu0 %8410
      %v8412 = vsel %vm635, %v8370, 0.0
      %8413 = vadd.xlane.f32.xlu0 %v8412
      %v8414 = vpop.xlane.xlu0 %8413
      %v8415 = vsel %vm635, %v8371, 0.0
      %8416 = vadd.xlane.f32.xlu0 %v8415
      %v8417 = vpop.xlane.xlu0 %8416
      %v8418 = vsel %vm635, %v8372, 0.0
      %8419 = vadd.xlane.f32.xlu0 %v8418
      %v8420 = vpop.xlane.xlu0 %8419
      %v8421 = vsel %vm635, %v8373, 0.0
      %8422 = vadd.xlane.f32.xlu0 %v8421
      %v8423 = vpop.xlane.xlu0 %8422
      %v8424 = vsel %vm635, %v8374, 0.0
      %8425 = vadd.xlane.f32.xlu0 %v8424
      %v8426 = vpop.xlane.xlu0 %8425
      %v8427 = vsel %vm635, %v8375, 0.0
      %8428 = vadd.xlane.f32.xlu0 %v8427
      %v8429 = vpop.xlane.xlu0 %8428
      %v8430 = vsel %vm635, %v8376, 0.0
      %8431 = vadd.xlane.f32.xlu0 %v8430
      %v8432 = vpop.xlane.xlu0 %8431
      %v8433 = vsel %vm635, %v8377, 0.0
      %8434 = vadd.xlane.f32.xlu0 %v8433
      %v8435 = vpop.xlane.xlu0 %8434
      %v8436 = vsel %vm635, %v8378, 0.0
      %8437 = vadd.xlane.f32.xlu0 %v8436
      %v8438 = vpop.xlane.xlu0 %8437
      %v8439 = vsel %vm635, %v8379, 0.0
      %8440 = vadd.xlane.f32.xlu0 %v8439
      %v8441 = vpop.xlane.xlu0 %8440
      %v8442 = vsel %vm635, %v8380, 0.0
      %8443 = vadd.xlane.f32.xlu0 %v8442
      %v8444 = vpop.xlane.xlu0 %8443
      %v8445 = vsel %vm635, %v8381, 0.0
      %8446 = vadd.xlane.f32.xlu0 %v8445
      %v8447 = vpop.xlane.xlu0 %8446
      %v8448 = vsel %vm635, %v8382, 0.0
      %8449 = vadd.xlane.f32.xlu0 %v8448
      %v8450 = vpop.xlane.xlu0 %8449
      %v8451 = vsel %vm635, %v8383, 0.0
      %8452 = vadd.xlane.f32.xlu0 %v8451
      %v8453 = vpop.xlane.xlu0 %8452
      %v8454 = vsel %vm635, %v8384, 0.0
      %8455 = vadd.xlane.f32.xlu0 %v8454
      %v8456 = vpop.xlane.xlu0 %8455
      %v8457 = vsel %vm635, %v8385, 0.0
      %8458 = vadd.xlane.f32.xlu0 %v8457
      %v8459 = vpop.xlane.xlu0 %8458
      %v8460 = vsel %vm635, %v8386, 0.0
      %8461 = vadd.xlane.f32.xlu0 %v8460
      %v8462 = vpop.xlane.xlu0 %8461
      %v8463 = vsel %vm635, %v8387, 0.0
      %8464 = vadd.xlane.f32.xlu0 %v8463
      %v8465 = vpop.xlane.xlu0 %8464
      %v8466 = vsel %vm635, %v8388, 0.0
      %8467 = vadd.xlane.f32.xlu0 %v8466
      %v8468 = vpop.xlane.xlu0 %8467
      %v8469 = vsel %vm635, %v8389, 0.0
      %8470 = vadd.xlane.f32.xlu0 %v8469
      %v8471 = vpop.xlane.xlu0 %8470
      %v8472 = vsel %vm635, %v8390, 0.0
      %8473 = vadd.xlane.f32.xlu0 %v8472
      %v8474 = vpop.xlane.xlu0 %8473
      %v8475 = vsel %vm635, %v8391, 0.0
      %8476 = vadd.xlane.f32.xlu0 %v8475
      %v8477 = vpop.xlane.xlu0 %8476
      %v8478 = vsel %vm635, %v8392, 0.0
      %8479 = vadd.xlane.f32.xlu0 %v8478
      %v8480 = vpop.xlane.xlu0 %8479
      %v8481 = vsel %vm635, %v8393, 0.0
      %8482 = vadd.xlane.f32.xlu0 %v8481
      %v8483 = vpop.xlane.xlu0 %8482
      %v8484 = vsel %vm635, %v8394, 0.0
      %8485 = vadd.xlane.f32.xlu0 %v8484
      %v8486 = vpop.xlane.xlu0 %8485
      %v8487 = vsel %vm635, %v8395, 0.0
      %8488 = vadd.xlane.f32.xlu0 %v8487
      %v8489 = vpop.xlane.xlu0 %8488
      %v8490 = vsel %vm635, %v8396, 0.0
      %8491 = vadd.xlane.f32.xlu0 %v8490
      %v8492 = vpop.xlane.xlu0 %8491
      %v8493 = vmul.f32 %v8399, %v738
      %v8494 = vmul.f32 %v8402, %v738
      %v8495 = vmul.f32 %v8405, %v738
      %v8496 = vmul.f32 %v8408, %v738
      %v8497 = vmul.f32 %v8411, %v738
      %v8498 = vmul.f32 %v8414, %v738
      %v8499 = vmul.f32 %v8417, %v738
      %v8500 = vmul.f32 %v8420, %v738
      %v8501 = vmul.f32 %v8423, %v738
      %v8502 = vmul.f32 %v8426, %v738
      %v8503 = vmul.f32 %v8429, %v738
      %v8504 = vmul.f32 %v8432, %v738
      %v8505 = vmul.f32 %v8435, %v738
      %v8506 = vmul.f32 %v8438, %v738
      %v8507 = vmul.f32 %v8441, %v738
      %v8508 = vmul.f32 %v8444, %v738
      %v8509 = vmul.f32 %v8447, %v738
      %v8510 = vmul.f32 %v8450, %v738
      %v8511 = vmul.f32 %v8453, %v738
      %v8512 = vmul.f32 %v8456, %v738
      %v8513 = vmul.f32 %v8459, %v738
      %v8514 = vmul.f32 %v8462, %v738
      %v8515 = vmul.f32 %v8465, %v738
      %v8516 = vmul.f32 %v8468, %v738
      %v8517 = vmul.f32 %v8471, %v738
      %v8518 = vmul.f32 %v8474, %v738
      %v8519 = vmul.f32 %v8477, %v738
      %v8520 = vmul.f32 %v8480, %v738
      %v8521 = vmul.f32 %v8483, %v738
      %v8522 = vmul.f32 %v8486, %v738
      %v8523 = vmul.f32 %v8489, %v738
      %v8524 = vmul.f32 %v8492, %v738
      %v8525 = vsub.f32 %v8365, %v8493
      %v8526 = vsub.f32 %v8366, %v8494
      %v8527 = vsub.f32 %v8367, %v8495
      %v8528 = vsub.f32 %v8368, %v8496
      %v8529 = vsub.f32 %v8369, %v8497
      %v8530 = vsub.f32 %v8370, %v8498
      %v8531 = vsub.f32 %v8371, %v8499
      %v8532 = vsub.f32 %v8372, %v8500
      %v8533 = vsub.f32 %v8373, %v8501
      %v8534 = vsub.f32 %v8374, %v8502
      %v8535 = vsub.f32 %v8375, %v8503
      %v8536 = vsub.f32 %v8376, %v8504
      %v8537 = vsub.f32 %v8377, %v8505
      %v8538 = vsub.f32 %v8378, %v8506
      %v8539 = vsub.f32 %v8379, %v8507
      %v8540 = vsub.f32 %v8380, %v8508
      %v8541 = vsub.f32 %v8381, %v8509
      %v8542 = vsub.f32 %v8382, %v8510
      %v8543 = vsub.f32 %v8383, %v8511
      %v8544 = vsub.f32 %v8384, %v8512
      %v8545 = vsub.f32 %v8385, %v8513
      %v8546 = vsub.f32 %v8386, %v8514
      %v8547 = vsub.f32 %v8387, %v8515
      %v8548 = vsub.f32 %v8388, %v8516
      %v8549 = vsub.f32 %v8389, %v8517
      %v8550 = vsub.f32 %v8390, %v8518
      %v8551 = vsub.f32 %v8391, %v8519
      %v8552 = vsub.f32 %v8392, %v8520
      %v8553 = vsub.f32 %v8393, %v8521
      %v8554 = vsub.f32 %v8394, %v8522
      %v8555 = vsub.f32 %v8395, %v8523
      %v8556 = vsub.f32 %v8396, %v8524
      %v8557 = vmul.f32 %v8525, %v8525
      %v8558 = vmul.f32 %v8526, %v8526
      %v8559 = vmul.f32 %v8527, %v8527
      %v8560 = vmul.f32 %v8528, %v8528
      %v8561 = vmul.f32 %v8529, %v8529
      %v8562 = vmul.f32 %v8530, %v8530
      %v8563 = vmul.f32 %v8531, %v8531
      %v8564 = vmul.f32 %v8532, %v8532
      %v8565 = vmul.f32 %v8533, %v8533
      %v8566 = vmul.f32 %v8534, %v8534
      %v8567 = vmul.f32 %v8535, %v8535
      %v8568 = vmul.f32 %v8536, %v8536
      %v8569 = vmul.f32 %v8537, %v8537
      %v8570 = vmul.f32 %v8538, %v8538
      %v8571 = vmul.f32 %v8539, %v8539
      %v8572 = vmul.f32 %v8540, %v8540
      %v8573 = vmul.f32 %v8541, %v8541
      %v8574 = vmul.f32 %v8542, %v8542
      %v8575 = vmul.f32 %v8543, %v8543
      %v8576 = vmul.f32 %v8544, %v8544
      %v8577 = vmul.f32 %v8545, %v8545
      %v8578 = vmul.f32 %v8546, %v8546
      %v8579 = vmul.f32 %v8547, %v8547
      %v8580 = vmul.f32 %v8548, %v8548
      %v8581 = vmul.f32 %v8549, %v8549
      %v8582 = vmul.f32 %v8550, %v8550
      %v8583 = vmul.f32 %v8551, %v8551
      %v8584 = vmul.f32 %v8552, %v8552
      %v8585 = vmul.f32 %v8553, %v8553
      %v8586 = vmul.f32 %v8554, %v8554
      %v8587 = vmul.f32 %v8555, %v8555
      %v8588 = vmul.f32 %v8556, %v8556
      %v8589 = vsel %vm635, %v8557, 0.0
      %8590 = vadd.xlane.f32.xlu0 %v8589
      %v8591 = vpop.xlane.xlu0 %8590
      %v8592 = vsel %vm635, %v8558, 0.0
      %8593 = vadd.xlane.f32.xlu0 %v8592
      %v8594 = vpop.xlane.xlu0 %8593
      %v8595 = vsel %vm635, %v8559, 0.0
      %8596 = vadd.xlane.f32.xlu0 %v8595
      %v8597 = vpop.xlane.xlu0 %8596
      %v8598 = vsel %vm635, %v8560, 0.0
      %8599 = vadd.xlane.f32.xlu0 %v8598
      %v8600 = vpop.xlane.xlu0 %8599
      %v8601 = vsel %vm635, %v8561, 0.0
      %8602 = vadd.xlane.f32.xlu0 %v8601
      %v8603 = vpop.xlane.xlu0 %8602
      %v8604 = vsel %vm635, %v8562, 0.0
      %8605 = vadd.xlane.f32.xlu0 %v8604
      %v8606 = vpop.xlane.xlu0 %8605
      %v8607 = vsel %vm635, %v8563, 0.0
      %8608 = vadd.xlane.f32.xlu0 %v8607
      %v8609 = vpop.xlane.xlu0 %8608
      %v8610 = vsel %vm635, %v8564, 0.0
      %8611 = vadd.xlane.f32.xlu0 %v8610
      %v8612 = vpop.xlane.xlu0 %8611
      %v8613 = vsel %vm635, %v8565, 0.0
      %8614 = vadd.xlane.f32.xlu0 %v8613
      %v8615 = vpop.xlane.xlu0 %8614
      %v8616 = vsel %vm635, %v8566, 0.0
      %8617 = vadd.xlane.f32.xlu0 %v8616
      %v8618 = vpop.xlane.xlu0 %8617
      %v8619 = vsel %vm635, %v8567, 0.0
      %8620 = vadd.xlane.f32.xlu0 %v8619
      %v8621 = vpop.xlane.xlu0 %8620
      %v8622 = vsel %vm635, %v8568, 0.0
      %8623 = vadd.xlane.f32.xlu0 %v8622
      %v8624 = vpop.xlane.xlu0 %8623
      %v8625 = vsel %vm635, %v8569, 0.0
      %8626 = vadd.xlane.f32.xlu0 %v8625
      %v8627 = vpop.xlane.xlu0 %8626
      %v8628 = vsel %vm635, %v8570, 0.0
      %8629 = vadd.xlane.f32.xlu0 %v8628
      %v8630 = vpop.xlane.xlu0 %8629
      %v8631 = vsel %vm635, %v8571, 0.0
      %8632 = vadd.xlane.f32.xlu0 %v8631
      %v8633 = vpop.xlane.xlu0 %8632
      %v8634 = vsel %vm635, %v8572, 0.0
      %8635 = vadd.xlane.f32.xlu0 %v8634
      %v8636 = vpop.xlane.xlu0 %8635
      %v8637 = vsel %vm635, %v8573, 0.0
      %8638 = vadd.xlane.f32.xlu0 %v8637
      %v8639 = vpop.xlane.xlu0 %8638
      %v8640 = vsel %vm635, %v8574, 0.0
      %8641 = vadd.xlane.f32.xlu0 %v8640
      %v8642 = vpop.xlane.xlu0 %8641
      %v8643 = vsel %vm635, %v8575, 0.0
      %8644 = vadd.xlane.f32.xlu0 %v8643
      %v8645 = vpop.xlane.xlu0 %8644
      %v8646 = vsel %vm635, %v8576, 0.0
      %8647 = vadd.xlane.f32.xlu0 %v8646
      %v8648 = vpop.xlane.xlu0 %8647
      %v8649 = vsel %vm635, %v8577, 0.0
      %8650 = vadd.xlane.f32.xlu0 %v8649
      %v8651 = vpop.xlane.xlu0 %8650
      %v8652 = vsel %vm635, %v8578, 0.0
      %8653 = vadd.xlane.f32.xlu0 %v8652
      %v8654 = vpop.xlane.xlu0 %8653
      %v8655 = vsel %vm635, %v8579, 0.0
      %8656 = vadd.xlane.f32.xlu0 %v8655
      %v8657 = vpop.xlane.xlu0 %8656
      %v8658 = vsel %vm635, %v8580, 0.0
      %8659 = vadd.xlane.f32.xlu0 %v8658
      %v8660 = vpop.xlane.xlu0 %8659
      %v8661 = vsel %vm635, %v8581, 0.0
      %8662 = vadd.xlane.f32.xlu0 %v8661
      %v8663 = vpop.xlane.xlu0 %8662
      %v8664 = vsel %vm635, %v8582, 0.0
      %8665 = vadd.xlane.f32.xlu0 %v8664
      %v8666 = vpop.xlane.xlu0 %8665
      %v8667 = vsel %vm635, %v8583, 0.0
      %8668 = vadd.xlane.f32.xlu0 %v8667
      %v8669 = vpop.xlane.xlu0 %8668
      %v8670 = vsel %vm635, %v8584, 0.0
      %8671 = vadd.xlane.f32.xlu0 %v8670
      %v8672 = vpop.xlane.xlu0 %8671
      %v8673 = vsel %vm635, %v8585, 0.0
      %8674 = vadd.xlane.f32.xlu0 %v8673
      %v8675 = vpop.xlane.xlu0 %8674
      %v8676 = vsel %vm635, %v8586, 0.0
      %8677 = vadd.xlane.f32.xlu0 %v8676
      %v8678 = vpop.xlane.xlu0 %8677
      %v8679 = vsel %vm635, %v8587, 0.0
      %8680 = vadd.xlane.f32.xlu0 %v8679
      %v8681 = vpop.xlane.xlu0 %8680
      %v8682 = vsel %vm635, %v8588, 0.0
      %8683 = vadd.xlane.f32.xlu0 %v8682
      %v8684 = vpop.xlane.xlu0 %8683
      %v8685 = vmul.f32 %v8591, %v738
      %v8686 = vmul.f32 %v8594, %v738
      %v8687 = vmul.f32 %v8597, %v738
      %v8688 = vmul.f32 %v8600, %v738
      %v8689 = vmul.f32 %v8603, %v738
      %v8690 = vmul.f32 %v8606, %v738
      %v8691 = vmul.f32 %v8609, %v738
      %v8692 = vmul.f32 %v8612, %v738
      %v8693 = vmul.f32 %v8615, %v738
      %v8694 = vmul.f32 %v8618, %v738
      %v8695 = vmul.f32 %v8621, %v738
      %v8696 = vmul.f32 %v8624, %v738
      %v8697 = vmul.f32 %v8627, %v738
      %v8698 = vmul.f32 %v8630, %v738
      %v8699 = vmul.f32 %v8633, %v738
      %v8700 = vmul.f32 %v8636, %v738
      %v8701 = vmul.f32 %v8639, %v738
      %v8702 = vmul.f32 %v8642, %v738
      %v8703 = vmul.f32 %v8645, %v738
      %v8704 = vmul.f32 %v8648, %v738
      %v8705 = vmul.f32 %v8651, %v738
      %v8706 = vmul.f32 %v8654, %v738
      %v8707 = vmul.f32 %v8657, %v738
      %v8708 = vmul.f32 %v8660, %v738
      %v8709 = vmul.f32 %v8663, %v738
      %v8710 = vmul.f32 %v8666, %v738
      %v8711 = vmul.f32 %v8669, %v738
      %v8712 = vmul.f32 %v8672, %v738
      %v8713 = vmul.f32 %v8675, %v738
      %v8714 = vmul.f32 %v8678, %v738
      %v8715 = vmul.f32 %v8681, %v738
      %v8716 = vmul.f32 %v8684, %v738
      %v8717 = vadd.f32 %v8685, 1e-05
      %v8718 = vadd.f32 %v8686, 1e-05
      %v8719 = vadd.f32 %v8687, 1e-05
      %v8720 = vadd.f32 %v8688, 1e-05
      %v8721 = vadd.f32 %v8689, 1e-05
      %v8722 = vadd.f32 %v8690, 1e-05
      %v8723 = vadd.f32 %v8691, 1e-05
      %v8724 = vadd.f32 %v8692, 1e-05
      %v8725 = vadd.f32 %v8693, 1e-05
      %v8726 = vadd.f32 %v8694, 1e-05
      %v8727 = vadd.f32 %v8695, 1e-05
      %v8728 = vadd.f32 %v8696, 1e-05
      %v8729 = vadd.f32 %v8697, 1e-05
      %v8730 = vadd.f32 %v8698, 1e-05
      %v8731 = vadd.f32 %v8699, 1e-05
      %v8732 = vadd.f32 %v8700, 1e-05
      %v8733 = vadd.f32 %v8701, 1e-05
      %v8734 = vadd.f32 %v8702, 1e-05
      %v8735 = vadd.f32 %v8703, 1e-05
      %v8736 = vadd.f32 %v8704, 1e-05
      %v8737 = vadd.f32 %v8705, 1e-05
      %v8738 = vadd.f32 %v8706, 1e-05
      %v8739 = vadd.f32 %v8707, 1e-05
      %v8740 = vadd.f32 %v8708, 1e-05
      %v8741 = vadd.f32 %v8709, 1e-05
      %v8742 = vadd.f32 %v8710, 1e-05
      %v8743 = vadd.f32 %v8711, 1e-05
      %v8744 = vadd.f32 %v8712, 1e-05
      %v8745 = vadd.f32 %v8713, 1e-05
      %v8746 = vadd.f32 %v8714, 1e-05
      %v8747 = vadd.f32 %v8715, 1e-05
      %v8748 = vadd.f32 %v8716, 1e-05
      %v8749 = vrsqrt.pop %v8717
      %v8750 = vmul.f32 %v8749, %v8717
      %v8751 = vmul.f32 %v8750, %v8749
      %v8752 = vmul.f32 0.5, %v8751
      %v8753 = vsub.f32 1.5, %v8752
      %v8754 = vmul.f32 %v8749, %v8753
      %vm8755 = vweird.f32 %v8717
      %vm8756 = vweird.f32 %v8749
      %vm8757 = vmor %vm8755, %vm8756
      %v8758 = vsel %vm8757, %v8749, %v8754
      %v8759 = vrsqrt.pop %v8718
      %v8760 = vmul.f32 %v8759, %v8718
      %v8761 = vmul.f32 %v8760, %v8759
      %v8762 = vmul.f32 0.5, %v8761
      %v8763 = vsub.f32 1.5, %v8762
      %v8764 = vmul.f32 %v8759, %v8763
      %vm8765 = vweird.f32 %v8718
      %vm8766 = vweird.f32 %v8759
      %vm8767 = vmor %vm8765, %vm8766
      %v8768 = vsel %vm8767, %v8759, %v8764
      %v8769 = vrsqrt.pop %v8719
      %v8770 = vmul.f32 %v8769, %v8719
      %v8771 = vmul.f32 %v8770, %v8769
      %v8772 = vmul.f32 0.5, %v8771
      %v8773 = vsub.f32 1.5, %v8772
      %v8774 = vmul.f32 %v8769, %v8773
      %vm8775 = vweird.f32 %v8719
      %vm8776 = vweird.f32 %v8769
      %vm8777 = vmor %vm8775, %vm8776
      %v8778 = vsel %vm8777, %v8769, %v8774
      %v8779 = vrsqrt.pop %v8720
      %v8780 = vmul.f32 %v8779, %v8720
      %v8781 = vmul.f32 %v8780, %v8779
      %v8782 = vmul.f32 0.5, %v8781
      %v8783 = vsub.f32 1.5, %v8782
      %v8784 = vmul.f32 %v8779, %v8783
      %vm8785 = vweird.f32 %v8720
      %vm8786 = vweird.f32 %v8779
      %vm8787 = vmor %vm8785, %vm8786
      %v8788 = vsel %vm8787, %v8779, %v8784
      %v8789 = vrsqrt.pop %v8721
      %v8790 = vmul.f32 %v8789, %v8721
      %v8791 = vmul.f32 %v8790, %v8789
      %v8792 = vmul.f32 0.5, %v8791
      %v8793 = vsub.f32 1.5, %v8792
      %v8794 = vmul.f32 %v8789, %v8793
      %vm8795 = vweird.f32 %v8721
      %vm8796 = vweird.f32 %v8789
      %vm8797 = vmor %vm8795, %vm8796
      %v8798 = vsel %vm8797, %v8789, %v8794
      %v8799 = vrsqrt.pop %v8722
      %v8800 = vmul.f32 %v8799, %v8722
      %v8801 = vmul.f32 %v8800, %v8799
      %v8802 = vmul.f32 0.5, %v8801
      %v8803 = vsub.f32 1.5, %v8802
      %v8804 = vmul.f32 %v8799, %v8803
      %vm8805 = vweird.f32 %v8722
      %vm8806 = vweird.f32 %v8799
      %vm8807 = vmor %vm8805, %vm8806
      %v8808 = vsel %vm8807, %v8799, %v8804
      %v8809 = vrsqrt.pop %v8723
      %v8810 = vmul.f32 %v8809, %v8723
      %v8811 = vmul.f32 %v8810, %v8809
      %v8812 = vmul.f32 0.5, %v8811
      %v8813 = vsub.f32 1.5, %v8812
      %v8814 = vmul.f32 %v8809, %v8813
      %vm8815 = vweird.f32 %v8723
      %vm8816 = vweird.f32 %v8809
      %vm8817 = vmor %vm8815, %vm8816
      %v8818 = vsel %vm8817, %v8809, %v8814
      %v8819 = vrsqrt.pop %v8724
      %v8820 = vmul.f32 %v8819, %v8724
      %v8821 = vmul.f32 %v8820, %v8819
      %v8822 = vmul.f32 0.5, %v8821
      %v8823 = vsub.f32 1.5, %v8822
      %v8824 = vmul.f32 %v8819, %v8823
      %vm8825 = vweird.f32 %v8724
      %vm8826 = vweird.f32 %v8819
      %vm8827 = vmor %vm8825, %vm8826
      %v8828 = vsel %vm8827, %v8819, %v8824
      %v8829 = vrsqrt.pop %v8725
      %v8830 = vmul.f32 %v8829, %v8725
      %v8831 = vmul.f32 %v8830, %v8829
      %v8832 = vmul.f32 0.5, %v8831
      %v8833 = vsub.f32 1.5, %v8832
      %v8834 = vmul.f32 %v8829, %v8833
      %vm8835 = vweird.f32 %v8725
      %vm8836 = vweird.f32 %v8829
      %vm8837 = vmor %vm8835, %vm8836
      %v8838 = vsel %vm8837, %v8829, %v8834
      %v8839 = vrsqrt.pop %v8726
      %v8840 = vmul.f32 %v8839, %v8726
      %v8841 = vmul.f32 %v8840, %v8839
      %v8842 = vmul.f32 0.5, %v8841
      %v8843 = vsub.f32 1.5, %v8842
      %v8844 = vmul.f32 %v8839, %v8843
      %vm8845 = vweird.f32 %v8726
      %vm8846 = vweird.f32 %v8839
      %vm8847 = vmor %vm8845, %vm8846
      %v8848 = vsel %vm8847, %v8839, %v8844
      %v8849 = vrsqrt.pop %v8727
      %v8850 = vmul.f32 %v8849, %v8727
      %v8851 = vmul.f32 %v8850, %v8849
      %v8852 = vmul.f32 0.5, %v8851
      %v8853 = vsub.f32 1.5, %v8852
      %v8854 = vmul.f32 %v8849, %v8853
      %vm8855 = vweird.f32 %v8727
      %vm8856 = vweird.f32 %v8849
      %vm8857 = vmor %vm8855, %vm8856
      %v8858 = vsel %vm8857, %v8849, %v8854
      %v8859 = vrsqrt.pop %v8728
      %v8860 = vmul.f32 %v8859, %v8728
      %v8861 = vmul.f32 %v8860, %v8859
      %v8862 = vmul.f32 0.5, %v8861
      %v8863 = vsub.f32 1.5, %v8862
      %v8864 = vmul.f32 %v8859, %v8863
      %vm8865 = vweird.f32 %v8728
      %vm8866 = vweird.f32 %v8859
      %vm8867 = vmor %vm8865, %vm8866
      %v8868 = vsel %vm8867, %v8859, %v8864
      %v8869 = vrsqrt.pop %v8729
      %v8870 = vmul.f32 %v8869, %v8729
      %v8871 = vmul.f32 %v8870, %v8869
      %v8872 = vmul.f32 0.5, %v8871
      %v8873 = vsub.f32 1.5, %v8872
      %v8874 = vmul.f32 %v8869, %v8873
      %vm8875 = vweird.f32 %v8729
      %vm8876 = vweird.f32 %v8869
      %vm8877 = vmor %vm8875, %vm8876
      %v8878 = vsel %vm8877, %v8869, %v8874
      %v8879 = vrsqrt.pop %v8730
      %v8880 = vmul.f32 %v8879, %v8730
      %v8881 = vmul.f32 %v8880, %v8879
      %v8882 = vmul.f32 0.5, %v8881
      %v8883 = vsub.f32 1.5, %v8882
      %v8884 = vmul.f32 %v8879, %v8883
      %vm8885 = vweird.f32 %v8730
      %vm8886 = vweird.f32 %v8879
      %vm8887 = vmor %vm8885, %vm8886
      %v8888 = vsel %vm8887, %v8879, %v8884
      %v8889 = vrsqrt.pop %v8731
      %v8890 = vmul.f32 %v8889, %v8731
      %v8891 = vmul.f32 %v8890, %v8889
      %v8892 = vmul.f32 0.5, %v8891
      %v8893 = vsub.f32 1.5, %v8892
      %v8894 = vmul.f32 %v8889, %v8893
      %vm8895 = vweird.f32 %v8731
      %vm8896 = vweird.f32 %v8889
      %vm8897 = vmor %vm8895, %vm8896
      %v8898 = vsel %vm8897, %v8889, %v8894
      %v8899 = vrsqrt.pop %v8732
      %v8900 = vmul.f32 %v8899, %v8732
      %v8901 = vmul.f32 %v8900, %v8899
      %v8902 = vmul.f32 0.5, %v8901
      %v8903 = vsub.f32 1.5, %v8902
      %v8904 = vmul.f32 %v8899, %v8903
      %vm8905 = vweird.f32 %v8732
      %vm8906 = vweird.f32 %v8899
      %vm8907 = vmor %vm8905, %vm8906
      %v8908 = vsel %vm8907, %v8899, %v8904
      %v8909 = vrsqrt.pop %v8733
      %v8910 = vmul.f32 %v8909, %v8733
      %v8911 = vmul.f32 %v8910, %v8909
      %v8912 = vmul.f32 0.5, %v8911
      %v8913 = vsub.f32 1.5, %v8912
      %v8914 = vmul.f32 %v8909, %v8913
      %vm8915 = vweird.f32 %v8733
      %vm8916 = vweird.f32 %v8909
      %vm8917 = vmor %vm8915, %vm8916
      %v8918 = vsel %vm8917, %v8909, %v8914
      %v8919 = vrsqrt.pop %v8734
      %v8920 = vmul.f32 %v8919, %v8734
      %v8921 = vmul.f32 %v8920, %v8919
      %v8922 = vmul.f32 0.5, %v8921
      %v8923 = vsub.f32 1.5, %v8922
      %v8924 = vmul.f32 %v8919, %v8923
      %vm8925 = vweird.f32 %v8734
      %vm8926 = vweird.f32 %v8919
      %vm8927 = vmor %vm8925, %vm8926
      %v8928 = vsel %vm8927, %v8919, %v8924
      %v8929 = vrsqrt.pop %v8735
      %v8930 = vmul.f32 %v8929, %v8735
      %v8931 = vmul.f32 %v8930, %v8929
      %v8932 = vmul.f32 0.5, %v8931
      %v8933 = vsub.f32 1.5, %v8932
      %v8934 = vmul.f32 %v8929, %v8933
      %vm8935 = vweird.f32 %v8735
      %vm8936 = vweird.f32 %v8929
      %vm8937 = vmor %vm8935, %vm8936
      %v8938 = vsel %vm8937, %v8929, %v8934
      %v8939 = vrsqrt.pop %v8736
      %v8940 = vmul.f32 %v8939, %v8736
      %v8941 = vmul.f32 %v8940, %v8939
      %v8942 = vmul.f32 0.5, %v8941
      %v8943 = vsub.f32 1.5, %v8942
      %v8944 = vmul.f32 %v8939, %v8943
      %vm8945 = vweird.f32 %v8736
      %vm8946 = vweird.f32 %v8939
      %vm8947 = vmor %vm8945, %vm8946
      %v8948 = vsel %vm8947, %v8939, %v8944
      %v8949 = vrsqrt.pop %v8737
      %v8950 = vmul.f32 %v8949, %v8737
      %v8951 = vmul.f32 %v8950, %v8949
      %v8952 = vmul.f32 0.5, %v8951
      %v8953 = vsub.f32 1.5, %v8952
      %v8954 = vmul.f32 %v8949, %v8953
      %vm8955 = vweird.f32 %v8737
      %vm8956 = vweird.f32 %v8949
      %vm8957 = vmor %vm8955, %vm8956
      %v8958 = vsel %vm8957, %v8949, %v8954
      %v8959 = vrsqrt.pop %v8738
      %v8960 = vmul.f32 %v8959, %v8738
      %v8961 = vmul.f32 %v8960, %v8959
      %v8962 = vmul.f32 0.5, %v8961
      %v8963 = vsub.f32 1.5, %v8962
      %v8964 = vmul.f32 %v8959, %v8963
      %vm8965 = vweird.f32 %v8738
      %vm8966 = vweird.f32 %v8959
      %vm8967 = vmor %vm8965, %vm8966
      %v8968 = vsel %vm8967, %v8959, %v8964
      %v8969 = vrsqrt.pop %v8739
      %v8970 = vmul.f32 %v8969, %v8739
      %v8971 = vmul.f32 %v8970, %v8969
      %v8972 = vmul.f32 0.5, %v8971
      %v8973 = vsub.f32 1.5, %v8972
      %v8974 = vmul.f32 %v8969, %v8973
      %vm8975 = vweird.f32 %v8739
      %vm8976 = vweird.f32 %v8969
      %vm8977 = vmor %vm8975, %vm8976
      %v8978 = vsel %vm8977, %v8969, %v8974
      %v8979 = vrsqrt.pop %v8740
      %v8980 = vmul.f32 %v8979, %v8740
      %v8981 = vmul.f32 %v8980, %v8979
      %v8982 = vmul.f32 0.5, %v8981
      %v8983 = vsub.f32 1.5, %v8982
      %v8984 = vmul.f32 %v8979, %v8983
      %vm8985 = vweird.f32 %v8740
      %vm8986 = vweird.f32 %v8979
      %vm8987 = vmor %vm8985, %vm8986
      %v8988 = vsel %vm8987, %v8979, %v8984
      %v8989 = vrsqrt.pop %v8741
      %v8990 = vmul.f32 %v8989, %v8741
      %v8991 = vmul.f32 %v8990, %v8989
      %v8992 = vmul.f32 0.5, %v8991
      %v8993 = vsub.f32 1.5, %v8992
      %v8994 = vmul.f32 %v8989, %v8993
      %vm8995 = vweird.f32 %v8741
      %vm8996 = vweird.f32 %v8989
      %vm8997 = vmor %vm8995, %vm8996
      %v8998 = vsel %vm8997, %v8989, %v8994
      %v8999 = vrsqrt.pop %v8742
      %v9000 = vmul.f32 %v8999, %v8742
      %v9001 = vmul.f32 %v9000, %v8999
      %v9002 = vmul.f32 0.5, %v9001
      %v9003 = vsub.f32 1.5, %v9002
      %v9004 = vmul.f32 %v8999, %v9003
      %vm9005 = vweird.f32 %v8742
      %vm9006 = vweird.f32 %v8999
      %vm9007 = vmor %vm9005, %vm9006
      %v9008 = vsel %vm9007, %v8999, %v9004
      %v9009 = vrsqrt.pop %v8743
      %v9010 = vmul.f32 %v9009, %v8743
      %v9011 = vmul.f32 %v9010, %v9009
      %v9012 = vmul.f32 0.5, %v9011
      %v9013 = vsub.f32 1.5, %v9012
      %v9014 = vmul.f32 %v9009, %v9013
      %vm9015 = vweird.f32 %v8743
      %vm9016 = vweird.f32 %v9009
      %vm9017 = vmor %vm9015, %vm9016
      %v9018 = vsel %vm9017, %v9009, %v9014
      %v9019 = vrsqrt.pop %v8744
      %v9020 = vmul.f32 %v9019, %v8744
      %v9021 = vmul.f32 %v9020, %v9019
      %v9022 = vmul.f32 0.5, %v9021
      %v9023 = vsub.f32 1.5, %v9022
      %v9024 = vmul.f32 %v9019, %v9023
      %vm9025 = vweird.f32 %v8744
      %vm9026 = vweird.f32 %v9019
      %vm9027 = vmor %vm9025, %vm9026
      %v9028 = vsel %vm9027, %v9019, %v9024
      %v9029 = vrsqrt.pop %v8745
      %v9030 = vmul.f32 %v9029, %v8745
      %v9031 = vmul.f32 %v9030, %v9029
      %v9032 = vmul.f32 0.5, %v9031
      %v9033 = vsub.f32 1.5, %v9032
      %v9034 = vmul.f32 %v9029, %v9033
      %vm9035 = vweird.f32 %v8745
      %vm9036 = vweird.f32 %v9029
      %vm9037 = vmor %vm9035, %vm9036
      %v9038 = vsel %vm9037, %v9029, %v9034
      %v9039 = vrsqrt.pop %v8746
      %v9040 = vmul.f32 %v9039, %v8746
      %v9041 = vmul.f32 %v9040, %v9039
      %v9042 = vmul.f32 0.5, %v9041
      %v9043 = vsub.f32 1.5, %v9042
      %v9044 = vmul.f32 %v9039, %v9043
      %vm9045 = vweird.f32 %v8746
      %vm9046 = vweird.f32 %v9039
      %vm9047 = vmor %vm9045, %vm9046
      %v9048 = vsel %vm9047, %v9039, %v9044
      %v9049 = vrsqrt.pop %v8747
      %v9050 = vmul.f32 %v9049, %v8747
      %v9051 = vmul.f32 %v9050, %v9049
      %v9052 = vmul.f32 0.5, %v9051
      %v9053 = vsub.f32 1.5, %v9052
      %v9054 = vmul.f32 %v9049, %v9053
      %vm9055 = vweird.f32 %v8747
      %vm9056 = vweird.f32 %v9049
      %vm9057 = vmor %vm9055, %vm9056
      %v9058 = vsel %vm9057, %v9049, %v9054
      %v9059 = vrsqrt.pop %v8748
      %v9060 = vmul.f32 %v9059, %v8748
      %v9061 = vmul.f32 %v9060, %v9059
      %v9062 = vmul.f32 0.5, %v9061
      %v9063 = vsub.f32 1.5, %v9062
      %v9064 = vmul.f32 %v9059, %v9063
      %vm9065 = vweird.f32 %v8748
      %vm9066 = vweird.f32 %v9059
      %vm9067 = vmor %vm9065, %vm9066
      %v9068 = vsel %vm9067, %v9059, %v9064
      %v9069 = vmul.f32 %v8525, %v8758
      %v9070 = vmul.f32 %v8526, %v8768
      %v9071 = vmul.f32 %v8527, %v8778
      %v9072 = vmul.f32 %v8528, %v8788
      %v9073 = vmul.f32 %v8529, %v8798
      %v9074 = vmul.f32 %v8530, %v8808
      %v9075 = vmul.f32 %v8531, %v8818
      %v9076 = vmul.f32 %v8532, %v8828
      %v9077 = vmul.f32 %v8533, %v8838
      %v9078 = vmul.f32 %v8534, %v8848
      %v9079 = vmul.f32 %v8535, %v8858
      %v9080 = vmul.f32 %v8536, %v8868
      %v9081 = vmul.f32 %v8537, %v8878
      %v9082 = vmul.f32 %v8538, %v8888
      %v9083 = vmul.f32 %v8539, %v8898
      %v9084 = vmul.f32 %v8540, %v8908
      %v9085 = vmul.f32 %v8541, %v8918
      %v9086 = vmul.f32 %v8542, %v8928
      %v9087 = vmul.f32 %v8543, %v8938
      %v9088 = vmul.f32 %v8544, %v8948
      %v9089 = vmul.f32 %v8545, %v8958
      %v9090 = vmul.f32 %v8546, %v8968
      %v9091 = vmul.f32 %v8547, %v8978
      %v9092 = vmul.f32 %v8548, %v8988
      %v9093 = vmul.f32 %v8549, %v8998
      %v9094 = vmul.f32 %v8550, %v9008
      %v9095 = vmul.f32 %v8551, %v9018
      %v9096 = vmul.f32 %v8552, %v9028
      %v9097 = vmul.f32 %v8553, %v9038
      %v9098 = vmul.f32 %v8554, %v9048
      %v9099 = vmul.f32 %v8555, %v9058
      %v9100 = vmul.f32 %v8556, %v9068
      %v9101 = vld [vmem:[%s8] sm:$0x1]
      %v9103 = vperm.slane %v9101, 0
      %v9105 = vmul.f32 %v9069, %v9103
      %v9106 = vmul.f32 %v9070, %v9103
      %v9107 = vmul.f32 %v9071, %v9103
      %v9108 = vmul.f32 %v9072, %v9103
      %v9109 = vmul.f32 %v9073, %v9103
      %v9110 = vmul.f32 %v9074, %v9103
      %v9111 = vmul.f32 %v9075, %v9103
      %v9112 = vmul.f32 %v9076, %v9103
      %v9113 = vmul.f32 %v9077, %v9103
      %v9114 = vmul.f32 %v9078, %v9103
      %v9115 = vmul.f32 %v9079, %v9103
      %v9116 = vmul.f32 %v9080, %v9103
      %v9117 = vmul.f32 %v9081, %v9103
      %v9118 = vmul.f32 %v9082, %v9103
      %v9119 = vmul.f32 %v9083, %v9103
      %v9120 = vmul.f32 %v9084, %v9103
      %v9121 = vmul.f32 %v9085, %v9103
      %v9122 = vmul.f32 %v9086, %v9103
      %v9123 = vmul.f32 %v9087, %v9103
      %v9124 = vmul.f32 %v9088, %v9103
      %v9125 = vmul.f32 %v9089, %v9103
      %v9126 = vmul.f32 %v9090, %v9103
      %v9127 = vmul.f32 %v9091, %v9103
      %v9128 = vmul.f32 %v9092, %v9103
      %v9129 = vmul.f32 %v9093, %v9103
      %v9130 = vmul.f32 %v9094, %v9103
      %v9131 = vmul.f32 %v9095, %v9103
      %v9132 = vmul.f32 %v9096, %v9103
      %v9133 = vmul.f32 %v9097, %v9103
      %v9134 = vmul.f32 %v9098, %v9103
      %v9135 = vmul.f32 %v9099, %v9103
      %v9136 = vmul.f32 %v9100, %v9103
      %v9137 = vld [vmem:[%s9] sm:$0x1]
      %v9139 = vperm.slane %v9137, 0
      %v9141 = vadd.f32 %v9105, %v9139
      %v9142 = vadd.f32 %v9106, %v9139
      %v9143 = vadd.f32 %v9107, %v9139
      %v9144 = vadd.f32 %v9108, %v9139
      %v9145 = vadd.f32 %v9109, %v9139
      %v9146 = vadd.f32 %v9110, %v9139
      %v9147 = vadd.f32 %v9111, %v9139
      %v9148 = vadd.f32 %v9112, %v9139
      %v9149 = vadd.f32 %v9113, %v9139
      %v9150 = vadd.f32 %v9114, %v9139
      %v9151 = vadd.f32 %v9115, %v9139
      %v9152 = vadd.f32 %v9116, %v9139
      %v9153 = vadd.f32 %v9117, %v9139
      %v9154 = vadd.f32 %v9118, %v9139
      %v9155 = vadd.f32 %v9119, %v9139
      %v9156 = vadd.f32 %v9120, %v9139
      %v9157 = vadd.f32 %v9121, %v9139
      %v9158 = vadd.f32 %v9122, %v9139
      %v9159 = vadd.f32 %v9123, %v9139
      %v9160 = vadd.f32 %v9124, %v9139
      %v9161 = vadd.f32 %v9125, %v9139
      %v9162 = vadd.f32 %v9126, %v9139
      %v9163 = vadd.f32 %v9127, %v9139
      %v9164 = vadd.f32 %v9128, %v9139
      %v9165 = vadd.f32 %v9129, %v9139
      %v9166 = vadd.f32 %v9130, %v9139
      %v9167 = vadd.f32 %v9131, %v9139
      %v9168 = vadd.f32 %v9132, %v9139
      %v9169 = vadd.f32 %v9133, %v9139
      %v9170 = vadd.f32 %v9134, %v9139
      %v9171 = vadd.f32 %v9135, %v9139
      %v9172 = vadd.f32 %v9136, %v9139
      %v9173 = vld [vmem:[%s10] sm:$0xff]
      %v9174 = vld [vmem:[%s10 + $0x8] sm:$0xff]
      %v9175 = vld [vmem:[%s10 + $0x10] sm:$0xff]
      %v9176 = vld [vmem:[%s10 + $0x18] sm:$0xff]
      %v9177 = vld [vmem:[%s11] sm:$0x1]
      %v9179 = vperm.slane %v9177, 0
      %v9182 = vsel %vm635, %v9141, 0
      %v9185 = vsel %vm635, %v9142, 0
      %v9188 = vsel %vm635, %v9143, 0
      %v9191 = vsel %vm635, %v9144, 0
      %v9194 = vsel %vm635, %v9145, 0
      %v9197 = vsel %vm635, %v9146, 0
      %v9200 = vsel %vm635, %v9147, 0
      %v9203 = vsel %vm635, %v9148, 0
      %v9206 = vsel %vm635, %v9149, 0
      %v9209 = vsel %vm635, %v9150, 0
      %v9212 = vsel %vm635, %v9151, 0
      %v9215 = vsel %vm635, %v9152, 0
      %v9218 = vsel %vm635, %v9153, 0
      %v9221 = vsel %vm635, %v9154, 0
      %v9224 = vsel %vm635, %v9155, 0
      %v9227 = vsel %vm635, %v9156, 0
      %v9230 = vsel %vm635, %v9157, 0
      %v9233 = vsel %vm635, %v9158, 0
      %v9236 = vsel %vm635, %v9159, 0
      %v9239 = vsel %vm635, %v9160, 0
      %v9242 = vsel %vm635, %v9161, 0
      %v9245 = vsel %vm635, %v9162, 0
      %v9248 = vsel %vm635, %v9163, 0
      %v9251 = vsel %vm635, %v9164, 0
      %v9254 = vsel %vm635, %v9165, 0
      %v9257 = vsel %vm635, %v9166, 0
      %v9260 = vsel %vm635, %v9167, 0
      %v9263 = vsel %vm635, %v9168, 0
      %v9266 = vsel %vm635, %v9169, 0
      %v9269 = vsel %vm635, %v9170, 0
      %v9272 = vsel %vm635, %v9171, 0
      %v9275 = vsel %vm635, %v9172, 0
      %9277 = vmatpush.msra.mxu0 0.0
      %9278 = vmatpush.msra.mxu0 0.0
      %9279 = vmatpush.msra.mxu0 0.0
      %9280 = vmatpush.msra.mxu0 0.0
      %9281 = vmatpush.msra.mxu0 0.0
      %9282 = vmatpush.msra.mxu0 0.0
      %9283 = vmatpush.msra.mxu0 0.0
      %9284 = vmatpush.msra.mxu0 0.0
      %9285 = vmatpush.msra.mxu0 0.0
      %9286 = vmatpush.msra.mxu0 0.0
      %9287 = vmatpush.msra.mxu0 0.0
      %9288 = vmatpush.msra.mxu0 0.0
      %9289 = vmatpush.msra.mxu0 %v9176
      %9290 = vmatpush.msra.mxu0 %v9175
      %9291 = vmatpush.msra.mxu0 %v9174
      %9292 = vmatpush.msra.mxu0 %v9173
      %9293 = vmatmul.f32.gmra.mxu0 %v9182
      %v9294 = vpop.f32.mrf.mxu0
      %v9295 = vadd.f32 %v9179, %v9294
      %9296 = vmatmul.f32.gmra.mxu0 %v9185
      %v9297 = vpop.f32.mrf.mxu0
      %v9298 = vadd.f32 %v9179, %v9297
      %9299 = vmatmul.f32.gmra.mxu0 %v9188
      %v9300 = vpop.f32.mrf.mxu0
      %v9301 = vadd.f32 %v9179, %v9300
      %9302 = vmatmul.f32.gmra.mxu0 %v9191
      %v9303 = vpop.f32.mrf.mxu0
      %v9304 = vadd.f32 %v9179, %v9303
      %9305 = vmatmul.f32.gmra.mxu0 %v9194
      %v9306 = vpop.f32.mrf.mxu0
      %v9307 = vadd.f32 %v9179, %v9306
      %9308 = vmatmul.f32.gmra.mxu0 %v9197
      %v9309 = vpop.f32.mrf.mxu0
      %v9310 = vadd.f32 %v9179, %v9309
      %9311 = vmatmul.f32.gmra.mxu0 %v9200
      %v9312 = vpop.f32.mrf.mxu0
      %v9313 = vadd.f32 %v9179, %v9312
      %9314 = vmatmul.f32.gmra.mxu0 %v9203
      %v9315 = vpop.f32.mrf.mxu0
      %v9316 = vadd.f32 %v9179, %v9315
      %9317 = vmatmul.f32.gmra.mxu0 %v9206
      %v9318 = vpop.f32.mrf.mxu0
      %v9319 = vadd.f32 %v9179, %v9318
      %9320 = vmatmul.f32.gmra.mxu0 %v9209
      %v9321 = vpop.f32.mrf.mxu0
      %v9322 = vadd.f32 %v9179, %v9321
      %9323 = vmatmul.f32.gmra.mxu0 %v9212
      %v9324 = vpop.f32.mrf.mxu0
      %v9325 = vadd.f32 %v9179, %v9324
      %9326 = vmatmul.f32.gmra.mxu0 %v9215
      %v9327 = vpop.f32.mrf.mxu0
      %v9328 = vadd.f32 %v9179, %v9327
      %9329 = vmatmul.f32.gmra.mxu0 %v9218
      %v9330 = vpop.f32.mrf.mxu0
      %v9331 = vadd.f32 %v9179, %v9330
      %9332 = vmatmul.f32.gmra.mxu0 %v9221
      %v9333 = vpop.f32.mrf.mxu0
      %v9334 = vadd.f32 %v9179, %v9333
      %9335 = vmatmul.f32.gmra.mxu0 %v9224
      %v9336 = vpop.f32.mrf.mxu0
      %v9337 = vadd.f32 %v9179, %v9336
      %9338 = vmatmul.f32.gmra.mxu0 %v9227
      %v9339 = vpop.f32.mrf.mxu0
      %v9340 = vadd.f32 %v9179, %v9339
      %9341 = vmatmul.f32.gmra.mxu0 %v9230
      %v9342 = vpop.f32.mrf.mxu0
      %v9343 = vadd.f32 %v9179, %v9342
      %9344 = vmatmul.f32.gmra.mxu0 %v9233
      %v9345 = vpop.f32.mrf.mxu0
      %v9346 = vadd.f32 %v9179, %v9345
      %9347 = vmatmul.f32.gmra.mxu0 %v9236
      %v9348 = vpop.f32.mrf.mxu0
      %v9349 = vadd.f32 %v9179, %v9348
      %9350 = vmatmul.f32.gmra.mxu0 %v9239
      %v9351 = vpop.f32.mrf.mxu0
      %v9352 = vadd.f32 %v9179, %v9351
      %9353 = vmatmul.f32.gmra.mxu0 %v9242
      %v9354 = vpop.f32.mrf.mxu0
      %v9355 = vadd.f32 %v9179, %v9354
      %9356 = vmatmul.f32.gmra.mxu0 %v9245
      %v9357 = vpop.f32.mrf.mxu0
      %v9358 = vadd.f32 %v9179, %v9357
      %9359 = vmatmul.f32.gmra.mxu0 %v9248
      %v9360 = vpop.f32.mrf.mxu0
      %v9361 = vadd.f32 %v9179, %v9360
      %9362 = vmatmul.f32.gmra.mxu0 %v9251
      %v9363 = vpop.f32.mrf.mxu0
      %v9364 = vadd.f32 %v9179, %v9363
      %9365 = vmatmul.f32.gmra.mxu0 %v9254
      %v9366 = vpop.f32.mrf.mxu0
      %v9367 = vadd.f32 %v9179, %v9366
      %9368 = vmatmul.f32.gmra.mxu0 %v9257
      %v9369 = vpop.f32.mrf.mxu0
      %v9370 = vadd.f32 %v9179, %v9369
      %9371 = vmatmul.f32.gmra.mxu0 %v9260
      %v9372 = vpop.f32.mrf.mxu0
      %v9373 = vadd.f32 %v9179, %v9372
      %9374 = vmatmul.f32.gmra.mxu0 %v9263
      %v9375 = vpop.f32.mrf.mxu0
      %v9376 = vadd.f32 %v9179, %v9375
      %9377 = vmatmul.f32.gmra.mxu0 %v9266
      %v9378 = vpop.f32.mrf.mxu0
      %v9379 = vadd.f32 %v9179, %v9378
      %9380 = vmatmul.f32.gmra.mxu0 %v9269
      %v9381 = vpop.f32.mrf.mxu0
      %v9382 = vadd.f32 %v9179, %v9381
      %9383 = vmatmul.f32.gmra.mxu0 %v9272
      %v9384 = vpop.f32.mrf.mxu0
      %v9385 = vadd.f32 %v9179, %v9384
      %9386 = vmatmul.f32.gmra.mxu0 %v9275
      %v9387 = vpop.f32.mrf.mxu0
      %v9388 = vadd.f32 %v9179, %v9387
      %9389 = vdwg.mxu0
      %v9390 = vmul.f32 %v9295, 0.5
      %v9391 = vmul.f32 %v9298, 0.5
      %v9392 = vmul.f32 %v9301, 0.5
      %v9393 = vmul.f32 %v9304, 0.5
      %v9394 = vmul.f32 %v9307, 0.5
      %v9395 = vmul.f32 %v9310, 0.5
      %v9396 = vmul.f32 %v9313, 0.5
      %v9397 = vmul.f32 %v9316, 0.5
      %v9398 = vmul.f32 %v9319, 0.5
      %v9399 = vmul.f32 %v9322, 0.5
      %v9400 = vmul.f32 %v9325, 0.5
      %v9401 = vmul.f32 %v9328, 0.5
      %v9402 = vmul.f32 %v9331, 0.5
      %v9403 = vmul.f32 %v9334, 0.5
      %v9404 = vmul.f32 %v9337, 0.5
      %v9405 = vmul.f32 %v9340, 0.5
      %v9406 = vmul.f32 %v9343, 0.5
      %v9407 = vmul.f32 %v9346, 0.5
      %v9408 = vmul.f32 %v9349, 0.5
      %v9409 = vmul.f32 %v9352, 0.5
      %v9410 = vmul.f32 %v9355, 0.5
      %v9411 = vmul.f32 %v9358, 0.5
      %v9412 = vmul.f32 %v9361, 0.5
      %v9413 = vmul.f32 %v9364, 0.5
      %v9414 = vmul.f32 %v9367, 0.5
      %v9415 = vmul.f32 %v9370, 0.5
      %v9416 = vmul.f32 %v9373, 0.5
      %v9417 = vmul.f32 %v9376, 0.5
      %v9418 = vmul.f32 %v9379, 0.5
      %v9419 = vmul.f32 %v9382, 0.5
      %v9420 = vmul.f32 %v9385, 0.5
      %v9421 = vmul.f32 %v9388, 0.5
      %v9422 = vmul.f32 %v9295, 0.044715
      %v9423 = vmul.f32 %v9298, 0.044715
      %v9424 = vmul.f32 %v9301, 0.044715
      %v9425 = vmul.f32 %v9304, 0.044715
      %v9426 = vmul.f32 %v9307, 0.044715
      %v9427 = vmul.f32 %v9310, 0.044715
      %v9428 = vmul.f32 %v9313, 0.044715
      %v9429 = vmul.f32 %v9316, 0.044715
      %v9430 = vmul.f32 %v9319, 0.044715
      %v9431 = vmul.f32 %v9322, 0.044715
      %v9432 = vmul.f32 %v9325, 0.044715
      %v9433 = vmul.f32 %v9328, 0.044715
      %v9434 = vmul.f32 %v9331, 0.044715
      %v9435 = vmul.f32 %v9334, 0.044715
      %v9436 = vmul.f32 %v9337, 0.044715
      %v9437 = vmul.f32 %v9340, 0.044715
      %v9438 = vmul.f32 %v9343, 0.044715
      %v9439 = vmul.f32 %v9346, 0.044715
      %v9440 = vmul.f32 %v9349, 0.044715
      %v9441 = vmul.f32 %v9352, 0.044715
      %v9442 = vmul.f32 %v9355, 0.044715
      %v9443 = vmul.f32 %v9358, 0.044715
      %v9444 = vmul.f32 %v9361, 0.044715
      %v9445 = vmul.f32 %v9364, 0.044715
      %v9446 = vmul.f32 %v9367, 0.044715
      %v9447 = vmul.f32 %v9370, 0.044715
      %v9448 = vmul.f32 %v9373, 0.044715
      %v9449 = vmul.f32 %v9376, 0.044715
      %v9450 = vmul.f32 %v9379, 0.044715
      %v9451 = vmul.f32 %v9382, 0.044715
      %v9452 = vmul.f32 %v9385, 0.044715
      %v9453 = vmul.f32 %v9388, 0.044715
      %v9454 = vmul.f32 %v9422, %v9295
      %v9455 = vmul.f32 %v9423, %v9298
      %v9456 = vmul.f32 %v9424, %v9301
      %v9457 = vmul.f32 %v9425, %v9304
      %v9458 = vmul.f32 %v9426, %v9307
      %v9459 = vmul.f32 %v9427, %v9310
      %v9460 = vmul.f32 %v9428, %v9313
      %v9461 = vmul.f32 %v9429, %v9316
      %v9462 = vmul.f32 %v9430, %v9319
      %v9463 = vmul.f32 %v9431, %v9322
      %v9464 = vmul.f32 %v9432, %v9325
      %v9465 = vmul.f32 %v9433, %v9328
      %v9466 = vmul.f32 %v9434, %v9331
      %v9467 = vmul.f32 %v9435, %v9334
      %v9468 = vmul.f32 %v9436, %v9337
      %v9469 = vmul.f32 %v9437, %v9340
      %v9470 = vmul.f32 %v9438, %v9343
      %v9471 = vmul.f32 %v9439, %v9346
      %v9472 = vmul.f32 %v9440, %v9349
      %v9473 = vmul.f32 %v9441, %v9352
      %v9474 = vmul.f32 %v9442, %v9355
      %v9475 = vmul.f32 %v9443, %v9358
      %v9476 = vmul.f32 %v9444, %v9361
      %v9477 = vmul.f32 %v9445, %v9364
      %v9478 = vmul.f32 %v9446, %v9367
      %v9479 = vmul.f32 %v9447, %v9370
      %v9480 = vmul.f32 %v9448, %v9373
      %v9481 = vmul.f32 %v9449, %v9376
      %v9482 = vmul.f32 %v9450, %v9379
      %v9483 = vmul.f32 %v9451, %v9382
      %v9484 = vmul.f32 %v9452, %v9385
      %v9485 = vmul.f32 %v9453, %v9388
      %v9486 = vmul.f32 %v9454, %v9295
      %v9487 = vmul.f32 %v9455, %v9298
      %v9488 = vmul.f32 %v9456, %v9301
      %v9489 = vmul.f32 %v9457, %v9304
      %v9490 = vmul.f32 %v9458, %v9307
      %v9491 = vmul.f32 %v9459, %v9310
      %v9492 = vmul.f32 %v9460, %v9313
      %v9493 = vmul.f32 %v9461, %v9316
      %v9494 = vmul.f32 %v9462, %v9319
      %v9495 = vmul.f32 %v9463, %v9322
      %v9496 = vmul.f32 %v9464, %v9325
      %v9497 = vmul.f32 %v9465, %v9328
      %v9498 = vmul.f32 %v9466, %v9331
      %v9499 = vmul.f32 %v9467, %v9334
      %v9500 = vmul.f32 %v9468, %v9337
      %v9501 = vmul.f32 %v9469, %v9340
      %v9502 = vmul.f32 %v9470, %v9343
      %v9503 = vmul.f32 %v9471, %v9346
      %v9504 = vmul.f32 %v9472, %v9349
      %v9505 = vmul.f32 %v9473, %v9352
      %v9506 = vmul.f32 %v9474, %v9355
      %v9507 = vmul.f32 %v9475, %v9358
      %v9508 = vmul.f32 %v9476, %v9361
      %v9509 = vmul.f32 %v9477, %v9364
      %v9510 = vmul.f32 %v9478, %v9367
      %v9511 = vmul.f32 %v9479, %v9370
      %v9512 = vmul.f32 %v9480, %v9373
      %v9513 = vmul.f32 %v9481, %v9376
      %v9514 = vmul.f32 %v9482, %v9379
      %v9515 = vmul.f32 %v9483, %v9382
      %v9516 = vmul.f32 %v9484, %v9385
      %v9517 = vmul.f32 %v9485, %v9388
      %v9518 = vadd.f32 %v9295, %v9486
      %v9519 = vadd.f32 %v9298, %v9487
      %v9520 = vadd.f32 %v9301, %v9488
      %v9521 = vadd.f32 %v9304, %v9489
      %v9522 = vadd.f32 %v9307, %v9490
      %v9523 = vadd.f32 %v9310, %v9491
      %v9524 = vadd.f32 %v9313, %v9492
      %v9525 = vadd.f32 %v9316, %v9493
      %v9526 = vadd.f32 %v9319, %v9494
      %v9527 = vadd.f32 %v9322, %v9495
      %v9528 = vadd.f32 %v9325, %v9496
      %v9529 = vadd.f32 %v9328, %v9497
      %v9530 = vadd.f32 %v9331, %v9498
      %v9531 = vadd.f32 %v9334, %v9499
      %v9532 = vadd.f32 %v9337, %v9500
      %v9533 = vadd.f32 %v9340, %v9501
      %v9534 = vadd.f32 %v9343, %v9502
      %v9535 = vadd.f32 %v9346, %v9503
      %v9536 = vadd.f32 %v9349, %v9504
      %v9537 = vadd.f32 %v9352, %v9505
      %v9538 = vadd.f32 %v9355, %v9506
      %v9539 = vadd.f32 %v9358, %v9507
      %v9540 = vadd.f32 %v9361, %v9508
      %v9541 = vadd.f32 %v9364, %v9509
      %v9542 = vadd.f32 %v9367, %v9510
      %v9543 = vadd.f32 %v9370, %v9511
      %v9544 = vadd.f32 %v9373, %v9512
      %v9545 = vadd.f32 %v9376, %v9513
      %v9546 = vadd.f32 %v9379, %v9514
      %v9547 = vadd.f32 %v9382, %v9515
      %v9548 = vadd.f32 %v9385, %v9516
      %v9549 = vadd.f32 %v9388, %v9517
      %v9550 = vmul.f32 %v9518, 0.7978846
      %v9551 = vmul.f32 %v9519, 0.7978846
      %v9552 = vmul.f32 %v9520, 0.7978846
      %v9553 = vmul.f32 %v9521, 0.7978846
      %v9554 = vmul.f32 %v9522, 0.7978846
      %v9555 = vmul.f32 %v9523, 0.7978846
      %v9556 = vmul.f32 %v9524, 0.7978846
      %v9557 = vmul.f32 %v9525, 0.7978846
      %v9558 = vmul.f32 %v9526, 0.7978846
      %v9559 = vmul.f32 %v9527, 0.7978846
      %v9560 = vmul.f32 %v9528, 0.7978846
      %v9561 = vmul.f32 %v9529, 0.7978846
      %v9562 = vmul.f32 %v9530, 0.7978846
      %v9563 = vmul.f32 %v9531, 0.7978846
      %v9564 = vmul.f32 %v9532, 0.7978846
      %v9565 = vmul.f32 %v9533, 0.7978846
      %v9566 = vmul.f32 %v9534, 0.7978846
      %v9567 = vmul.f32 %v9535, 0.7978846
      %v9568 = vmul.f32 %v9536, 0.7978846
      %v9569 = vmul.f32 %v9537, 0.7978846
      %v9570 = vmul.f32 %v9538, 0.7978846
      %v9571 = vmul.f32 %v9539, 0.7978846
      %v9572 = vmul.f32 %v9540, 0.7978846
      %v9573 = vmul.f32 %v9541, 0.7978846
      %v9574 = vmul.f32 %v9542, 0.7978846
      %v9575 = vmul.f32 %v9543, 0.7978846
      %v9576 = vmul.f32 %v9544, 0.7978846
      %v9577 = vmul.f32 %v9545, 0.7978846
      %v9578 = vmul.f32 %v9546, 0.7978846
      %v9579 = vmul.f32 %v9547, 0.7978846
      %v9580 = vmul.f32 %v9548, 0.7978846
      %v9581 = vmul.f32 %v9549, 0.7978846
      %v9582 = vtanh.pop %v9550
      %v9583 = vtanh.pop %v9551
      %v9584 = vtanh.pop %v9552
      %v9585 = vtanh.pop %v9553
      %v9586 = vtanh.pop %v9554
      %v9587 = vtanh.pop %v9555
      %v9588 = vtanh.pop %v9556
      %v9589 = vtanh.pop %v9557
      %v9590 = vtanh.pop %v9558
      %v9591 = vtanh.pop %v9559
      %v9592 = vtanh.pop %v9560
      %v9593 = vtanh.pop %v9561
      %v9594 = vtanh.pop %v9562
      %v9595 = vtanh.pop %v9563
      %v9596 = vtanh.pop %v9564
      %v9597 = vtanh.pop %v9565
      %v9598 = vtanh.pop %v9566
      %v9599 = vtanh.pop %v9567
      %v9600 = vtanh.pop %v9568
      %v9601 = vtanh.pop %v9569
      %v9602 = vtanh.pop %v9570
      %v9603 = vtanh.pop %v9571
      %v9604 = vtanh.pop %v9572
      %v9605 = vtanh.pop %v9573
      %v9606 = vtanh.pop %v9574
      %v9607 = vtanh.pop %v9575
      %v9608 = vtanh.pop %v9576
      %v9609 = vtanh.pop %v9577
      %v9610 = vtanh.pop %v9578
      %v9611 = vtanh.pop %v9579
      %v9612 = vtanh.pop %v9580
      %v9613 = vtanh.pop %v9581
      %v9614 = vadd.f32 %v9582, 1.0
      %v9615 = vadd.f32 %v9583, 1.0
      %v9616 = vadd.f32 %v9584, 1.0
      %v9617 = vadd.f32 %v9585, 1.0
      %v9618 = vadd.f32 %v9586, 1.0
      %v9619 = vadd.f32 %v9587, 1.0
      %v9620 = vadd.f32 %v9588, 1.0
      %v9621 = vadd.f32 %v9589, 1.0
      %v9622 = vadd.f32 %v9590, 1.0
      %v9623 = vadd.f32 %v9591, 1.0
      %v9624 = vadd.f32 %v9592, 1.0
      %v9625 = vadd.f32 %v9593, 1.0
      %v9626 = vadd.f32 %v9594, 1.0
      %v9627 = vadd.f32 %v9595, 1.0
      %v9628 = vadd.f32 %v9596, 1.0
      %v9629 = vadd.f32 %v9597, 1.0
      %v9630 = vadd.f32 %v9598, 1.0
      %v9631 = vadd.f32 %v9599, 1.0
      %v9632 = vadd.f32 %v9600, 1.0
      %v9633 = vadd.f32 %v9601, 1.0
      %v9634 = vadd.f32 %v9602, 1.0
      %v9635 = vadd.f32 %v9603, 1.0
      %v9636 = vadd.f32 %v9604, 1.0
      %v9637 = vadd.f32 %v9605, 1.0
      %v9638 = vadd.f32 %v9606, 1.0
      %v9639 = vadd.f32 %v9607, 1.0
      %v9640 = vadd.f32 %v9608, 1.0
      %v9641 = vadd.f32 %v9609, 1.0
      %v9642 = vadd.f32 %v9610, 1.0
      %v9643 = vadd.f32 %v9611, 1.0
      %v9644 = vadd.f32 %v9612, 1.0
      %v9645 = vadd.f32 %v9613, 1.0
      %v9646 = vmul.f32 %v9390, %v9614
      %v9647 = vmul.f32 %v9391, %v9615
      %v9648 = vmul.f32 %v9392, %v9616
      %v9649 = vmul.f32 %v9393, %v9617
      %v9650 = vmul.f32 %v9394, %v9618
      %v9651 = vmul.f32 %v9395, %v9619
      %v9652 = vmul.f32 %v9396, %v9620
      %v9653 = vmul.f32 %v9397, %v9621
      %v9654 = vmul.f32 %v9398, %v9622
      %v9655 = vmul.f32 %v9399, %v9623
      %v9656 = vmul.f32 %v9400, %v9624
      %v9657 = vmul.f32 %v9401, %v9625
      %v9658 = vmul.f32 %v9402, %v9626
      %v9659 = vmul.f32 %v9403, %v9627
      %v9660 = vmul.f32 %v9404, %v9628
      %v9661 = vmul.f32 %v9405, %v9629
      %v9662 = vmul.f32 %v9406, %v9630
      %v9663 = vmul.f32 %v9407, %v9631
      %v9664 = vmul.f32 %v9408, %v9632
      %v9665 = vmul.f32 %v9409, %v9633
      %v9666 = vmul.f32 %v9410, %v9634
      %v9667 = vmul.f32 %v9411, %v9635
      %v9668 = vmul.f32 %v9412, %v9636
      %v9669 = vmul.f32 %v9413, %v9637
      %v9670 = vmul.f32 %v9414, %v9638
      %v9671 = vmul.f32 %v9415, %v9639
      %v9672 = vmul.f32 %v9416, %v9640
      %v9673 = vmul.f32 %v9417, %v9641
      %v9674 = vmul.f32 %v9418, %v9642
      %v9675 = vmul.f32 %v9419, %v9643
      %v9676 = vmul.f32 %v9420, %v9644
      %v9677 = vmul.f32 %v9421, %v9645
      %v9678 = vld [vmem:[%s12] sm:$0xff]
      %v9679 = vld [vmem:[%s12 + $0x8] sm:$0xff]
      %v9680 = vld [vmem:[%s12 + $0x10] sm:$0xff]
      %v9681 = vld [vmem:[%s12 + $0x18] sm:$0xff]
      %v9682 = vld [vmem:[%s12 + $0x20] sm:$0xff]
      %v9683 = vld [vmem:[%s12 + $0x28] sm:$0xff]
      %v9684 = vld [vmem:[%s12 + $0x30] sm:$0xff]
      %v9685 = vld [vmem:[%s12 + $0x38] sm:$0xff]
      %v9686 = vld [vmem:[%s12 + $0x40] sm:$0xff]
      %v9687 = vld [vmem:[%s12 + $0x48] sm:$0xff]
      %v9688 = vld [vmem:[%s12 + $0x50] sm:$0xff]
      %v9689 = vld [vmem:[%s12 + $0x58] sm:$0xff]
      %v9690 = vld [vmem:[%s12 + $0x60] sm:$0xff]
      %v9691 = vld [vmem:[%s12 + $0x68] sm:$0xff]
      %v9692 = vld [vmem:[%s12 + $0x70] sm:$0xff]
      %v9693 = vld [vmem:[%s12 + $0x78] sm:$0xff]
      %v9694 = vld [vmem:[%s13] sm:$0x1]
      %v9696 = vperm.slane %v9694, 0
      %9698 = vmatpush.msra.mxu0 %v9693
      %9699 = vmatpush.msra.mxu0 %v9692
      %9700 = vmatpush.msra.mxu0 %v9691
      %9701 = vmatpush.msra.mxu0 %v9690
      %9702 = vmatpush.msra.mxu0 %v9689
      %9703 = vmatpush.msra.mxu0 %v9688
      %9704 = vmatpush.msra.mxu0 %v9687
      %9705 = vmatpush.msra.mxu0 %v9686
      %9706 = vmatpush.msra.mxu0 %v9685
      %9707 = vmatpush.msra.mxu0 %v9684
      %9708 = vmatpush.msra.mxu0 %v9683
      %9709 = vmatpush.msra.mxu0 %v9682
      %9710 = vmatpush.msra.mxu0 %v9681
      %9711 = vmatpush.msra.mxu0 %v9680
      %9712 = vmatpush.msra.mxu0 %v9679
      %9713 = vmatpush.msra.mxu0 %v9678
      %9714 = vmatmul.f32.gmra.mxu0 %v9646
      %v9715 = vpop.f32.mrf.mxu0
      %v9716 = vadd.f32 %v9696, %v9715
      %9717 = vmatmul.f32.gmra.mxu0 %v9647
      %v9718 = vpop.f32.mrf.mxu0
      %v9719 = vadd.f32 %v9696, %v9718
      %9720 = vmatmul.f32.gmra.mxu0 %v9648
      %v9721 = vpop.f32.mrf.mxu0
      %v9722 = vadd.f32 %v9696, %v9721
      %9723 = vmatmul.f32.gmra.mxu0 %v9649
      %v9724 = vpop.f32.mrf.mxu0
      %v9725 = vadd.f32 %v9696, %v9724
      %9726 = vmatmul.f32.gmra.mxu0 %v9650
      %v9727 = vpop.f32.mrf.mxu0
      %v9728 = vadd.f32 %v9696, %v9727
      %9729 = vmatmul.f32.gmra.mxu0 %v9651
      %v9730 = vpop.f32.mrf.mxu0
      %v9731 = vadd.f32 %v9696, %v9730
      %9732 = vmatmul.f32.gmra.mxu0 %v9652
      %v9733 = vpop.f32.mrf.mxu0
      %v9734 = vadd.f32 %v9696, %v9733
      %9735 = vmatmul.f32.gmra.mxu0 %v9653
      %v9736 = vpop.f32.mrf.mxu0
      %v9737 = vadd.f32 %v9696, %v9736
      %9738 = vmatmul.f32.gmra.mxu0 %v9654
      %v9739 = vpop.f32.mrf.mxu0
      %v9740 = vadd.f32 %v9696, %v9739
      %9741 = vmatmul.f32.gmra.mxu0 %v9655
      %v9742 = vpop.f32.mrf.mxu0
      %v9743 = vadd.f32 %v9696, %v9742
      %9744 = vmatmul.f32.gmra.mxu0 %v9656
      %v9745 = vpop.f32.mrf.mxu0
      %v9746 = vadd.f32 %v9696, %v9745
      %9747 = vmatmul.f32.gmra.mxu0 %v9657
      %v9748 = vpop.f32.mrf.mxu0
      %v9749 = vadd.f32 %v9696, %v9748
      %9750 = vmatmul.f32.gmra.mxu0 %v9658
      %v9751 = vpop.f32.mrf.mxu0
      %v9752 = vadd.f32 %v9696, %v9751
      %9753 = vmatmul.f32.gmra.mxu0 %v9659
      %v9754 = vpop.f32.mrf.mxu0
      %v9755 = vadd.f32 %v9696, %v9754
      %9756 = vmatmul.f32.gmra.mxu0 %v9660
      %v9757 = vpop.f32.mrf.mxu0
      %v9758 = vadd.f32 %v9696, %v9757
      %9759 = vmatmul.f32.gmra.mxu0 %v9661
      %v9760 = vpop.f32.mrf.mxu0
      %v9761 = vadd.f32 %v9696, %v9760
      %9762 = vmatmul.f32.gmra.mxu0 %v9662
      %v9763 = vpop.f32.mrf.mxu0
      %v9764 = vadd.f32 %v9696, %v9763
      %9765 = vmatmul.f32.gmra.mxu0 %v9663
      %v9766 = vpop.f32.mrf.mxu0
      %v9767 = vadd.f32 %v9696, %v9766
      %9768 = vmatmul.f32.gmra.mxu0 %v9664
      %v9769 = vpop.f32.mrf.mxu0
      %v9770 = vadd.f32 %v9696, %v9769
      %9771 = vmatmul.f32.gmra.mxu0 %v9665
      %v9772 = vpop.f32.mrf.mxu0
      %v9773 = vadd.f32 %v9696, %v9772
      %9774 = vmatmul.f32.gmra.mxu0 %v9666
      %v9775 = vpop.f32.mrf.mxu0
      %v9776 = vadd.f32 %v9696, %v9775
      %9777 = vmatmul.f32.gmra.mxu0 %v9667
      %v9778 = vpop.f32.mrf.mxu0
      %v9779 = vadd.f32 %v9696, %v9778
      %9780 = vmatmul.f32.gmra.mxu0 %v9668
      %v9781 = vpop.f32.mrf.mxu0
      %v9782 = vadd.f32 %v9696, %v9781
      %9783 = vmatmul.f32.gmra.mxu0 %v9669
      %v9784 = vpop.f32.mrf.mxu0
      %v9785 = vadd.f32 %v9696, %v9784
      %9786 = vmatmul.f32.gmra.mxu0 %v9670
      %v9787 = vpop.f32.mrf.mxu0
      %v9788 = vadd.f32 %v9696, %v9787
      %9789 = vmatmul.f32.gmra.mxu0 %v9671
      %v9790 = vpop.f32.mrf.mxu0
      %v9791 = vadd.f32 %v9696, %v9790
      %9792 = vmatmul.f32.gmra.mxu0 %v9672
      %v9793 = vpop.f32.mrf.mxu0
      %v9794 = vadd.f32 %v9696, %v9793
      %9795 = vmatmul.f32.gmra.mxu0 %v9673
      %v9796 = vpop.f32.mrf.mxu0
      %v9797 = vadd.f32 %v9696, %v9796
      %9798 = vmatmul.f32.gmra.mxu0 %v9674
      %v9799 = vpop.f32.mrf.mxu0
      %v9800 = vadd.f32 %v9696, %v9799
      %9801 = vmatmul.f32.gmra.mxu0 %v9675
      %v9802 = vpop.f32.mrf.mxu0
      %v9803 = vadd.f32 %v9696, %v9802
      %9804 = vmatmul.f32.gmra.mxu0 %v9676
      %v9805 = vpop.f32.mrf.mxu0
      %v9806 = vadd.f32 %v9696, %v9805
      %9807 = vmatmul.f32.gmra.mxu0 %v9677
      %v9808 = vpop.f32.mrf.mxu0
      %v9809 = vadd.f32 %v9696, %v9808
      %9810 = vdwg.mxu0
      %v9811 = vadd.f32 %v8365, %v9716
      %v9812 = vadd.f32 %v8366, %v9719
      %v9813 = vadd.f32 %v8367, %v9722
      %v9814 = vadd.f32 %v8368, %v9725
      %v9815 = vadd.f32 %v8369, %v9728
      %v9816 = vadd.f32 %v8370, %v9731
      %v9817 = vadd.f32 %v8371, %v9734
      %v9818 = vadd.f32 %v8372, %v9737
      %v9819 = vadd.f32 %v8373, %v9740
      %v9820 = vadd.f32 %v8374, %v9743
      %v9821 = vadd.f32 %v8375, %v9746
      %v9822 = vadd.f32 %v8376, %v9749
      %v9823 = vadd.f32 %v8377, %v9752
      %v9824 = vadd.f32 %v8378, %v9755
      %v9825 = vadd.f32 %v8379, %v9758
      %v9826 = vadd.f32 %v8380, %v9761
      %v9827 = vadd.f32 %v8381, %v9764
      %v9828 = vadd.f32 %v8382, %v9767
      %v9829 = vadd.f32 %v8383, %v9770
      %v9830 = vadd.f32 %v8384, %v9773
      %v9831 = vadd.f32 %v8385, %v9776
      %v9832 = vadd.f32 %v8386, %v9779
      %v9833 = vadd.f32 %v8387, %v9782
      %v9834 = vadd.f32 %v8388, %v9785
      %v9835 = vadd.f32 %v8389, %v9788
      %v9836 = vadd.f32 %v8390, %v9791
      %v9837 = vadd.f32 %v8391, %v9794
      %v9838 = vadd.f32 %v8392, %v9797
      %v9839 = vadd.f32 %v8393, %v9800
      %v9840 = vadd.f32 %v8394, %v9803
      %v9841 = vadd.f32 %v8395, %v9806
      %v9842 = vadd.f32 %v8396, %v9809
      %9843 = vst.msk [vmem:[%s580] sm:$0xff] %vm635, %v9811
      %9844 = vst.msk [vmem:[%s580 + $0x8] sm:$0xff] %vm635, %v9812
      %9845 = vst.msk [vmem:[%s580 + $0x10] sm:$0xff] %vm635, %v9813
      %9846 = vst.msk [vmem:[%s580 + $0x18] sm:$0xff] %vm635, %v9814
      %9847 = vst.msk [vmem:[%s580 + $0x20] sm:$0xff] %vm635, %v9815
      %9848 = vst.msk [vmem:[%s580 + $0x28] sm:$0xff] %vm635, %v9816
      %9849 = vst.msk [vmem:[%s580 + $0x30] sm:$0xff] %vm635, %v9817
      %9850 = vst.msk [vmem:[%s580 + $0x38] sm:$0xff] %vm635, %v9818
      %9851 = vst.msk [vmem:[%s580 + $0x40] sm:$0xff] %vm635, %v9819
      %9852 = vst.msk [vmem:[%s580 + $0x48] sm:$0xff] %vm635, %v9820
      %9853 = vst.msk [vmem:[%s580 + $0x50] sm:$0xff] %vm635, %v9821
      %9854 = vst.msk [vmem:[%s580 + $0x58] sm:$0xff] %vm635, %v9822
      %9855 = vst.msk [vmem:[%s580 + $0x60] sm:$0xff] %vm635, %v9823
      %9856 = vst.msk [vmem:[%s580 + $0x68] sm:$0xff] %vm635, %v9824
      %9857 = vst.msk [vmem:[%s580 + $0x70] sm:$0xff] %vm635, %v9825
      %9858 = vst.msk [vmem:[%s580 + $0x78] sm:$0xff] %vm635, %v9826
      %9859 = vst.msk [vmem:[%s580 + $0x80] sm:$0xff] %vm635, %v9827
      %9860 = vst.msk [vmem:[%s580 + $0x88] sm:$0xff] %vm635, %v9828
      %9861 = vst.msk [vmem:[%s580 + $0x90] sm:$0xff] %vm635, %v9829
      %9862 = vst.msk [vmem:[%s580 + $0x98] sm:$0xff] %vm635, %v9830
      %9863 = vst.msk [vmem:[%s580 + $0xa0] sm:$0xff] %vm635, %v9831
      %9864 = vst.msk [vmem:[%s580 + $0xa8] sm:$0xff] %vm635, %v9832
      %9865 = vst.msk [vmem:[%s580 + $0xb0] sm:$0xff] %vm635, %v9833
      %9866 = vst.msk [vmem:[%s580 + $0xb8] sm:$0xff] %vm635, %v9834
      %9867 = vst.msk [vmem:[%s580 + $0xc0] sm:$0xff] %vm635, %v9835
      %9868 = vst.msk [vmem:[%s580 + $0xc8] sm:$0xff] %vm635, %v9836
      %9869 = vst.msk [vmem:[%s580 + $0xd0] sm:$0xff] %vm635, %v9837
      %9870 = vst.msk [vmem:[%s580 + $0xd8] sm:$0xff] %vm635, %v9838
      %9871 = vst.msk [vmem:[%s580 + $0xe0] sm:$0xff] %vm635, %v9839
      %9872 = vst.msk [vmem:[%s580 + $0xe8] sm:$0xff] %vm635, %v9840
      %9873 = vst.msk [vmem:[%s580 + $0xf0] sm:$0xff] %vm635, %v9841
      %9874 = vst.msk [vmem:[%s580 + $0xf8] sm:$0xff] %vm635, %v9842
      %s9875 = smul.u32 8, %s29
      %p9876 = scmp.lt.s32.totalorder %s9875, 15
      %s9877 = scalar_select %p9876, %s9875, 15
      %s9878 = smul.addr %s9877, 4
      %s9879 = smul.addr %s9878, 8
      %s9880 = scalar_lea.vmem %s14, %s9879
      %s9881 = smul.u32 8, %s29
      %p9882 = scmp.lt.s32.totalorder %s9881, 15
      %s9883 = scalar_select %p9882, %s9881, 15
      %s9884 = smul.addr %s9883, 16
      %s9885 = smul.addr %s9884, 8
      %s9886 = scalar_lea.vmem %s15, %s9885
      %s9887 = smul.u32 8, %s29
      %p9888 = scmp.lt.s32.totalorder %s9887, 15
      %s9889 = scalar_select %p9888, %s9887, 15
      %s9890 = smul.addr %s9889, 16
      %s9891 = smul.addr %s9890, 8
      %s9892 = scalar_lea.vmem %s16, %s9891
      %s9893 = smul.u32 8, %s29
      %p9894 = scmp.lt.s32.totalorder %s9893, 15
      %s9895 = scalar_select %p9894, %s9893, 15
      %s9896 = smul.addr %s9895, 16
      %s9897 = smul.addr %s9896, 8
      %s9898 = scalar_lea.vmem %s17, %s9897
      // Predicated region
      $region77: #{swin_block_forward.1} parent=75 // pred_check
        %p9899 = pneg %p346
      $region78: #{swin_block_forward.1} parent=75 // pred_check_branch
        %9901 = sbr.rel (%p9899) target = $region80
      $region79: #{swin_block_forward.1} parent=75 // pred_region
        %s9902 = smul.u32 8, %s29
      $region80: #{swin_block_forward.1} parent=75 // pred_fallthru
        _
      // Predicated region
      $region81: #{swin_block_forward.1} parent=75 // pred_check
        %p9903 = pneg %p372
      $region82: #{swin_block_forward.1} parent=75 // pred_check_branch
        %9905 = sbr.rel (%p9903) target = $region84
      $region83: #{swin_block_forward.1} parent=75 // pred_region
        %s9906 = smul.u32 8, %s29
      $region84: #{swin_block_forward.1} parent=75 // pred_fallthru
        _
      // Predicated region
      $region85: #{swin_block_forward.1} parent=75 // pred_check
        %p9907 = pneg %p398
      $region86: #{swin_block_forward.1} parent=75 // pred_check_branch
        %9909 = sbr.rel (%p9907) target = $region88
      $region87: #{swin_block_forward.1} parent=75 // pred_region
        %s9910 = smul.u32 8, %s29
      $region88: #{swin_block_forward.1} parent=75 // pred_fallthru
        _
      // Predicated region
      $region89: #{swin_block_forward.1} parent=75 // pred_check
        %p9911 = pneg %p424
      $region90: #{swin_block_forward.1} parent=75 // pred_check_branch
        %9913 = sbr.rel (%p9911) target = $region92
      $region91: #{swin_block_forward.1} parent=75 // pred_region
        %s9914 = smul.u32 8, %s29
      $region92: #{swin_block_forward.1} parent=75 // pred_fallthru
        _
    $region76: #{swin_block_forward.1} parent=5 // pred_fallthru
      _
    %p9915 = scmp.le.s32.totalorder 2, %s24
    // Predicated region
    $region93: #{swin_block_forward.1} parent=5 // pred_check
      %p9916 = pneg %p9915
    $region94: #{swin_block_forward.1} parent=5 // pred_check_branch
      %9918 = sbr.rel (%p9916) target = $region96
    $region95: #{swin_block_forward.1} parent=5 // pred_region
      %s9919 = ssub.s32 %s24, 2
      // Predicated region
      $region97: #{swin_block_forward.1} parent=95 // pred_check
        %p9920 = pneg %p352
      $region98: #{swin_block_forward.1} parent=95 // pred_check_branch
        %9922 = sbr.rel (%p9920) target = $region100
      $region99: #{swin_block_forward.1} parent=95 // pred_region
        %s9923 = smul.u32 8, %s30
        %p9924 = scmp.lt.s32.totalorder %s9923, 15
        %s9925 = scalar_select %p9924, %s9923, 15
        %s9926 = smul.addr %s9925, 4
        %s9927 = smul.addr %s9926, 8
        %s9928 = scalar_lea.vmem %s14, %s9927
      $region100: #{swin_block_forward.1} parent=95 // pred_fallthru
        _
      // Predicated region
      $region101: #{swin_block_forward.1} parent=95 // pred_check
        %p9929 = pneg %p378
      $region102: #{swin_block_forward.1} parent=95 // pred_check_branch
        %9931 = sbr.rel (%p9929) target = $region104
      $region103: #{swin_block_forward.1} parent=95 // pred_region
        %s9932 = smul.u32 8, %s30
        %p9933 = scmp.lt.s32.totalorder %s9932, 15
        %s9934 = scalar_select %p9933, %s9932, 15
        %s9935 = smul.addr %s9934, 16
        %s9936 = smul.addr %s9935, 8
        %s9937 = scalar_lea.vmem %s15, %s9936
      $region104: #{swin_block_forward.1} parent=95 // pred_fallthru
        _
      // Predicated region
      $region105: #{swin_block_forward.1} parent=95 // pred_check
        %p9938 = pneg %p404
      $region106: #{swin_block_forward.1} parent=95 // pred_check_branch
        %9940 = sbr.rel (%p9938) target = $region108
      $region107: #{swin_block_forward.1} parent=95 // pred_region
        %s9941 = smul.u32 8, %s30
        %p9942 = scmp.lt.s32.totalorder %s9941, 15
        %s9943 = scalar_select %p9942, %s9941, 15
        %s9944 = smul.addr %s9943, 16
        %s9945 = smul.addr %s9944, 8
        %s9946 = scalar_lea.vmem %s16, %s9945
      $region108: #{swin_block_forward.1} parent=95 // pred_fallthru
        _
      // Predicated region
      $region109: #{swin_block_forward.1} parent=95 // pred_check
        %p9947 = pneg %p430
      $region110: #{swin_block_forward.1} parent=95 // pred_check_branch
        %9949 = sbr.rel (%p9947) target = $region112
      $region111: #{swin_block_forward.1} parent=95 // pred_region
        %s9950 = smul.u32 8, %s30
        %p9951 = scmp.lt.s32.totalorder %s9950, 15
        %s9952 = scalar_select %p9951, %s9950, 15
        %s9953 = smul.addr %s9952, 16
        %s9954 = smul.addr %s9953, 8
        %s9955 = scalar_lea.vmem %s17, %s9954
      $region112: #{swin_block_forward.1} parent=95 // pred_fallthru
        _
    $region96: #{swin_block_forward.1} parent=5 // pred_fallthru
      _
  $region6: #{swin_block_forward.1} parent=0 // loop_footer
    %s28 = sadd.s32 1, %s24
  $region7: #{swin_block_forward.1} parent=0 // loop_footer_branch
    %23 = sbr.rel target = $region3
  $region8: #{swin_block_forward.1} parent=0 // loop_exit
    _

</llo_original>
